<compile_context>
chip_gen: v6e
topology: v6e:2x2x1
jax: 0.10.0
libtpu: 0.0.40
codegen_flags: <defaults>
</compile_context>

<pallas_src>
import functools

import jax
import jax.numpy as jnp
from jax.experimental import pallas as pl
from jax.experimental.pallas import tpu as pltpu

BN_EPS = 1e-5
LRELU_SLOPE = 0.01
LANE = 128                       # channel dims padded to lane width (lane-dense stores)
MAX_TILE_ROWS = 1024             # target TH*W rows per matmul tile (good MXU M dim)


def _round_up(x, m):
    return (x + m - 1) // m * m


def _vmem_budget_bytes():
    """Generation-aware VMEM budget (~75% of physical per-core VMEM)."""
    try:
        cap = int(pltpu.get_tpu_info().vmem_capacity_bytes)
    except Exception:            # no query available -> assume the smallest (v7x, 64 MiB)
        cap = 64 * 1024 * 1024
    return int(cap * 3 // 4)


_VMEM_BUDGET = _vmem_budget_bytes()


def _conv_vmem_bytes(h, w, th, cpi, cpo, in_bytes):
    """Conservative VMEM estimate for one conv-stats call (incl. scratch + temporaries)."""
    kcpi = 3 * cpi
    est = (h + 2) * (w + 2) * cpi * 2          # padded activated image scratch (bf16)
    est += h * w * cpi * in_bytes              # staged raw image scratch (single-buffered)
    est += 2 * 3 * kcpi * cpo * 2              # weights (bf16, double-buffered allocation)
    est += 2 * th * w * cpo * 2                # y output block (bf16, double-buffered)
    est += 4 * 2 * cpo * 4                     # per-tile stat blocks
    est += th * w * cpo * 4                    # in-kernel f32 accumulator
    est += 2 * th * w * kcpi * 2               # lhs slab + shifted tap-slice copies (bf16)
    est += 2 * h * w * cpi * 4                 # activation-build f32 temporaries (ti==0)
    return est


def _pick_tile_rows(h, w, cpi, cpo, budget, in_bytes):
    """Largest divisor TH of H with TH*W <= MAX_TILE_ROWS that fits the VMEM budget."""
    fitting = [d for d in range(1, h + 1)
               if h % d == 0 and _conv_vmem_bytes(h, w, d, cpi, cpo, in_bytes) <= budget]
    if not fitting:
        # TODO(synk): fall back to W-tiling / manual halo DMA for very large images.
        raise ValueError("conv image does not fit the VMEM budget; W-tiling needed")
    capped = [d for d in fitting if d * w <= MAX_TILE_ROWS]
    return max(capped) if capped else min(fitting)


# --------------------------------------------------------------------------------------
# Kernel 1: fused (previous BN + LeakyReLU + halo pad) -> 3x3 conv -> BN partial stats
# --------------------------------------------------------------------------------------
def _conv_stats_kernel(x_hbm, scale_ref, shift_ref, w_ref,
                       y_ref, s_ref, m2_ref,
                       xstage_ref, xpad_ref,
                       *, th, hh, ww, apply_lrelu):
    """One (batch, row-tile) grid step.

    x_hbm      : (N, H, W, Cpi)   raw input, stays in HBM (memory_space=pl.ANY)
    scale/shift: (1, 1, Cpi)      folded BN of the *previous* block (identity for block 1)
    w_ref      : (3, 3*Cpi, Cpo)  bf16 weights, dx taps concatenated along K
    y_ref      : (1, TH, W, Cpo)  bf16 pre-BN conv output tile
    s_ref/m2_ref: (1, 1, 1, Cpo)  per-tile channel sum / shifted sum of squares
    xstage_ref : (H, W, Cpi)      VMEM scratch, single-buffered copy of the image
    xpad_ref   : (H+2, W+2, Cpi)  VMEM scratch, zero-padded activated bf16 image
    """
    ni = pl.program_id(0)
    ti = pl.program_id(1)
    cpi = xpad_ref.shape[2]
    cpo = w_ref.shape[2]

    # Once per batch element (row-tile axis is sequential / "arbitrary"): fetch the image
    # with a single manual DMA, apply the previous block's folded BN (+ LeakyReLU) and
    # build the spatially zero-padded bf16 slab entirely in VMEM.  This fuses block-1's
    # BN+LReLU and the inter-block halo pad into block-2's conv kernel.
    @pl.when(ti == 0)
    def _():
        pltpu.sync_copy(x_hbm.at[ni], xstage_ref)          # single-buffered image DMA
        xpad_ref[...] = jnp.zeros_like(xpad_ref)
        a = xstage_ref[...].astype(jnp.float32)
        a = a * scale_ref[...] + shift_ref[...]
        if apply_lrelu:
            a = jnp.where(a >= 0.0, a, LRELU_SLOPE * a)
        xpad_ref[pl.ds(1, hh), pl.ds(1, ww), :] = a.astype(xpad_ref.dtype)

    # 3x3 conv on this row tile: 3 MXU matmuls with K = 3*Cpi (dx taps folded into K).
    h0 = ti * th
    acc = jnp.zeros((th * ww, cpo), jnp.float32)
    for dy in range(3):
        rows = xpad_ref[pl.ds(h0 + dy, th), :, :]                      # (TH, W+2, Cpi)
        lhs = jnp.concatenate([rows[:, dx:dx + ww, :] for dx in range(3)], axis=-1)
        lhs = lhs.reshape(th * ww, 3 * cpi)                            # (TH*W, 3*Cpi)
        acc = acc + jnp.dot(lhs, w_ref[dy], preferred_element_type=jnp.float32)

    y_ref[...] = acc.reshape(1, th, ww, cpo).astype(y_ref.dtype)

    # Per-tile BN partials with a tile-local shift (avoids E[x^2]-E[x]^2 cancellation).
    cnt = float(th * ww)
    tsum = jnp.sum(acc, axis=0)                                        # (Cpo,)
    d = acc - (tsum / cnt)[None, :]
    s_ref[...] = tsum.reshape(1, 1, 1, cpo)
    m2_ref[...] = jnp.sum(d * d, axis=0).reshape(1, 1, 1, cpo)


def _conv3x3_bn_stats(x_nhwc, w_oihw, scale_in, shift_in, *, apply_lrelu):
    """3x3 conv (pad=1) of act(x) where act = LReLU?(x*scale_in + shift_in).

    Returns (pre-BN conv output in bf16 with padded channels, per-channel mean, var).
    """
    n, h, w, cpi = x_nhwc.shape
    c_out, c_in_real = w_oihw.shape[0], w_oihw.shape[1]
    assert cpi % LANE == 0 and cpi >= c_in_real
    cpo = _round_up(c_out, LANE)

    # (Cout, Cin, kh, kw) -> (kh, kw, Cin, Cout) -> pad channels -> (3, 3*Cpi, Cpo), bf16.
    wt = jnp.transpose(w_oihw, (2, 3, 1, 0))
    wt = jnp.pad(wt, ((0, 0), (0, 0), (0, cpi - c_in_real), (0, cpo - c_out)))
    wt = wt.reshape(3, 3 * cpi, cpo).astype(jnp.bfloat16)

    in_bytes = jnp.dtype(x_nhwc.dtype).itemsize
    th = _pick_tile_rows(h, w, cpi, cpo, int(0.9 * _VMEM_BUDGET), in_bytes)
    ht = h // th
    grid = (n, ht)

    kernel = functools.partial(_conv_stats_kernel, th=th, hh=h, ww=w,
                               apply_lrelu=apply_lrelu)
    y, tsum, tm2 = pl.pallas_call(
        kernel,
        grid=grid,
        in_specs=[
            pl.BlockSpec(memory_space=pl.ANY),                         # image: manual DMA,
            pl.BlockSpec((1, 1, cpi), lambda ni, ti: (0, 0, 0)),       # single-buffered
            pl.BlockSpec((1, 1, cpi), lambda ni, ti: (0, 0, 0)),
            pl.BlockSpec((3, 3 * cpi, cpo), lambda ni, ti: (0, 0, 0)),
        ],
        out_specs=[
            pl.BlockSpec((1, th, w, cpo), lambda ni, ti: (ni, ti, 0, 0)),
            pl.BlockSpec((1, 1, 1, cpo), lambda ni, ti: (ni, ti, 0, 0)),
            pl.BlockSpec((1, 1, 1, cpo), lambda ni, ti: (ni, ti, 0, 0)),
        ],
        out_shape=[
            jax.ShapeDtypeStruct((n, h, w, cpo), jnp.bfloat16),        # pre-BN conv output
            jax.ShapeDtypeStruct((n, ht, 1, cpo), jnp.float32),        # per-tile sum
            jax.ShapeDtypeStruct((n, ht, 1, cpo), jnp.float32),        # per-tile M2
        ],
        scratch_shapes=[
            pltpu.VMEM((h, w, cpi), x_nhwc.dtype),                     # staged raw image
            pltpu.VMEM((h + 2, w + 2, cpi), jnp.bfloat16),             # padded activated img
        ],
        compiler_params=pltpu.CompilerParams(
            # batch axis parallel (megacore), row-tile axis sequential so the resident
            # per-batch image/scratch is never re-built per tile.
            dimension_semantics=("parallel", "arbitrary"),
            vmem_limit_bytes=_VMEM_BUDGET),
    )(x_nhwc, scale_in, shift_in, wt)

    # Chan-style combine of per-tile (sum, M2) partials into batch statistics (f32).
    n_t = float(th * w)
    total = float(n * h * w)
    mean = jnp.sum(tsum, axis=(0, 1, 2)) / total
    tile_mean = tsum / n_t
    m2 = jnp.sum(tm2, axis=(0, 1, 2)) + jnp.sum(n_t * (tile_mean - mean) ** 2,
                                                axis=(0, 1, 2))
    var = jnp.maximum(m2 / total, 0.0)                                 # biased, as in BN
    return y, mean, var


def _fold_bn(mean, var, gamma, beta):
    """Fold training-mode BN into per-channel scale/shift (padded channels -> 0)."""
    cpo = mean.shape[0]
    c = gamma.shape[0]
    g = jnp.pad(gamma.astype(jnp.float32), (0, cpo - c))
    b = jnp.pad(beta.astype(jnp.float32), (0, cpo - c))
    inv = jax.lax.rsqrt(var + BN_EPS)
    scale = g * inv
    shift = b - mean * scale
    return scale.reshape(1, 1, cpo), shift.reshape(1, 1, cpo)


# --------------------------------------------------------------------------------------
# Kernel 2: final BatchNorm (folded scale/shift) + LeakyReLU
# --------------------------------------------------------------------------------------
def _bn_lrelu_kernel(y_ref, scale_ref, shift_ref, o_ref):
    z = y_ref[...].astype(jnp.float32) * scale_ref[...] + shift_ref[...]
    o_ref[...] = jnp.where(z >= 0.0, z, LRELU_SLOPE * z).astype(o_ref.dtype)


def _bn_lrelu(y, scale, shift, out_dtype):
    n, h, w, cpo = y.shape
    cands = [d for d in range(1, h + 1) if h % d == 0 and d * w <= MAX_TILE_ROWS]
    th = max(cands) if cands else 1
    grid = (n, h // th)
    return pl.pallas_call(
        _bn_lrelu_kernel,
        grid=grid,
        in_specs=[
            pl.BlockSpec((1, th, w, cpo), lambda ni, ti: (ni, ti, 0, 0)),
            pl.BlockSpec((1, 1, cpo), lambda ni, ti: (0, 0, 0)),
            pl.BlockSpec((1, 1, cpo), lambda ni, ti: (0, 0, 0)),
        ],
        out_specs=pl.BlockSpec((1, th, w, cpo), lambda ni, ti: (ni, ti, 0, 0)),
        out_shape=jax.ShapeDtypeStruct((n, h, w, cpo), out_dtype),
        compiler_params=pltpu.CompilerParams(
            dimension_semantics=("parallel", "parallel"),
            vmem_limit_bytes=_VMEM_BUDGET),
    )(y, scale, shift)


# --------------------------------------------------------------------------------------
# DoubleConv forward
# --------------------------------------------------------------------------------------
def init_double_conv_params(key, in_ch, out_ch):
    """Deterministic synthetic parameters matching nn.Conv2d / nn.BatchNorm2d shapes."""
    k1, k2, k3, k4, k5, k6, k7, k8 = jax.random.split(key, 8)
    return {
        "w1": jax.random.normal(k1, (out_ch, in_ch, 3, 3), jnp.float32) * 0.1,
        "cb1": jax.random.normal(k2, (out_ch,), jnp.float32) * 0.1,
        "g1": 1.0 + 0.1 * jax.random.normal(k3, (out_ch,), jnp.float32),
        "b1": 0.1 * jax.random.normal(k4, (out_ch,), jnp.float32),
        "w2": jax.random.normal(k5, (out_ch, out_ch, 3, 3), jnp.float32) * 0.1,
        "cb2": jax.random.normal(k6, (out_ch,), jnp.float32) * 0.1,
        "g2": 1.0 + 0.1 * jax.random.normal(k7, (out_ch,), jnp.float32),
        "b2": 0.1 * jax.random.normal(k8, (out_ch,), jnp.float32),
    }


@jax.jit
def double_conv(x_nchw, params):
    n, c_in, h, w = x_nchw.shape
    c_out = params["w1"].shape[0]
    cpi1 = _round_up(c_in, LANE)
    cpo = _round_up(c_out, LANE)

    # NCHW (PyTorch) -> NHWC (lane-dense channels), zero-pad channels, cast bf16 for MXU.
    x = jnp.transpose(x_nchw, (0, 2, 3, 1))
    x = jnp.pad(x, ((0, 0), (0, 0), (0, 0), (0, cpi1 - c_in))).astype(jnp.bfloat16)

    one = jnp.ones((1, 1, cpi1), jnp.float32)
    zero = jnp.zeros((1, 1, cpi1), jnp.float32)

    # Conv biases (params["cb*"]) are intentionally dropped: a per-channel constant added
    # before training-mode BatchNorm cancels exactly in the mean subtraction.
    y1, mean1, var1 = _conv3x3_bn_stats(x, params["w1"], one, zero, apply_lrelu=False)
    scale1, shift1 = _fold_bn(mean1, var1, params["g1"], params["b1"])

    # Block 2 consumes the *pre-BN* block-1 output; BN1 + LeakyReLU + halo pad are fused
    # into its conv kernel (no extra full-activation HBM round trips between the blocks).
    y2, mean2, var2 = _conv3x3_bn_stats(y1, params["w2"], scale1, shift1, apply_lrelu=True)
    scale2, shift2 = _fold_bn(mean2, var2, params["g2"], params["b2"])

    out = _bn_lrelu(y2, scale2, shift2, x_nchw.dtype)
    # Dropout2d(p=0.0) is the identity.
    out = out[..., :c_out]                               # strip channel padding
    return jnp.transpose(out, (0, 3, 1, 2))              # back to NCHW


def _double_conv_ref(x_nchw, p):
    """Pure-JAX reference of the PyTorch module (training-mode BN, includes conv bias)."""
    def block(x, wgt, cb, g, b):
        y = jax.lax.conv_general_dilated(
            x, wgt, window_strides=(1, 1), padding=((1, 1), (1, 1)),
            dimension_numbers=("NCHW", "OIHW", "NCHW"),
            precision=jax.lax.Precision.HIGHEST) + cb[None, :, None, None]
        mean = jnp.mean(y, axis=(0, 2, 3), keepdims=True)
        var = jnp.mean((y - mean) ** 2, axis=(0, 2, 3), keepdims=True)
        y = (y - mean) * jax.lax.rsqrt(var + BN_EPS)
        y = y * g[None, :, None, None] + b[None, :, None, None]
        return jnp.where(y >= 0, y, LRELU_SLOPE * y)

    h = block(x_nchw, p["w1"], p["cb1"], p["g1"], p["b1"])
    h = block(h, p["w2"], p["cb2"], p["g2"], p["b2"])
    return h


if __name__ == "__main__":
    key = jax.random.PRNGKey(0)
    kx, kp = jax.random.split(key)

    in_ch, out_ch = 4, 8
    x = jax.random.normal(kx, (2, in_ch, 16, 16), jnp.float32)  # NCHW, like PyTorch
    params = init_double_conv_params(kp, in_ch, out_ch)

    y = double_conv(x, params)
    jax.block_until_ready(y)
    assert y.shape == (2, out_ch, 16, 16), y.shape

    # Correctness check against the pure-JAX (f32, HIGHEST-precision) reference.
    y_ref = _double_conv_ref(x, params)
    d = jnp.abs(y.astype(jnp.float32) - y_ref)
    err_max = float(jnp.max(d))
    err_rel_rms = float(jnp.sqrt(jnp.mean(d * d) / jnp.mean(y_ref * y_ref)))
    # bf16 error budget: two conv stages with bf16 inputs (unit roundoff ~2^-8) on
    # BN-normalized O(1) activations -> expected rel-RMS ~1e-2, max-abs ~3e-2.
    assert err_rel_rms < 3e-2, f"relative RMS error too large: {err_rel_rms}"
    assert err_max < 7.5e-2, f"max abs error too large: {err_max}"

    print("KERNEL_OK")
</pallas_src>

<mosaic_0001>
module attributes {stable_mosaic.version = 11 : i64} {
  func.func @_conv_stats_kernel(%arg0: i32, %arg1: i32, %arg2: memref<2x16x16x128xbf16, #tpu.memory_space<any>>, %arg3: memref<1x1x128xf32, #tpu.memory_space<vmem>>, %arg4: memref<1x1x128xf32, #tpu.memory_space<vmem>>, %arg5: memref<3x384x128xbf16, #tpu.memory_space<vmem>>, %arg6: memref<1x16x16x128xbf16, #tpu.memory_space<vmem>>, %arg7: memref<1x1x1x128xf32, #tpu.memory_space<vmem>>, %arg8: memref<1x1x1x128xf32, #tpu.memory_space<vmem>>, %arg9: memref<16x16x128xbf16, #tpu.memory_space<vmem>>, %arg10: memref<18x18x128xbf16, #tpu.memory_space<vmem>>) attributes {dimension_semantics = [#tpu.dimension_semantics<parallel>, #tpu.dimension_semantics<arbitrary>], iteration_bounds = array<i64: 2, 1>, scalar_prefetch = 0 : i64, scratch_operands = 2 : i64, tpu.core_type = #tpu.core_type<tc>, window_params = [{}, {pipeline_mode = #tpu.pipeline_mode<synchronous>, transform_indices = @transform_1, window_bounds = array<i64: 1, 1, 128>}, {pipeline_mode = #tpu.pipeline_mode<synchronous>, transform_indices = @transform_2, window_bounds = array<i64: 1, 1, 128>}, {pipeline_mode = #tpu.pipeline_mode<synchronous>, transform_indices = @transform_3, window_bounds = array<i64: 3, 384, 128>}, {transform_indices = @transform_4, window_bounds = array<i64: 1, 16, 16, 128>}, {transform_indices = @transform_5, window_bounds = array<i64: 1, 1, 1, 128>}, {transform_indices = @transform_6, window_bounds = array<i64: 1, 1, 1, 128>}]} {
    %c0_i32 = arith.constant 0 : i32
    %0 = arith.cmpi eq, %arg1, %c0_i32 : i32
    %1 = arith.extui %0 : i1 to i32
    %c0_i32_0 = arith.constant 0 : i32
    %2 = arith.cmpi ne, %1, %c0_i32_0 : i32
    scf.if %2 {
      "tpu.region"() ({
        %68 = tpu.sem_alloc : memref<!tpu.dma_semaphore, #tpu.memory_space<semaphore_mem>>
        %c0_i32_48 = arith.constant 0 : i32
        %c0_i32_49 = arith.constant 0 : i32
        %c0_i32_50 = arith.constant 0 : i32
        %69 = tpu.memref_slice %arg2[%arg0, %c0_i32_48, %c0_i32_49, %c0_i32_50] : memref<2x16x16x128xbf16, #tpu.memory_space<any>> -> memref<1x16x16x128xbf16, #tpu.memory_space<any>>
        %70 = tpu.memref_squeeze %69 : memref<1x16x16x128xbf16, #tpu.memory_space<any>> -> memref<16x16x128xbf16, #tpu.memory_space<any>>
        tpu.enqueue_dma source(%70 : memref<16x16x128xbf16, #tpu.memory_space<any>>) target(%arg9 : memref<16x16x128xbf16, #tpu.memory_space<vmem>>) target_semaphore(%68 : memref<!tpu.dma_semaphore, #tpu.memory_space<semaphore_mem>>)
        %c0_i32_51 = arith.constant 0 : i32
        %c0_i32_52 = arith.constant 0 : i32
        %c0_i32_53 = arith.constant 0 : i32
        %71 = tpu.memref_slice %arg2[%arg0, %c0_i32_51, %c0_i32_52, %c0_i32_53] : memref<2x16x16x128xbf16, #tpu.memory_space<any>> -> memref<1x16x16x128xbf16, #tpu.memory_space<any>>
        %72 = tpu.memref_squeeze %71 : memref<1x16x16x128xbf16, #tpu.memory_space<any>> -> memref<16x16x128xbf16, #tpu.memory_space<any>>
        tpu.wait_dma2 semaphore(%68 : memref<!tpu.dma_semaphore, #tpu.memory_space<semaphore_mem>>) src(%72 : memref<16x16x128xbf16, #tpu.memory_space<any>>) dst(%arg9 : memref<16x16x128xbf16, #tpu.memory_space<vmem>>)
        tpu.yield
      }) : () -> ()
      %cst_32 = arith.constant 0.000000e+00 : bf16
      %56 = vector.broadcast %cst_32 : bf16 to vector<18x18x128xbf16>
      %c0_33 = arith.constant 0 : index
      %c0_34 = arith.constant 0 : index
      %c0_35 = arith.constant 0 : index
      %57 = vector.load %arg10[%c0_33, %c0_34, %c0_35] : memref<18x18x128xbf16, #tpu.memory_space<vmem>>, vector<18x18x128xbf16>
      tpu.vector_store %arg10[%c0_33, %c0_34, %c0_35], %56 {strides = array<i32>} : memref<18x18x128xbf16, #tpu.memory_space<vmem>>, vector<18x18x128xbf16>,
      %c0_36 = arith.constant 0 : index
      %c0_37 = arith.constant 0 : index
      %c0_38 = arith.constant 0 : index
      %58 = vector.load %arg9[%c0_36, %c0_37, %c0_38] : memref<16x16x128xbf16, #tpu.memory_space<vmem>>, vector<16x16x128xbf16>
      %59 = arith.extf %58 : vector<16x16x128xbf16> to vector<16x16x128xf32>
      %c0_39 = arith.constant 0 : index
      %c0_40 = arith.constant 0 : index
      %c0_41 = arith.constant 0 : index
      %60 = vector.load %arg3[%c0_39, %c0_40, %c0_41] : memref<1x1x128xf32, #tpu.memory_space<vmem>>, vector<1x1x128xf32>
      %61 = vector.broadcast %60 : vector<1x1x128xf32> to vector<16x16x128xf32>
      %62 = arith.mulf %59, %61 : vector<16x16x128xf32>
      %c0_42 = arith.constant 0 : index
      %c0_43 = arith.constant 0 : index
      %c0_44 = arith.constant 0 : index
      %63 = vector.load %arg4[%c0_42, %c0_43, %c0_44] : memref<1x1x128xf32, #tpu.memory_space<vmem>>, vector<1x1x128xf32>
      %64 = vector.broadcast %63 : vector<1x1x128xf32> to vector<16x16x128xf32>
      %65 = arith.addf %62, %64 : vector<16x16x128xf32>
      %66 = arith.truncf %65 : vector<16x16x128xf32> to vector<16x16x128xbf16>
      %c1_45 = arith.constant 1 : index
      %c1_46 = arith.constant 1 : index
      %c0_47 = arith.constant 0 : index
      %67 = vector.load %arg10[%c1_45, %c1_46, %c0_47] : memref<18x18x128xbf16, #tpu.memory_space<vmem>>, vector<16x16x128xbf16>
      tpu.vector_store %arg10[%c1_45, %c1_46, %c0_47], %66 {strides = array<i32>} : memref<18x18x128xbf16, #tpu.memory_space<vmem>>, vector<16x16x128xbf16>,
    } else {
    }
    %c16_i32 = arith.constant 16 : i32
    %3 = arith.muli %arg1, %c16_i32 : i32
    %cst = arith.constant 0.000000e+00 : f32
    %4 = vector.broadcast %cst : f32 to vector<256x128xf32>
    %c0_i32_1 = arith.constant 0 : i32
    %5 = arith.addi %3, %c0_i32_1 : i32
    %6 = arith.index_cast %5 : i32 to index
    %c0 = arith.constant 0 : index
    %c0_2 = arith.constant 0 : index
    %7 = vector.load %arg10[%6, %c0, %c0_2] : memref<18x18x128xbf16, #tpu.memory_space<vmem>>, vector<16x18x128xbf16>
    %8 = vector.extract_strided_slice %7 {offsets = [0, 0, 0], sizes = [16, 16, 128], strides = [1, 1, 1]} : vector<16x18x128xbf16> to vector<16x16x128xbf16>
    %9 = vector.extract_strided_slice %7 {offsets = [0, 1, 0], sizes = [16, 16, 128], strides = [1, 1, 1]} : vector<16x18x128xbf16> to vector<16x16x128xbf16>
    %10 = vector.extract_strided_slice %7 {offsets = [0, 2, 0], sizes = [16, 16, 128], strides = [1, 1, 1]} : vector<16x18x128xbf16> to vector<16x16x128xbf16>
    %11 = tpu.concatenate %8, %9, %10 in 2 : vector<16x16x128xbf16>, vector<16x16x128xbf16>, vector<16x16x128xbf16> -> vector<16x16x384xbf16>
    %12 = vector.shape_cast %11 : vector<16x16x384xbf16> to vector<256x384xbf16>
    %c0_3 = arith.constant 0 : index
    %c0_4 = arith.constant 0 : index
    %c0_5 = arith.constant 0 : index
    %13 = vector.load %arg5[%c0_3, %c0_4, %c0_5] : memref<3x384x128xbf16, #tpu.memory_space<vmem>>, vector<1x384x128xbf16>
    %14 = vector.shape_cast %13 : vector<1x384x128xbf16> to vector<384x128xbf16>
    %cst_6 = arith.constant dense<0.000000e+00> : vector<256x128xf32>
    %15 = tpu.matmul %12, %14, %cst_6 {dimension_numbers = #tpu.dot_dimension_numbers<[1], [0], [0], [1], [0, 0, 1, 1], [], []>} : vector<256x384xbf16>, vector<384x128xbf16>, vector<256x128xf32> -> vector<256x128xf32>
    %16 = arith.addf %4, %15 : vector<256x128xf32>
    %c1_i32 = arith.constant 1 : i32
    %17 = arith.addi %3, %c1_i32 : i32
    %18 = arith.index_cast %17 : i32 to index
    %c0_7 = arith.constant 0 : index
    %c0_8 = arith.constant 0 : index
    %19 = vector.load %arg10[%18, %c0_7, %c0_8] : memref<18x18x128xbf16, #tpu.memory_space<vmem>>, vector<16x18x128xbf16>
    %20 = vector.extract_strided_slice %19 {offsets = [0, 0, 0], sizes = [16, 16, 128], strides = [1, 1, 1]} : vector<16x18x128xbf16> to vector<16x16x128xbf16>
    %21 = vector.extract_strided_slice %19 {offsets = [0, 1, 0], sizes = [16, 16, 128], strides = [1, 1, 1]} : vector<16x18x128xbf16> to vector<16x16x128xbf16>
    %22 = vector.extract_strided_slice %19 {offsets = [0, 2, 0], sizes = [16, 16, 128], strides = [1, 1, 1]} : vector<16x18x128xbf16> to vector<16x16x128xbf16>
    %23 = tpu.concatenate %20, %21, %22 in 2 : vector<16x16x128xbf16>, vector<16x16x128xbf16>, vector<16x16x128xbf16> -> vector<16x16x384xbf16>
    %24 = vector.shape_cast %23 : vector<16x16x384xbf16> to vector<256x384xbf16>
    %c1 = arith.constant 1 : index
    %c0_9 = arith.constant 0 : index
    %c0_10 = arith.constant 0 : index
    %25 = vector.load %arg5[%c1, %c0_9, %c0_10] : memref<3x384x128xbf16, #tpu.memory_space<vmem>>, vector<1x384x128xbf16>
    %26 = vector.shape_cast %25 : vector<1x384x128xbf16> to vector<384x128xbf16>
    %cst_11 = arith.constant dense<0.000000e+00> : vector<256x128xf32>
    %27 = tpu.matmul %24, %26, %cst_11 {dimension_numbers = #tpu.dot_dimension_numbers<[1], [0], [0], [1], [0, 0, 1, 1], [], []>} : vector<256x384xbf16>, vector<384x128xbf16>, vector<256x128xf32> -> vector<256x128xf32>
    %28 = arith.addf %16, %27 : vector<256x128xf32>
    %c2_i32 = arith.constant 2 : i32
    %29 = arith.addi %3, %c2_i32 : i32
    %30 = arith.index_cast %29 : i32 to index
    %c0_12 = arith.constant 0 : index
    %c0_13 = arith.constant 0 : index
    %31 = vector.load %arg10[%30, %c0_12, %c0_13] : memref<18x18x128xbf16, #tpu.memory_space<vmem>>, vector<16x18x128xbf16>
    %32 = vector.extract_strided_slice %31 {offsets = [0, 0, 0], sizes = [16, 16, 128], strides = [1, 1, 1]} : vector<16x18x128xbf16> to vector<16x16x128xbf16>
    %33 = vector.extract_strided_slice %31 {offsets = [0, 1, 0], sizes = [16, 16, 128], strides = [1, 1, 1]} : vector<16x18x128xbf16> to vector<16x16x128xbf16>
    %34 = vector.extract_strided_slice %31 {offsets = [0, 2, 0], sizes = [16, 16, 128], strides = [1, 1, 1]} : vector<16x18x128xbf16> to vector<16x16x128xbf16>
    %35 = tpu.concatenate %32, %33, %34 in 2 : vector<16x16x128xbf16>, vector<16x16x128xbf16>, vector<16x16x128xbf16> -> vector<16x16x384xbf16>
    %36 = vector.shape_cast %35 : vector<16x16x384xbf16> to vector<256x384xbf16>
    %c2 = arith.constant 2 : index
    %c0_14 = arith.constant 0 : index
    %c0_15 = arith.constant 0 : index
    %37 = vector.load %arg5[%c2, %c0_14, %c0_15] : memref<3x384x128xbf16, #tpu.memory_space<vmem>>, vector<1x384x128xbf16>
    %38 = vector.shape_cast %37 : vector<1x384x128xbf16> to vector<384x128xbf16>
    %cst_16 = arith.constant dense<0.000000e+00> : vector<256x128xf32>
    %39 = tpu.matmul %36, %38, %cst_16 {dimension_numbers = #tpu.dot_dimension_numbers<[1], [0], [0], [1], [0, 0, 1, 1], [], []>} : vector<256x384xbf16>, vector<384x128xbf16>, vector<256x128xf32> -> vector<256x128xf32>
    %40 = arith.addf %28, %39 : vector<256x128xf32>
    %41 = vector.shape_cast %40 : vector<256x128xf32> to vector<1x16x16x128xf32>
    %42 = arith.truncf %41 : vector<1x16x16x128xf32> to vector<1x16x16x128xbf16>
    %c0_17 = arith.constant 0 : index
    %c0_18 = arith.constant 0 : index
    %c0_19 = arith.constant 0 : index
    %c0_20 = arith.constant 0 : index
    %43 = vector.load %arg6[%c0_17, %c0_18, %c0_19, %c0_20] : memref<1x16x16x128xbf16, #tpu.memory_space<vmem>>, vector<1x16x16x128xbf16>
    tpu.vector_store %arg6[%c0_17, %c0_18, %c0_19, %c0_20], %42 {strides = array<i32>} : memref<1x16x16x128xbf16, #tpu.memory_space<vmem>>, vector<1x16x16x128xbf16>,
    %cst_21 = arith.constant dense<0.000000e+00> : vector<128xf32>
    %44 = vector.multi_reduction <add>, %40, %cst_21 [0] : vector<256x128xf32> to vector<128xf32>
    %cst_22 = arith.constant 2.560000e+02 : f32
    %45 = vector.broadcast %cst_22 : f32 to vector<128xf32>
    %46 = arith.divf %44, %45 : vector<128xf32>
    %47 = vector.shape_cast %46 : vector<128xf32> to vector<1x128xf32>
    %48 = vector.broadcast %47 : vector<1x128xf32> to vector<256x128xf32>
    %49 = arith.subf %40, %48 : vector<256x128xf32>
    %50 = vector.shape_cast %44 : vector<128xf32> to vector<1x1x1x128xf32>
    %c0_23 = arith.constant 0 : index
    %c0_24 = arith.constant 0 : index
    %c0_25 = arith.constant 0 : index
    %c0_26 = arith.constant 0 : index
    %51 = vector.load %arg7[%c0_23, %c0_24, %c0_25, %c0_26] : memref<1x1x1x128xf32, #tpu.memory_space<vmem>>, vector<1x1x1x128xf32>
    tpu.vector_store %arg7[%c0_23, %c0_24, %c0_25, %c0_26], %50 {strides = array<i32>} : memref<1x1x1x128xf32, #tpu.memory_space<vmem>>, vector<1x1x1x128xf32>,
    %52 = arith.mulf %49, %49 : vector<256x128xf32>
    %cst_27 = arith.constant dense<0.000000e+00> : vector<128xf32>
    %53 = vector.multi_reduction <add>, %52, %cst_27 [0] : vector<256x128xf32> to vector<128xf32>
    %54 = vector.shape_cast %53 : vector<128xf32> to vector<1x1x1x128xf32>
    %c0_28 = arith.constant 0 : index
    %c0_29 = arith.constant 0 : index
    %c0_30 = arith.constant 0 : index
    %c0_31 = arith.constant 0 : index
    %55 = vector.load %arg8[%c0_28, %c0_29, %c0_30, %c0_31] : memref<1x1x1x128xf32, #tpu.memory_space<vmem>>, vector<1x1x1x128xf32>
    tpu.vector_store %arg8[%c0_28, %c0_29, %c0_30, %c0_31], %54 {strides = array<i32>} : memref<1x1x1x128xf32, #tpu.memory_space<vmem>>, vector<1x1x1x128xf32>,
    return
  }
  func.func @transform_1(%arg0: i32, %arg1: i32) -> (i32, i32, i32) {
    %c0_i32 = arith.constant 0 : i32
    %c0_i32_0 = arith.constant 0 : i32
    %c0_i32_1 = arith.constant 0 : i32
    %c0_i32_2 = arith.constant 0 : i32
    return %c0_i32, %c0_i32_0, %c0_i32_1 : i32, i32, i32
  }
  func.func @transform_2(%arg0: i32, %arg1: i32) -> (i32, i32, i32) {
    %c0_i32 = arith.constant 0 : i32
    %c0_i32_0 = arith.constant 0 : i32
    %c0_i32_1 = arith.constant 0 : i32
    %c0_i32_2 = arith.constant 0 : i32
    return %c0_i32, %c0_i32_0, %c0_i32_1 : i32, i32, i32
  }
  func.func @transform_3(%arg0: i32, %arg1: i32) -> (i32, i32, i32) {
    %c0_i32 = arith.constant 0 : i32
    %c0_i32_0 = arith.constant 0 : i32
    %c0_i32_1 = arith.constant 0 : i32
    %c0_i32_2 = arith.constant 0 : i32
    return %c0_i32, %c0_i32_0, %c0_i32_1 : i32, i32, i32
  }
  func.func @transform_4(%arg0: i32, %arg1: i32) -> (i32, i32, i32, i32) {
    %c0_i32 = arith.constant 0 : i32
    %c0_i32_0 = arith.constant 0 : i32
    %c0_i32_1 = arith.constant 0 : i32
    return %arg0, %arg1, %c0_i32, %c0_i32_0 : i32, i32, i32, i32
  }
  func.func @transform_5(%arg0: i32, %arg1: i32) -> (i32, i32, i32, i32) {
    %c0_i32 = arith.constant 0 : i32
    %c0_i32_0 = arith.constant 0 : i32
    %c0_i32_1 = arith.constant 0 : i32
    return %arg0, %arg1, %c0_i32, %c0_i32_0 : i32, i32, i32, i32
  }
  func.func @transform_6(%arg0: i32, %arg1: i32) -> (i32, i32, i32, i32) {
    %c0_i32 = arith.constant 0 : i32
    %c0_i32_0 = arith.constant 0 : i32
    %c0_i32_1 = arith.constant 0 : i32
    return %arg0, %arg1, %c0_i32, %c0_i32_0 : i32, i32, i32, i32
  }
}

module attributes {stable_mosaic.version = 11 : i64} {
  func.func @_conv_stats_kernel(%arg0: i32, %arg1: i32, %arg2: memref<2x16x16x128xbf16, #tpu.memory_space<any>>, %arg3: memref<1x1x128xf32, #tpu.memory_space<vmem>>, %arg4: memref<1x1x128xf32, #tpu.memory_space<vmem>>, %arg5: memref<3x384x128xbf16, #tpu.memory_space<vmem>>, %arg6: memref<1x16x16x128xbf16, #tpu.memory_space<vmem>>, %arg7: memref<1x1x1x128xf32, #tpu.memory_space<vmem>>, %arg8: memref<1x1x1x128xf32, #tpu.memory_space<vmem>>, %arg9: memref<16x16x128xbf16, #tpu.memory_space<vmem>>, %arg10: memref<18x18x128xbf16, #tpu.memory_space<vmem>>) attributes {dimension_semantics = [#tpu.dimension_semantics<parallel>, #tpu.dimension_semantics<arbitrary>], iteration_bounds = array<i64: 2, 1>, scalar_prefetch = 0 : i64, scratch_operands = 2 : i64, tpu.core_type = #tpu.core_type<tc>, window_params = [{}, {pipeline_mode = #tpu.pipeline_mode<synchronous>, transform_indices = @transform_1, window_bounds = array<i64: 1, 1, 128>}, {pipeline_mode = #tpu.pipeline_mode<synchronous>, transform_indices = @transform_2, window_bounds = array<i64: 1, 1, 128>}, {pipeline_mode = #tpu.pipeline_mode<synchronous>, transform_indices = @transform_3, window_bounds = array<i64: 3, 384, 128>}, {transform_indices = @transform_4, window_bounds = array<i64: 1, 16, 16, 128>}, {transform_indices = @transform_5, window_bounds = array<i64: 1, 1, 1, 128>}, {transform_indices = @transform_6, window_bounds = array<i64: 1, 1, 1, 128>}]} {
    %c0_i32 = arith.constant 0 : i32
    %0 = arith.cmpi eq, %arg1, %c0_i32 : i32
    %1 = arith.extui %0 : i1 to i32
    %c0_i32_0 = arith.constant 0 : i32
    %2 = arith.cmpi ne, %1, %c0_i32_0 : i32
    scf.if %2 {
      "tpu.region"() ({
        %73 = tpu.sem_alloc : memref<!tpu.dma_semaphore, #tpu.memory_space<semaphore_mem>>
        %c0_i32_50 = arith.constant 0 : i32
        %c0_i32_51 = arith.constant 0 : i32
        %c0_i32_52 = arith.constant 0 : i32
        %74 = tpu.memref_slice %arg2[%arg0, %c0_i32_50, %c0_i32_51, %c0_i32_52] : memref<2x16x16x128xbf16, #tpu.memory_space<any>> -> memref<1x16x16x128xbf16, #tpu.memory_space<any>>
        %75 = tpu.memref_squeeze %74 : memref<1x16x16x128xbf16, #tpu.memory_space<any>> -> memref<16x16x128xbf16, #tpu.memory_space<any>>
        tpu.enqueue_dma source(%75 : memref<16x16x128xbf16, #tpu.memory_space<any>>) target(%arg9 : memref<16x16x128xbf16, #tpu.memory_space<vmem>>) target_semaphore(%73 : memref<!tpu.dma_semaphore, #tpu.memory_space<semaphore_mem>>)
        %c0_i32_53 = arith.constant 0 : i32
        %c0_i32_54 = arith.constant 0 : i32
        %c0_i32_55 = arith.constant 0 : i32
        %76 = tpu.memref_slice %arg2[%arg0, %c0_i32_53, %c0_i32_54, %c0_i32_55] : memref<2x16x16x128xbf16, #tpu.memory_space<any>> -> memref<1x16x16x128xbf16, #tpu.memory_space<any>>
        %77 = tpu.memref_squeeze %76 : memref<1x16x16x128xbf16, #tpu.memory_space<any>> -> memref<16x16x128xbf16, #tpu.memory_space<any>>
        tpu.wait_dma2 semaphore(%73 : memref<!tpu.dma_semaphore, #tpu.memory_space<semaphore_mem>>) src(%77 : memref<16x16x128xbf16, #tpu.memory_space<any>>) dst(%arg9 : memref<16x16x128xbf16, #tpu.memory_space<vmem>>)
        tpu.yield
      }) : () -> ()
      %cst_32 = arith.constant 0.000000e+00 : bf16
      %56 = vector.broadcast %cst_32 : bf16 to vector<18x18x128xbf16>
      %c0_33 = arith.constant 0 : index
      %c0_34 = arith.constant 0 : index
      %c0_35 = arith.constant 0 : index
      %57 = vector.load %arg10[%c0_33, %c0_34, %c0_35] : memref<18x18x128xbf16, #tpu.memory_space<vmem>>, vector<18x18x128xbf16>
      tpu.vector_store %arg10[%c0_33, %c0_34, %c0_35], %56 {strides = array<i32>} : memref<18x18x128xbf16, #tpu.memory_space<vmem>>, vector<18x18x128xbf16>,
      %c0_36 = arith.constant 0 : index
      %c0_37 = arith.constant 0 : index
      %c0_38 = arith.constant 0 : index
      %58 = vector.load %arg9[%c0_36, %c0_37, %c0_38] : memref<16x16x128xbf16, #tpu.memory_space<vmem>>, vector<16x16x128xbf16>
      %59 = arith.extf %58 : vector<16x16x128xbf16> to vector<16x16x128xf32>
      %c0_39 = arith.constant 0 : index
      %c0_40 = arith.constant 0 : index
      %c0_41 = arith.constant 0 : index
      %60 = vector.load %arg3[%c0_39, %c0_40, %c0_41] : memref<1x1x128xf32, #tpu.memory_space<vmem>>, vector<1x1x128xf32>
      %61 = vector.broadcast %60 : vector<1x1x128xf32> to vector<16x16x128xf32>
      %62 = arith.mulf %59, %61 : vector<16x16x128xf32>
      %c0_42 = arith.constant 0 : index
      %c0_43 = arith.constant 0 : index
      %c0_44 = arith.constant 0 : index
      %63 = vector.load %arg4[%c0_42, %c0_43, %c0_44] : memref<1x1x128xf32, #tpu.memory_space<vmem>>, vector<1x1x128xf32>
      %64 = vector.broadcast %63 : vector<1x1x128xf32> to vector<16x16x128xf32>
      %65 = arith.addf %62, %64 : vector<16x16x128xf32>
      %cst_45 = arith.constant 0.000000e+00 : f32
      %66 = vector.broadcast %cst_45 : f32 to vector<16x16x128xf32>
      %67 = arith.cmpf oge, %65, %66 : vector<16x16x128xf32>
      %cst_46 = arith.constant 0.00999999977 : f32
      %68 = vector.broadcast %cst_46 : f32 to vector<16x16x128xf32>
      %69 = arith.mulf %68, %65 : vector<16x16x128xf32>
      %70 = arith.select %67, %65, %69 : vector<16x16x128xi1>, vector<16x16x128xf32>
      %71 = arith.truncf %70 : vector<16x16x128xf32> to vector<16x16x128xbf16>
      %c1_47 = arith.constant 1 : index
      %c1_48 = arith.constant 1 : index
      %c0_49 = arith.constant 0 : index
      %72 = vector.load %arg10[%c1_47, %c1_48, %c0_49] : memref<18x18x128xbf16, #tpu.memory_space<vmem>>, vector<16x16x128xbf16>
      tpu.vector_store %arg10[%c1_47, %c1_48, %c0_49], %71 {strides = array<i32>} : memref<18x18x128xbf16, #tpu.memory_space<vmem>>, vector<16x16x128xbf16>,
    } else {
    }
    %c16_i32 = arith.constant 16 : i32
    %3 = arith.muli %arg1, %c16_i32 : i32
    %cst = arith.constant 0.000000e+00 : f32
    %4 = vector.broadcast %cst : f32 to vector<256x128xf32>
    %c0_i32_1 = arith.constant 0 : i32
    %5 = arith.addi %3, %c0_i32_1 : i32
    %6 = arith.index_cast %5 : i32 to index
    %c0 = arith.constant 0 : index
    %c0_2 = arith.constant 0 : index
    %7 = vector.load %arg10[%6, %c0, %c0_2] : memref<18x18x128xbf16, #tpu.memory_space<vmem>>, vector<16x18x128xbf16>
    %8 = vector.extract_strided_slice %7 {offsets = [0, 0, 0], sizes = [16, 16, 128], strides = [1, 1, 1]} : vector<16x18x128xbf16> to vector<16x16x128xbf16>
    %9 = vector.extract_strided_slice %7 {offsets = [0, 1, 0], sizes = [16, 16, 128], strides = [1, 1, 1]} : vector<16x18x128xbf16> to vector<16x16x128xbf16>
    %10 = vector.extract_strided_slice %7 {offsets = [0, 2, 0], sizes = [16, 16, 128], strides = [1, 1, 1]} : vector<16x18x128xbf16> to vector<16x16x128xbf16>
    %11 = tpu.concatenate %8, %9, %10 in 2 : vector<16x16x128xbf16>, vector<16x16x128xbf16>, vector<16x16x128xbf16> -> vector<16x16x384xbf16>
    %12 = vector.shape_cast %11 : vector<16x16x384xbf16> to vector<256x384xbf16>
    %c0_3 = arith.constant 0 : index
    %c0_4 = arith.constant 0 : index
    %c0_5 = arith.constant 0 : index
    %13 = vector.load %arg5[%c0_3, %c0_4, %c0_5] : memref<3x384x128xbf16, #tpu.memory_space<vmem>>, vector<1x384x128xbf16>
    %14 = vector.shape_cast %13 : vector<1x384x128xbf16> to vector<384x128xbf16>
    %cst_6 = arith.constant dense<0.000000e+00> : vector<256x128xf32>
    %15 = tpu.matmul %12, %14, %cst_6 {dimension_numbers = #tpu.dot_dimension_numbers<[1], [0], [0], [1], [0, 0, 1, 1], [], []>} : vector<256x384xbf16>, vector<384x128xbf16>, vector<256x128xf32> -> vector<256x128xf32>
    %16 = arith.addf %4, %15 : vector<256x128xf32>
    %c1_i32 = arith.constant 1 : i32
    %17 = arith.addi %3, %c1_i32 : i32
    %18 = arith.index_cast %17 : i32 to index
    %c0_7 = arith.constant 0 : index
    %c0_8 = arith.constant 0 : index
    %19 = vector.load %arg10[%18, %c0_7, %c0_8] : memref<18x18x128xbf16, #tpu.memory_space<vmem>>, vector<16x18x128xbf16>
    %20 = vector.extract_strided_slice %19 {offsets = [0, 0, 0], sizes = [16, 16, 128], strides = [1, 1, 1]} : vector<16x18x128xbf16> to vector<16x16x128xbf16>
    %21 = vector.extract_strided_slice %19 {offsets = [0, 1, 0], sizes = [16, 16, 128], strides = [1, 1, 1]} : vector<16x18x128xbf16> to vector<16x16x128xbf16>
    %22 = vector.extract_strided_slice %19 {offsets = [0, 2, 0], sizes = [16, 16, 128], strides = [1, 1, 1]} : vector<16x18x128xbf16> to vector<16x16x128xbf16>
    %23 = tpu.concatenate %20, %21, %22 in 2 : vector<16x16x128xbf16>, vector<16x16x128xbf16>, vector<16x16x128xbf16> -> vector<16x16x384xbf16>
    %24 = vector.shape_cast %23 : vector<16x16x384xbf16> to vector<256x384xbf16>
    %c1 = arith.constant 1 : index
    %c0_9 = arith.constant 0 : index
    %c0_10 = arith.constant 0 : index
    %25 = vector.load %arg5[%c1, %c0_9, %c0_10] : memref<3x384x128xbf16, #tpu.memory_space<vmem>>, vector<1x384x128xbf16>
    %26 = vector.shape_cast %25 : vector<1x384x128xbf16> to vector<384x128xbf16>
    %cst_11 = arith.constant dense<0.000000e+00> : vector<256x128xf32>
    %27 = tpu.matmul %24, %26, %cst_11 {dimension_numbers = #tpu.dot_dimension_numbers<[1], [0], [0], [1], [0, 0, 1, 1], [], []>} : vector<256x384xbf16>, vector<384x128xbf16>, vector<256x128xf32> -> vector<256x128xf32>
    %28 = arith.addf %16, %27 : vector<256x128xf32>
    %c2_i32 = arith.constant 2 : i32
    %29 = arith.addi %3, %c2_i32 : i32
    %30 = arith.index_cast %29 : i32 to index
    %c0_12 = arith.constant 0 : index
    %c0_13 = arith.constant 0 : index
    %31 = vector.load %arg10[%30, %c0_12, %c0_13] : memref<18x18x128xbf16, #tpu.memory_space<vmem>>, vector<16x18x128xbf16>
    %32 = vector.extract_strided_slice %31 {offsets = [0, 0, 0], sizes = [16, 16, 128], strides = [1, 1, 1]} : vector<16x18x128xbf16> to vector<16x16x128xbf16>
    %33 = vector.extract_strided_slice %31 {offsets = [0, 1, 0], sizes = [16, 16, 128], strides = [1, 1, 1]} : vector<16x18x128xbf16> to vector<16x16x128xbf16>
    %34 = vector.extract_strided_slice %31 {offsets = [0, 2, 0], sizes = [16, 16, 128], strides = [1, 1, 1]} : vector<16x18x128xbf16> to vector<16x16x128xbf16>
    %35 = tpu.concatenate %32, %33, %34 in 2 : vector<16x16x128xbf16>, vector<16x16x128xbf16>, vector<16x16x128xbf16> -> vector<16x16x384xbf16>
    %36 = vector.shape_cast %35 : vector<16x16x384xbf16> to vector<256x384xbf16>
    %c2 = arith.constant 2 : index
    %c0_14 = arith.constant 0 : index
    %c0_15 = arith.constant 0 : index
    %37 = vector.load %arg5[%c2, %c0_14, %c0_15] : memref<3x384x128xbf16, #tpu.memory_space<vmem>>, vector<1x384x128xbf16>
    %38 = vector.shape_cast %37 : vector<1x384x128xbf16> to vector<384x128xbf16>
    %cst_16 = arith.constant dense<0.000000e+00> : vector<256x128xf32>
    %39 = tpu.matmul %36, %38, %cst_16 {dimension_numbers = #tpu.dot_dimension_numbers<[1], [0], [0], [1], [0, 0, 1, 1], [], []>} : vector<256x384xbf16>, vector<384x128xbf16>, vector<256x128xf32> -> vector<256x128xf32>
    %40 = arith.addf %28, %39 : vector<256x128xf32>
    %41 = vector.shape_cast %40 : vector<256x128xf32> to vector<1x16x16x128xf32>
    %42 = arith.truncf %41 : vector<1x16x16x128xf32> to vector<1x16x16x128xbf16>
    %c0_17 = arith.constant 0 : index
    %c0_18 = arith.constant 0 : index
    %c0_19 = arith.constant 0 : index
    %c0_20 = arith.constant 0 : index
    %43 = vector.load %arg6[%c0_17, %c0_18, %c0_19, %c0_20] : memref<1x16x16x128xbf16, #tpu.memory_space<vmem>>, vector<1x16x16x128xbf16>
    tpu.vector_store %arg6[%c0_17, %c0_18, %c0_19, %c0_20], %42 {strides = array<i32>} : memref<1x16x16x128xbf16, #tpu.memory_space<vmem>>, vector<1x16x16x128xbf16>,
    %cst_21 = arith.constant dense<0.000000e+00> : vector<128xf32>
    %44 = vector.multi_reduction <add>, %40, %cst_21 [0] : vector<256x128xf32> to vector<128xf32>
    %cst_22 = arith.constant 2.560000e+02 : f32
    %45 = vector.broadcast %cst_22 : f32 to vector<128xf32>
    %46 = arith.divf %44, %45 : vector<128xf32>
    %47 = vector.shape_cast %46 : vector<128xf32> to vector<1x128xf32>
    %48 = vector.broadcast %47 : vector<1x128xf32> to vector<256x128xf32>
    %49 = arith.subf %40, %48 : vector<256x128xf32>
    %50 = vector.shape_cast %44 : vector<128xf32> to vector<1x1x1x128xf32>
    %c0_23 = arith.constant 0 : index
    %c0_24 = arith.constant 0 : index
    %c0_25 = arith.constant 0 : index
    %c0_26 = arith.constant 0 : index
    %51 = vector.load %arg7[%c0_23, %c0_24, %c0_25, %c0_26] : memref<1x1x1x128xf32, #tpu.memory_space<vmem>>, vector<1x1x1x128xf32>
    tpu.vector_store %arg7[%c0_23, %c0_24, %c0_25, %c0_26], %50 {strides = array<i32>} : memref<1x1x1x128xf32, #tpu.memory_space<vmem>>, vector<1x1x1x128xf32>,
    %52 = arith.mulf %49, %49 : vector<256x128xf32>
    %cst_27 = arith.constant dense<0.000000e+00> : vector<128xf32>
    %53 = vector.multi_reduction <add>, %52, %cst_27 [0] : vector<256x128xf32> to vector<128xf32>
    %54 = vector.shape_cast %53 : vector<128xf32> to vector<1x1x1x128xf32>
    %c0_28 = arith.constant 0 : index
    %c0_29 = arith.constant 0 : index
    %c0_30 = arith.constant 0 : index
    %c0_31 = arith.constant 0 : index
    %55 = vector.load %arg8[%c0_28, %c0_29, %c0_30, %c0_31] : memref<1x1x1x128xf32, #tpu.memory_space<vmem>>, vector<1x1x1x128xf32>
    tpu.vector_store %arg8[%c0_28, %c0_29, %c0_30, %c0_31], %54 {strides = array<i32>} : memref<1x1x1x128xf32, #tpu.memory_space<vmem>>, vector<1x1x1x128xf32>,
    return
  }
  func.func @transform_1(%arg0: i32, %arg1: i32) -> (i32, i32, i32) {
    %c0_i32 = arith.constant 0 : i32
    %c0_i32_0 = arith.constant 0 : i32
    %c0_i32_1 = arith.constant 0 : i32
    %c0_i32_2 = arith.constant 0 : i32
    return %c0_i32, %c0_i32_0, %c0_i32_1 : i32, i32, i32
  }
  func.func @transform_2(%arg0: i32, %arg1: i32) -> (i32, i32, i32) {
    %c0_i32 = arith.constant 0 : i32
    %c0_i32_0 = arith.constant 0 : i32
    %c0_i32_1 = arith.constant 0 : i32
    %c0_i32_2 = arith.constant 0 : i32
    return %c0_i32, %c0_i32_0, %c0_i32_1 : i32, i32, i32
  }
  func.func @transform_3(%arg0: i32, %arg1: i32) -> (i32, i32, i32) {
    %c0_i32 = arith.constant 0 : i32
    %c0_i32_0 = arith.constant 0 : i32
    %c0_i32_1 = arith.constant 0 : i32
    %c0_i32_2 = arith.constant 0 : i32
    return %c0_i32, %c0_i32_0, %c0_i32_1 : i32, i32, i32
  }
  func.func @transform_4(%arg0: i32, %arg1: i32) -> (i32, i32, i32, i32) {
    %c0_i32 = arith.constant 0 : i32
    %c0_i32_0 = arith.constant 0 : i32
    %c0_i32_1 = arith.constant 0 : i32
    return %arg0, %arg1, %c0_i32, %c0_i32_0 : i32, i32, i32, i32
  }
  func.func @transform_5(%arg0: i32, %arg1: i32) -> (i32, i32, i32, i32) {
    %c0_i32 = arith.constant 0 : i32
    %c0_i32_0 = arith.constant 0 : i32
    %c0_i32_1 = arith.constant 0 : i32
    return %arg0, %arg1, %c0_i32, %c0_i32_0 : i32, i32, i32, i32
  }
  func.func @transform_6(%arg0: i32, %arg1: i32) -> (i32, i32, i32, i32) {
    %c0_i32 = arith.constant 0 : i32
    %c0_i32_0 = arith.constant 0 : i32
    %c0_i32_1 = arith.constant 0 : i32
    return %arg0, %arg1, %c0_i32, %c0_i32_0 : i32, i32, i32, i32
  }
}

module attributes {stable_mosaic.version = 11 : i64} {
  func.func @_bn_lrelu_kernel(%arg0: i32, %arg1: i32, %arg2: memref<1x16x16x128xbf16, #tpu.memory_space<vmem>>, %arg3: memref<1x1x128xf32, #tpu.memory_space<vmem>>, %arg4: memref<1x1x128xf32, #tpu.memory_space<vmem>>, %arg5: memref<1x16x16x128xf32, #tpu.memory_space<vmem>>) attributes {dimension_semantics = [#tpu.dimension_semantics<parallel>, #tpu.dimension_semantics<parallel>], iteration_bounds = array<i64: 2, 1>, scalar_prefetch = 0 : i64, scratch_operands = 0 : i64, tpu.core_type = #tpu.core_type<tc>, window_params = [{transform_indices = @transform_0, window_bounds = array<i64: 1, 16, 16, 128>}, {pipeline_mode = #tpu.pipeline_mode<synchronous>, transform_indices = @transform_1, window_bounds = array<i64: 1, 1, 128>}, {pipeline_mode = #tpu.pipeline_mode<synchronous>, transform_indices = @transform_2, window_bounds = array<i64: 1, 1, 128>}, {transform_indices = @transform_3, window_bounds = array<i64: 1, 16, 16, 128>}]} {
    %c0 = arith.constant 0 : index
    %c0_0 = arith.constant 0 : index
    %c0_1 = arith.constant 0 : index
    %c0_2 = arith.constant 0 : index
    %0 = vector.load %arg2[%c0, %c0_0, %c0_1, %c0_2] : memref<1x16x16x128xbf16, #tpu.memory_space<vmem>>, vector<1x16x16x128xbf16>
    %1 = arith.extf %0 : vector<1x16x16x128xbf16> to vector<1x16x16x128xf32>
    %c0_3 = arith.constant 0 : index
    %c0_4 = arith.constant 0 : index
    %c0_5 = arith.constant 0 : index
    %2 = vector.load %arg3[%c0_3, %c0_4, %c0_5] : memref<1x1x128xf32, #tpu.memory_space<vmem>>, vector<1x1x128xf32>
    %3 = vector.shape_cast %2 : vector<1x1x128xf32> to vector<1x1x1x128xf32>
    %4 = vector.broadcast %3 : vector<1x1x1x128xf32> to vector<1x16x16x128xf32>
    %5 = arith.mulf %1, %4 : vector<1x16x16x128xf32>
    %c0_6 = arith.constant 0 : index
    %c0_7 = arith.constant 0 : index
    %c0_8 = arith.constant 0 : index
    %6 = vector.load %arg4[%c0_6, %c0_7, %c0_8] : memref<1x1x128xf32, #tpu.memory_space<vmem>>, vector<1x1x128xf32>
    %7 = vector.shape_cast %6 : vector<1x1x128xf32> to vector<1x1x1x128xf32>
    %8 = vector.broadcast %7 : vector<1x1x1x128xf32> to vector<1x16x16x128xf32>
    %9 = arith.addf %5, %8 : vector<1x16x16x128xf32>
    %cst = arith.constant 0.000000e+00 : f32
    %10 = vector.broadcast %cst : f32 to vector<1x16x16x128xf32>
    %11 = arith.cmpf oge, %9, %10 : vector<1x16x16x128xf32>
    %cst_9 = arith.constant 0.00999999977 : f32
    %12 = vector.broadcast %cst_9 : f32 to vector<1x16x16x128xf32>
    %13 = arith.mulf %12, %9 : vector<1x16x16x128xf32>
    %14 = arith.select %11, %9, %13 : vector<1x16x16x128xi1>, vector<1x16x16x128xf32>
    %c0_10 = arith.constant 0 : index
    %c0_11 = arith.constant 0 : index
    %c0_12 = arith.constant 0 : index
    %c0_13 = arith.constant 0 : index
    %15 = vector.load %arg5[%c0_10, %c0_11, %c0_12, %c0_13] : memref<1x16x16x128xf32, #tpu.memory_space<vmem>>, vector<1x16x16x128xf32>
    tpu.vector_store %arg5[%c0_10, %c0_11, %c0_12, %c0_13], %14 {strides = array<i32>} : memref<1x16x16x128xf32, #tpu.memory_space<vmem>>, vector<1x16x16x128xf32>,
    return
  }
  func.func @transform_0(%arg0: i32, %arg1: i32) -> (i32, i32, i32, i32) {
    %c0_i32 = arith.constant 0 : i32
    %c0_i32_0 = arith.constant 0 : i32
    %c0_i32_1 = arith.constant 0 : i32
    return %arg0, %arg1, %c0_i32, %c0_i32_0 : i32, i32, i32, i32
  }
  func.func @transform_1(%arg0: i32, %arg1: i32) -> (i32, i32, i32) {
    %c0_i32 = arith.constant 0 : i32
    %c0_i32_0 = arith.constant 0 : i32
    %c0_i32_1 = arith.constant 0 : i32
    %c0_i32_2 = arith.constant 0 : i32
    return %c0_i32, %c0_i32_0, %c0_i32_1 : i32, i32, i32
  }
  func.func @transform_2(%arg0: i32, %arg1: i32) -> (i32, i32, i32) {
    %c0_i32 = arith.constant 0 : i32
    %c0_i32_0 = arith.constant 0 : i32
    %c0_i32_1 = arith.constant 0 : i32
    %c0_i32_2 = arith.constant 0 : i32
    return %c0_i32, %c0_i32_0, %c0_i32_1 : i32, i32, i32
  }
  func.func @transform_3(%arg0: i32, %arg1: i32) -> (i32, i32, i32, i32) {
    %c0_i32 = arith.constant 0 : i32
    %c0_i32_0 = arith.constant 0 : i32
    %c0_i32_1 = arith.constant 0 : i32
    return %arg0, %arg1, %c0_i32, %c0_i32_0 : i32, i32, i32, i32
  }
}

</mosaic_0001>

<llo_original>
// kernel: double_conv.5
$region0: #{double_conv.5}
  #allocation0 [shape = 'u32[]', space=smem, size = 0x4, offset = 0x4, fixed_abs, tag = 'smem constant byte address 0x4 - core index']
  #allocation1 [shape = 'u32[144,128]{1,0:T(1,128)}', space=vmem, size = 0x12000, scoped, tag = 'internal scratch']
  %s0 = inlined_call_operand.vmem [shape: bf16[2,16,16,128], index: 0, kind: input, shape index: {}]
  %s1 = inlined_call_operand.vmem [shape: f32[1,1,128], index: 1, kind: input, shape index: {}]
  %s2 = inlined_call_operand.vmem [shape: f32[1,1,128], index: 2, kind: input, shape index: {}]
  %s3 = inlined_call_operand.vmem [shape: f32[2,16,16,128], index: 3, kind: output, shape index: {}]
  %s4 = sld [smem:[#allocation0]]
  $region45: #{double_conv.5} parent=0
    _
  %s6 = ssub.s32 1, %s4
  %s7 = scalar_select 0, %s6, %s4
  loop: start=0, step=1, limit=4
  $region2: #{double_conv.5} parent=0 // loop_pre_header
    _
  $region3: #{double_conv.5} parent=0 // loop_header
    %s9 = sphi 0, %s13
    %p10 = scmp.ge.s32.totalorder %s9, 4
    %s16 = sphi 0, %s28
    %s17 = sphi 0, %s24
    %s18 = sphi 0, %s16
    %s19 = sphi 0, %s17
    %s20 = sphi 0, %s18
    %s21 = sphi 0, %s19
    %s33 = sphi 0, %s35
    %s36 = sphi 0, %s33
    %s37 = sphi 0, %s36
    %s53 = sphi 0, %s37
    %s57 = sphi 0, %s57
    %s59 = sphi 0, %s57
    %s60 = sphi 0, %s59
    %s74 = sphi 0, %s60
    %s78 = sphi 0, %s78
    %s80 = sphi 0, %s78
    %s81 = sphi 0, %s80
    %s95 = sphi 0, %s81
    %s103 = sphi 0, %s105
    %s106 = sphi 0, %s103
    %s107 = sphi 0, %s106
    %s123 = sphi 0, %s107
  $region4: #{double_conv.5} parent=0 // loop_header_branch
    %12 = sbr.rel (%p10) target = $region8
  $region5: #{double_conv.5} parent=0 // loop_body
    %s14 = ssub.s32 %s9, 1
    %s15 = ssub.s32 %s9, 2
    %s22 = sadd.s32 1, %s17
    %p23 = scmp.ge.s32.totalorder %s22, 1
    %s24 = scalar_select %p23, 0, %s22
    %s25 = sadd.s32 1, %s16
    %s26 = scalar_select %p23, %s25, %s16
    %p27 = scmp.ge.s32.totalorder %s26, 2
    %s28 = scalar_select %p27, 0, %s26
    %s29 = ssub.s32 %s16, %s28
    %s30 = ssub.s32 %s17, %s24
    %s31 = sor.u32 %s29, %s30
    %p32 = scmp.eq.s32.totalorder %s31, 0
    %s34 = sadd.s32 %s33, 1
    %s35 = scalar_select %p32, %s33, %s34
    %p38 = pneg %p32
    %p39 = scmp.eq.s32.totalorder %s9, 1
    %p40 = por %p38, %p39
    %p41 = scmp.ne.s32.totalorder %s33, %s36
    %p42 = scmp.eq.s32.totalorder %s9, 0
    %p43 = por %p41, %p42
    %p44 = scmp.ne.s32.totalorder %s33, %s36
    %p45 = scmp.eq.s32.totalorder %s14, 1
    %p46 = por %p44, %p45
    %p47 = scmp.ne.s32.totalorder %s36, %s37
    %p48 = scmp.eq.s32.totalorder %s14, 0
    %p49 = por %p47, %p48
    %p50 = scmp.ne.s32.totalorder %s36, %s37
    %p51 = scmp.eq.s32.totalorder %s15, 1
    %p52 = por %p50, %p51
    %p54 = scmp.ne.s32.totalorder %s37, %s53
    %p55 = scmp.eq.s32.totalorder %s15, 0
    %p56 = por %p54, %p55
    %s58 = sadd.s32 %s57, 1
    %p61 = scmp.eq.s32.totalorder %s9, 1
    %p62 = scmp.ne.s32.totalorder %s57, %s59
    %p63 = scmp.eq.s32.totalorder %s9, 0
    %p64 = por %p62, %p63
    %p65 = scmp.ne.s32.totalorder %s57, %s59
    %p66 = scmp.eq.s32.totalorder %s14, 1
    %p67 = por %p65, %p66
    %p68 = scmp.ne.s32.totalorder %s59, %s60
    %p69 = scmp.eq.s32.totalorder %s14, 0
    %p70 = por %p68, %p69
    %p71 = scmp.ne.s32.totalorder %s59, %s60
    %p72 = scmp.eq.s32.totalorder %s15, 1
    %p73 = por %p71, %p72
    %p75 = scmp.ne.s32.totalorder %s60, %s74
    %p76 = scmp.eq.s32.totalorder %s15, 0
    %p77 = por %p75, %p76
    %s79 = sadd.s32 %s78, 1
    %p82 = scmp.eq.s32.totalorder %s9, 1
    %p83 = scmp.ne.s32.totalorder %s78, %s80
    %p84 = scmp.eq.s32.totalorder %s9, 0
    %p85 = por %p83, %p84
    %p86 = scmp.ne.s32.totalorder %s78, %s80
    %p87 = scmp.eq.s32.totalorder %s14, 1
    %p88 = por %p86, %p87
    %p89 = scmp.ne.s32.totalorder %s80, %s81
    %p90 = scmp.eq.s32.totalorder %s14, 0
    %p91 = por %p89, %p90
    %p92 = scmp.ne.s32.totalorder %s80, %s81
    %p93 = scmp.eq.s32.totalorder %s15, 1
    %p94 = por %p92, %p93
    %p96 = scmp.ne.s32.totalorder %s81, %s95
    %p97 = scmp.eq.s32.totalorder %s15, 0
    %p98 = por %p96, %p97
    %s99 = ssub.s32 %s16, %s28
    %s100 = ssub.s32 %s17, %s24
    %s101 = sor.u32 %s99, %s100
    %p102 = scmp.eq.s32.totalorder %s101, 0
    %s104 = sadd.s32 %s103, 1
    %s105 = scalar_select %p102, %s103, %s104
    %p108 = pneg %p102
    %p109 = scmp.eq.s32.totalorder %s9, 1
    %p110 = por %p108, %p109
    %p111 = scmp.ne.s32.totalorder %s103, %s106
    %p112 = scmp.eq.s32.totalorder %s9, 0
    %p113 = por %p111, %p112
    %p114 = scmp.ne.s32.totalorder %s103, %s106
    %p115 = scmp.eq.s32.totalorder %s14, 1
    %p116 = por %p114, %p115
    %p117 = scmp.ne.s32.totalorder %s106, %s107
    %p118 = scmp.eq.s32.totalorder %s14, 0
    %p119 = por %p117, %p118
    %p120 = scmp.ne.s32.totalorder %s106, %s107
    %p121 = scmp.eq.s32.totalorder %s15, 1
    %p122 = por %p120, %p121
    %p124 = scmp.ne.s32.totalorder %s107, %s123
    %p125 = scmp.eq.s32.totalorder %s15, 0
    %p126 = por %p124, %p125
    %p127 = scmp.le.s32.totalorder 1, %s9
    %p128 = scmp.lt.s32.totalorder %s9, 3
    %p129 = pnand %p127, %p128
    %p130 = pneg %p129
    // Predicated region
    $region9: #{double_conv.5} parent=5 // pred_check
      _
    $region10: #{double_conv.5} parent=5 // pred_check_branch
      %132 = sbr.rel (%p129) target = $region12
    $region11: #{double_conv.5} parent=5 // pred_region
      %s133 = ssub.s32 %s9, 1
      // Predicated region
      $region13: #{double_conv.5} parent=11 // pred_check
        %p134 = pneg %p70
      $region14: #{double_conv.5} parent=11 // pred_check_branch
        %136 = sbr.rel (%p134) target = $region16
      $region15: #{double_conv.5} parent=11 // pred_region
        _
      $region16: #{double_conv.5} parent=11 // pred_fallthru
        _
      // Predicated region
      $region17: #{double_conv.5} parent=11 // pred_check
        %p137 = pneg %p91
      $region18: #{double_conv.5} parent=11 // pred_check_branch
        %139 = sbr.rel (%p137) target = $region20
      $region19: #{double_conv.5} parent=11 // pred_region
        _
      $region20: #{double_conv.5} parent=11 // pred_fallthru
        _
    $region12: #{double_conv.5} parent=5 // pred_fallthru
      _
    %p140 = scmp.lt.s32.totalorder %s9, 2
    // Predicated region
    $region21: #{double_conv.5} parent=5 // pred_check
      %p141 = pneg %p140
    $region22: #{double_conv.5} parent=5 // pred_check_branch
      %143 = sbr.rel (%p141) target = $region24
    $region23: #{double_conv.5} parent=5 // pred_region
      // Predicated region
      $region25: #{double_conv.5} parent=23 // pred_check
        %p144 = pneg %p43
      $region26: #{double_conv.5} parent=23 // pred_check_branch
        %146 = sbr.rel (%p144) target = $region28
      $region27: #{double_conv.5} parent=23 // pred_region
        %s147 = smul.u32 16, %s17
        %p148 = scmp.lt.s32.totalorder %s16, 1
        %s149 = scalar_select %p148, %s16, 1
        %p150 = scmp.lt.s32.totalorder %s147, 15
        %s151 = scalar_select %p150, %s147, 15
        %s152 = smul.addr %s151, 2
        %s153 = smul.addr %s149, 32
        %s154 = sadd.s32 %s152, %s153
        %s155 = smul.addr %s154, 4
        %s156 = scalar_lea.vmem %s0, %s155
        %s157 = smul.u32 16, %s17
      $region28: #{double_conv.5} parent=23 // pred_fallthru
        _
    $region24: #{double_conv.5} parent=5 // pred_fallthru
      _
    %p158 = scmp.le.s32.totalorder 1, %s9
    %p159 = scmp.lt.s32.totalorder %s9, 3
    %p160 = pnand %p158, %p159
    %p161 = pneg %p160
    // Predicated region
    $region29: #{double_conv.5} parent=5 // pred_check
      _
    $region30: #{double_conv.5} parent=5 // pred_check_branch
      %163 = sbr.rel (%p160) target = $region32
    $region31: #{double_conv.5} parent=5 // pred_region
      %s164 = ssub.s32 %s9, 1
      %s165 = smul.u32 16, %s19
      %p166 = scmp.lt.s32.totalorder %s18, 1
      %s167 = scalar_select %p166, %s18, 1
      %p168 = scmp.lt.s32.totalorder %s165, 15
      %s169 = scalar_select %p168, %s165, 15
      %s170 = smul.addr %s169, 2
      %s171 = smul.addr %s167, 32
      %s172 = sadd.s32 %s170, %s171
      %s173 = smul.addr %s172, 4
      %s174 = scalar_lea.vmem %s0, %s173
      %p175 = pneg %p49
      %p176 = pneg %p46
      %p177 = pneg %p70
      %p178 = pneg %p67
      %p179 = pneg %p91
      %p180 = pneg %p88
      %p181 = pneg %p119
      %p182 = pneg %p116
      %s183 = smul.u32 16, %s19
      %p184 = scmp.lt.s32.totalorder %s18, 1
      %s185 = scalar_select %p184, %s18, 1
      %p186 = scmp.lt.s32.totalorder %s183, 15
      %s187 = scalar_select %p186, %s183, 15
      %s188 = smul.addr %s187, 2
      %s189 = smul.addr %s185, 32
      %s190 = sadd.s32 %s188, %s189
      %s191 = smul.addr %s190, 8
      %s192 = scalar_lea.vmem %s3, %s191
      %s193 = smul.u32 16, %s19
      %p194 = scmp.lt.s32.totalorder %s18, 1
      %s195 = scalar_select %p194, %s18, 1
      %p196 = scmp.lt.s32.totalorder %s193, 15
      %s197 = scalar_select %p196, %s193, 15
      %s198 = smul.addr %s197, 2
      %s199 = smul.addr %s195, 32
      %s200 = sadd.s32 %s198, %s199
      %s201 = smul.addr %s200, 4
      %s202 = scalar_lea.vmem %s0, %s201
      %s203 = smul.u32 16, %s19
      %s204 = smul.u32 16, %s19
      %p205 = scmp.lt.s32.totalorder %s18, 1
      %s206 = scalar_select %p205, %s18, 1
      %p207 = scmp.lt.s32.totalorder %s204, 15
      %s208 = scalar_select %p207, %s204, 15
      %s209 = smul.addr %s208, 2
      %s210 = smul.addr %s206, 32
      %s211 = sadd.s32 %s209, %s210
      %s212 = smul.addr %s211, 8
      %s213 = scalar_lea.vmem %s3, %s212
      %s214 = smul.u32 16, %s19
      %v215 = vld [vmem:[%s202] sm:$0xf]
      %v216 = vld [vmem:[%s202 + $0x4] sm:$0xf]
      %v217 = vld [vmem:[%s202 + $0x8] sm:$0xf]
      %v218 = vld [vmem:[%s202 + $0xc] sm:$0xf]
      %v219 = vld [vmem:[%s202 + $0x10] sm:$0xf]
      %v220 = vld [vmem:[%s202 + $0x14] sm:$0xf]
      %v221 = vld [vmem:[%s202 + $0x18] sm:$0xf]
      %v222 = vld [vmem:[%s202 + $0x1c] sm:$0xf]
      %v223 = vld [vmem:[%s202 + $0x20] sm:$0xf]
      %v224 = vld [vmem:[%s202 + $0x24] sm:$0xf]
      %v225 = vld [vmem:[%s202 + $0x28] sm:$0xf]
      %v226 = vld [vmem:[%s202 + $0x2c] sm:$0xf]
      %v227 = vld [vmem:[%s202 + $0x30] sm:$0xf]
      %v228 = vld [vmem:[%s202 + $0x34] sm:$0xf]
      %v229 = vld [vmem:[%s202 + $0x38] sm:$0xf]
      %v230 = vld [vmem:[%s202 + $0x3c] sm:$0xf]
      %v231 = vld [vmem:[%s202 + $0x40] sm:$0xf]
      %v232 = vld [vmem:[%s202 + $0x44] sm:$0xf]
      %v233 = vld [vmem:[%s202 + $0x48] sm:$0xf]
      %v234 = vld [vmem:[%s202 + $0x4c] sm:$0xf]
      %v235 = vld [vmem:[%s202 + $0x50] sm:$0xf]
      %v236 = vld [vmem:[%s202 + $0x54] sm:$0xf]
      %v237 = vld [vmem:[%s202 + $0x58] sm:$0xf]
      %v238 = vld [vmem:[%s202 + $0x5c] sm:$0xf]
      %v239 = vld [vmem:[%s202 + $0x60] sm:$0xf]
      %v240 = vld [vmem:[%s202 + $0x64] sm:$0xf]
      %v241 = vld [vmem:[%s202 + $0x68] sm:$0xf]
      %v242 = vld [vmem:[%s202 + $0x6c] sm:$0xf]
      %v243 = vld [vmem:[%s202 + $0x70] sm:$0xf]
      %v244 = vld [vmem:[%s202 + $0x74] sm:$0xf]
      %v245 = vld [vmem:[%s202 + $0x78] sm:$0xf]
      %v246 = vld [vmem:[%s202 + $0x7c] sm:$0xf]
      %v247 = vunpack.c.l.bf16 %v215
      %v248 = vunpack.c.l.bf16 %v216
      %v249 = vunpack.c.l.bf16 %v217
      %v250 = vunpack.c.l.bf16 %v218
      %v251 = vunpack.c.l.bf16 %v219
      %v252 = vunpack.c.l.bf16 %v220
      %v253 = vunpack.c.l.bf16 %v221
      %v254 = vunpack.c.l.bf16 %v222
      %v255 = vunpack.c.l.bf16 %v223
      %v256 = vunpack.c.l.bf16 %v224
      %v257 = vunpack.c.l.bf16 %v225
      %v258 = vunpack.c.l.bf16 %v226
      %v259 = vunpack.c.l.bf16 %v227
      %v260 = vunpack.c.l.bf16 %v228
      %v261 = vunpack.c.l.bf16 %v229
      %v262 = vunpack.c.l.bf16 %v230
      %v263 = vunpack.c.l.bf16 %v231
      %v264 = vunpack.c.l.bf16 %v232
      %v265 = vunpack.c.l.bf16 %v233
      %v266 = vunpack.c.l.bf16 %v234
      %v267 = vunpack.c.l.bf16 %v235
      %v268 = vunpack.c.l.bf16 %v236
      %v269 = vunpack.c.l.bf16 %v237
      %v270 = vunpack.c.l.bf16 %v238
      %v271 = vunpack.c.l.bf16 %v239
      %v272 = vunpack.c.l.bf16 %v240
      %v273 = vunpack.c.l.bf16 %v241
      %v274 = vunpack.c.l.bf16 %v242
      %v275 = vunpack.c.l.bf16 %v243
      %v276 = vunpack.c.l.bf16 %v244
      %v277 = vunpack.c.l.bf16 %v245
      %v278 = vunpack.c.l.bf16 %v246
      %v279 = vld [vmem:[%s1] sm:$0x1]
      %v281 = vlaneseq
      %v282 = vshrl.u32 %v281, 7
      %v283 = vsub.s32 0, %v282
      %v284 = vrot.slane %v279, %v283
      %v286 = vmul.f32 %v247, %v284
      %v287 = vmul.f32 %v248, %v284
      %v288 = vmul.f32 %v249, %v284
      %v289 = vmul.f32 %v250, %v284
      %v290 = vmul.f32 %v251, %v284
      %v291 = vmul.f32 %v252, %v284
      %v292 = vmul.f32 %v253, %v284
      %v293 = vmul.f32 %v254, %v284
      %v294 = vmul.f32 %v255, %v284
      %v295 = vmul.f32 %v256, %v284
      %v296 = vmul.f32 %v257, %v284
      %v297 = vmul.f32 %v258, %v284
      %v298 = vmul.f32 %v259, %v284
      %v299 = vmul.f32 %v260, %v284
      %v300 = vmul.f32 %v261, %v284
      %v301 = vmul.f32 %v262, %v284
      %v302 = vmul.f32 %v263, %v284
      %v303 = vmul.f32 %v264, %v284
      %v304 = vmul.f32 %v265, %v284
      %v305 = vmul.f32 %v266, %v284
      %v306 = vmul.f32 %v267, %v284
      %v307 = vmul.f32 %v268, %v284
      %v308 = vmul.f32 %v269, %v284
      %v309 = vmul.f32 %v270, %v284
      %v310 = vmul.f32 %v271, %v284
      %v311 = vmul.f32 %v272, %v284
      %v312 = vmul.f32 %v273, %v284
      %v313 = vmul.f32 %v274, %v284
      %v314 = vmul.f32 %v275, %v284
      %v315 = vmul.f32 %v276, %v284
      %v316 = vmul.f32 %v277, %v284
      %v317 = vmul.f32 %v278, %v284
      %v318 = vld [vmem:[%s2] sm:$0x1]
      %v320 = vlaneseq
      %v321 = vshrl.u32 %v320, 7
      %v322 = vsub.s32 0, %v321
      %v323 = vrot.slane %v318, %v322
      %v325 = vadd.f32 %v286, %v323
      %v326 = vadd.f32 %v287, %v323
      %v327 = vadd.f32 %v288, %v323
      %v328 = vadd.f32 %v289, %v323
      %v329 = vadd.f32 %v290, %v323
      %v330 = vadd.f32 %v291, %v323
      %v331 = vadd.f32 %v292, %v323
      %v332 = vadd.f32 %v293, %v323
      %v333 = vadd.f32 %v294, %v323
      %v334 = vadd.f32 %v295, %v323
      %v335 = vadd.f32 %v296, %v323
      %v336 = vadd.f32 %v297, %v323
      %v337 = vadd.f32 %v298, %v323
      %v338 = vadd.f32 %v299, %v323
      %v339 = vadd.f32 %v300, %v323
      %v340 = vadd.f32 %v301, %v323
      %v341 = vadd.f32 %v302, %v323
      %v342 = vadd.f32 %v303, %v323
      %v343 = vadd.f32 %v304, %v323
      %v344 = vadd.f32 %v305, %v323
      %v345 = vadd.f32 %v306, %v323
      %v346 = vadd.f32 %v307, %v323
      %v347 = vadd.f32 %v308, %v323
      %v348 = vadd.f32 %v309, %v323
      %v349 = vadd.f32 %v310, %v323
      %v350 = vadd.f32 %v311, %v323
      %v351 = vadd.f32 %v312, %v323
      %v352 = vadd.f32 %v313, %v323
      %v353 = vadd.f32 %v314, %v323
      %v354 = vadd.f32 %v315, %v323
      %v355 = vadd.f32 %v316, %v323
      %v356 = vadd.f32 %v317, %v323
      %vm357 = vcmp.ge.f32.partialorder %v325, 0.0
      %vm358 = vcmp.ge.f32.partialorder %v326, 0.0
      %vm359 = vcmp.ge.f32.partialorder %v327, 0.0
      %vm360 = vcmp.ge.f32.partialorder %v328, 0.0
      %vm361 = vcmp.ge.f32.partialorder %v329, 0.0
      %vm362 = vcmp.ge.f32.partialorder %v330, 0.0
      %vm363 = vcmp.ge.f32.partialorder %v331, 0.0
      %vm364 = vcmp.ge.f32.partialorder %v332, 0.0
      %vm365 = vcmp.ge.f32.partialorder %v333, 0.0
      %vm366 = vcmp.ge.f32.partialorder %v334, 0.0
      %vm367 = vcmp.ge.f32.partialorder %v335, 0.0
      %vm368 = vcmp.ge.f32.partialorder %v336, 0.0
      %vm369 = vcmp.ge.f32.partialorder %v337, 0.0
      %vm370 = vcmp.ge.f32.partialorder %v338, 0.0
      %vm371 = vcmp.ge.f32.partialorder %v339, 0.0
      %vm372 = vcmp.ge.f32.partialorder %v340, 0.0
      %vm373 = vcmp.ge.f32.partialorder %v341, 0.0
      %vm374 = vcmp.ge.f32.partialorder %v342, 0.0
      %vm375 = vcmp.ge.f32.partialorder %v343, 0.0
      %vm376 = vcmp.ge.f32.partialorder %v344, 0.0
      %vm377 = vcmp.ge.f32.partialorder %v345, 0.0
      %vm378 = vcmp.ge.f32.partialorder %v346, 0.0
      %vm379 = vcmp.ge.f32.partialorder %v347, 0.0
      %vm380 = vcmp.ge.f32.partialorder %v348, 0.0
      %vm381 = vcmp.ge.f32.partialorder %v349, 0.0
      %vm382 = vcmp.ge.f32.partialorder %v350, 0.0
      %vm383 = vcmp.ge.f32.partialorder %v351, 0.0
      %vm384 = vcmp.ge.f32.partialorder %v352, 0.0
      %vm385 = vcmp.ge.f32.partialorder %v353, 0.0
      %vm386 = vcmp.ge.f32.partialorder %v354, 0.0
      %vm387 = vcmp.ge.f32.partialorder %v355, 0.0
      %vm388 = vcmp.ge.f32.partialorder %v356, 0.0
      %v389 = vmul.f32 %v325, 0.01
      %v390 = vmul.f32 %v326, 0.01
      %v391 = vmul.f32 %v327, 0.01
      %v392 = vmul.f32 %v328, 0.01
      %v393 = vmul.f32 %v329, 0.01
      %v394 = vmul.f32 %v330, 0.01
      %v395 = vmul.f32 %v331, 0.01
      %v396 = vmul.f32 %v332, 0.01
      %v397 = vmul.f32 %v333, 0.01
      %v398 = vmul.f32 %v334, 0.01
      %v399 = vmul.f32 %v335, 0.01
      %v400 = vmul.f32 %v336, 0.01
      %v401 = vmul.f32 %v337, 0.01
      %v402 = vmul.f32 %v338, 0.01
      %v403 = vmul.f32 %v339, 0.01
      %v404 = vmul.f32 %v340, 0.01
      %v405 = vmul.f32 %v341, 0.01
      %v406 = vmul.f32 %v342, 0.01
      %v407 = vmul.f32 %v343, 0.01
      %v408 = vmul.f32 %v344, 0.01
      %v409 = vmul.f32 %v345, 0.01
      %v410 = vmul.f32 %v346, 0.01
      %v411 = vmul.f32 %v347, 0.01
      %v412 = vmul.f32 %v348, 0.01
      %v413 = vmul.f32 %v349, 0.01
      %v414 = vmul.f32 %v350, 0.01
      %v415 = vmul.f32 %v351, 0.01
      %v416 = vmul.f32 %v352, 0.01
      %v417 = vmul.f32 %v353, 0.01
      %v418 = vmul.f32 %v354, 0.01
      %v419 = vmul.f32 %v355, 0.01
      %v420 = vmul.f32 %v356, 0.01
      %v421 = vsel %vm357, %v325, %v389
      %v422 = vsel %vm358, %v326, %v390
      %v423 = vsel %vm359, %v327, %v391
      %v424 = vsel %vm360, %v328, %v392
      %v425 = vsel %vm361, %v329, %v393
      %v426 = vsel %vm362, %v330, %v394
      %v427 = vsel %vm363, %v331, %v395
      %v428 = vsel %vm364, %v332, %v396
      %v429 = vsel %vm365, %v333, %v397
      %v430 = vsel %vm366, %v334, %v398
      %v431 = vsel %vm367, %v335, %v399
      %v432 = vsel %vm368, %v336, %v400
      %v433 = vsel %vm369, %v337, %v401
      %v434 = vsel %vm370, %v338, %v402
      %v435 = vsel %vm371, %v339, %v403
      %v436 = vsel %vm372, %v340, %v404
      %v437 = vsel %vm373, %v341, %v405
      %v438 = vsel %vm374, %v342, %v406
      %v439 = vsel %vm375, %v343, %v407
      %v440 = vsel %vm376, %v344, %v408
      %v441 = vsel %vm377, %v345, %v409
      %v442 = vsel %vm378, %v346, %v410
      %v443 = vsel %vm379, %v347, %v411
      %v444 = vsel %vm380, %v348, %v412
      %v445 = vsel %vm381, %v349, %v413
      %v446 = vsel %vm382, %v350, %v414
      %v447 = vsel %vm383, %v351, %v415
      %v448 = vsel %vm384, %v352, %v416
      %v449 = vsel %vm385, %v353, %v417
      %v450 = vsel %vm386, %v354, %v418
      %v451 = vsel %vm387, %v355, %v419
      %v452 = vsel %vm388, %v356, %v420
      %453 = vst [vmem:[%s213] sm:$0xff] %v421
      %454 = vst [vmem:[%s213 + $0x8] sm:$0xff] %v422
      %455 = vst [vmem:[%s213 + $0x10] sm:$0xff] %v423
      %456 = vst [vmem:[%s213 + $0x18] sm:$0xff] %v424
      %457 = vst [vmem:[%s213 + $0x20] sm:$0xff] %v425
      %458 = vst [vmem:[%s213 + $0x28] sm:$0xff] %v426
      %459 = vst [vmem:[%s213 + $0x30] sm:$0xff] %v427
      %460 = vst [vmem:[%s213 + $0x38] sm:$0xff] %v428
      %461 = vst [vmem:[%s213 + $0x40] sm:$0xff] %v429
      %462 = vst [vmem:[%s213 + $0x48] sm:$0xff] %v430
      %463 = vst [vmem:[%s213 + $0x50] sm:$0xff] %v431
      %464 = vst [vmem:[%s213 + $0x58] sm:$0xff] %v432
      %465 = vst [vmem:[%s213 + $0x60] sm:$0xff] %v433
      %466 = vst [vmem:[%s213 + $0x68] sm:$0xff] %v434
      %467 = vst [vmem:[%s213 + $0x70] sm:$0xff] %v435
      %468 = vst [vmem:[%s213 + $0x78] sm:$0xff] %v436
      %469 = vst [vmem:[%s213 + $0x80] sm:$0xff] %v437
      %470 = vst [vmem:[%s213 + $0x88] sm:$0xff] %v438
      %471 = vst [vmem:[%s213 + $0x90] sm:$0xff] %v439
      %472 = vst [vmem:[%s213 + $0x98] sm:$0xff] %v440
      %473 = vst [vmem:[%s213 + $0xa0] sm:$0xff] %v441
      %474 = vst [vmem:[%s213 + $0xa8] sm:$0xff] %v442
      %475 = vst [vmem:[%s213 + $0xb0] sm:$0xff] %v443
      %476 = vst [vmem:[%s213 + $0xb8] sm:$0xff] %v444
      %477 = vst [vmem:[%s213 + $0xc0] sm:$0xff] %v445
      %478 = vst [vmem:[%s213 + $0xc8] sm:$0xff] %v446
      %479 = vst [vmem:[%s213 + $0xd0] sm:$0xff] %v447
      %480 = vst [vmem:[%s213 + $0xd8] sm:$0xff] %v448
      %481 = vst [vmem:[%s213 + $0xe0] sm:$0xff] %v449
      %482 = vst [vmem:[%s213 + $0xe8] sm:$0xff] %v450
      %483 = vst [vmem:[%s213 + $0xf0] sm:$0xff] %v451
      %484 = vst [vmem:[%s213 + $0xf8] sm:$0xff] %v452
      %s485 = smul.u32 16, %s19
      %p486 = scmp.lt.s32.totalorder %s18, 1
      %s487 = scalar_select %p486, %s18, 1
      %p488 = scmp.lt.s32.totalorder %s485, 15
      %s489 = scalar_select %p488, %s485, 15
      %s490 = smul.addr %s489, 2
      %s491 = smul.addr %s487, 32
      %s492 = sadd.s32 %s490, %s491
      %s493 = smul.addr %s492, 8
      %s494 = scalar_lea.vmem %s3, %s493
      // Predicated region
      $region33: #{double_conv.5} parent=31 // pred_check
        %p495 = pneg %p116
      $region34: #{double_conv.5} parent=31 // pred_check_branch
        %497 = sbr.rel (%p495) target = $region36
      $region35: #{double_conv.5} parent=31 // pred_region
        %s498 = smul.u32 16, %s19
      $region36: #{double_conv.5} parent=31 // pred_fallthru
        _
    $region32: #{double_conv.5} parent=5 // pred_fallthru
      _
    %p499 = scmp.le.s32.totalorder 2, %s9
    // Predicated region
    $region37: #{double_conv.5} parent=5 // pred_check
      %p500 = pneg %p499
    $region38: #{double_conv.5} parent=5 // pred_check_branch
      %502 = sbr.rel (%p500) target = $region40
    $region39: #{double_conv.5} parent=5 // pred_region
      %s503 = ssub.s32 %s9, 2
      // Predicated region
      $region41: #{double_conv.5} parent=39 // pred_check
        %p504 = pneg %p122
      $region42: #{double_conv.5} parent=39 // pred_check_branch
        %506 = sbr.rel (%p504) target = $region44
      $region43: #{double_conv.5} parent=39 // pred_region
        %s507 = smul.u32 16, %s21
        %p508 = scmp.lt.s32.totalorder %s20, 1
        %s509 = scalar_select %p508, %s20, 1
        %p510 = scmp.lt.s32.totalorder %s507, 15
        %s511 = scalar_select %p510, %s507, 15
        %s512 = smul.addr %s511, 2
        %s513 = smul.addr %s509, 32
        %s514 = sadd.s32 %s512, %s513
        %s515 = smul.addr %s514, 8
        %s516 = scalar_lea.vmem %s3, %s515
      $region44: #{double_conv.5} parent=39 // pred_fallthru
        _
    $region40: #{double_conv.5} parent=5 // pred_fallthru
      _
  $region6: #{double_conv.5} parent=0 // loop_footer
    %s13 = sadd.s32 1, %s9
  $region7: #{double_conv.5} parent=0 // loop_footer_branch
    %8 = sbr.rel target = $region3
  $region8: #{double_conv.5} parent=0 // loop_exit
    _

// kernel: double_conv.3
$region0: #{double_conv.3}
  #allocation0 [shape = 'u32[]', space=smem, size = 0x4, offset = 0x4, fixed_abs, tag = 'smem constant byte address 0x4 - core index']
  #allocation1 [shape = 'u32[144,128]{1,0:T(1,128)}', space=vmem, size = 0x12000, scoped, tag = 'internal scratch']
  #allocation2 [shape = 'bf16[16,16,128]{2,1,0:T(8,128)(2,1)}', space=vmem, size = 0x10000, scoped, tag = 'scratch operand']
  #allocation3 [shape = 'bf16[18,18,128]{2,1,0:T(8,128)(2,1)}', space=vmem, size = 0x1b000, scoped, tag = 'scratch operand']
  #allocation5 [shape = 's32[]', space=sflag, size = 0x4, offset = 0, fixed_abs, tag = 'sflag constant byte address 0x0 - dummy sync flag']
  %s0 = inlined_call_operand.vmem [shape: bf16[2,16,16,128], index: 0, kind: input, shape index: {}]
  %s1 = inlined_call_operand.vmem [shape: f32[1,1,128], index: 1, kind: input, shape index: {}]
  %s2 = inlined_call_operand.vmem [shape: f32[1,1,128], index: 2, kind: input, shape index: {}]
  %s3 = inlined_call_operand.vmem [shape: bf16[3,384,128], index: 3, kind: input, shape index: {}]
  %s4 = inlined_call_operand.vmem [shape: bf16[2,16,16,128], index: 4, kind: output, shape index: {0}]
  %s5 = inlined_call_operand.vmem [shape: f32[2,1,1,128], index: 5, kind: output, shape index: {1}]
  %s6 = inlined_call_operand.vmem [shape: f32[2,1,1,128], index: 6, kind: output, shape index: {2}]
  %7 = xla_tuple %s4, %s5, %s6
  %s8 = sld [smem:[#allocation0]]
  $region100: #{double_conv.3} parent=0
    _
  %s10 = ssub.s32 1, %s8
  %s11 = scalar_select 0, %s10, %s8
  loop: start=0, step=1, limit=4
  $region2: #{double_conv.3} parent=0 // loop_pre_header
    _
  $region3: #{double_conv.3} parent=0 // loop_header
    %s13 = sphi 0, %s17
    %p14 = scmp.ge.s32.totalorder %s13, 4
    %s20 = sphi 0, %s32
    %s21 = sphi 0, %s28
    %s22 = sphi 0, %s20
    %s23 = sphi 0, %s21
    %s24 = sphi 0, %s22
    %s25 = sphi 0, %s23
    %s33 = sphi 0, %s33
    %s35 = sphi 0, %s33
    %s36 = sphi 0, %s35
    %s50 = sphi 0, %s36
    %s54 = sphi 0, %s54
    %s56 = sphi 0, %s54
    %s57 = sphi 0, %s56
    %s71 = sphi 0, %s57
    %s75 = sphi 0, %s75
    %s77 = sphi 0, %s75
    %s78 = sphi 0, %s77
    %s92 = sphi 0, %s78
    %s100 = sphi 0, %s102
    %s103 = sphi 0, %s100
    %s104 = sphi 0, %s103
    %s120 = sphi 0, %s104
    %s128 = sphi 0, %s130
    %s131 = sphi 0, %s128
    %s132 = sphi 0, %s131
    %s148 = sphi 0, %s132
    %s156 = sphi 0, %s158
    %s159 = sphi 0, %s156
    %s160 = sphi 0, %s159
    %s176 = sphi 0, %s160
  $region4: #{double_conv.3} parent=0 // loop_header_branch
    %16 = sbr.rel (%p14) target = $region8
  $region5: #{double_conv.3} parent=0 // loop_body
    %s18 = ssub.s32 %s13, 1
    %s19 = ssub.s32 %s13, 2
    %s26 = sadd.s32 1, %s21
    %p27 = scmp.ge.s32.totalorder %s26, 1
    %s28 = scalar_select %p27, 0, %s26
    %s29 = sadd.s32 1, %s20
    %s30 = scalar_select %p27, %s29, %s20
    %p31 = scmp.ge.s32.totalorder %s30, 2
    %s32 = scalar_select %p31, 0, %s30
    %s34 = sadd.s32 %s33, 1
    %p37 = scmp.eq.s32.totalorder %s13, 1
    %p38 = scmp.ne.s32.totalorder %s33, %s35
    %p39 = scmp.eq.s32.totalorder %s13, 0
    %p40 = por %p38, %p39
    %p41 = scmp.ne.s32.totalorder %s33, %s35
    %p42 = scmp.eq.s32.totalorder %s18, 1
    %p43 = por %p41, %p42
    %p44 = scmp.ne.s32.totalorder %s35, %s36
    %p45 = scmp.eq.s32.totalorder %s18, 0
    %p46 = por %p44, %p45
    %p47 = scmp.ne.s32.totalorder %s35, %s36
    %p48 = scmp.eq.s32.totalorder %s19, 1
    %p49 = por %p47, %p48
    %p51 = scmp.ne.s32.totalorder %s36, %s50
    %p52 = scmp.eq.s32.totalorder %s19, 0
    %p53 = por %p51, %p52
    %s55 = sadd.s32 %s54, 1
    %p58 = scmp.eq.s32.totalorder %s13, 1
    %p59 = scmp.ne.s32.totalorder %s54, %s56
    %p60 = scmp.eq.s32.totalorder %s13, 0
    %p61 = por %p59, %p60
    %p62 = scmp.ne.s32.totalorder %s54, %s56
    %p63 = scmp.eq.s32.totalorder %s18, 1
    %p64 = por %p62, %p63
    %p65 = scmp.ne.s32.totalorder %s56, %s57
    %p66 = scmp.eq.s32.totalorder %s18, 0
    %p67 = por %p65, %p66
    %p68 = scmp.ne.s32.totalorder %s56, %s57
    %p69 = scmp.eq.s32.totalorder %s19, 1
    %p70 = por %p68, %p69
    %p72 = scmp.ne.s32.totalorder %s57, %s71
    %p73 = scmp.eq.s32.totalorder %s19, 0
    %p74 = por %p72, %p73
    %s76 = sadd.s32 %s75, 1
    %p79 = scmp.eq.s32.totalorder %s13, 1
    %p80 = scmp.ne.s32.totalorder %s75, %s77
    %p81 = scmp.eq.s32.totalorder %s13, 0
    %p82 = por %p80, %p81
    %p83 = scmp.ne.s32.totalorder %s75, %s77
    %p84 = scmp.eq.s32.totalorder %s18, 1
    %p85 = por %p83, %p84
    %p86 = scmp.ne.s32.totalorder %s77, %s78
    %p87 = scmp.eq.s32.totalorder %s18, 0
    %p88 = por %p86, %p87
    %p89 = scmp.ne.s32.totalorder %s77, %s78
    %p90 = scmp.eq.s32.totalorder %s19, 1
    %p91 = por %p89, %p90
    %p93 = scmp.ne.s32.totalorder %s78, %s92
    %p94 = scmp.eq.s32.totalorder %s19, 0
    %p95 = por %p93, %p94
    %s96 = ssub.s32 %s20, %s32
    %s97 = ssub.s32 %s21, %s28
    %s98 = sor.u32 %s96, %s97
    %p99 = scmp.eq.s32.totalorder %s98, 0
    %s101 = sadd.s32 %s100, 1
    %s102 = scalar_select %p99, %s100, %s101
    %p105 = pneg %p99
    %p106 = scmp.eq.s32.totalorder %s13, 1
    %p107 = por %p105, %p106
    %p108 = scmp.ne.s32.totalorder %s100, %s103
    %p109 = scmp.eq.s32.totalorder %s13, 0
    %p110 = por %p108, %p109
    %p111 = scmp.ne.s32.totalorder %s100, %s103
    %p112 = scmp.eq.s32.totalorder %s18, 1
    %p113 = por %p111, %p112
    %p114 = scmp.ne.s32.totalorder %s103, %s104
    %p115 = scmp.eq.s32.totalorder %s18, 0
    %p116 = por %p114, %p115
    %p117 = scmp.ne.s32.totalorder %s103, %s104
    %p118 = scmp.eq.s32.totalorder %s19, 1
    %p119 = por %p117, %p118
    %p121 = scmp.ne.s32.totalorder %s104, %s120
    %p122 = scmp.eq.s32.totalorder %s19, 0
    %p123 = por %p121, %p122
    %s124 = ssub.s32 %s20, %s32
    %s125 = ssub.s32 %s21, %s28
    %s126 = sor.u32 %s124, %s125
    %p127 = scmp.eq.s32.totalorder %s126, 0
    %s129 = sadd.s32 %s128, 1
    %s130 = scalar_select %p127, %s128, %s129
    %p133 = pneg %p127
    %p134 = scmp.eq.s32.totalorder %s13, 1
    %p135 = por %p133, %p134
    %p136 = scmp.ne.s32.totalorder %s128, %s131
    %p137 = scmp.eq.s32.totalorder %s13, 0
    %p138 = por %p136, %p137
    %p139 = scmp.ne.s32.totalorder %s128, %s131
    %p140 = scmp.eq.s32.totalorder %s18, 1
    %p141 = por %p139, %p140
    %p142 = scmp.ne.s32.totalorder %s131, %s132
    %p143 = scmp.eq.s32.totalorder %s18, 0
    %p144 = por %p142, %p143
    %p145 = scmp.ne.s32.totalorder %s131, %s132
    %p146 = scmp.eq.s32.totalorder %s19, 1
    %p147 = por %p145, %p146
    %p149 = scmp.ne.s32.totalorder %s132, %s148
    %p150 = scmp.eq.s32.totalorder %s19, 0
    %p151 = por %p149, %p150
    %s152 = ssub.s32 %s20, %s32
    %s153 = ssub.s32 %s21, %s28
    %s154 = sor.u32 %s152, %s153
    %p155 = scmp.eq.s32.totalorder %s154, 0
    %s157 = sadd.s32 %s156, 1
    %s158 = scalar_select %p155, %s156, %s157
    %p161 = pneg %p155
    %p162 = scmp.eq.s32.totalorder %s13, 1
    %p163 = por %p161, %p162
    %p164 = scmp.ne.s32.totalorder %s156, %s159
    %p165 = scmp.eq.s32.totalorder %s13, 0
    %p166 = por %p164, %p165
    %p167 = scmp.ne.s32.totalorder %s156, %s159
    %p168 = scmp.eq.s32.totalorder %s18, 1
    %p169 = por %p167, %p168
    %p170 = scmp.ne.s32.totalorder %s159, %s160
    %p171 = scmp.eq.s32.totalorder %s18, 0
    %p172 = por %p170, %p171
    %p173 = scmp.ne.s32.totalorder %s159, %s160
    %p174 = scmp.eq.s32.totalorder %s19, 1
    %p175 = por %p173, %p174
    %p177 = scmp.ne.s32.totalorder %s160, %s176
    %p178 = scmp.eq.s32.totalorder %s19, 0
    %p179 = por %p177, %p178
    %p180 = scmp.le.s32.totalorder 1, %s13
    %p181 = scmp.lt.s32.totalorder %s13, 3
    %p182 = pnand %p180, %p181
    %p183 = pneg %p182
    // Predicated region
    $region9: #{double_conv.3} parent=5 // pred_check
      _
    $region10: #{double_conv.3} parent=5 // pred_check_branch
      %185 = sbr.rel (%p182) target = $region12
    $region11: #{double_conv.3} parent=5 // pred_region
      %s186 = ssub.s32 %s13, 1
      // Predicated region
      $region13: #{double_conv.3} parent=11 // pred_check
        %p187 = pneg %p46
      $region14: #{double_conv.3} parent=11 // pred_check_branch
        %189 = sbr.rel (%p187) target = $region16
      $region15: #{double_conv.3} parent=11 // pred_region
        _
      $region16: #{double_conv.3} parent=11 // pred_fallthru
        _
      // Predicated region
      $region17: #{double_conv.3} parent=11 // pred_check
        %p190 = pneg %p67
      $region18: #{double_conv.3} parent=11 // pred_check_branch
        %192 = sbr.rel (%p190) target = $region20
      $region19: #{double_conv.3} parent=11 // pred_region
        _
      $region20: #{double_conv.3} parent=11 // pred_fallthru
        _
      // Predicated region
      $region21: #{double_conv.3} parent=11 // pred_check
        %p193 = pneg %p88
      $region22: #{double_conv.3} parent=11 // pred_check_branch
        %195 = sbr.rel (%p193) target = $region24
      $region23: #{double_conv.3} parent=11 // pred_region
        _
      $region24: #{double_conv.3} parent=11 // pred_fallthru
        _
    $region12: #{double_conv.3} parent=5 // pred_fallthru
      _
    %p196 = scmp.lt.s32.totalorder %s13, 2
    // Predicated region
    $region25: #{double_conv.3} parent=5 // pred_check
      %p197 = pneg %p196
    $region26: #{double_conv.3} parent=5 // pred_check_branch
      %199 = sbr.rel (%p197) target = $region28
    $region27: #{double_conv.3} parent=5 // pred_region
      _
    $region28: #{double_conv.3} parent=5 // pred_fallthru
      _
    %p200 = scmp.le.s32.totalorder 1, %s13
    %p201 = scmp.lt.s32.totalorder %s13, 3
    %p202 = pnand %p200, %p201
    %p203 = pneg %p202
    // Predicated region
    $region29: #{double_conv.3} parent=5 // pred_check
      _
    $region30: #{double_conv.3} parent=5 // pred_check_branch
      %205 = sbr.rel (%p202) target = $region32
    $region31: #{double_conv.3} parent=5 // pred_region
      %s206 = ssub.s32 %s13, 1
      %p207 = pneg %p46
      %p208 = pneg %p43
      %p209 = pneg %p67
      %p210 = pneg %p64
      %p211 = pneg %p88
      %p212 = pneg %p85
      %p213 = pneg %p116
      %p214 = pneg %p113
      %s215 = smul.u32 16, %s23
      %p216 = scmp.lt.s32.totalorder %s22, 1
      %s217 = scalar_select %p216, %s22, 1
      %p218 = scmp.lt.s32.totalorder %s215, 15
      %s219 = scalar_select %p218, %s215, 15
      %s220 = smul.addr %s219, 2
      %s221 = smul.addr %s217, 32
      %s222 = sadd.s32 %s220, %s221
      %s223 = smul.addr %s222, 4
      %s224 = scalar_lea.vmem %s4, %s223
      %p225 = pneg %p144
      %p226 = pneg %p141
      %p227 = scmp.lt.s32.totalorder %s22, 1
      %s228 = scalar_select %p227, %s22, 1
      %p229 = scmp.lt.s32.totalorder %s23, 0
      %s230 = scalar_select %p229, %s23, 0
      %s231 = sadd.s32 %s230, %s228
      %s232 = scalar_lea.vmem %s5, %s231
      %p233 = pneg %p172
      %p234 = pneg %p169
      %p235 = scmp.lt.s32.totalorder %s22, 1
      %s236 = scalar_select %p235, %s22, 1
      %p237 = scmp.lt.s32.totalorder %s23, 0
      %s238 = scalar_select %p237, %s23, 0
      %s239 = sadd.s32 %s238, %s236
      %s240 = scalar_lea.vmem %s6, %s239
      %s241 = smul.u32 16, %s23
      %p242 = scmp.lt.s32.totalorder %s22, 1
      %s243 = scalar_select %p242, %s22, 1
      %p244 = scmp.lt.s32.totalorder %s241, 15
      %s245 = scalar_select %p244, %s241, 15
      %s246 = smul.addr %s245, 2
      %s247 = smul.addr %s243, 32
      %s248 = sadd.s32 %s246, %s247
      %s249 = smul.addr %s248, 4
      %s250 = scalar_lea.vmem %s4, %s249
      %s251 = smul.u32 16, %s23
      %p252 = scmp.lt.s32.totalorder %s22, 1
      %s253 = scalar_select %p252, %s22, 1
      %p254 = scmp.lt.s32.totalorder %s23, 0
      %s255 = scalar_select %p254, %s23, 0
      %s256 = sadd.s32 %s255, %s253
      %s257 = scalar_lea.vmem %s5, %s256
      %p258 = scmp.lt.s32.totalorder %s22, 1
      %s259 = scalar_select %p258, %s22, 1
      %p260 = scmp.lt.s32.totalorder %s23, 0
      %s261 = scalar_select %p260, %s23, 0
      %s262 = sadd.s32 %s261, %s259
      %s263 = scalar_lea.vmem %s6, %s262
      %p265 = scmp.eq.s32.totalorder %s23, 0
      // Predicated region
      $region33: #{double_conv.3} parent=31 // pred_check
        %p266 = pneg %p265
      $region34: #{double_conv.3} parent=31 // pred_check_branch
        %268 = sbr.rel (%p266) target = $region36
      $region35: #{double_conv.3} parent=31 // pred_region
        $region37: #{double_conv.3} parent=35
          #allocation4 [shape = 's32[1]{0}', space=sflag, size = 0x4, scoped, tag = 'scoped memory for double_conv.3']
          %s269 = smul.u32 %s22, 32
          %s270 = smul.addr %s269, 4
          %s271 = scalar_lea.vmem %s0, %s270
          %p273 = scmp.lt.u32.totalorder 128, 8
          %p274 = pneg %p273
          // Predicated region
          $region38: #{double_conv.3} parent=37 // pred_check
            _
          $region39: #{double_conv.3} parent=37 // pred_check_branch
            %276 = sbr.rel (%p273) target = $region41
          $region40: #{double_conv.3} parent=37 // pred_region
            %s292 = sand.u32 128, 7
            %p293 = scmp.eq.s32.totalorder %s292, 0
            // Predicated region
            $region53: #{double_conv.3} parent=40 // pred_check
              %p294 = pneg %p293
            $region54: #{double_conv.3} parent=40 // pred_check_branch
              %296 = sbr.rel (%p294) target = $region56
            $region55: #{double_conv.3} parent=40 // pred_region
              loop: start=0, step=1, limit=1
              $region57: #{double_conv.3} parent=55 // loop_pre_header
                _
              $region58: #{double_conv.3} parent=55 // loop_header
                %s298 = sphi 0, %s302
                %p299 = scmp.ge.s32.totalorder %s298, 1
                %s303 = sphi %s271, %s271
                %s304 = sphi [#allocation2], [#allocation2]
              $region59: #{double_conv.3} parent=55 // loop_header_branch
                %301 = sbr.rel (%p299) target = $region63
              $region60: #{double_conv.3} parent=55 // loop_body
                %v305 = vld [vmem:[%s303] sm:$0xff]
                %306 = vst [vmem:[%s304] sm:$0xff] %v305
                %v307 = vld [vmem:[%s303 + $0x8] sm:$0xff]
                %308 = vst [vmem:[%s304 + $0x8] sm:$0xff] %v307
                %v309 = vld [vmem:[%s303 + $0x10] sm:$0xff]
                %310 = vst [vmem:[%s304 + $0x10] sm:$0xff] %v309
                %v311 = vld [vmem:[%s303 + $0x18] sm:$0xff]
                %312 = vst [vmem:[%s304 + $0x18] sm:$0xff] %v311
                %v313 = vld [vmem:[%s303 + $0x20] sm:$0xff]
                %314 = vst [vmem:[%s304 + $0x20] sm:$0xff] %v313
                %v315 = vld [vmem:[%s303 + $0x28] sm:$0xff]
                %316 = vst [vmem:[%s304 + $0x28] sm:$0xff] %v315
                %v317 = vld [vmem:[%s303 + $0x30] sm:$0xff]
                %318 = vst [vmem:[%s304 + $0x30] sm:$0xff] %v317
                %v319 = vld [vmem:[%s303 + $0x38] sm:$0xff]
                %320 = vst [vmem:[%s304 + $0x38] sm:$0xff] %v319
                %v321 = vld [vmem:[%s303 + $0x40] sm:$0xff]
                %322 = vst [vmem:[%s304 + $0x40] sm:$0xff] %v321
                %v323 = vld [vmem:[%s303 + $0x48] sm:$0xff]
                %324 = vst [vmem:[%s304 + $0x48] sm:$0xff] %v323
                %v325 = vld [vmem:[%s303 + $0x50] sm:$0xff]
                %326 = vst [vmem:[%s304 + $0x50] sm:$0xff] %v325
                %v327 = vld [vmem:[%s303 + $0x58] sm:$0xff]
                %328 = vst [vmem:[%s304 + $0x58] sm:$0xff] %v327
                %v329 = vld [vmem:[%s303 + $0x60] sm:$0xff]
                %330 = vst [vmem:[%s304 + $0x60] sm:$0xff] %v329
                %v331 = vld [vmem:[%s303 + $0x68] sm:$0xff]
                %332 = vst [vmem:[%s304 + $0x68] sm:$0xff] %v331
                %v333 = vld [vmem:[%s303 + $0x70] sm:$0xff]
                %334 = vst [vmem:[%s304 + $0x70] sm:$0xff] %v333
                %v335 = vld [vmem:[%s303 + $0x78] sm:$0xff]
                %336 = vst [vmem:[%s304 + $0x78] sm:$0xff] %v335
              $region61: #{double_conv.3} parent=55 // loop_footer
                %s302 = sadd.s32 1, %s298
              $region62: #{double_conv.3} parent=55 // loop_footer_branch
                %297 = sbr.rel target = $region58
              $region63: #{double_conv.3} parent=55 // loop_exit
                _
            $region56: #{double_conv.3} parent=40 // pred_fallthru
              _
            %p337 = pneg %p293
            // Predicated region
            $region64: #{double_conv.3} parent=40 // pred_check
              _
            $region65: #{double_conv.3} parent=40 // pred_check_branch
              %339 = sbr.rel (%p293) target = $region67
            $region66: #{double_conv.3} parent=40 // pred_region
              %s340 = sand.u32 128, 7
            $region67: #{double_conv.3} parent=40 // pred_fallthru
              _
          $region41: #{double_conv.3} parent=37 // pred_fallthru
            _
          // Predicated region
          $region42: #{double_conv.3} parent=37 // pred_check
            %p277 = pneg %p273
          $region43: #{double_conv.3} parent=37 // pred_check_branch
            %279 = sbr.rel (%p277) target = $region45
          $region44: #{double_conv.3} parent=37 // pred_region
            %s280 = sshll.u32 1, 128
            %s281 = ssub.s32 %s280, 1
            loop: start=0, step=1, limit=1
            $region46: #{double_conv.3} parent=44 // loop_pre_header
              _
            $region47: #{double_conv.3} parent=44 // loop_header
              %s283 = sphi 0, %s287
              %p284 = scmp.ge.s32.totalorder %s283, 1
              %s288 = sphi %s271, %s271
              %s289 = sphi [#allocation2], [#allocation2]
            $region48: #{double_conv.3} parent=44 // loop_header_branch
              %286 = sbr.rel (%p284) target = $region52
            $region49: #{double_conv.3} parent=44 // loop_body
              %v290 = vld [vmem:[%s288] sm:%s281]
              %291 = vst [vmem:[%s289] sm:%s281] %v290
            $region50: #{double_conv.3} parent=44 // loop_footer
              %s287 = sadd.s32 1, %s283
            $region51: #{double_conv.3} parent=44 // loop_footer_branch
              %282 = sbr.rel target = $region47
            $region52: #{double_conv.3} parent=44 // loop_exit
              _
          $region45: #{double_conv.3} parent=37 // pred_fallthru
            _
          // Predicated region
          $region68: #{double_conv.3} parent=37 // pred_check
            _
          $region69: #{double_conv.3} parent=37 // pred_check_branch
            %343 = sbr.rel (0) target = $region71
          $region70: #{double_conv.3} parent=37 // pred_region
            %344 = vsyncadd [#allocation4], 2048
          $region71: #{double_conv.3} parent=37 // pred_fallthru
            _
          %s345 = smul.u32 4, 16
          %s346 = smul.u32 %s345, 2
          %s347 = smul.u32 %s346, 1
          %s348 = sshll.u32 %s347, 4
          %349 = dma.done [#allocation4], %s348
        %350 = vst [vmem:[#allocation3] sm:$0xf] 0
        %351 = vst [vmem:[#allocation3 + $0x4] sm:$0xf] 0
        %352 = vst [vmem:[#allocation3 + $0x8] sm:$0x1] 0
        %353 = vst [vmem:[#allocation3 + $0xc] sm:$0xf] 0
        %354 = vst [vmem:[#allocation3 + $0x10] sm:$0xf] 0
        %355 = vst [vmem:[#allocation3 + $0x14] sm:$0x1] 0
        %356 = vst [vmem:[#allocation3 + $0x18] sm:$0xf] 0
        %357 = vst [vmem:[#allocation3 + $0x1c] sm:$0xf] 0
        %358 = vst [vmem:[#allocation3 + $0x20] sm:$0x1] 0
        %359 = vst [vmem:[#allocation3 + $0x24] sm:$0xf] 0
        %360 = vst [vmem:[#allocation3 + $0x28] sm:$0xf] 0
        %361 = vst [vmem:[#allocation3 + $0x2c] sm:$0x1] 0
        %362 = vst [vmem:[#allocation3 + $0x30] sm:$0xf] 0
        %363 = vst [vmem:[#allocation3 + $0x34] sm:$0xf] 0
        %364 = vst [vmem:[#allocation3 + $0x38] sm:$0x1] 0
        %365 = vst [vmem:[#allocation3 + $0x3c] sm:$0xf] 0
        %366 = vst [vmem:[#allocation3 + $0x40] sm:$0xf] 0
        %367 = vst [vmem:[#allocation3 + $0x44] sm:$0x1] 0
        %368 = vst [vmem:[#allocation3 + $0x48] sm:$0xf] 0
        %369 = vst [vmem:[#allocation3 + $0x4c] sm:$0xf] 0
        %370 = vst [vmem:[#allocation3 + $0x50] sm:$0x1] 0
        %371 = vst [vmem:[#allocation3 + $0x54] sm:$0xf] 0
        %372 = vst [vmem:[#allocation3 + $0x58] sm:$0xf] 0
        %373 = vst [vmem:[#allocation3 + $0x5c] sm:$0x1] 0
        %374 = vst [vmem:[#allocation3 + $0x60] sm:$0xf] 0
        %375 = vst [vmem:[#allocation3 + $0x64] sm:$0xf] 0
        %376 = vst [vmem:[#allocation3 + $0x68] sm:$0x1] 0
        %377 = vst [vmem:[#allocation3 + $0x6c] sm:$0xf] 0
        %378 = vst [vmem:[#allocation3 + $0x70] sm:$0xf] 0
        %379 = vst [vmem:[#allocation3 + $0x74] sm:$0x1] 0
        %380 = vst [vmem:[#allocation3 + $0x78] sm:$0xf] 0
        %381 = vst [vmem:[#allocation3 + $0x7c] sm:$0xf] 0
        %382 = vst [vmem:[#allocation3 + $0x80] sm:$0x1] 0
        %383 = vst [vmem:[#allocation3 + $0x84] sm:$0xf] 0
        %384 = vst [vmem:[#allocation3 + $0x88] sm:$0xf] 0
        %385 = vst [vmem:[#allocation3 + $0x8c] sm:$0x1] 0
        %386 = vst [vmem:[#allocation3 + $0x90] sm:$0xf] 0
        %387 = vst [vmem:[#allocation3 + $0x94] sm:$0xf] 0
        %388 = vst [vmem:[#allocation3 + $0x98] sm:$0x1] 0
        %389 = vst [vmem:[#allocation3 + $0x9c] sm:$0xf] 0
        %390 = vst [vmem:[#allocation3 + $0xa0] sm:$0xf] 0
        %391 = vst [vmem:[#allocation3 + $0xa4] sm:$0x1] 0
        %392 = vst [vmem:[#allocation3 + $0xa8] sm:$0xf] 0
        %393 = vst [vmem:[#allocation3 + $0xac] sm:$0xf] 0
        %394 = vst [vmem:[#allocation3 + $0xb0] sm:$0x1] 0
        %395 = vst [vmem:[#allocation3 + $0xb4] sm:$0xf] 0
        %396 = vst [vmem:[#allocation3 + $0xb8] sm:$0xf] 0
        %397 = vst [vmem:[#allocation3 + $0xbc] sm:$0x1] 0
        %398 = vst [vmem:[#allocation3 + $0xc0] sm:$0xf] 0
        %399 = vst [vmem:[#allocation3 + $0xc4] sm:$0xf] 0
        %400 = vst [vmem:[#allocation3 + $0xc8] sm:$0x1] 0
        %401 = vst [vmem:[#allocation3 + $0xcc] sm:$0xf] 0
        %402 = vst [vmem:[#allocation3 + $0xd0] sm:$0xf] 0
        %403 = vst [vmem:[#allocation3 + $0xd4] sm:$0x1] 0
        %v404 = vld [vmem:[#allocation2] sm:$0xf]
        %v405 = vld [vmem:[#allocation2 + $0x4] sm:$0xf]
        %v406 = vld [vmem:[#allocation2 + $0x8] sm:$0xf]
        %v407 = vld [vmem:[#allocation2 + $0xc] sm:$0xf]
        %v408 = vld [vmem:[#allocation2 + $0x10] sm:$0xf]
        %v409 = vld [vmem:[#allocation2 + $0x14] sm:$0xf]
        %v410 = vld [vmem:[#allocation2 + $0x18] sm:$0xf]
        %v411 = vld [vmem:[#allocation2 + $0x1c] sm:$0xf]
        %v412 = vld [vmem:[#allocation2 + $0x20] sm:$0xf]
        %v413 = vld [vmem:[#allocation2 + $0x24] sm:$0xf]
        %v414 = vld [vmem:[#allocation2 + $0x28] sm:$0xf]
        %v415 = vld [vmem:[#allocation2 + $0x2c] sm:$0xf]
        %v416 = vld [vmem:[#allocation2 + $0x30] sm:$0xf]
        %v417 = vld [vmem:[#allocation2 + $0x34] sm:$0xf]
        %v418 = vld [vmem:[#allocation2 + $0x38] sm:$0xf]
        %v419 = vld [vmem:[#allocation2 + $0x3c] sm:$0xf]
        %v420 = vld [vmem:[#allocation2 + $0x40] sm:$0xf]
        %v421 = vld [vmem:[#allocation2 + $0x44] sm:$0xf]
        %v422 = vld [vmem:[#allocation2 + $0x48] sm:$0xf]
        %v423 = vld [vmem:[#allocation2 + $0x4c] sm:$0xf]
        %v424 = vld [vmem:[#allocation2 + $0x50] sm:$0xf]
        %v425 = vld [vmem:[#allocation2 + $0x54] sm:$0xf]
        %v426 = vld [vmem:[#allocation2 + $0x58] sm:$0xf]
        %v427 = vld [vmem:[#allocation2 + $0x5c] sm:$0xf]
        %v428 = vld [vmem:[#allocation2 + $0x60] sm:$0xf]
        %v429 = vld [vmem:[#allocation2 + $0x64] sm:$0xf]
        %v430 = vld [vmem:[#allocation2 + $0x68] sm:$0xf]
        %v431 = vld [vmem:[#allocation2 + $0x6c] sm:$0xf]
        %v432 = vld [vmem:[#allocation2 + $0x70] sm:$0xf]
        %v433 = vld [vmem:[#allocation2 + $0x74] sm:$0xf]
        %v434 = vld [vmem:[#allocation2 + $0x78] sm:$0xf]
        %v435 = vld [vmem:[#allocation2 + $0x7c] sm:$0xf]
        %v436 = vunpack.c.l.bf16 %v404
        %v437 = vunpack.c.l.bf16 %v405
        %v438 = vunpack.c.l.bf16 %v406
        %v439 = vunpack.c.l.bf16 %v407
        %v440 = vunpack.c.l.bf16 %v408
        %v441 = vunpack.c.l.bf16 %v409
        %v442 = vunpack.c.l.bf16 %v410
        %v443 = vunpack.c.l.bf16 %v411
        %v444 = vunpack.c.l.bf16 %v412
        %v445 = vunpack.c.l.bf16 %v413
        %v446 = vunpack.c.l.bf16 %v414
        %v447 = vunpack.c.l.bf16 %v415
        %v448 = vunpack.c.l.bf16 %v416
        %v449 = vunpack.c.l.bf16 %v417
        %v450 = vunpack.c.l.bf16 %v418
        %v451 = vunpack.c.l.bf16 %v419
        %v452 = vunpack.c.l.bf16 %v420
        %v453 = vunpack.c.l.bf16 %v421
        %v454 = vunpack.c.l.bf16 %v422
        %v455 = vunpack.c.l.bf16 %v423
        %v456 = vunpack.c.l.bf16 %v424
        %v457 = vunpack.c.l.bf16 %v425
        %v458 = vunpack.c.l.bf16 %v426
        %v459 = vunpack.c.l.bf16 %v427
        %v460 = vunpack.c.l.bf16 %v428
        %v461 = vunpack.c.l.bf16 %v429
        %v462 = vunpack.c.l.bf16 %v430
        %v463 = vunpack.c.l.bf16 %v431
        %v464 = vunpack.c.l.bf16 %v432
        %v465 = vunpack.c.l.bf16 %v433
        %v466 = vunpack.c.l.bf16 %v434
        %v467 = vunpack.c.l.bf16 %v435
        %v468 = vld [vmem:[%s1] sm:$0x1]
        %v470 = vlaneseq
        %v471 = vshrl.u32 %v470, 7
        %v472 = vsub.s32 0, %v471
        %v473 = vrot.slane %v468, %v472
        %v475 = vmul.f32 %v436, %v473
        %v476 = vmul.f32 %v437, %v473
        %v477 = vmul.f32 %v438, %v473
        %v478 = vmul.f32 %v439, %v473
        %v479 = vmul.f32 %v440, %v473
        %v480 = vmul.f32 %v441, %v473
        %v481 = vmul.f32 %v442, %v473
        %v482 = vmul.f32 %v443, %v473
        %v483 = vmul.f32 %v444, %v473
        %v484 = vmul.f32 %v445, %v473
        %v485 = vmul.f32 %v446, %v473
        %v486 = vmul.f32 %v447, %v473
        %v487 = vmul.f32 %v448, %v473
        %v488 = vmul.f32 %v449, %v473
        %v489 = vmul.f32 %v450, %v473
        %v490 = vmul.f32 %v451, %v473
        %v491 = vmul.f32 %v452, %v473
        %v492 = vmul.f32 %v453, %v473
        %v493 = vmul.f32 %v454, %v473
        %v494 = vmul.f32 %v455, %v473
        %v495 = vmul.f32 %v456, %v473
        %v496 = vmul.f32 %v457, %v473
        %v497 = vmul.f32 %v458, %v473
        %v498 = vmul.f32 %v459, %v473
        %v499 = vmul.f32 %v460, %v473
        %v500 = vmul.f32 %v461, %v473
        %v501 = vmul.f32 %v462, %v473
        %v502 = vmul.f32 %v463, %v473
        %v503 = vmul.f32 %v464, %v473
        %v504 = vmul.f32 %v465, %v473
        %v505 = vmul.f32 %v466, %v473
        %v506 = vmul.f32 %v467, %v473
        %v507 = vld [vmem:[%s2] sm:$0x1]
        %v509 = vlaneseq
        %v510 = vshrl.u32 %v509, 7
        %v511 = vsub.s32 0, %v510
        %v512 = vrot.slane %v507, %v511
        %v514 = vadd.f32 %v475, %v512
        %v515 = vadd.f32 %v476, %v512
        %v516 = vadd.f32 %v477, %v512
        %v517 = vadd.f32 %v478, %v512
        %v518 = vadd.f32 %v479, %v512
        %v519 = vadd.f32 %v480, %v512
        %v520 = vadd.f32 %v481, %v512
        %v521 = vadd.f32 %v482, %v512
        %v522 = vadd.f32 %v483, %v512
        %v523 = vadd.f32 %v484, %v512
        %v524 = vadd.f32 %v485, %v512
        %v525 = vadd.f32 %v486, %v512
        %v526 = vadd.f32 %v487, %v512
        %v527 = vadd.f32 %v488, %v512
        %v528 = vadd.f32 %v489, %v512
        %v529 = vadd.f32 %v490, %v512
        %v530 = vadd.f32 %v491, %v512
        %v531 = vadd.f32 %v492, %v512
        %v532 = vadd.f32 %v493, %v512
        %v533 = vadd.f32 %v494, %v512
        %v534 = vadd.f32 %v495, %v512
        %v535 = vadd.f32 %v496, %v512
        %v536 = vadd.f32 %v497, %v512
        %v537 = vadd.f32 %v498, %v512
        %v538 = vadd.f32 %v499, %v512
        %v539 = vadd.f32 %v500, %v512
        %v540 = vadd.f32 %v501, %v512
        %v541 = vadd.f32 %v502, %v512
        %v542 = vadd.f32 %v503, %v512
        %v543 = vadd.f32 %v504, %v512
        %v544 = vadd.f32 %v505, %v512
        %v545 = vadd.f32 %v506, %v512
        %v546 = vpack.c.bf16 %v515, %v514
        %v547 = vpack.c.bf16 %v517, %v516
        %v548 = vpack.c.bf16 %v519, %v518
        %v549 = vpack.c.bf16 %v521, %v520
        %v550 = vpack.c.bf16 %v523, %v522
        %v551 = vpack.c.bf16 %v525, %v524
        %v552 = vpack.c.bf16 %v527, %v526
        %v553 = vpack.c.bf16 %v529, %v528
        %v554 = vpack.c.bf16 %v531, %v530
        %v555 = vpack.c.bf16 %v533, %v532
        %v556 = vpack.c.bf16 %v535, %v534
        %v557 = vpack.c.bf16 %v537, %v536
        %v558 = vpack.c.bf16 %v539, %v538
        %v559 = vpack.c.bf16 %v541, %v540
        %v560 = vpack.c.bf16 %v543, %v542
        %v561 = vpack.c.bf16 %v545, %v544
        %v578 = vunpack.c.l.b16 %v546
        %v579 = vunpack.c.h.b16 %v546
        %v580 = vunpack.c.l.b16 %v547
        %v581 = vunpack.c.h.b16 %v547
        %v582 = vunpack.c.l.b16 %v548
        %v583 = vunpack.c.h.b16 %v548
        %v584 = vunpack.c.l.b16 %v549
        %v585 = vunpack.c.h.b16 %v549
        %v586 = vunpack.c.l.b16 %v550
        %v587 = vunpack.c.h.b16 %v550
        %v588 = vunpack.c.l.b16 %v551
        %v589 = vunpack.c.h.b16 %v551
        %v590 = vunpack.c.l.b16 %v552
        %v591 = vunpack.c.h.b16 %v552
        %v592 = vunpack.c.l.b16 %v553
        %v593 = vunpack.c.h.b16 %v553
        %v594 = vunpack.c.l.b16 %v554
        %v595 = vunpack.c.h.b16 %v554
        %v596 = vunpack.c.l.b16 %v555
        %v597 = vunpack.c.h.b16 %v555
        %v598 = vunpack.c.l.b16 %v556
        %v599 = vunpack.c.h.b16 %v556
        %v600 = vunpack.c.l.b16 %v557
        %v601 = vunpack.c.h.b16 %v557
        %v602 = vunpack.c.l.b16 %v558
        %v603 = vunpack.c.h.b16 %v558
        %v604 = vunpack.c.l.b16 %v559
        %v605 = vunpack.c.h.b16 %v559
        %v606 = vunpack.c.l.b16 %v560
        %v607 = vunpack.c.h.b16 %v560
        %v608 = vunpack.c.l.b16 %v561
        %v609 = vunpack.c.h.b16 %v561
        %v610 = vpack.c.b16 %v578, %v578
        %v611 = vpack.c.b16 %v579, %v579
        %v612 = vpack.c.b16 %v580, %v580
        %v613 = vpack.c.b16 %v581, %v581
        %v614 = vpack.c.b16 %v582, %v582
        %v615 = vpack.c.b16 %v583, %v583
        %v616 = vpack.c.b16 %v584, %v584
        %v617 = vpack.c.b16 %v585, %v585
        %v618 = vpack.c.b16 %v586, %v586
        %v619 = vpack.c.b16 %v587, %v587
        %v620 = vpack.c.b16 %v588, %v588
        %v621 = vpack.c.b16 %v589, %v589
        %v622 = vpack.c.b16 %v590, %v590
        %v623 = vpack.c.b16 %v591, %v591
        %v624 = vpack.c.b16 %v592, %v592
        %v625 = vpack.c.b16 %v593, %v593
        %v626 = vpack.c.b16 %v594, %v594
        %v627 = vpack.c.b16 %v595, %v595
        %v628 = vpack.c.b16 %v596, %v596
        %v629 = vpack.c.b16 %v597, %v597
        %v630 = vpack.c.b16 %v598, %v598
        %v631 = vpack.c.b16 %v599, %v599
        %v632 = vpack.c.b16 %v600, %v600
        %v633 = vpack.c.b16 %v601, %v601
        %v634 = vpack.c.b16 %v602, %v602
        %v635 = vpack.c.b16 %v603, %v603
        %v636 = vpack.c.b16 %v604, %v604
        %v637 = vpack.c.b16 %v605, %v605
        %v638 = vpack.c.b16 %v606, %v606
        %v639 = vpack.c.b16 %v607, %v607
        %v640 = vpack.c.b16 %v608, %v608
        %v641 = vpack.c.b16 %v609, %v609
        %vm642 = vsmask.f32 256
        %vm643 = vsmask.f32 4368
        %vm644 = vmor %vm642, %vm643
        %v646 = vshrl.u32 %v610, 16
        %v648 = vrot.slane %v646, 7
        %v649 = vshll.u32 %v610, 16
        %v651 = vor.u32 %v648, %v649
        %v652 = vrot.slane %v648, 4
        %v654 = vshrl.u32 %v611, 16
        %v656 = vrot.slane %v654, 7
        %v657 = vshll.u32 %v611, 16
        %v659 = vor.u32 %v656, %v657
        %v660 = vsel %vm644, %v652, %v659
        %v661 = vrot.slane %v656, 4
        %v663 = vshrl.u32 %v612, 16
        %v665 = vrot.slane %v663, 7
        %v666 = vshll.u32 %v612, 16
        %v668 = vor.u32 %v665, %v666
        %v669 = vrot.slane %v665, 4
        %v671 = vshrl.u32 %v613, 16
        %v673 = vrot.slane %v671, 7
        %v674 = vshll.u32 %v613, 16
        %v676 = vor.u32 %v673, %v674
        %v677 = vsel %vm644, %v669, %v676
        %v678 = vrot.slane %v673, 4
        %v680 = vshrl.u32 %v614, 16
        %v682 = vrot.slane %v680, 7
        %v683 = vshll.u32 %v614, 16
        %v685 = vor.u32 %v682, %v683
        %v686 = vrot.slane %v682, 4
        %v688 = vshrl.u32 %v615, 16
        %v690 = vrot.slane %v688, 7
        %v691 = vshll.u32 %v615, 16
        %v693 = vor.u32 %v690, %v691
        %v694 = vsel %vm644, %v686, %v693
        %v695 = vrot.slane %v690, 4
        %v697 = vshrl.u32 %v616, 16
        %v699 = vrot.slane %v697, 7
        %v700 = vshll.u32 %v616, 16
        %v702 = vor.u32 %v699, %v700
        %v703 = vrot.slane %v699, 4
        %v705 = vshrl.u32 %v617, 16
        %v707 = vrot.slane %v705, 7
        %v708 = vshll.u32 %v617, 16
        %v710 = vor.u32 %v707, %v708
        %v711 = vsel %vm644, %v703, %v710
        %v712 = vrot.slane %v707, 4
        %v714 = vshrl.u32 %v618, 16
        %v716 = vrot.slane %v714, 7
        %v717 = vshll.u32 %v618, 16
        %v719 = vor.u32 %v716, %v717
        %v720 = vrot.slane %v716, 4
        %v722 = vshrl.u32 %v619, 16
        %v724 = vrot.slane %v722, 7
        %v725 = vshll.u32 %v619, 16
        %v727 = vor.u32 %v724, %v725
        %v728 = vsel %vm644, %v720, %v727
        %v729 = vrot.slane %v724, 4
        %v731 = vshrl.u32 %v620, 16
        %v733 = vrot.slane %v731, 7
        %v734 = vshll.u32 %v620, 16
        %v736 = vor.u32 %v733, %v734
        %v737 = vrot.slane %v733, 4
        %v739 = vshrl.u32 %v621, 16
        %v741 = vrot.slane %v739, 7
        %v742 = vshll.u32 %v621, 16
        %v744 = vor.u32 %v741, %v742
        %v745 = vsel %vm644, %v737, %v744
        %v746 = vrot.slane %v741, 4
        %v748 = vshrl.u32 %v622, 16
        %v750 = vrot.slane %v748, 7
        %v751 = vshll.u32 %v622, 16
        %v753 = vor.u32 %v750, %v751
        %v754 = vrot.slane %v750, 4
        %v756 = vshrl.u32 %v623, 16
        %v758 = vrot.slane %v756, 7
        %v759 = vshll.u32 %v623, 16
        %v761 = vor.u32 %v758, %v759
        %v762 = vsel %vm644, %v754, %v761
        %v763 = vrot.slane %v758, 4
        %v765 = vshrl.u32 %v624, 16
        %v767 = vrot.slane %v765, 7
        %v768 = vshll.u32 %v624, 16
        %v770 = vor.u32 %v767, %v768
        %v771 = vrot.slane %v767, 4
        %v773 = vshrl.u32 %v625, 16
        %v775 = vrot.slane %v773, 7
        %v776 = vshll.u32 %v625, 16
        %v778 = vor.u32 %v775, %v776
        %v779 = vsel %vm644, %v771, %v778
        %v780 = vrot.slane %v775, 4
        %v782 = vshrl.u32 %v626, 16
        %v784 = vrot.slane %v782, 7
        %v785 = vshll.u32 %v626, 16
        %v787 = vor.u32 %v784, %v785
        %v788 = vrot.slane %v784, 4
        %v790 = vshrl.u32 %v627, 16
        %v792 = vrot.slane %v790, 7
        %v793 = vshll.u32 %v627, 16
        %v795 = vor.u32 %v792, %v793
        %v796 = vsel %vm644, %v788, %v795
        %v797 = vrot.slane %v792, 4
        %v799 = vshrl.u32 %v628, 16
        %v801 = vrot.slane %v799, 7
        %v802 = vshll.u32 %v628, 16
        %v804 = vor.u32 %v801, %v802
        %v805 = vrot.slane %v801, 4
        %v807 = vshrl.u32 %v629, 16
        %v809 = vrot.slane %v807, 7
        %v810 = vshll.u32 %v629, 16
        %v812 = vor.u32 %v809, %v810
        %v813 = vsel %vm644, %v805, %v812
        %v814 = vrot.slane %v809, 4
        %v816 = vshrl.u32 %v630, 16
        %v818 = vrot.slane %v816, 7
        %v819 = vshll.u32 %v630, 16
        %v821 = vor.u32 %v818, %v819
        %v822 = vrot.slane %v818, 4
        %v824 = vshrl.u32 %v631, 16
        %v826 = vrot.slane %v824, 7
        %v827 = vshll.u32 %v631, 16
        %v829 = vor.u32 %v826, %v827
        %v830 = vsel %vm644, %v822, %v829
        %v831 = vrot.slane %v826, 4
        %v833 = vshrl.u32 %v632, 16
        %v835 = vrot.slane %v833, 7
        %v836 = vshll.u32 %v632, 16
        %v838 = vor.u32 %v835, %v836
        %v839 = vrot.slane %v835, 4
        %v841 = vshrl.u32 %v633, 16
        %v843 = vrot.slane %v841, 7
        %v844 = vshll.u32 %v633, 16
        %v846 = vor.u32 %v843, %v844
        %v847 = vsel %vm644, %v839, %v846
        %v848 = vrot.slane %v843, 4
        %v850 = vshrl.u32 %v634, 16
        %v852 = vrot.slane %v850, 7
        %v853 = vshll.u32 %v634, 16
        %v855 = vor.u32 %v852, %v853
        %v856 = vrot.slane %v852, 4
        %v858 = vshrl.u32 %v635, 16
        %v860 = vrot.slane %v858, 7
        %v861 = vshll.u32 %v635, 16
        %v863 = vor.u32 %v860, %v861
        %v864 = vsel %vm644, %v856, %v863
        %v865 = vrot.slane %v860, 4
        %v867 = vshrl.u32 %v636, 16
        %v869 = vrot.slane %v867, 7
        %v870 = vshll.u32 %v636, 16
        %v872 = vor.u32 %v869, %v870
        %v873 = vrot.slane %v869, 4
        %v875 = vshrl.u32 %v637, 16
        %v877 = vrot.slane %v875, 7
        %v878 = vshll.u32 %v637, 16
        %v880 = vor.u32 %v877, %v878
        %v881 = vsel %vm644, %v873, %v880
        %v882 = vrot.slane %v877, 4
        %v884 = vshrl.u32 %v638, 16
        %v886 = vrot.slane %v884, 7
        %v887 = vshll.u32 %v638, 16
        %v889 = vor.u32 %v886, %v887
        %v890 = vrot.slane %v886, 4
        %v892 = vshrl.u32 %v639, 16
        %v894 = vrot.slane %v892, 7
        %v895 = vshll.u32 %v639, 16
        %v897 = vor.u32 %v894, %v895
        %v898 = vsel %vm644, %v890, %v897
        %v899 = vrot.slane %v894, 4
        %v901 = vshrl.u32 %v640, 16
        %v903 = vrot.slane %v901, 7
        %v904 = vshll.u32 %v640, 16
        %v906 = vor.u32 %v903, %v904
        %v907 = vrot.slane %v903, 4
        %v909 = vshrl.u32 %v641, 16
        %v911 = vrot.slane %v909, 7
        %v912 = vshll.u32 %v641, 16
        %v914 = vor.u32 %v911, %v912
        %v915 = vsel %vm644, %v907, %v914
        %v916 = vrot.slane %v911, 4
        %s965 = scalar_lea.vmem [#allocation3], 12
        %vm966 = vcmask 1043456
        %vm967 = vsmask.f32 7938
        %vm968 = vmand %vm966, %vm967
        %v969 = vld [vmem:[%s965] sm:$0xf]
        %v970 = vsel %vm968, %v651, %v969
        %971 = vst [vmem:[%s965] sm:$0xf] %v970
        %972 = vst [vmem:[%s965 + $0x4] sm:$0xf] %v660
        %vm973 = vcmask 1040384
        %vm974 = vmand %vm973, %vm642
        %v975 = vld [vmem:[%s965 + $0x8] sm:$0x1]
        %v976 = vsel %vm974, %v661, %v975
        %977 = vst [vmem:[%s965 + $0x8] sm:$0x1] %v976
        %v978 = vld [vmem:[%s965 + $0xc] sm:$0xf]
        %v979 = vsel %vm968, %v668, %v978
        %980 = vst [vmem:[%s965 + $0xc] sm:$0xf] %v979
        %981 = vst [vmem:[%s965 + $0x10] sm:$0xf] %v677
        %v982 = vld [vmem:[%s965 + $0x14] sm:$0x1]
        %v983 = vsel %vm974, %v678, %v982
        %984 = vst [vmem:[%s965 + $0x14] sm:$0x1] %v983
        %v985 = vld [vmem:[%s965 + $0x18] sm:$0xf]
        %v986 = vsel %vm968, %v685, %v985
        %987 = vst [vmem:[%s965 + $0x18] sm:$0xf] %v986
        %988 = vst [vmem:[%s965 + $0x1c] sm:$0xf] %v694
        %v989 = vld [vmem:[%s965 + $0x20] sm:$0x1]
        %v990 = vsel %vm974, %v695, %v989
        %991 = vst [vmem:[%s965 + $0x20] sm:$0x1] %v990
        %v992 = vld [vmem:[%s965 + $0x24] sm:$0xf]
        %v993 = vsel %vm968, %v702, %v992
        %994 = vst [vmem:[%s965 + $0x24] sm:$0xf] %v993
        %995 = vst [vmem:[%s965 + $0x28] sm:$0xf] %v711
        %v996 = vld [vmem:[%s965 + $0x2c] sm:$0x1]
        %v997 = vsel %vm974, %v712, %v996
        %998 = vst [vmem:[%s965 + $0x2c] sm:$0x1] %v997
        %v999 = vld [vmem:[%s965 + $0x30] sm:$0xf]
        %v1000 = vsel %vm968, %v719, %v999
        %1001 = vst [vmem:[%s965 + $0x30] sm:$0xf] %v1000
        %1002 = vst [vmem:[%s965 + $0x34] sm:$0xf] %v728
        %v1003 = vld [vmem:[%s965 + $0x38] sm:$0x1]
        %v1004 = vsel %vm974, %v729, %v1003
        %1005 = vst [vmem:[%s965 + $0x38] sm:$0x1] %v1004
        %v1006 = vld [vmem:[%s965 + $0x3c] sm:$0xf]
        %v1007 = vsel %vm968, %v736, %v1006
        %1008 = vst [vmem:[%s965 + $0x3c] sm:$0xf] %v1007
        %1009 = vst [vmem:[%s965 + $0x40] sm:$0xf] %v745
        %v1010 = vld [vmem:[%s965 + $0x44] sm:$0x1]
        %v1011 = vsel %vm974, %v746, %v1010
        %1012 = vst [vmem:[%s965 + $0x44] sm:$0x1] %v1011
        %v1013 = vld [vmem:[%s965 + $0x48] sm:$0xf]
        %v1014 = vsel %vm968, %v753, %v1013
        %1015 = vst [vmem:[%s965 + $0x48] sm:$0xf] %v1014
        %1016 = vst [vmem:[%s965 + $0x4c] sm:$0xf] %v762
        %v1017 = vld [vmem:[%s965 + $0x50] sm:$0x1]
        %v1018 = vsel %vm974, %v763, %v1017
        %1019 = vst [vmem:[%s965 + $0x50] sm:$0x1] %v1018
        %v1020 = vld [vmem:[%s965 + $0x54] sm:$0xf]
        %v1021 = vsel %vm968, %v770, %v1020
        %1022 = vst [vmem:[%s965 + $0x54] sm:$0xf] %v1021
        %1023 = vst [vmem:[%s965 + $0x58] sm:$0xf] %v779
        %v1024 = vld [vmem:[%s965 + $0x5c] sm:$0x1]
        %v1025 = vsel %vm974, %v780, %v1024
        %1026 = vst [vmem:[%s965 + $0x5c] sm:$0x1] %v1025
        %v1027 = vld [vmem:[%s965 + $0x60] sm:$0xf]
        %v1028 = vsel %vm968, %v787, %v1027
        %1029 = vst [vmem:[%s965 + $0x60] sm:$0xf] %v1028
        %1030 = vst [vmem:[%s965 + $0x64] sm:$0xf] %v796
        %v1031 = vld [vmem:[%s965 + $0x68] sm:$0x1]
        %v1032 = vsel %vm974, %v797, %v1031
        %1033 = vst [vmem:[%s965 + $0x68] sm:$0x1] %v1032
        %v1034 = vld [vmem:[%s965 + $0x6c] sm:$0xf]
        %v1035 = vsel %vm968, %v804, %v1034
        %1036 = vst [vmem:[%s965 + $0x6c] sm:$0xf] %v1035
        %1037 = vst [vmem:[%s965 + $0x70] sm:$0xf] %v813
        %v1038 = vld [vmem:[%s965 + $0x74] sm:$0x1]
        %v1039 = vsel %vm974, %v814, %v1038
        %1040 = vst [vmem:[%s965 + $0x74] sm:$0x1] %v1039
        %v1041 = vld [vmem:[%s965 + $0x78] sm:$0xf]
        %v1042 = vsel %vm968, %v821, %v1041
        %1043 = vst [vmem:[%s965 + $0x78] sm:$0xf] %v1042
        %1044 = vst [vmem:[%s965 + $0x7c] sm:$0xf] %v830
        %v1045 = vld [vmem:[%s965 + $0x80] sm:$0x1]
        %v1046 = vsel %vm974, %v831, %v1045
        %1047 = vst [vmem:[%s965 + $0x80] sm:$0x1] %v1046
        %v1048 = vld [vmem:[%s965 + $0x84] sm:$0xf]
        %v1049 = vsel %vm968, %v838, %v1048
        %1050 = vst [vmem:[%s965 + $0x84] sm:$0xf] %v1049
        %1051 = vst [vmem:[%s965 + $0x88] sm:$0xf] %v847
        %v1052 = vld [vmem:[%s965 + $0x8c] sm:$0x1]
        %v1053 = vsel %vm974, %v848, %v1052
        %1054 = vst [vmem:[%s965 + $0x8c] sm:$0x1] %v1053
        %v1055 = vld [vmem:[%s965 + $0x90] sm:$0xf]
        %v1056 = vsel %vm968, %v855, %v1055
        %1057 = vst [vmem:[%s965 + $0x90] sm:$0xf] %v1056
        %1058 = vst [vmem:[%s965 + $0x94] sm:$0xf] %v864
        %v1059 = vld [vmem:[%s965 + $0x98] sm:$0x1]
        %v1060 = vsel %vm974, %v865, %v1059
        %1061 = vst [vmem:[%s965 + $0x98] sm:$0x1] %v1060
        %v1062 = vld [vmem:[%s965 + $0x9c] sm:$0xf]
        %v1063 = vsel %vm968, %v872, %v1062
        %1064 = vst [vmem:[%s965 + $0x9c] sm:$0xf] %v1063
        %1065 = vst [vmem:[%s965 + $0xa0] sm:$0xf] %v881
        %v1066 = vld [vmem:[%s965 + $0xa4] sm:$0x1]
        %v1067 = vsel %vm974, %v882, %v1066
        %1068 = vst [vmem:[%s965 + $0xa4] sm:$0x1] %v1067
        %v1069 = vld [vmem:[%s965 + $0xa8] sm:$0xf]
        %v1070 = vsel %vm968, %v889, %v1069
        %1071 = vst [vmem:[%s965 + $0xa8] sm:$0xf] %v1070
        %1072 = vst [vmem:[%s965 + $0xac] sm:$0xf] %v898
        %v1073 = vld [vmem:[%s965 + $0xb0] sm:$0x1]
        %v1074 = vsel %vm974, %v899, %v1073
        %1075 = vst [vmem:[%s965 + $0xb0] sm:$0x1] %v1074
        %v1076 = vld [vmem:[%s965 + $0xb4] sm:$0xf]
        %v1077 = vsel %vm968, %v906, %v1076
        %1078 = vst [vmem:[%s965 + $0xb4] sm:$0xf] %v1077
        %1079 = vst [vmem:[%s965 + $0xb8] sm:$0xf] %v915
        %v1080 = vld [vmem:[%s965 + $0xbc] sm:$0x1]
        %v1081 = vsel %vm974, %v916, %v1080
        %1082 = vst [vmem:[%s965 + $0xbc] sm:$0x1] %v1081
      $region36: #{double_conv.3} parent=31 // pred_fallthru
        _
      %s1083 = smul.u32 %s23, 16
      %s1084 = smul.u32 %s1083, 3
      %s1085 = smul.addr %s1084, 4
      %s1086 = scalar_lea.vmem [#allocation3], %s1085
      %v1087 = vld [vmem:[%s1086] sm:$0xf]
      %v1088 = vld [vmem:[%s1086 + $0x4] sm:$0xf]
      %v1089 = vld [vmem:[%s1086 + $0x8] sm:$0x1]
      %v1090 = vld [vmem:[%s1086 + $0xc] sm:$0xf]
      %v1091 = vld [vmem:[%s1086 + $0x10] sm:$0xf]
      %v1092 = vld [vmem:[%s1086 + $0x14] sm:$0x1]
      %v1093 = vld [vmem:[%s1086 + $0x18] sm:$0xf]
      %v1094 = vld [vmem:[%s1086 + $0x1c] sm:$0xf]
      %v1095 = vld [vmem:[%s1086 + $0x20] sm:$0x1]
      %v1096 = vld [vmem:[%s1086 + $0x24] sm:$0xf]
      %v1097 = vld [vmem:[%s1086 + $0x28] sm:$0xf]
      %v1098 = vld [vmem:[%s1086 + $0x2c] sm:$0x1]
      %v1099 = vld [vmem:[%s1086 + $0x30] sm:$0xf]
      %v1100 = vld [vmem:[%s1086 + $0x34] sm:$0xf]
      %v1101 = vld [vmem:[%s1086 + $0x38] sm:$0x1]
      %v1102 = vld [vmem:[%s1086 + $0x3c] sm:$0xf]
      %v1103 = vld [vmem:[%s1086 + $0x40] sm:$0xf]
      %v1104 = vld [vmem:[%s1086 + $0x44] sm:$0x1]
      %v1105 = vld [vmem:[%s1086 + $0x48] sm:$0xf]
      %v1106 = vld [vmem:[%s1086 + $0x4c] sm:$0xf]
      %v1107 = vld [vmem:[%s1086 + $0x50] sm:$0x1]
      %v1108 = vld [vmem:[%s1086 + $0x54] sm:$0xf]
      %v1109 = vld [vmem:[%s1086 + $0x58] sm:$0xf]
      %v1110 = vld [vmem:[%s1086 + $0x5c] sm:$0x1]
      %v1111 = vld [vmem:[%s1086 + $0x60] sm:$0xf]
      %v1112 = vld [vmem:[%s1086 + $0x64] sm:$0xf]
      %v1113 = vld [vmem:[%s1086 + $0x68] sm:$0x1]
      %v1114 = vld [vmem:[%s1086 + $0x6c] sm:$0xf]
      %v1115 = vld [vmem:[%s1086 + $0x70] sm:$0xf]
      %v1116 = vld [vmem:[%s1086 + $0x74] sm:$0x1]
      %v1117 = vld [vmem:[%s1086 + $0x78] sm:$0xf]
      %v1118 = vld [vmem:[%s1086 + $0x7c] sm:$0xf]
      %v1119 = vld [vmem:[%s1086 + $0x80] sm:$0x1]
      %v1120 = vld [vmem:[%s1086 + $0x84] sm:$0xf]
      %v1121 = vld [vmem:[%s1086 + $0x88] sm:$0xf]
      %v1122 = vld [vmem:[%s1086 + $0x8c] sm:$0x1]
      %v1123 = vld [vmem:[%s1086 + $0x90] sm:$0xf]
      %v1124 = vld [vmem:[%s1086 + $0x94] sm:$0xf]
      %v1125 = vld [vmem:[%s1086 + $0x98] sm:$0x1]
      %v1126 = vld [vmem:[%s1086 + $0x9c] sm:$0xf]
      %v1127 = vld [vmem:[%s1086 + $0xa0] sm:$0xf]
      %v1128 = vld [vmem:[%s1086 + $0xa4] sm:$0x1]
      %v1129 = vld [vmem:[%s1086 + $0xa8] sm:$0xf]
      %v1130 = vld [vmem:[%s1086 + $0xac] sm:$0xf]
      %v1131 = vld [vmem:[%s1086 + $0xb0] sm:$0x1]
      %v1132 = vld [vmem:[%s1086 + $0xb4] sm:$0xf]
      %v1133 = vld [vmem:[%s1086 + $0xb8] sm:$0xf]
      %v1134 = vld [vmem:[%s1086 + $0xbc] sm:$0x1]
      %v1167 = vunpack.c.l.b16 %v1087
      %v1168 = vunpack.c.l.b16 %v1088
      %v1169 = vunpack.c.l.b16 %v1090
      %v1170 = vunpack.c.l.b16 %v1091
      %v1171 = vunpack.c.l.b16 %v1093
      %v1172 = vunpack.c.l.b16 %v1094
      %v1173 = vunpack.c.l.b16 %v1096
      %v1174 = vunpack.c.l.b16 %v1097
      %v1175 = vunpack.c.l.b16 %v1099
      %v1176 = vunpack.c.l.b16 %v1100
      %v1177 = vunpack.c.l.b16 %v1102
      %v1178 = vunpack.c.l.b16 %v1103
      %v1179 = vunpack.c.l.b16 %v1105
      %v1180 = vunpack.c.l.b16 %v1106
      %v1181 = vunpack.c.l.b16 %v1108
      %v1182 = vunpack.c.l.b16 %v1109
      %v1183 = vunpack.c.l.b16 %v1111
      %v1184 = vunpack.c.l.b16 %v1112
      %v1185 = vunpack.c.l.b16 %v1114
      %v1186 = vunpack.c.l.b16 %v1115
      %v1187 = vunpack.c.l.b16 %v1117
      %v1188 = vunpack.c.l.b16 %v1118
      %v1189 = vunpack.c.l.b16 %v1120
      %v1190 = vunpack.c.l.b16 %v1121
      %v1191 = vunpack.c.l.b16 %v1123
      %v1192 = vunpack.c.l.b16 %v1124
      %v1193 = vunpack.c.l.b16 %v1126
      %v1194 = vunpack.c.l.b16 %v1127
      %v1195 = vunpack.c.l.b16 %v1129
      %v1196 = vunpack.c.l.b16 %v1130
      %v1197 = vunpack.c.l.b16 %v1132
      %v1198 = vunpack.c.l.b16 %v1133
      %v1199 = vpack.c.b16 %v1168, %v1167
      %v1200 = vpack.c.b16 %v1170, %v1169
      %v1201 = vpack.c.b16 %v1172, %v1171
      %v1202 = vpack.c.b16 %v1174, %v1173
      %v1203 = vpack.c.b16 %v1176, %v1175
      %v1204 = vpack.c.b16 %v1178, %v1177
      %v1205 = vpack.c.b16 %v1180, %v1179
      %v1206 = vpack.c.b16 %v1182, %v1181
      %v1207 = vpack.c.b16 %v1184, %v1183
      %v1208 = vpack.c.b16 %v1186, %v1185
      %v1209 = vpack.c.b16 %v1188, %v1187
      %v1210 = vpack.c.b16 %v1190, %v1189
      %v1211 = vpack.c.b16 %v1192, %v1191
      %v1212 = vpack.c.b16 %v1194, %v1193
      %v1213 = vpack.c.b16 %v1196, %v1195
      %v1214 = vpack.c.b16 %v1198, %v1197
      %v1247 = vunpack.c.l.b16 %v1089
      %v1248 = vunpack.c.l.b16 %v1092
      %v1249 = vunpack.c.l.b16 %v1095
      %v1250 = vunpack.c.l.b16 %v1098
      %v1251 = vunpack.c.l.b16 %v1101
      %v1252 = vunpack.c.l.b16 %v1104
      %v1253 = vunpack.c.l.b16 %v1107
      %v1254 = vunpack.c.l.b16 %v1110
      %v1255 = vunpack.c.l.b16 %v1113
      %v1256 = vunpack.c.l.b16 %v1116
      %v1257 = vunpack.c.l.b16 %v1119
      %v1258 = vunpack.c.l.b16 %v1122
      %v1259 = vunpack.c.l.b16 %v1125
      %v1260 = vunpack.c.l.b16 %v1128
      %v1261 = vunpack.c.l.b16 %v1131
      %v1262 = vunpack.c.l.b16 %v1134
      %v1263 = vpack.c.b16 %v1247, %v1247
      %v1264 = vpack.c.b16 %v1248, %v1248
      %v1265 = vpack.c.b16 %v1249, %v1249
      %v1266 = vpack.c.b16 %v1250, %v1250
      %v1267 = vpack.c.b16 %v1251, %v1251
      %v1268 = vpack.c.b16 %v1252, %v1252
      %v1269 = vpack.c.b16 %v1253, %v1253
      %v1270 = vpack.c.b16 %v1254, %v1254
      %v1271 = vpack.c.b16 %v1255, %v1255
      %v1272 = vpack.c.b16 %v1256, %v1256
      %v1273 = vpack.c.b16 %v1257, %v1257
      %v1274 = vpack.c.b16 %v1258, %v1258
      %v1275 = vpack.c.b16 %v1259, %v1259
      %v1276 = vpack.c.b16 %v1260, %v1260
      %v1277 = vpack.c.b16 %v1261, %v1261
      %v1278 = vpack.c.b16 %v1262, %v1262
      %vm1279 = vsmask.f32 7424
      %v1281 = vshrl.u32 %v1199, 16
      %v1283 = vshll.u32 %v1199, 16
      %v1285 = vrot.slane %v1283, 1
      %v1286 = vor.u32 %v1281, %v1285
      %v1288 = vshll.u32 %v1263, 16
      %v1290 = vrot.slane %v1288, 1
      %v1291 = vsel %vm1279, %v1286, %v1290
      %v1293 = vshrl.u32 %v1200, 16
      %v1295 = vshll.u32 %v1200, 16
      %v1297 = vrot.slane %v1295, 1
      %v1298 = vor.u32 %v1293, %v1297
      %v1300 = vshll.u32 %v1264, 16
      %v1302 = vrot.slane %v1300, 1
      %v1303 = vsel %vm1279, %v1298, %v1302
      %v1305 = vshrl.u32 %v1201, 16
      %v1307 = vshll.u32 %v1201, 16
      %v1309 = vrot.slane %v1307, 1
      %v1310 = vor.u32 %v1305, %v1309
      %v1312 = vshll.u32 %v1265, 16
      %v1314 = vrot.slane %v1312, 1
      %v1315 = vsel %vm1279, %v1310, %v1314
      %v1317 = vshrl.u32 %v1202, 16
      %v1319 = vshll.u32 %v1202, 16
      %v1321 = vrot.slane %v1319, 1
      %v1322 = vor.u32 %v1317, %v1321
      %v1324 = vshll.u32 %v1266, 16
      %v1326 = vrot.slane %v1324, 1
      %v1327 = vsel %vm1279, %v1322, %v1326
      %v1329 = vshrl.u32 %v1203, 16
      %v1331 = vshll.u32 %v1203, 16
      %v1333 = vrot.slane %v1331, 1
      %v1334 = vor.u32 %v1329, %v1333
      %v1336 = vshll.u32 %v1267, 16
      %v1338 = vrot.slane %v1336, 1
      %v1339 = vsel %vm1279, %v1334, %v1338
      %v1341 = vshrl.u32 %v1204, 16
      %v1343 = vshll.u32 %v1204, 16
      %v1345 = vrot.slane %v1343, 1
      %v1346 = vor.u32 %v1341, %v1345
      %v1348 = vshll.u32 %v1268, 16
      %v1350 = vrot.slane %v1348, 1
      %v1351 = vsel %vm1279, %v1346, %v1350
      %v1353 = vshrl.u32 %v1205, 16
      %v1355 = vshll.u32 %v1205, 16
      %v1357 = vrot.slane %v1355, 1
      %v1358 = vor.u32 %v1353, %v1357
      %v1360 = vshll.u32 %v1269, 16
      %v1362 = vrot.slane %v1360, 1
      %v1363 = vsel %vm1279, %v1358, %v1362
      %v1365 = vshrl.u32 %v1206, 16
      %v1367 = vshll.u32 %v1206, 16
      %v1369 = vrot.slane %v1367, 1
      %v1370 = vor.u32 %v1365, %v1369
      %v1372 = vshll.u32 %v1270, 16
      %v1374 = vrot.slane %v1372, 1
      %v1375 = vsel %vm1279, %v1370, %v1374
      %v1377 = vshrl.u32 %v1207, 16
      %v1379 = vshll.u32 %v1207, 16
      %v1381 = vrot.slane %v1379, 1
      %v1382 = vor.u32 %v1377, %v1381
      %v1384 = vshll.u32 %v1271, 16
      %v1386 = vrot.slane %v1384, 1
      %v1387 = vsel %vm1279, %v1382, %v1386
      %v1389 = vshrl.u32 %v1208, 16
      %v1391 = vshll.u32 %v1208, 16
      %v1393 = vrot.slane %v1391, 1
      %v1394 = vor.u32 %v1389, %v1393
      %v1396 = vshll.u32 %v1272, 16
      %v1398 = vrot.slane %v1396, 1
      %v1399 = vsel %vm1279, %v1394, %v1398
      %v1401 = vshrl.u32 %v1209, 16
      %v1403 = vshll.u32 %v1209, 16
      %v1405 = vrot.slane %v1403, 1
      %v1406 = vor.u32 %v1401, %v1405
      %v1408 = vshll.u32 %v1273, 16
      %v1410 = vrot.slane %v1408, 1
      %v1411 = vsel %vm1279, %v1406, %v1410
      %v1413 = vshrl.u32 %v1210, 16
      %v1415 = vshll.u32 %v1210, 16
      %v1417 = vrot.slane %v1415, 1
      %v1418 = vor.u32 %v1413, %v1417
      %v1420 = vshll.u32 %v1274, 16
      %v1422 = vrot.slane %v1420, 1
      %v1423 = vsel %vm1279, %v1418, %v1422
      %v1425 = vshrl.u32 %v1211, 16
      %v1427 = vshll.u32 %v1211, 16
      %v1429 = vrot.slane %v1427, 1
      %v1430 = vor.u32 %v1425, %v1429
      %v1432 = vshll.u32 %v1275, 16
      %v1434 = vrot.slane %v1432, 1
      %v1435 = vsel %vm1279, %v1430, %v1434
      %v1437 = vshrl.u32 %v1212, 16
      %v1439 = vshll.u32 %v1212, 16
      %v1441 = vrot.slane %v1439, 1
      %v1442 = vor.u32 %v1437, %v1441
      %v1444 = vshll.u32 %v1276, 16
      %v1446 = vrot.slane %v1444, 1
      %v1447 = vsel %vm1279, %v1442, %v1446
      %v1449 = vshrl.u32 %v1213, 16
      %v1451 = vshll.u32 %v1213, 16
      %v1453 = vrot.slane %v1451, 1
      %v1454 = vor.u32 %v1449, %v1453
      %v1456 = vshll.u32 %v1277, 16
      %v1458 = vrot.slane %v1456, 1
      %v1459 = vsel %vm1279, %v1454, %v1458
      %v1461 = vshrl.u32 %v1214, 16
      %v1463 = vshll.u32 %v1214, 16
      %v1465 = vrot.slane %v1463, 1
      %v1466 = vor.u32 %v1461, %v1465
      %v1468 = vshll.u32 %v1278, 16
      %v1470 = vrot.slane %v1468, 1
      %v1471 = vsel %vm1279, %v1466, %v1470
      %vm1488 = vcmask 1046528
      %v1489 = vrot.slane %v1199, 1
      %v1490 = vrot.slane %v1263, 1
      %v1491 = vsel %vm1488, %v1489, %v1490
      %v1492 = vrot.slane %v1200, 1
      %v1493 = vrot.slane %v1264, 1
      %v1494 = vsel %vm1488, %v1492, %v1493
      %v1495 = vrot.slane %v1201, 1
      %v1496 = vrot.slane %v1265, 1
      %v1497 = vsel %vm1488, %v1495, %v1496
      %v1498 = vrot.slane %v1202, 1
      %v1499 = vrot.slane %v1266, 1
      %v1500 = vsel %vm1488, %v1498, %v1499
      %v1501 = vrot.slane %v1203, 1
      %v1502 = vrot.slane %v1267, 1
      %v1503 = vsel %vm1488, %v1501, %v1502
      %v1504 = vrot.slane %v1204, 1
      %v1505 = vrot.slane %v1268, 1
      %v1506 = vsel %vm1488, %v1504, %v1505
      %v1507 = vrot.slane %v1205, 1
      %v1508 = vrot.slane %v1269, 1
      %v1509 = vsel %vm1488, %v1507, %v1508
      %v1510 = vrot.slane %v1206, 1
      %v1511 = vrot.slane %v1270, 1
      %v1512 = vsel %vm1488, %v1510, %v1511
      %v1513 = vrot.slane %v1207, 1
      %v1514 = vrot.slane %v1271, 1
      %v1515 = vsel %vm1488, %v1513, %v1514
      %v1516 = vrot.slane %v1208, 1
      %v1517 = vrot.slane %v1272, 1
      %v1518 = vsel %vm1488, %v1516, %v1517
      %v1519 = vrot.slane %v1209, 1
      %v1520 = vrot.slane %v1273, 1
      %v1521 = vsel %vm1488, %v1519, %v1520
      %v1522 = vrot.slane %v1210, 1
      %v1523 = vrot.slane %v1274, 1
      %v1524 = vsel %vm1488, %v1522, %v1523
      %v1525 = vrot.slane %v1211, 1
      %v1526 = vrot.slane %v1275, 1
      %v1527 = vsel %vm1488, %v1525, %v1526
      %v1528 = vrot.slane %v1212, 1
      %v1529 = vrot.slane %v1276, 1
      %v1530 = vsel %vm1488, %v1528, %v1529
      %v1531 = vrot.slane %v1213, 1
      %v1532 = vrot.slane %v1277, 1
      %v1533 = vsel %vm1488, %v1531, %v1532
      %v1534 = vrot.slane %v1214, 1
      %v1535 = vrot.slane %v1278, 1
      %v1536 = vsel %vm1488, %v1534, %v1535
      %v1553 = vld [vmem:[%s3] sm:$0xf]
      %v1554 = vld [vmem:[%s3 + $0x4] sm:$0xf]
      %v1555 = vld [vmem:[%s3 + $0x8] sm:$0xf]
      %v1556 = vld [vmem:[%s3 + $0xc] sm:$0xf]
      %v1557 = vld [vmem:[%s3 + $0x10] sm:$0xf]
      %v1558 = vld [vmem:[%s3 + $0x14] sm:$0xf]
      %v1559 = vld [vmem:[%s3 + $0x18] sm:$0xf]
      %v1560 = vld [vmem:[%s3 + $0x1c] sm:$0xf]
      %v1561 = vld [vmem:[%s3 + $0x20] sm:$0xf]
      %v1562 = vld [vmem:[%s3 + $0x24] sm:$0xf]
      %v1563 = vld [vmem:[%s3 + $0x28] sm:$0xf]
      %v1564 = vld [vmem:[%s3 + $0x2c] sm:$0xf]
      %v1565 = vld [vmem:[%s3 + $0x30] sm:$0xf]
      %v1566 = vld [vmem:[%s3 + $0x34] sm:$0xf]
      %v1567 = vld [vmem:[%s3 + $0x38] sm:$0xf]
      %v1568 = vld [vmem:[%s3 + $0x3c] sm:$0xf]
      %v1569 = vld [vmem:[%s3 + $0x40] sm:$0xf]
      %v1570 = vld [vmem:[%s3 + $0x44] sm:$0xf]
      %v1571 = vld [vmem:[%s3 + $0x48] sm:$0xf]
      %v1572 = vld [vmem:[%s3 + $0x4c] sm:$0xf]
      %v1573 = vld [vmem:[%s3 + $0x50] sm:$0xf]
      %v1574 = vld [vmem:[%s3 + $0x54] sm:$0xf]
      %v1575 = vld [vmem:[%s3 + $0x58] sm:$0xf]
      %v1576 = vld [vmem:[%s3 + $0x5c] sm:$0xf]
      %v1577 = vld [vmem:[%s3 + $0x60] sm:$0xf]
      %v1578 = vld [vmem:[%s3 + $0x64] sm:$0xf]
      %v1579 = vld [vmem:[%s3 + $0x68] sm:$0xf]
      %v1580 = vld [vmem:[%s3 + $0x6c] sm:$0xf]
      %v1581 = vld [vmem:[%s3 + $0x70] sm:$0xf]
      %v1582 = vld [vmem:[%s3 + $0x74] sm:$0xf]
      %v1583 = vld [vmem:[%s3 + $0x78] sm:$0xf]
      %v1584 = vld [vmem:[%s3 + $0x7c] sm:$0xf]
      %v1585 = vld [vmem:[%s3 + $0x80] sm:$0xf]
      %v1586 = vld [vmem:[%s3 + $0x84] sm:$0xf]
      %v1587 = vld [vmem:[%s3 + $0x88] sm:$0xf]
      %v1588 = vld [vmem:[%s3 + $0x8c] sm:$0xf]
      %v1589 = vld [vmem:[%s3 + $0x90] sm:$0xf]
      %v1590 = vld [vmem:[%s3 + $0x94] sm:$0xf]
      %v1591 = vld [vmem:[%s3 + $0x98] sm:$0xf]
      %v1592 = vld [vmem:[%s3 + $0x9c] sm:$0xf]
      %v1593 = vld [vmem:[%s3 + $0xa0] sm:$0xf]
      %v1594 = vld [vmem:[%s3 + $0xa4] sm:$0xf]
      %v1595 = vld [vmem:[%s3 + $0xa8] sm:$0xf]
      %v1596 = vld [vmem:[%s3 + $0xac] sm:$0xf]
      %v1597 = vld [vmem:[%s3 + $0xb0] sm:$0xf]
      %v1598 = vld [vmem:[%s3 + $0xb4] sm:$0xf]
      %v1599 = vld [vmem:[%s3 + $0xb8] sm:$0xf]
      %v1600 = vld [vmem:[%s3 + $0xbc] sm:$0xf]
      %s1601 = sadd.s32 %s1083, 1
      %s1602 = smul.u32 %s1601, 3
      %s1603 = smul.addr %s1602, 4
      %s1604 = scalar_lea.vmem [#allocation3], %s1603
      %v1605 = vld [vmem:[%s1604] sm:$0xf]
      %v1606 = vld [vmem:[%s1604 + $0x4] sm:$0xf]
      %v1607 = vld [vmem:[%s1604 + $0x8] sm:$0x1]
      %v1608 = vld [vmem:[%s1604 + $0xc] sm:$0xf]
      %v1609 = vld [vmem:[%s1604 + $0x10] sm:$0xf]
      %v1610 = vld [vmem:[%s1604 + $0x14] sm:$0x1]
      %v1611 = vld [vmem:[%s1604 + $0x18] sm:$0xf]
      %v1612 = vld [vmem:[%s1604 + $0x1c] sm:$0xf]
      %v1613 = vld [vmem:[%s1604 + $0x20] sm:$0x1]
      %v1614 = vld [vmem:[%s1604 + $0x24] sm:$0xf]
      %v1615 = vld [vmem:[%s1604 + $0x28] sm:$0xf]
      %v1616 = vld [vmem:[%s1604 + $0x2c] sm:$0x1]
      %v1617 = vld [vmem:[%s1604 + $0x30] sm:$0xf]
      %v1618 = vld [vmem:[%s1604 + $0x34] sm:$0xf]
      %v1619 = vld [vmem:[%s1604 + $0x38] sm:$0x1]
      %v1620 = vld [vmem:[%s1604 + $0x3c] sm:$0xf]
      %v1621 = vld [vmem:[%s1604 + $0x40] sm:$0xf]
      %v1622 = vld [vmem:[%s1604 + $0x44] sm:$0x1]
      %v1623 = vld [vmem:[%s1604 + $0x48] sm:$0xf]
      %v1624 = vld [vmem:[%s1604 + $0x4c] sm:$0xf]
      %v1625 = vld [vmem:[%s1604 + $0x50] sm:$0x1]
      %v1626 = vld [vmem:[%s1604 + $0x54] sm:$0xf]
      %v1627 = vld [vmem:[%s1604 + $0x58] sm:$0xf]
      %v1628 = vld [vmem:[%s1604 + $0x5c] sm:$0x1]
      %v1629 = vld [vmem:[%s1604 + $0x60] sm:$0xf]
      %v1630 = vld [vmem:[%s1604 + $0x64] sm:$0xf]
      %v1631 = vld [vmem:[%s1604 + $0x68] sm:$0x1]
      %v1632 = vld [vmem:[%s1604 + $0x6c] sm:$0xf]
      %v1633 = vld [vmem:[%s1604 + $0x70] sm:$0xf]
      %v1634 = vld [vmem:[%s1604 + $0x74] sm:$0x1]
      %v1635 = vld [vmem:[%s1604 + $0x78] sm:$0xf]
      %v1636 = vld [vmem:[%s1604 + $0x7c] sm:$0xf]
      %v1637 = vld [vmem:[%s1604 + $0x80] sm:$0x1]
      %v1638 = vld [vmem:[%s1604 + $0x84] sm:$0xf]
      %v1639 = vld [vmem:[%s1604 + $0x88] sm:$0xf]
      %v1640 = vld [vmem:[%s1604 + $0x8c] sm:$0x1]
      %v1641 = vld [vmem:[%s1604 + $0x90] sm:$0xf]
      %v1642 = vld [vmem:[%s1604 + $0x94] sm:$0xf]
      %v1643 = vld [vmem:[%s1604 + $0x98] sm:$0x1]
      %v1644 = vld [vmem:[%s1604 + $0x9c] sm:$0xf]
      %v1645 = vld [vmem:[%s1604 + $0xa0] sm:$0xf]
      %v1646 = vld [vmem:[%s1604 + $0xa4] sm:$0x1]
      %v1647 = vld [vmem:[%s1604 + $0xa8] sm:$0xf]
      %v1648 = vld [vmem:[%s1604 + $0xac] sm:$0xf]
      %v1649 = vld [vmem:[%s1604 + $0xb0] sm:$0x1]
      %v1650 = vld [vmem:[%s1604 + $0xb4] sm:$0xf]
      %v1651 = vld [vmem:[%s1604 + $0xb8] sm:$0xf]
      %v1652 = vld [vmem:[%s1604 + $0xbc] sm:$0x1]
      %v1685 = vunpack.c.l.b16 %v1605
      %v1686 = vunpack.c.l.b16 %v1606
      %v1687 = vunpack.c.l.b16 %v1608
      %v1688 = vunpack.c.l.b16 %v1609
      %v1689 = vunpack.c.l.b16 %v1611
      %v1690 = vunpack.c.l.b16 %v1612
      %v1691 = vunpack.c.l.b16 %v1614
      %v1692 = vunpack.c.l.b16 %v1615
      %v1693 = vunpack.c.l.b16 %v1617
      %v1694 = vunpack.c.l.b16 %v1618
      %v1695 = vunpack.c.l.b16 %v1620
      %v1696 = vunpack.c.l.b16 %v1621
      %v1697 = vunpack.c.l.b16 %v1623
      %v1698 = vunpack.c.l.b16 %v1624
      %v1699 = vunpack.c.l.b16 %v1626
      %v1700 = vunpack.c.l.b16 %v1627
      %v1701 = vunpack.c.l.b16 %v1629
      %v1702 = vunpack.c.l.b16 %v1630
      %v1703 = vunpack.c.l.b16 %v1632
      %v1704 = vunpack.c.l.b16 %v1633
      %v1705 = vunpack.c.l.b16 %v1635
      %v1706 = vunpack.c.l.b16 %v1636
      %v1707 = vunpack.c.l.b16 %v1638
      %v1708 = vunpack.c.l.b16 %v1639
      %v1709 = vunpack.c.l.b16 %v1641
      %v1710 = vunpack.c.l.b16 %v1642
      %v1711 = vunpack.c.l.b16 %v1644
      %v1712 = vunpack.c.l.b16 %v1645
      %v1713 = vunpack.c.l.b16 %v1647
      %v1714 = vunpack.c.l.b16 %v1648
      %v1715 = vunpack.c.l.b16 %v1650
      %v1716 = vunpack.c.l.b16 %v1651
      %v1717 = vpack.c.b16 %v1686, %v1685
      %v1718 = vpack.c.b16 %v1688, %v1687
      %v1719 = vpack.c.b16 %v1690, %v1689
      %v1720 = vpack.c.b16 %v1692, %v1691
      %v1721 = vpack.c.b16 %v1694, %v1693
      %v1722 = vpack.c.b16 %v1696, %v1695
      %v1723 = vpack.c.b16 %v1698, %v1697
      %v1724 = vpack.c.b16 %v1700, %v1699
      %v1725 = vpack.c.b16 %v1702, %v1701
      %v1726 = vpack.c.b16 %v1704, %v1703
      %v1727 = vpack.c.b16 %v1706, %v1705
      %v1728 = vpack.c.b16 %v1708, %v1707
      %v1729 = vpack.c.b16 %v1710, %v1709
      %v1730 = vpack.c.b16 %v1712, %v1711
      %v1731 = vpack.c.b16 %v1714, %v1713
      %v1732 = vpack.c.b16 %v1716, %v1715
      %v1765 = vunpack.c.l.b16 %v1607
      %v1766 = vunpack.c.l.b16 %v1610
      %v1767 = vunpack.c.l.b16 %v1613
      %v1768 = vunpack.c.l.b16 %v1616
      %v1769 = vunpack.c.l.b16 %v1619
      %v1770 = vunpack.c.l.b16 %v1622
      %v1771 = vunpack.c.l.b16 %v1625
      %v1772 = vunpack.c.l.b16 %v1628
      %v1773 = vunpack.c.l.b16 %v1631
      %v1774 = vunpack.c.l.b16 %v1634
      %v1775 = vunpack.c.l.b16 %v1637
      %v1776 = vunpack.c.l.b16 %v1640
      %v1777 = vunpack.c.l.b16 %v1643
      %v1778 = vunpack.c.l.b16 %v1646
      %v1779 = vunpack.c.l.b16 %v1649
      %v1780 = vunpack.c.l.b16 %v1652
      %v1781 = vpack.c.b16 %v1765, %v1765
      %v1782 = vpack.c.b16 %v1766, %v1766
      %v1783 = vpack.c.b16 %v1767, %v1767
      %v1784 = vpack.c.b16 %v1768, %v1768
      %v1785 = vpack.c.b16 %v1769, %v1769
      %v1786 = vpack.c.b16 %v1770, %v1770
      %v1787 = vpack.c.b16 %v1771, %v1771
      %v1788 = vpack.c.b16 %v1772, %v1772
      %v1789 = vpack.c.b16 %v1773, %v1773
      %v1790 = vpack.c.b16 %v1774, %v1774
      %v1791 = vpack.c.b16 %v1775, %v1775
      %v1792 = vpack.c.b16 %v1776, %v1776
      %v1793 = vpack.c.b16 %v1777, %v1777
      %v1794 = vpack.c.b16 %v1778, %v1778
      %v1795 = vpack.c.b16 %v1779, %v1779
      %v1796 = vpack.c.b16 %v1780, %v1780
      %v1798 = vshrl.u32 %v1717, 16
      %v1800 = vshll.u32 %v1717, 16
      %v1802 = vrot.slane %v1800, 1
      %v1803 = vor.u32 %v1798, %v1802
      %v1805 = vshll.u32 %v1781, 16
      %v1807 = vrot.slane %v1805, 1
      %v1808 = vsel %vm1279, %v1803, %v1807
      %v1810 = vshrl.u32 %v1718, 16
      %v1812 = vshll.u32 %v1718, 16
      %v1814 = vrot.slane %v1812, 1
      %v1815 = vor.u32 %v1810, %v1814
      %v1817 = vshll.u32 %v1782, 16
      %v1819 = vrot.slane %v1817, 1
      %v1820 = vsel %vm1279, %v1815, %v1819
      %v1822 = vshrl.u32 %v1719, 16
      %v1824 = vshll.u32 %v1719, 16
      %v1826 = vrot.slane %v1824, 1
      %v1827 = vor.u32 %v1822, %v1826
      %v1829 = vshll.u32 %v1783, 16
      %v1831 = vrot.slane %v1829, 1
      %v1832 = vsel %vm1279, %v1827, %v1831
      %v1834 = vshrl.u32 %v1720, 16
      %v1836 = vshll.u32 %v1720, 16
      %v1838 = vrot.slane %v1836, 1
      %v1839 = vor.u32 %v1834, %v1838
      %v1841 = vshll.u32 %v1784, 16
      %v1843 = vrot.slane %v1841, 1
      %v1844 = vsel %vm1279, %v1839, %v1843
      %v1846 = vshrl.u32 %v1721, 16
      %v1848 = vshll.u32 %v1721, 16
      %v1850 = vrot.slane %v1848, 1
      %v1851 = vor.u32 %v1846, %v1850
      %v1853 = vshll.u32 %v1785, 16
      %v1855 = vrot.slane %v1853, 1
      %v1856 = vsel %vm1279, %v1851, %v1855
      %v1858 = vshrl.u32 %v1722, 16
      %v1860 = vshll.u32 %v1722, 16
      %v1862 = vrot.slane %v1860, 1
      %v1863 = vor.u32 %v1858, %v1862
      %v1865 = vshll.u32 %v1786, 16
      %v1867 = vrot.slane %v1865, 1
      %v1868 = vsel %vm1279, %v1863, %v1867
      %v1870 = vshrl.u32 %v1723, 16
      %v1872 = vshll.u32 %v1723, 16
      %v1874 = vrot.slane %v1872, 1
      %v1875 = vor.u32 %v1870, %v1874
      %v1877 = vshll.u32 %v1787, 16
      %v1879 = vrot.slane %v1877, 1
      %v1880 = vsel %vm1279, %v1875, %v1879
      %v1882 = vshrl.u32 %v1724, 16
      %v1884 = vshll.u32 %v1724, 16
      %v1886 = vrot.slane %v1884, 1
      %v1887 = vor.u32 %v1882, %v1886
      %v1889 = vshll.u32 %v1788, 16
      %v1891 = vrot.slane %v1889, 1
      %v1892 = vsel %vm1279, %v1887, %v1891
      %v1894 = vshrl.u32 %v1725, 16
      %v1896 = vshll.u32 %v1725, 16
      %v1898 = vrot.slane %v1896, 1
      %v1899 = vor.u32 %v1894, %v1898
      %v1901 = vshll.u32 %v1789, 16
      %v1903 = vrot.slane %v1901, 1
      %v1904 = vsel %vm1279, %v1899, %v1903
      %v1906 = vshrl.u32 %v1726, 16
      %v1908 = vshll.u32 %v1726, 16
      %v1910 = vrot.slane %v1908, 1
      %v1911 = vor.u32 %v1906, %v1910
      %v1913 = vshll.u32 %v1790, 16
      %v1915 = vrot.slane %v1913, 1
      %v1916 = vsel %vm1279, %v1911, %v1915
      %v1918 = vshrl.u32 %v1727, 16
      %v1920 = vshll.u32 %v1727, 16
      %v1922 = vrot.slane %v1920, 1
      %v1923 = vor.u32 %v1918, %v1922
      %v1925 = vshll.u32 %v1791, 16
      %v1927 = vrot.slane %v1925, 1
      %v1928 = vsel %vm1279, %v1923, %v1927
      %v1930 = vshrl.u32 %v1728, 16
      %v1932 = vshll.u32 %v1728, 16
      %v1934 = vrot.slane %v1932, 1
      %v1935 = vor.u32 %v1930, %v1934
      %v1937 = vshll.u32 %v1792, 16
      %v1939 = vrot.slane %v1937, 1
      %v1940 = vsel %vm1279, %v1935, %v1939
      %v1942 = vshrl.u32 %v1729, 16
      %v1944 = vshll.u32 %v1729, 16
      %v1946 = vrot.slane %v1944, 1
      %v1947 = vor.u32 %v1942, %v1946
      %v1949 = vshll.u32 %v1793, 16
      %v1951 = vrot.slane %v1949, 1
      %v1952 = vsel %vm1279, %v1947, %v1951
      %v1954 = vshrl.u32 %v1730, 16
      %v1956 = vshll.u32 %v1730, 16
      %v1958 = vrot.slane %v1956, 1
      %v1959 = vor.u32 %v1954, %v1958
      %v1961 = vshll.u32 %v1794, 16
      %v1963 = vrot.slane %v1961, 1
      %v1964 = vsel %vm1279, %v1959, %v1963
      %v1966 = vshrl.u32 %v1731, 16
      %v1968 = vshll.u32 %v1731, 16
      %v1970 = vrot.slane %v1968, 1
      %v1971 = vor.u32 %v1966, %v1970
      %v1973 = vshll.u32 %v1795, 16
      %v1975 = vrot.slane %v1973, 1
      %v1976 = vsel %vm1279, %v1971, %v1975
      %v1978 = vshrl.u32 %v1732, 16
      %v1980 = vshll.u32 %v1732, 16
      %v1982 = vrot.slane %v1980, 1
      %v1983 = vor.u32 %v1978, %v1982
      %v1985 = vshll.u32 %v1796, 16
      %v1987 = vrot.slane %v1985, 1
      %v1988 = vsel %vm1279, %v1983, %v1987
      %v2005 = vrot.slane %v1717, 1
      %v2006 = vrot.slane %v1781, 1
      %v2007 = vsel %vm1488, %v2005, %v2006
      %v2008 = vrot.slane %v1718, 1
      %v2009 = vrot.slane %v1782, 1
      %v2010 = vsel %vm1488, %v2008, %v2009
      %v2011 = vrot.slane %v1719, 1
      %v2012 = vrot.slane %v1783, 1
      %v2013 = vsel %vm1488, %v2011, %v2012
      %v2014 = vrot.slane %v1720, 1
      %v2015 = vrot.slane %v1784, 1
      %v2016 = vsel %vm1488, %v2014, %v2015
      %v2017 = vrot.slane %v1721, 1
      %v2018 = vrot.slane %v1785, 1
      %v2019 = vsel %vm1488, %v2017, %v2018
      %v2020 = vrot.slane %v1722, 1
      %v2021 = vrot.slane %v1786, 1
      %v2022 = vsel %vm1488, %v2020, %v2021
      %v2023 = vrot.slane %v1723, 1
      %v2024 = vrot.slane %v1787, 1
      %v2025 = vsel %vm1488, %v2023, %v2024
      %v2026 = vrot.slane %v1724, 1
      %v2027 = vrot.slane %v1788, 1
      %v2028 = vsel %vm1488, %v2026, %v2027
      %v2029 = vrot.slane %v1725, 1
      %v2030 = vrot.slane %v1789, 1
      %v2031 = vsel %vm1488, %v2029, %v2030
      %v2032 = vrot.slane %v1726, 1
      %v2033 = vrot.slane %v1790, 1
      %v2034 = vsel %vm1488, %v2032, %v2033
      %v2035 = vrot.slane %v1727, 1
      %v2036 = vrot.slane %v1791, 1
      %v2037 = vsel %vm1488, %v2035, %v2036
      %v2038 = vrot.slane %v1728, 1
      %v2039 = vrot.slane %v1792, 1
      %v2040 = vsel %vm1488, %v2038, %v2039
      %v2041 = vrot.slane %v1729, 1
      %v2042 = vrot.slane %v1793, 1
      %v2043 = vsel %vm1488, %v2041, %v2042
      %v2044 = vrot.slane %v1730, 1
      %v2045 = vrot.slane %v1794, 1
      %v2046 = vsel %vm1488, %v2044, %v2045
      %v2047 = vrot.slane %v1731, 1
      %v2048 = vrot.slane %v1795, 1
      %v2049 = vsel %vm1488, %v2047, %v2048
      %v2050 = vrot.slane %v1732, 1
      %v2051 = vrot.slane %v1796, 1
      %v2052 = vsel %vm1488, %v2050, %v2051
      %s2069 = scalar_lea.vmem %s3, 192
      %v2070 = vld [vmem:[%s2069] sm:$0xf]
      %v2071 = vld [vmem:[%s2069 + $0x4] sm:$0xf]
      %v2072 = vld [vmem:[%s2069 + $0x8] sm:$0xf]
      %v2073 = vld [vmem:[%s2069 + $0xc] sm:$0xf]
      %v2074 = vld [vmem:[%s2069 + $0x10] sm:$0xf]
      %v2075 = vld [vmem:[%s2069 + $0x14] sm:$0xf]
      %v2076 = vld [vmem:[%s2069 + $0x18] sm:$0xf]
      %v2077 = vld [vmem:[%s2069 + $0x1c] sm:$0xf]
      %v2078 = vld [vmem:[%s2069 + $0x20] sm:$0xf]
      %v2079 = vld [vmem:[%s2069 + $0x24] sm:$0xf]
      %v2080 = vld [vmem:[%s2069 + $0x28] sm:$0xf]
      %v2081 = vld [vmem:[%s2069 + $0x2c] sm:$0xf]
      %v2082 = vld [vmem:[%s2069 + $0x30] sm:$0xf]
      %v2083 = vld [vmem:[%s2069 + $0x34] sm:$0xf]
      %v2084 = vld [vmem:[%s2069 + $0x38] sm:$0xf]
      %v2085 = vld [vmem:[%s2069 + $0x3c] sm:$0xf]
      %v2086 = vld [vmem:[%s2069 + $0x40] sm:$0xf]
      %v2087 = vld [vmem:[%s2069 + $0x44] sm:$0xf]
      %v2088 = vld [vmem:[%s2069 + $0x48] sm:$0xf]
      %v2089 = vld [vmem:[%s2069 + $0x4c] sm:$0xf]
      %v2090 = vld [vmem:[%s2069 + $0x50] sm:$0xf]
      %v2091 = vld [vmem:[%s2069 + $0x54] sm:$0xf]
      %v2092 = vld [vmem:[%s2069 + $0x58] sm:$0xf]
      %v2093 = vld [vmem:[%s2069 + $0x5c] sm:$0xf]
      %v2094 = vld [vmem:[%s2069 + $0x60] sm:$0xf]
      %v2095 = vld [vmem:[%s2069 + $0x64] sm:$0xf]
      %v2096 = vld [vmem:[%s2069 + $0x68] sm:$0xf]
      %v2097 = vld [vmem:[%s2069 + $0x6c] sm:$0xf]
      %v2098 = vld [vmem:[%s2069 + $0x70] sm:$0xf]
      %v2099 = vld [vmem:[%s2069 + $0x74] sm:$0xf]
      %v2100 = vld [vmem:[%s2069 + $0x78] sm:$0xf]
      %v2101 = vld [vmem:[%s2069 + $0x7c] sm:$0xf]
      %v2102 = vld [vmem:[%s2069 + $0x80] sm:$0xf]
      %v2103 = vld [vmem:[%s2069 + $0x84] sm:$0xf]
      %v2104 = vld [vmem:[%s2069 + $0x88] sm:$0xf]
      %v2105 = vld [vmem:[%s2069 + $0x8c] sm:$0xf]
      %v2106 = vld [vmem:[%s2069 + $0x90] sm:$0xf]
      %v2107 = vld [vmem:[%s2069 + $0x94] sm:$0xf]
      %v2108 = vld [vmem:[%s2069 + $0x98] sm:$0xf]
      %v2109 = vld [vmem:[%s2069 + $0x9c] sm:$0xf]
      %v2110 = vld [vmem:[%s2069 + $0xa0] sm:$0xf]
      %v2111 = vld [vmem:[%s2069 + $0xa4] sm:$0xf]
      %v2112 = vld [vmem:[%s2069 + $0xa8] sm:$0xf]
      %v2113 = vld [vmem:[%s2069 + $0xac] sm:$0xf]
      %v2114 = vld [vmem:[%s2069 + $0xb0] sm:$0xf]
      %v2115 = vld [vmem:[%s2069 + $0xb4] sm:$0xf]
      %v2116 = vld [vmem:[%s2069 + $0xb8] sm:$0xf]
      %v2117 = vld [vmem:[%s2069 + $0xbc] sm:$0xf]
      %v2166 = vunpack.c.l.b16 %v2070
      %v2167 = vunpack.c.l.b16 %v2071
      %v2168 = vunpack.c.l.b16 %v2072
      %v2169 = vunpack.c.l.b16 %v2073
      %v2170 = vunpack.c.l.b16 %v2074
      %v2171 = vunpack.c.l.b16 %v2075
      %v2172 = vunpack.c.l.b16 %v2076
      %v2173 = vunpack.c.l.b16 %v2077
      %v2174 = vunpack.c.l.b16 %v2078
      %v2175 = vunpack.c.l.b16 %v2079
      %v2176 = vunpack.c.l.b16 %v2080
      %v2177 = vunpack.c.l.b16 %v2081
      %v2178 = vunpack.c.l.b16 %v2082
      %v2179 = vunpack.c.l.b16 %v2083
      %v2180 = vunpack.c.l.b16 %v2084
      %v2181 = vunpack.c.l.b16 %v2085
      %v2182 = vunpack.c.l.b16 %v2086
      %v2183 = vunpack.c.l.b16 %v2087
      %v2184 = vunpack.c.l.b16 %v2088
      %v2185 = vunpack.c.l.b16 %v2089
      %v2186 = vunpack.c.l.b16 %v2090
      %v2187 = vunpack.c.l.b16 %v2091
      %v2188 = vunpack.c.l.b16 %v2092
      %v2189 = vunpack.c.l.b16 %v2093
      %v2190 = vunpack.c.l.b16 %v2094
      %v2191 = vunpack.c.l.b16 %v2095
      %v2192 = vunpack.c.l.b16 %v2096
      %v2193 = vunpack.c.l.b16 %v2097
      %v2194 = vunpack.c.l.b16 %v2098
      %v2195 = vunpack.c.l.b16 %v2099
      %v2196 = vunpack.c.l.b16 %v2100
      %v2197 = vunpack.c.l.b16 %v2101
      %v2198 = vunpack.c.l.b16 %v2102
      %v2199 = vunpack.c.l.b16 %v2103
      %v2200 = vunpack.c.l.b16 %v2104
      %v2201 = vunpack.c.l.b16 %v2105
      %v2202 = vunpack.c.l.b16 %v2106
      %v2203 = vunpack.c.l.b16 %v2107
      %v2204 = vunpack.c.l.b16 %v2108
      %v2205 = vunpack.c.l.b16 %v2109
      %v2206 = vunpack.c.l.b16 %v2110
      %v2207 = vunpack.c.l.b16 %v2111
      %v2208 = vunpack.c.l.b16 %v2112
      %v2209 = vunpack.c.l.b16 %v2113
      %v2210 = vunpack.c.l.b16 %v2114
      %v2211 = vunpack.c.l.b16 %v2115
      %v2212 = vunpack.c.l.b16 %v2116
      %v2213 = vunpack.c.l.b16 %v2117
      %v2214 = vpack.c.b16 %v2167, %v2166
      %v2215 = vpack.c.b16 %v2169, %v2168
      %v2216 = vpack.c.b16 %v2171, %v2170
      %v2217 = vpack.c.b16 %v2173, %v2172
      %v2218 = vpack.c.b16 %v2175, %v2174
      %v2219 = vpack.c.b16 %v2177, %v2176
      %v2220 = vpack.c.b16 %v2179, %v2178
      %v2221 = vpack.c.b16 %v2181, %v2180
      %v2222 = vpack.c.b16 %v2183, %v2182
      %v2223 = vpack.c.b16 %v2185, %v2184
      %v2224 = vpack.c.b16 %v2187, %v2186
      %v2225 = vpack.c.b16 %v2189, %v2188
      %v2226 = vpack.c.b16 %v2191, %v2190
      %v2227 = vpack.c.b16 %v2193, %v2192
      %v2228 = vpack.c.b16 %v2195, %v2194
      %v2229 = vpack.c.b16 %v2197, %v2196
      %v2230 = vpack.c.b16 %v2199, %v2198
      %v2231 = vpack.c.b16 %v2201, %v2200
      %v2232 = vpack.c.b16 %v2203, %v2202
      %v2233 = vpack.c.b16 %v2205, %v2204
      %v2234 = vpack.c.b16 %v2207, %v2206
      %v2235 = vpack.c.b16 %v2209, %v2208
      %v2236 = vpack.c.b16 %v2211, %v2210
      %v2237 = vpack.c.b16 %v2213, %v2212
      %2262 = vmatprep.subr.bf16.mxu0 0
      %2263 = vmatpush1.bf16.msra.mxu0 %v2221
      %2264 = vmatprep.subr.bf16.mxu0 0
      %2265 = vmatpush1.bf16.msra.mxu0 %v2220
      %2266 = vmatprep.subr.bf16.mxu0 0
      %2267 = vmatpush1.bf16.msra.mxu0 %v2219
      %2268 = vmatprep.subr.bf16.mxu0 0
      %2269 = vmatpush1.bf16.msra.mxu0 %v2218
      %2270 = vmatprep.subr.bf16.mxu0 0
      %2271 = vmatpush1.bf16.msra.mxu0 %v2217
      %2272 = vmatprep.subr.bf16.mxu0 0
      %2273 = vmatpush1.bf16.msra.mxu0 %v2216
      %2274 = vmatprep.subr.bf16.mxu0 0
      %2275 = vmatpush1.bf16.msra.mxu0 %v2215
      %2276 = vmatprep.subr.bf16.mxu0 0
      %2277 = vmatpush1.bf16.msra.mxu0 %v2214
      %2278 = vmatprep.subr.bf16.mxu0 0
      %2279 = vmatpush2.bf16.msra.mxu0 %v2229
      %2280 = vmatprep.subr.bf16.mxu0 0
      %2281 = vmatpush2.bf16.msra.mxu0 %v2228
      %2282 = vmatprep.subr.bf16.mxu0 0
      %2283 = vmatpush2.bf16.msra.mxu0 %v2227
      %2284 = vmatprep.subr.bf16.mxu0 0
      %2285 = vmatpush2.bf16.msra.mxu0 %v2226
      %2286 = vmatprep.subr.bf16.mxu0 0
      %2287 = vmatpush2.bf16.msra.mxu0 %v2225
      %2288 = vmatprep.subr.bf16.mxu0 0
      %2289 = vmatpush2.bf16.msra.mxu0 %v2224
      %2290 = vmatprep.subr.bf16.mxu0 0
      %2291 = vmatpush2.bf16.msra.mxu0 %v2223
      %2292 = vmatprep.subr.bf16.mxu0 0
      %2293 = vmatpush2.bf16.msra.mxu0 %v2222
      %2294 = vmatprep.mubr.bf16.mxu0 %v1808
      %2295 = vmatmul.mubr.bf16.gmra.mxu0 %v1717
      %v2296 = vpop.f32.mrf.mxu0
      %v2297 = vadd.f32 0.0, %v2296
      %v2298 = vpop.f32.mrf.mxu0
      %v2299 = vpop.f32.mrf.mxu0
      %v2300 = vadd.f32 0.0, %v2299
      %v2301 = vpop.f32.mrf.mxu0
      %2302 = vmatprep.mubr.bf16.mxu0 %v1820
      %2303 = vmatmul.mubr.bf16.gmra.mxu0 %v1718
      %v2304 = vpop.f32.mrf.mxu0
      %v2305 = vadd.f32 0.0, %v2304
      %v2306 = vpop.f32.mrf.mxu0
      %v2307 = vpop.f32.mrf.mxu0
      %v2308 = vadd.f32 0.0, %v2307
      %v2309 = vpop.f32.mrf.mxu0
      %2310 = vmatprep.mubr.bf16.mxu0 %v1832
      %2311 = vmatmul.mubr.bf16.gmra.mxu0 %v1719
      %v2312 = vpop.f32.mrf.mxu0
      %v2313 = vadd.f32 0.0, %v2312
      %v2314 = vpop.f32.mrf.mxu0
      %v2315 = vpop.f32.mrf.mxu0
      %v2316 = vadd.f32 0.0, %v2315
      %v2317 = vpop.f32.mrf.mxu0
      %2318 = vmatprep.mubr.bf16.mxu0 %v1844
      %2319 = vmatmul.mubr.bf16.gmra.mxu0 %v1720
      %v2320 = vpop.f32.mrf.mxu0
      %v2321 = vadd.f32 0.0, %v2320
      %v2322 = vpop.f32.mrf.mxu0
      %v2323 = vpop.f32.mrf.mxu0
      %v2324 = vadd.f32 0.0, %v2323
      %v2325 = vpop.f32.mrf.mxu0
      %2326 = vmatprep.mubr.bf16.mxu0 %v1856
      %2327 = vmatmul.mubr.bf16.gmra.mxu0 %v1721
      %v2328 = vpop.f32.mrf.mxu0
      %v2329 = vadd.f32 0.0, %v2328
      %v2330 = vpop.f32.mrf.mxu0
      %v2331 = vpop.f32.mrf.mxu0
      %v2332 = vadd.f32 0.0, %v2331
      %v2333 = vpop.f32.mrf.mxu0
      %2334 = vmatprep.mubr.bf16.mxu0 %v1868
      %2335 = vmatmul.mubr.bf16.gmra.mxu0 %v1722
      %v2336 = vpop.f32.mrf.mxu0
      %v2337 = vadd.f32 0.0, %v2336
      %v2338 = vpop.f32.mrf.mxu0
      %v2339 = vpop.f32.mrf.mxu0
      %v2340 = vadd.f32 0.0, %v2339
      %v2341 = vpop.f32.mrf.mxu0
      %2342 = vmatprep.mubr.bf16.mxu0 %v1880
      %2343 = vmatmul.mubr.bf16.gmra.mxu0 %v1723
      %v2344 = vpop.f32.mrf.mxu0
      %v2345 = vadd.f32 0.0, %v2344
      %v2346 = vpop.f32.mrf.mxu0
      %v2347 = vpop.f32.mrf.mxu0
      %v2348 = vadd.f32 0.0, %v2347
      %v2349 = vpop.f32.mrf.mxu0
      %2350 = vmatprep.mubr.bf16.mxu0 %v1892
      %2351 = vmatmul.mubr.bf16.gmra.mxu0 %v1724
      %v2352 = vpop.f32.mrf.mxu0
      %v2353 = vadd.f32 0.0, %v2352
      %v2354 = vpop.f32.mrf.mxu0
      %v2355 = vpop.f32.mrf.mxu0
      %v2356 = vadd.f32 0.0, %v2355
      %v2357 = vpop.f32.mrf.mxu0
      %2358 = vmatprep.mubr.bf16.mxu0 %v1904
      %2359 = vmatmul.mubr.bf16.gmra.mxu0 %v1725
      %v2360 = vpop.f32.mrf.mxu0
      %v2361 = vadd.f32 0.0, %v2360
      %v2362 = vpop.f32.mrf.mxu0
      %v2363 = vpop.f32.mrf.mxu0
      %v2364 = vadd.f32 0.0, %v2363
      %v2365 = vpop.f32.mrf.mxu0
      %2366 = vmatprep.mubr.bf16.mxu0 %v1916
      %2367 = vmatmul.mubr.bf16.gmra.mxu0 %v1726
      %v2368 = vpop.f32.mrf.mxu0
      %v2369 = vadd.f32 0.0, %v2368
      %v2370 = vpop.f32.mrf.mxu0
      %v2371 = vpop.f32.mrf.mxu0
      %v2372 = vadd.f32 0.0, %v2371
      %v2373 = vpop.f32.mrf.mxu0
      %2374 = vmatprep.mubr.bf16.mxu0 %v1928
      %2375 = vmatmul.mubr.bf16.gmra.mxu0 %v1727
      %v2376 = vpop.f32.mrf.mxu0
      %v2377 = vadd.f32 0.0, %v2376
      %v2378 = vpop.f32.mrf.mxu0
      %v2379 = vpop.f32.mrf.mxu0
      %v2380 = vadd.f32 0.0, %v2379
      %v2381 = vpop.f32.mrf.mxu0
      %2382 = vmatprep.mubr.bf16.mxu0 %v1940
      %2383 = vmatmul.mubr.bf16.gmra.mxu0 %v1728
      %v2384 = vpop.f32.mrf.mxu0
      %v2385 = vadd.f32 0.0, %v2384
      %v2386 = vpop.f32.mrf.mxu0
      %v2387 = vpop.f32.mrf.mxu0
      %v2388 = vadd.f32 0.0, %v2387
      %v2389 = vpop.f32.mrf.mxu0
      %2390 = vmatprep.mubr.bf16.mxu0 %v1952
      %2391 = vmatmul.mubr.bf16.gmra.mxu0 %v1729
      %v2392 = vpop.f32.mrf.mxu0
      %v2393 = vadd.f32 0.0, %v2392
      %v2394 = vpop.f32.mrf.mxu0
      %v2395 = vpop.f32.mrf.mxu0
      %v2396 = vadd.f32 0.0, %v2395
      %v2397 = vpop.f32.mrf.mxu0
      %2398 = vmatprep.mubr.bf16.mxu0 %v1964
      %2399 = vmatmul.mubr.bf16.gmra.mxu0 %v1730
      %v2400 = vpop.f32.mrf.mxu0
      %v2401 = vadd.f32 0.0, %v2400
      %v2402 = vpop.f32.mrf.mxu0
      %v2403 = vpop.f32.mrf.mxu0
      %v2404 = vadd.f32 0.0, %v2403
      %v2405 = vpop.f32.mrf.mxu0
      %2406 = vmatprep.mubr.bf16.mxu0 %v1976
      %2407 = vmatmul.mubr.bf16.gmra.mxu0 %v1731
      %v2408 = vpop.f32.mrf.mxu0
      %v2409 = vadd.f32 0.0, %v2408
      %v2410 = vpop.f32.mrf.mxu0
      %v2411 = vpop.f32.mrf.mxu0
      %v2412 = vadd.f32 0.0, %v2411
      %v2413 = vpop.f32.mrf.mxu0
      %2414 = vmatprep.mubr.bf16.mxu0 %v1988
      %2415 = vmatmul.mubr.bf16.gmra.mxu0 %v1732
      %v2416 = vpop.f32.mrf.mxu0
      %v2417 = vadd.f32 0.0, %v2416
      %v2418 = vpop.f32.mrf.mxu0
      %v2419 = vpop.f32.mrf.mxu0
      %v2420 = vadd.f32 0.0, %v2419
      %v2421 = vpop.f32.mrf.mxu0
      %2422 = vdwg.mxu0
      %2423 = vmatprep.subr.bf16.mxu0 0
      %2424 = vmatpush1.bf16.msra.mxu0 %v2237
      %2425 = vmatprep.subr.bf16.mxu0 0
      %2426 = vmatpush1.bf16.msra.mxu0 %v2236
      %2427 = vmatprep.subr.bf16.mxu0 0
      %2428 = vmatpush1.bf16.msra.mxu0 %v2235
      %2429 = vmatprep.subr.bf16.mxu0 0
      %2430 = vmatpush1.bf16.msra.mxu0 %v2234
      %2431 = vmatprep.subr.bf16.mxu0 0
      %2432 = vmatpush1.bf16.msra.mxu0 %v2233
      %2433 = vmatprep.subr.bf16.mxu0 0
      %2434 = vmatpush1.bf16.msra.mxu0 %v2232
      %2435 = vmatprep.subr.bf16.mxu0 0
      %2436 = vmatpush1.bf16.msra.mxu0 %v2231
      %2437 = vmatprep.subr.bf16.mxu0 0
      %2438 = vmatpush1.bf16.msra.mxu0 %v2230
      %2439 = vmatprep.subr.bf16.mxu0 0
      %2440 = vmatpush2.bf16.msra.mxu0 0
      %2441 = vmatprep.subr.bf16.mxu0 0
      %2442 = vmatpush2.bf16.msra.mxu0 0
      %2443 = vmatprep.subr.bf16.mxu0 0
      %2444 = vmatpush2.bf16.msra.mxu0 0
      %2445 = vmatprep.subr.bf16.mxu0 0
      %2446 = vmatpush2.bf16.msra.mxu0 0
      %2447 = vmatprep.subr.bf16.mxu0 0
      %2448 = vmatpush2.bf16.msra.mxu0 0
      %2449 = vmatprep.subr.bf16.mxu0 0
      %2450 = vmatpush2.bf16.msra.mxu0 0
      %2451 = vmatprep.subr.bf16.mxu0 0
      %2452 = vmatpush2.bf16.msra.mxu0 0
      %2453 = vmatprep.subr.bf16.mxu0 0
      %2454 = vmatpush2.bf16.msra.mxu0 0
      %2455 = vmatprep.mubr.bf16.mxu0 0
      %2456 = vmatmul.mubr.bf16.gmra.mxu0 %v2007
      %v2457 = vpop.f32.mrf.mxu0
      %v2458 = vadd.f32 %v2297, %v2457
      %v2459 = vpop.f32.mrf.mxu0
      %v2460 = vpop.f32.mrf.mxu0
      %v2461 = vadd.f32 %v2300, %v2460
      %v2462 = vpop.f32.mrf.mxu0
      %2463 = vmatprep.mubr.bf16.mxu0 0
      %2464 = vmatmul.mubr.bf16.gmra.mxu0 %v2010
      %v2465 = vpop.f32.mrf.mxu0
      %v2466 = vadd.f32 %v2305, %v2465
      %v2467 = vpop.f32.mrf.mxu0
      %v2468 = vpop.f32.mrf.mxu0
      %v2469 = vadd.f32 %v2308, %v2468
      %v2470 = vpop.f32.mrf.mxu0
      %2471 = vmatprep.mubr.bf16.mxu0 0
      %2472 = vmatmul.mubr.bf16.gmra.mxu0 %v2013
      %v2473 = vpop.f32.mrf.mxu0
      %v2474 = vadd.f32 %v2313, %v2473
      %v2475 = vpop.f32.mrf.mxu0
      %v2476 = vpop.f32.mrf.mxu0
      %v2477 = vadd.f32 %v2316, %v2476
      %v2478 = vpop.f32.mrf.mxu0
      %2479 = vmatprep.mubr.bf16.mxu0 0
      %2480 = vmatmul.mubr.bf16.gmra.mxu0 %v2016
      %v2481 = vpop.f32.mrf.mxu0
      %v2482 = vadd.f32 %v2321, %v2481
      %v2483 = vpop.f32.mrf.mxu0
      %v2484 = vpop.f32.mrf.mxu0
      %v2485 = vadd.f32 %v2324, %v2484
      %v2486 = vpop.f32.mrf.mxu0
      %2487 = vmatprep.mubr.bf16.mxu0 0
      %2488 = vmatmul.mubr.bf16.gmra.mxu0 %v2019
      %v2489 = vpop.f32.mrf.mxu0
      %v2490 = vadd.f32 %v2329, %v2489
      %v2491 = vpop.f32.mrf.mxu0
      %v2492 = vpop.f32.mrf.mxu0
      %v2493 = vadd.f32 %v2332, %v2492
      %v2494 = vpop.f32.mrf.mxu0
      %2495 = vmatprep.mubr.bf16.mxu0 0
      %2496 = vmatmul.mubr.bf16.gmra.mxu0 %v2022
      %v2497 = vpop.f32.mrf.mxu0
      %v2498 = vadd.f32 %v2337, %v2497
      %v2499 = vpop.f32.mrf.mxu0
      %v2500 = vpop.f32.mrf.mxu0
      %v2501 = vadd.f32 %v2340, %v2500
      %v2502 = vpop.f32.mrf.mxu0
      %2503 = vmatprep.mubr.bf16.mxu0 0
      %2504 = vmatmul.mubr.bf16.gmra.mxu0 %v2025
      %v2505 = vpop.f32.mrf.mxu0
      %v2506 = vadd.f32 %v2345, %v2505
      %v2507 = vpop.f32.mrf.mxu0
      %v2508 = vpop.f32.mrf.mxu0
      %v2509 = vadd.f32 %v2348, %v2508
      %v2510 = vpop.f32.mrf.mxu0
      %2511 = vmatprep.mubr.bf16.mxu0 0
      %2512 = vmatmul.mubr.bf16.gmra.mxu0 %v2028
      %v2513 = vpop.f32.mrf.mxu0
      %v2514 = vadd.f32 %v2353, %v2513
      %v2515 = vpop.f32.mrf.mxu0
      %v2516 = vpop.f32.mrf.mxu0
      %v2517 = vadd.f32 %v2356, %v2516
      %v2518 = vpop.f32.mrf.mxu0
      %2519 = vmatprep.mubr.bf16.mxu0 0
      %2520 = vmatmul.mubr.bf16.gmra.mxu0 %v2031
      %v2521 = vpop.f32.mrf.mxu0
      %v2522 = vadd.f32 %v2361, %v2521
      %v2523 = vpop.f32.mrf.mxu0
      %v2524 = vpop.f32.mrf.mxu0
      %v2525 = vadd.f32 %v2364, %v2524
      %v2526 = vpop.f32.mrf.mxu0
      %2527 = vmatprep.mubr.bf16.mxu0 0
      %2528 = vmatmul.mubr.bf16.gmra.mxu0 %v2034
      %v2529 = vpop.f32.mrf.mxu0
      %v2530 = vadd.f32 %v2369, %v2529
      %v2531 = vpop.f32.mrf.mxu0
      %v2532 = vpop.f32.mrf.mxu0
      %v2533 = vadd.f32 %v2372, %v2532
      %v2534 = vpop.f32.mrf.mxu0
      %2535 = vmatprep.mubr.bf16.mxu0 0
      %2536 = vmatmul.mubr.bf16.gmra.mxu0 %v2037
      %v2537 = vpop.f32.mrf.mxu0
      %v2538 = vadd.f32 %v2377, %v2537
      %v2539 = vpop.f32.mrf.mxu0
      %v2540 = vpop.f32.mrf.mxu0
      %v2541 = vadd.f32 %v2380, %v2540
      %v2542 = vpop.f32.mrf.mxu0
      %2543 = vmatprep.mubr.bf16.mxu0 0
      %2544 = vmatmul.mubr.bf16.gmra.mxu0 %v2040
      %v2545 = vpop.f32.mrf.mxu0
      %v2546 = vadd.f32 %v2385, %v2545
      %v2547 = vpop.f32.mrf.mxu0
      %v2548 = vpop.f32.mrf.mxu0
      %v2549 = vadd.f32 %v2388, %v2548
      %v2550 = vpop.f32.mrf.mxu0
      %2551 = vmatprep.mubr.bf16.mxu0 0
      %2552 = vmatmul.mubr.bf16.gmra.mxu0 %v2043
      %v2553 = vpop.f32.mrf.mxu0
      %v2554 = vadd.f32 %v2393, %v2553
      %v2555 = vpop.f32.mrf.mxu0
      %v2556 = vpop.f32.mrf.mxu0
      %v2557 = vadd.f32 %v2396, %v2556
      %v2558 = vpop.f32.mrf.mxu0
      %2559 = vmatprep.mubr.bf16.mxu0 0
      %2560 = vmatmul.mubr.bf16.gmra.mxu0 %v2046
      %v2561 = vpop.f32.mrf.mxu0
      %v2562 = vadd.f32 %v2401, %v2561
      %v2563 = vpop.f32.mrf.mxu0
      %v2564 = vpop.f32.mrf.mxu0
      %v2565 = vadd.f32 %v2404, %v2564
      %v2566 = vpop.f32.mrf.mxu0
      %2567 = vmatprep.mubr.bf16.mxu0 0
      %2568 = vmatmul.mubr.bf16.gmra.mxu0 %v2049
      %v2569 = vpop.f32.mrf.mxu0
      %v2570 = vadd.f32 %v2409, %v2569
      %v2571 = vpop.f32.mrf.mxu0
      %v2572 = vpop.f32.mrf.mxu0
      %v2573 = vadd.f32 %v2412, %v2572
      %v2574 = vpop.f32.mrf.mxu0
      %2575 = vmatprep.mubr.bf16.mxu0 0
      %2576 = vmatmul.mubr.bf16.gmra.mxu0 %v2052
      %v2577 = vpop.f32.mrf.mxu0
      %v2578 = vadd.f32 %v2417, %v2577
      %v2579 = vpop.f32.mrf.mxu0
      %v2580 = vpop.f32.mrf.mxu0
      %v2581 = vadd.f32 %v2420, %v2580
      %v2582 = vpop.f32.mrf.mxu0
      %2583 = vdwg.mxu0
      %v2632 = vunpack.c.l.b16 %v1553
      %v2633 = vunpack.c.l.b16 %v1554
      %v2634 = vunpack.c.l.b16 %v1555
      %v2635 = vunpack.c.l.b16 %v1556
      %v2636 = vunpack.c.l.b16 %v1557
      %v2637 = vunpack.c.l.b16 %v1558
      %v2638 = vunpack.c.l.b16 %v1559
      %v2639 = vunpack.c.l.b16 %v1560
      %v2640 = vunpack.c.l.b16 %v1561
      %v2641 = vunpack.c.l.b16 %v1562
      %v2642 = vunpack.c.l.b16 %v1563
      %v2643 = vunpack.c.l.b16 %v1564
      %v2644 = vunpack.c.l.b16 %v1565
      %v2645 = vunpack.c.l.b16 %v1566
      %v2646 = vunpack.c.l.b16 %v1567
      %v2647 = vunpack.c.l.b16 %v1568
      %v2648 = vunpack.c.l.b16 %v1569
      %v2649 = vunpack.c.l.b16 %v1570
      %v2650 = vunpack.c.l.b16 %v1571
      %v2651 = vunpack.c.l.b16 %v1572
      %v2652 = vunpack.c.l.b16 %v1573
      %v2653 = vunpack.c.l.b16 %v1574
      %v2654 = vunpack.c.l.b16 %v1575
      %v2655 = vunpack.c.l.b16 %v1576
      %v2656 = vunpack.c.l.b16 %v1577
      %v2657 = vunpack.c.l.b16 %v1578
      %v2658 = vunpack.c.l.b16 %v1579
      %v2659 = vunpack.c.l.b16 %v1580
      %v2660 = vunpack.c.l.b16 %v1581
      %v2661 = vunpack.c.l.b16 %v1582
      %v2662 = vunpack.c.l.b16 %v1583
      %v2663 = vunpack.c.l.b16 %v1584
      %v2664 = vunpack.c.l.b16 %v1585
      %v2665 = vunpack.c.l.b16 %v1586
      %v2666 = vunpack.c.l.b16 %v1587
      %v2667 = vunpack.c.l.b16 %v1588
      %v2668 = vunpack.c.l.b16 %v1589
      %v2669 = vunpack.c.l.b16 %v1590
      %v2670 = vunpack.c.l.b16 %v1591
      %v2671 = vunpack.c.l.b16 %v1592
      %v2672 = vunpack.c.l.b16 %v1593
      %v2673 = vunpack.c.l.b16 %v1594
      %v2674 = vunpack.c.l.b16 %v1595
      %v2675 = vunpack.c.l.b16 %v1596
      %v2676 = vunpack.c.l.b16 %v1597
      %v2677 = vunpack.c.l.b16 %v1598
      %v2678 = vunpack.c.l.b16 %v1599
      %v2679 = vunpack.c.l.b16 %v1600
      %v2680 = vpack.c.b16 %v2633, %v2632
      %v2681 = vpack.c.b16 %v2635, %v2634
      %v2682 = vpack.c.b16 %v2637, %v2636
      %v2683 = vpack.c.b16 %v2639, %v2638
      %v2684 = vpack.c.b16 %v2641, %v2640
      %v2685 = vpack.c.b16 %v2643, %v2642
      %v2686 = vpack.c.b16 %v2645, %v2644
      %v2687 = vpack.c.b16 %v2647, %v2646
      %v2688 = vpack.c.b16 %v2649, %v2648
      %v2689 = vpack.c.b16 %v2651, %v2650
      %v2690 = vpack.c.b16 %v2653, %v2652
      %v2691 = vpack.c.b16 %v2655, %v2654
      %v2692 = vpack.c.b16 %v2657, %v2656
      %v2693 = vpack.c.b16 %v2659, %v2658
      %v2694 = vpack.c.b16 %v2661, %v2660
      %v2695 = vpack.c.b16 %v2663, %v2662
      %v2696 = vpack.c.b16 %v2665, %v2664
      %v2697 = vpack.c.b16 %v2667, %v2666
      %v2698 = vpack.c.b16 %v2669, %v2668
      %v2699 = vpack.c.b16 %v2671, %v2670
      %v2700 = vpack.c.b16 %v2673, %v2672
      %v2701 = vpack.c.b16 %v2675, %v2674
      %v2702 = vpack.c.b16 %v2677, %v2676
      %v2703 = vpack.c.b16 %v2679, %v2678
      %2728 = vmatprep.subr.bf16.mxu0 0
      %2729 = vmatpush1.bf16.msra.mxu0 %v2687
      %2730 = vmatprep.subr.bf16.mxu0 0
      %2731 = vmatpush1.bf16.msra.mxu0 %v2686
      %2732 = vmatprep.subr.bf16.mxu0 0
      %2733 = vmatpush1.bf16.msra.mxu0 %v2685
      %2734 = vmatprep.subr.bf16.mxu0 0
      %2735 = vmatpush1.bf16.msra.mxu0 %v2684
      %2736 = vmatprep.subr.bf16.mxu0 0
      %2737 = vmatpush1.bf16.msra.mxu0 %v2683
      %2738 = vmatprep.subr.bf16.mxu0 0
      %2739 = vmatpush1.bf16.msra.mxu0 %v2682
      %2740 = vmatprep.subr.bf16.mxu0 0
      %2741 = vmatpush1.bf16.msra.mxu0 %v2681
      %2742 = vmatprep.subr.bf16.mxu0 0
      %2743 = vmatpush1.bf16.msra.mxu0 %v2680
      %2744 = vmatprep.subr.bf16.mxu0 0
      %2745 = vmatpush2.bf16.msra.mxu0 %v2695
      %2746 = vmatprep.subr.bf16.mxu0 0
      %2747 = vmatpush2.bf16.msra.mxu0 %v2694
      %2748 = vmatprep.subr.bf16.mxu0 0
      %2749 = vmatpush2.bf16.msra.mxu0 %v2693
      %2750 = vmatprep.subr.bf16.mxu0 0
      %2751 = vmatpush2.bf16.msra.mxu0 %v2692
      %2752 = vmatprep.subr.bf16.mxu0 0
      %2753 = vmatpush2.bf16.msra.mxu0 %v2691
      %2754 = vmatprep.subr.bf16.mxu0 0
      %2755 = vmatpush2.bf16.msra.mxu0 %v2690
      %2756 = vmatprep.subr.bf16.mxu0 0
      %2757 = vmatpush2.bf16.msra.mxu0 %v2689
      %2758 = vmatprep.subr.bf16.mxu0 0
      %2759 = vmatpush2.bf16.msra.mxu0 %v2688
      %2760 = vmatprep.mubr.bf16.mxu0 %v1291
      %2761 = vmatmul.mubr.bf16.gmra.mxu0 %v1199
      %v2762 = vpop.f32.mrf.mxu0
      %v2763 = vadd.f32 %v2458, %v2762
      %v2764 = vpop.f32.mrf.mxu0
      %v2765 = vpop.f32.mrf.mxu0
      %v2766 = vadd.f32 %v2461, %v2765
      %v2767 = vpop.f32.mrf.mxu0
      %2768 = vmatprep.mubr.bf16.mxu0 %v1303
      %2769 = vmatmul.mubr.bf16.gmra.mxu0 %v1200
      %v2770 = vpop.f32.mrf.mxu0
      %v2771 = vadd.f32 %v2466, %v2770
      %v2772 = vpop.f32.mrf.mxu0
      %v2773 = vpop.f32.mrf.mxu0
      %v2774 = vadd.f32 %v2469, %v2773
      %v2775 = vpop.f32.mrf.mxu0
      %2776 = vmatprep.mubr.bf16.mxu0 %v1315
      %2777 = vmatmul.mubr.bf16.gmra.mxu0 %v1201
      %v2778 = vpop.f32.mrf.mxu0
      %v2779 = vadd.f32 %v2474, %v2778
      %v2780 = vpop.f32.mrf.mxu0
      %v2781 = vpop.f32.mrf.mxu0
      %v2782 = vadd.f32 %v2477, %v2781
      %v2783 = vpop.f32.mrf.mxu0
      %2784 = vmatprep.mubr.bf16.mxu0 %v1327
      %2785 = vmatmul.mubr.bf16.gmra.mxu0 %v1202
      %v2786 = vpop.f32.mrf.mxu0
      %v2787 = vadd.f32 %v2482, %v2786
      %v2788 = vpop.f32.mrf.mxu0
      %v2789 = vpop.f32.mrf.mxu0
      %v2790 = vadd.f32 %v2485, %v2789
      %v2791 = vpop.f32.mrf.mxu0
      %2792 = vmatprep.mubr.bf16.mxu0 %v1339
      %2793 = vmatmul.mubr.bf16.gmra.mxu0 %v1203
      %v2794 = vpop.f32.mrf.mxu0
      %v2795 = vadd.f32 %v2490, %v2794
      %v2796 = vpop.f32.mrf.mxu0
      %v2797 = vpop.f32.mrf.mxu0
      %v2798 = vadd.f32 %v2493, %v2797
      %v2799 = vpop.f32.mrf.mxu0
      %2800 = vmatprep.mubr.bf16.mxu0 %v1351
      %2801 = vmatmul.mubr.bf16.gmra.mxu0 %v1204
      %v2802 = vpop.f32.mrf.mxu0
      %v2803 = vadd.f32 %v2498, %v2802
      %v2804 = vpop.f32.mrf.mxu0
      %v2805 = vpop.f32.mrf.mxu0
      %v2806 = vadd.f32 %v2501, %v2805
      %v2807 = vpop.f32.mrf.mxu0
      %2808 = vmatprep.mubr.bf16.mxu0 %v1363
      %2809 = vmatmul.mubr.bf16.gmra.mxu0 %v1205
      %v2810 = vpop.f32.mrf.mxu0
      %v2811 = vadd.f32 %v2506, %v2810
      %v2812 = vpop.f32.mrf.mxu0
      %v2813 = vpop.f32.mrf.mxu0
      %v2814 = vadd.f32 %v2509, %v2813
      %v2815 = vpop.f32.mrf.mxu0
      %2816 = vmatprep.mubr.bf16.mxu0 %v1375
      %2817 = vmatmul.mubr.bf16.gmra.mxu0 %v1206
      %v2818 = vpop.f32.mrf.mxu0
      %v2819 = vadd.f32 %v2514, %v2818
      %v2820 = vpop.f32.mrf.mxu0
      %v2821 = vpop.f32.mrf.mxu0
      %v2822 = vadd.f32 %v2517, %v2821
      %v2823 = vpop.f32.mrf.mxu0
      %2824 = vmatprep.mubr.bf16.mxu0 %v1387
      %2825 = vmatmul.mubr.bf16.gmra.mxu0 %v1207
      %v2826 = vpop.f32.mrf.mxu0
      %v2827 = vadd.f32 %v2522, %v2826
      %v2828 = vpop.f32.mrf.mxu0
      %v2829 = vpop.f32.mrf.mxu0
      %v2830 = vadd.f32 %v2525, %v2829
      %v2831 = vpop.f32.mrf.mxu0
      %2832 = vmatprep.mubr.bf16.mxu0 %v1399
      %2833 = vmatmul.mubr.bf16.gmra.mxu0 %v1208
      %v2834 = vpop.f32.mrf.mxu0
      %v2835 = vadd.f32 %v2530, %v2834
      %v2836 = vpop.f32.mrf.mxu0
      %v2837 = vpop.f32.mrf.mxu0
      %v2838 = vadd.f32 %v2533, %v2837
      %v2839 = vpop.f32.mrf.mxu0
      %2840 = vmatprep.mubr.bf16.mxu0 %v1411
      %2841 = vmatmul.mubr.bf16.gmra.mxu0 %v1209
      %v2842 = vpop.f32.mrf.mxu0
      %v2843 = vadd.f32 %v2538, %v2842
      %v2844 = vpop.f32.mrf.mxu0
      %v2845 = vpop.f32.mrf.mxu0
      %v2846 = vadd.f32 %v2541, %v2845
      %v2847 = vpop.f32.mrf.mxu0
      %2848 = vmatprep.mubr.bf16.mxu0 %v1423
      %2849 = vmatmul.mubr.bf16.gmra.mxu0 %v1210
      %v2850 = vpop.f32.mrf.mxu0
      %v2851 = vadd.f32 %v2546, %v2850
      %v2852 = vpop.f32.mrf.mxu0
      %v2853 = vpop.f32.mrf.mxu0
      %v2854 = vadd.f32 %v2549, %v2853
      %v2855 = vpop.f32.mrf.mxu0
      %2856 = vmatprep.mubr.bf16.mxu0 %v1435
      %2857 = vmatmul.mubr.bf16.gmra.mxu0 %v1211
      %v2858 = vpop.f32.mrf.mxu0
      %v2859 = vadd.f32 %v2554, %v2858
      %v2860 = vpop.f32.mrf.mxu0
      %v2861 = vpop.f32.mrf.mxu0
      %v2862 = vadd.f32 %v2557, %v2861
      %v2863 = vpop.f32.mrf.mxu0
      %2864 = vmatprep.mubr.bf16.mxu0 %v1447
      %2865 = vmatmul.mubr.bf16.gmra.mxu0 %v1212
      %v2866 = vpop.f32.mrf.mxu0
      %v2867 = vadd.f32 %v2562, %v2866
      %v2868 = vpop.f32.mrf.mxu0
      %v2869 = vpop.f32.mrf.mxu0
      %v2870 = vadd.f32 %v2565, %v2869
      %v2871 = vpop.f32.mrf.mxu0
      %2872 = vmatprep.mubr.bf16.mxu0 %v1459
      %2873 = vmatmul.mubr.bf16.gmra.mxu0 %v1213
      %v2874 = vpop.f32.mrf.mxu0
      %v2875 = vadd.f32 %v2570, %v2874
      %v2876 = vpop.f32.mrf.mxu0
      %v2877 = vpop.f32.mrf.mxu0
      %v2878 = vadd.f32 %v2573, %v2877
      %v2879 = vpop.f32.mrf.mxu0
      %2880 = vmatprep.mubr.bf16.mxu0 %v1471
      %2881 = vmatmul.mubr.bf16.gmra.mxu0 %v1214
      %v2882 = vpop.f32.mrf.mxu0
      %v2883 = vadd.f32 %v2578, %v2882
      %v2884 = vpop.f32.mrf.mxu0
      %v2885 = vpop.f32.mrf.mxu0
      %v2886 = vadd.f32 %v2581, %v2885
      %v2887 = vpop.f32.mrf.mxu0
      %2888 = vdwg.mxu0
      %2889 = vmatprep.subr.bf16.mxu0 0
      %2890 = vmatpush1.bf16.msra.mxu0 %v2703
      %2891 = vmatprep.subr.bf16.mxu0 0
      %2892 = vmatpush1.bf16.msra.mxu0 %v2702
      %2893 = vmatprep.subr.bf16.mxu0 0
      %2894 = vmatpush1.bf16.msra.mxu0 %v2701
      %2895 = vmatprep.subr.bf16.mxu0 0
      %2896 = vmatpush1.bf16.msra.mxu0 %v2700
      %2897 = vmatprep.subr.bf16.mxu0 0
      %2898 = vmatpush1.bf16.msra.mxu0 %v2699
      %2899 = vmatprep.subr.bf16.mxu0 0
      %2900 = vmatpush1.bf16.msra.mxu0 %v2698
      %2901 = vmatprep.subr.bf16.mxu0 0
      %2902 = vmatpush1.bf16.msra.mxu0 %v2697
      %2903 = vmatprep.subr.bf16.mxu0 0
      %2904 = vmatpush1.bf16.msra.mxu0 %v2696
      %2905 = vmatprep.subr.bf16.mxu0 0
      %2906 = vmatpush2.bf16.msra.mxu0 0
      %2907 = vmatprep.subr.bf16.mxu0 0
      %2908 = vmatpush2.bf16.msra.mxu0 0
      %2909 = vmatprep.subr.bf16.mxu0 0
      %2910 = vmatpush2.bf16.msra.mxu0 0
      %2911 = vmatprep.subr.bf16.mxu0 0
      %2912 = vmatpush2.bf16.msra.mxu0 0
      %2913 = vmatprep.subr.bf16.mxu0 0
      %2914 = vmatpush2.bf16.msra.mxu0 0
      %2915 = vmatprep.subr.bf16.mxu0 0
      %2916 = vmatpush2.bf16.msra.mxu0 0
      %2917 = vmatprep.subr.bf16.mxu0 0
      %2918 = vmatpush2.bf16.msra.mxu0 0
      %2919 = vmatprep.subr.bf16.mxu0 0
      %2920 = vmatpush2.bf16.msra.mxu0 0
      %2921 = vmatprep.mubr.bf16.mxu0 0
      %2922 = vmatmul.mubr.bf16.gmra.mxu0 %v1491
      %v2923 = vpop.f32.mrf.mxu0
      %v2924 = vadd.f32 %v2763, %v2923
      %v2925 = vpop.f32.mrf.mxu0
      %v2926 = vpop.f32.mrf.mxu0
      %v2927 = vadd.f32 %v2766, %v2926
      %v2928 = vpop.f32.mrf.mxu0
      %2929 = vmatprep.mubr.bf16.mxu0 0
      %2930 = vmatmul.mubr.bf16.gmra.mxu0 %v1494
      %v2931 = vpop.f32.mrf.mxu0
      %v2932 = vadd.f32 %v2771, %v2931
      %v2933 = vpop.f32.mrf.mxu0
      %v2934 = vpop.f32.mrf.mxu0
      %v2935 = vadd.f32 %v2774, %v2934
      %v2936 = vpop.f32.mrf.mxu0
      %2937 = vmatprep.mubr.bf16.mxu0 0
      %2938 = vmatmul.mubr.bf16.gmra.mxu0 %v1497
      %v2939 = vpop.f32.mrf.mxu0
      %v2940 = vadd.f32 %v2779, %v2939
      %v2941 = vpop.f32.mrf.mxu0
      %v2942 = vpop.f32.mrf.mxu0
      %v2943 = vadd.f32 %v2782, %v2942
      %v2944 = vpop.f32.mrf.mxu0
      %2945 = vmatprep.mubr.bf16.mxu0 0
      %2946 = vmatmul.mubr.bf16.gmra.mxu0 %v1500
      %v2947 = vpop.f32.mrf.mxu0
      %v2948 = vadd.f32 %v2787, %v2947
      %v2949 = vpop.f32.mrf.mxu0
      %v2950 = vpop.f32.mrf.mxu0
      %v2951 = vadd.f32 %v2790, %v2950
      %v2952 = vpop.f32.mrf.mxu0
      %2953 = vmatprep.mubr.bf16.mxu0 0
      %2954 = vmatmul.mubr.bf16.gmra.mxu0 %v1503
      %v2955 = vpop.f32.mrf.mxu0
      %v2956 = vadd.f32 %v2795, %v2955
      %v2957 = vpop.f32.mrf.mxu0
      %v2958 = vpop.f32.mrf.mxu0
      %v2959 = vadd.f32 %v2798, %v2958
      %v2960 = vpop.f32.mrf.mxu0
      %2961 = vmatprep.mubr.bf16.mxu0 0
      %2962 = vmatmul.mubr.bf16.gmra.mxu0 %v1506
      %v2963 = vpop.f32.mrf.mxu0
      %v2964 = vadd.f32 %v2803, %v2963
      %v2965 = vpop.f32.mrf.mxu0
      %v2966 = vpop.f32.mrf.mxu0
      %v2967 = vadd.f32 %v2806, %v2966
      %v2968 = vpop.f32.mrf.mxu0
      %2969 = vmatprep.mubr.bf16.mxu0 0
      %2970 = vmatmul.mubr.bf16.gmra.mxu0 %v1509
      %v2971 = vpop.f32.mrf.mxu0
      %v2972 = vadd.f32 %v2811, %v2971
      %v2973 = vpop.f32.mrf.mxu0
      %v2974 = vpop.f32.mrf.mxu0
      %v2975 = vadd.f32 %v2814, %v2974
      %v2976 = vpop.f32.mrf.mxu0
      %2977 = vmatprep.mubr.bf16.mxu0 0
      %2978 = vmatmul.mubr.bf16.gmra.mxu0 %v1512
      %v2979 = vpop.f32.mrf.mxu0
      %v2980 = vadd.f32 %v2819, %v2979
      %v2981 = vpop.f32.mrf.mxu0
      %v2982 = vpop.f32.mrf.mxu0
      %v2983 = vadd.f32 %v2822, %v2982
      %v2984 = vpop.f32.mrf.mxu0
      %2985 = vmatprep.mubr.bf16.mxu0 0
      %2986 = vmatmul.mubr.bf16.gmra.mxu0 %v1515
      %v2987 = vpop.f32.mrf.mxu0
      %v2988 = vadd.f32 %v2827, %v2987
      %v2989 = vpop.f32.mrf.mxu0
      %v2990 = vpop.f32.mrf.mxu0
      %v2991 = vadd.f32 %v2830, %v2990
      %v2992 = vpop.f32.mrf.mxu0
      %2993 = vmatprep.mubr.bf16.mxu0 0
      %2994 = vmatmul.mubr.bf16.gmra.mxu0 %v1518
      %v2995 = vpop.f32.mrf.mxu0
      %v2996 = vadd.f32 %v2835, %v2995
      %v2997 = vpop.f32.mrf.mxu0
      %v2998 = vpop.f32.mrf.mxu0
      %v2999 = vadd.f32 %v2838, %v2998
      %v3000 = vpop.f32.mrf.mxu0
      %3001 = vmatprep.mubr.bf16.mxu0 0
      %3002 = vmatmul.mubr.bf16.gmra.mxu0 %v1521
      %v3003 = vpop.f32.mrf.mxu0
      %v3004 = vadd.f32 %v2843, %v3003
      %v3005 = vpop.f32.mrf.mxu0
      %v3006 = vpop.f32.mrf.mxu0
      %v3007 = vadd.f32 %v2846, %v3006
      %v3008 = vpop.f32.mrf.mxu0
      %3009 = vmatprep.mubr.bf16.mxu0 0
      %3010 = vmatmul.mubr.bf16.gmra.mxu0 %v1524
      %v3011 = vpop.f32.mrf.mxu0
      %v3012 = vadd.f32 %v2851, %v3011
      %v3013 = vpop.f32.mrf.mxu0
      %v3014 = vpop.f32.mrf.mxu0
      %v3015 = vadd.f32 %v2854, %v3014
      %v3016 = vpop.f32.mrf.mxu0
      %3017 = vmatprep.mubr.bf16.mxu0 0
      %3018 = vmatmul.mubr.bf16.gmra.mxu0 %v1527
      %v3019 = vpop.f32.mrf.mxu0
      %v3020 = vadd.f32 %v2859, %v3019
      %v3021 = vpop.f32.mrf.mxu0
      %v3022 = vpop.f32.mrf.mxu0
      %v3023 = vadd.f32 %v2862, %v3022
      %v3024 = vpop.f32.mrf.mxu0
      %3025 = vmatprep.mubr.bf16.mxu0 0
      %3026 = vmatmul.mubr.bf16.gmra.mxu0 %v1530
      %v3027 = vpop.f32.mrf.mxu0
      %v3028 = vadd.f32 %v2867, %v3027
      %v3029 = vpop.f32.mrf.mxu0
      %v3030 = vpop.f32.mrf.mxu0
      %v3031 = vadd.f32 %v2870, %v3030
      %v3032 = vpop.f32.mrf.mxu0
      %3033 = vmatprep.mubr.bf16.mxu0 0
      %3034 = vmatmul.mubr.bf16.gmra.mxu0 %v1533
      %v3035 = vpop.f32.mrf.mxu0
      %v3036 = vadd.f32 %v2875, %v3035
      %v3037 = vpop.f32.mrf.mxu0
      %v3038 = vpop.f32.mrf.mxu0
      %v3039 = vadd.f32 %v2878, %v3038
      %v3040 = vpop.f32.mrf.mxu0
      %3041 = vmatprep.mubr.bf16.mxu0 0
      %3042 = vmatmul.mubr.bf16.gmra.mxu0 %v1536
      %v3043 = vpop.f32.mrf.mxu0
      %v3044 = vadd.f32 %v2883, %v3043
      %v3045 = vpop.f32.mrf.mxu0
      %v3046 = vpop.f32.mrf.mxu0
      %v3047 = vadd.f32 %v2886, %v3046
      %v3048 = vpop.f32.mrf.mxu0
      %3049 = vdwg.mxu0
      %s3050 = sadd.s32 %s1083, 2
      %s3051 = smul.u32 %s3050, 3
      %s3052 = smul.addr %s3051, 4
      %s3053 = scalar_lea.vmem [#allocation3], %s3052
      %v3054 = vld [vmem:[%s3053] sm:$0xf]
      %v3055 = vld [vmem:[%s3053 + $0x4] sm:$0xf]
      %v3056 = vld [vmem:[%s3053 + $0x8] sm:$0x1]
      %v3057 = vld [vmem:[%s3053 + $0xc] sm:$0xf]
      %v3058 = vld [vmem:[%s3053 + $0x10] sm:$0xf]
      %v3059 = vld [vmem:[%s3053 + $0x14] sm:$0x1]
      %v3060 = vld [vmem:[%s3053 + $0x18] sm:$0xf]
      %v3061 = vld [vmem:[%s3053 + $0x1c] sm:$0xf]
      %v3062 = vld [vmem:[%s3053 + $0x20] sm:$0x1]
      %v3063 = vld [vmem:[%s3053 + $0x24] sm:$0xf]
      %v3064 = vld [vmem:[%s3053 + $0x28] sm:$0xf]
      %v3065 = vld [vmem:[%s3053 + $0x2c] sm:$0x1]
      %v3066 = vld [vmem:[%s3053 + $0x30] sm:$0xf]
      %v3067 = vld [vmem:[%s3053 + $0x34] sm:$0xf]
      %v3068 = vld [vmem:[%s3053 + $0x38] sm:$0x1]
      %v3069 = vld [vmem:[%s3053 + $0x3c] sm:$0xf]
      %v3070 = vld [vmem:[%s3053 + $0x40] sm:$0xf]
      %v3071 = vld [vmem:[%s3053 + $0x44] sm:$0x1]
      %v3072 = vld [vmem:[%s3053 + $0x48] sm:$0xf]
      %v3073 = vld [vmem:[%s3053 + $0x4c] sm:$0xf]
      %v3074 = vld [vmem:[%s3053 + $0x50] sm:$0x1]
      %v3075 = vld [vmem:[%s3053 + $0x54] sm:$0xf]
      %v3076 = vld [vmem:[%s3053 + $0x58] sm:$0xf]
      %v3077 = vld [vmem:[%s3053 + $0x5c] sm:$0x1]
      %v3078 = vld [vmem:[%s3053 + $0x60] sm:$0xf]
      %v3079 = vld [vmem:[%s3053 + $0x64] sm:$0xf]
      %v3080 = vld [vmem:[%s3053 + $0x68] sm:$0x1]
      %v3081 = vld [vmem:[%s3053 + $0x6c] sm:$0xf]
      %v3082 = vld [vmem:[%s3053 + $0x70] sm:$0xf]
      %v3083 = vld [vmem:[%s3053 + $0x74] sm:$0x1]
      %v3084 = vld [vmem:[%s3053 + $0x78] sm:$0xf]
      %v3085 = vld [vmem:[%s3053 + $0x7c] sm:$0xf]
      %v3086 = vld [vmem:[%s3053 + $0x80] sm:$0x1]
      %v3087 = vld [vmem:[%s3053 + $0x84] sm:$0xf]
      %v3088 = vld [vmem:[%s3053 + $0x88] sm:$0xf]
      %v3089 = vld [vmem:[%s3053 + $0x8c] sm:$0x1]
      %v3090 = vld [vmem:[%s3053 + $0x90] sm:$0xf]
      %v3091 = vld [vmem:[%s3053 + $0x94] sm:$0xf]
      %v3092 = vld [vmem:[%s3053 + $0x98] sm:$0x1]
      %v3093 = vld [vmem:[%s3053 + $0x9c] sm:$0xf]
      %v3094 = vld [vmem:[%s3053 + $0xa0] sm:$0xf]
      %v3095 = vld [vmem:[%s3053 + $0xa4] sm:$0x1]
      %v3096 = vld [vmem:[%s3053 + $0xa8] sm:$0xf]
      %v3097 = vld [vmem:[%s3053 + $0xac] sm:$0xf]
      %v3098 = vld [vmem:[%s3053 + $0xb0] sm:$0x1]
      %v3099 = vld [vmem:[%s3053 + $0xb4] sm:$0xf]
      %v3100 = vld [vmem:[%s3053 + $0xb8] sm:$0xf]
      %v3101 = vld [vmem:[%s3053 + $0xbc] sm:$0x1]
      %v3134 = vunpack.c.l.b16 %v3054
      %v3135 = vunpack.c.l.b16 %v3055
      %v3136 = vunpack.c.l.b16 %v3057
      %v3137 = vunpack.c.l.b16 %v3058
      %v3138 = vunpack.c.l.b16 %v3060
      %v3139 = vunpack.c.l.b16 %v3061
      %v3140 = vunpack.c.l.b16 %v3063
      %v3141 = vunpack.c.l.b16 %v3064
      %v3142 = vunpack.c.l.b16 %v3066
      %v3143 = vunpack.c.l.b16 %v3067
      %v3144 = vunpack.c.l.b16 %v3069
      %v3145 = vunpack.c.l.b16 %v3070
      %v3146 = vunpack.c.l.b16 %v3072
      %v3147 = vunpack.c.l.b16 %v3073
      %v3148 = vunpack.c.l.b16 %v3075
      %v3149 = vunpack.c.l.b16 %v3076
      %v3150 = vunpack.c.l.b16 %v3078
      %v3151 = vunpack.c.l.b16 %v3079
      %v3152 = vunpack.c.l.b16 %v3081
      %v3153 = vunpack.c.l.b16 %v3082
      %v3154 = vunpack.c.l.b16 %v3084
      %v3155 = vunpack.c.l.b16 %v3085
      %v3156 = vunpack.c.l.b16 %v3087
      %v3157 = vunpack.c.l.b16 %v3088
      %v3158 = vunpack.c.l.b16 %v3090
      %v3159 = vunpack.c.l.b16 %v3091
      %v3160 = vunpack.c.l.b16 %v3093
      %v3161 = vunpack.c.l.b16 %v3094
      %v3162 = vunpack.c.l.b16 %v3096
      %v3163 = vunpack.c.l.b16 %v3097
      %v3164 = vunpack.c.l.b16 %v3099
      %v3165 = vunpack.c.l.b16 %v3100
      %v3166 = vpack.c.b16 %v3135, %v3134
      %v3167 = vpack.c.b16 %v3137, %v3136
      %v3168 = vpack.c.b16 %v3139, %v3138
      %v3169 = vpack.c.b16 %v3141, %v3140
      %v3170 = vpack.c.b16 %v3143, %v3142
      %v3171 = vpack.c.b16 %v3145, %v3144
      %v3172 = vpack.c.b16 %v3147, %v3146
      %v3173 = vpack.c.b16 %v3149, %v3148
      %v3174 = vpack.c.b16 %v3151, %v3150
      %v3175 = vpack.c.b16 %v3153, %v3152
      %v3176 = vpack.c.b16 %v3155, %v3154
      %v3177 = vpack.c.b16 %v3157, %v3156
      %v3178 = vpack.c.b16 %v3159, %v3158
      %v3179 = vpack.c.b16 %v3161, %v3160
      %v3180 = vpack.c.b16 %v3163, %v3162
      %v3181 = vpack.c.b16 %v3165, %v3164
      %v3214 = vunpack.c.l.b16 %v3056
      %v3215 = vunpack.c.l.b16 %v3059
      %v3216 = vunpack.c.l.b16 %v3062
      %v3217 = vunpack.c.l.b16 %v3065
      %v3218 = vunpack.c.l.b16 %v3068
      %v3219 = vunpack.c.l.b16 %v3071
      %v3220 = vunpack.c.l.b16 %v3074
      %v3221 = vunpack.c.l.b16 %v3077
      %v3222 = vunpack.c.l.b16 %v3080
      %v3223 = vunpack.c.l.b16 %v3083
      %v3224 = vunpack.c.l.b16 %v3086
      %v3225 = vunpack.c.l.b16 %v3089
      %v3226 = vunpack.c.l.b16 %v3092
      %v3227 = vunpack.c.l.b16 %v3095
      %v3228 = vunpack.c.l.b16 %v3098
      %v3229 = vunpack.c.l.b16 %v3101
      %v3230 = vpack.c.b16 %v3214, %v3214
      %v3231 = vpack.c.b16 %v3215, %v3215
      %v3232 = vpack.c.b16 %v3216, %v3216
      %v3233 = vpack.c.b16 %v3217, %v3217
      %v3234 = vpack.c.b16 %v3218, %v3218
      %v3235 = vpack.c.b16 %v3219, %v3219
      %v3236 = vpack.c.b16 %v3220, %v3220
      %v3237 = vpack.c.b16 %v3221, %v3221
      %v3238 = vpack.c.b16 %v3222, %v3222
      %v3239 = vpack.c.b16 %v3223, %v3223
      %v3240 = vpack.c.b16 %v3224, %v3224
      %v3241 = vpack.c.b16 %v3225, %v3225
      %v3242 = vpack.c.b16 %v3226, %v3226
      %v3243 = vpack.c.b16 %v3227, %v3227
      %v3244 = vpack.c.b16 %v3228, %v3228
      %v3245 = vpack.c.b16 %v3229, %v3229
      %v3247 = vshrl.u32 %v3166, 16
      %v3249 = vshll.u32 %v3166, 16
      %v3251 = vrot.slane %v3249, 1
      %v3252 = vor.u32 %v3247, %v3251
      %v3254 = vshll.u32 %v3230, 16
      %v3256 = vrot.slane %v3254, 1
      %v3257 = vsel %vm1279, %v3252, %v3256
      %v3259 = vshrl.u32 %v3167, 16
      %v3261 = vshll.u32 %v3167, 16
      %v3263 = vrot.slane %v3261, 1
      %v3264 = vor.u32 %v3259, %v3263
      %v3266 = vshll.u32 %v3231, 16
      %v3268 = vrot.slane %v3266, 1
      %v3269 = vsel %vm1279, %v3264, %v3268
      %v3271 = vshrl.u32 %v3168, 16
      %v3273 = vshll.u32 %v3168, 16
      %v3275 = vrot.slane %v3273, 1
      %v3276 = vor.u32 %v3271, %v3275
      %v3278 = vshll.u32 %v3232, 16
      %v3280 = vrot.slane %v3278, 1
      %v3281 = vsel %vm1279, %v3276, %v3280
      %v3283 = vshrl.u32 %v3169, 16
      %v3285 = vshll.u32 %v3169, 16
      %v3287 = vrot.slane %v3285, 1
      %v3288 = vor.u32 %v3283, %v3287
      %v3290 = vshll.u32 %v3233, 16
      %v3292 = vrot.slane %v3290, 1
      %v3293 = vsel %vm1279, %v3288, %v3292
      %v3295 = vshrl.u32 %v3170, 16
      %v3297 = vshll.u32 %v3170, 16
      %v3299 = vrot.slane %v3297, 1
      %v3300 = vor.u32 %v3295, %v3299
      %v3302 = vshll.u32 %v3234, 16
      %v3304 = vrot.slane %v3302, 1
      %v3305 = vsel %vm1279, %v3300, %v3304
      %v3307 = vshrl.u32 %v3171, 16
      %v3309 = vshll.u32 %v3171, 16
      %v3311 = vrot.slane %v3309, 1
      %v3312 = vor.u32 %v3307, %v3311
      %v3314 = vshll.u32 %v3235, 16
      %v3316 = vrot.slane %v3314, 1
      %v3317 = vsel %vm1279, %v3312, %v3316
      %v3319 = vshrl.u32 %v3172, 16
      %v3321 = vshll.u32 %v3172, 16
      %v3323 = vrot.slane %v3321, 1
      %v3324 = vor.u32 %v3319, %v3323
      %v3326 = vshll.u32 %v3236, 16
      %v3328 = vrot.slane %v3326, 1
      %v3329 = vsel %vm1279, %v3324, %v3328
      %v3331 = vshrl.u32 %v3173, 16
      %v3333 = vshll.u32 %v3173, 16
      %v3335 = vrot.slane %v3333, 1
      %v3336 = vor.u32 %v3331, %v3335
      %v3338 = vshll.u32 %v3237, 16
      %v3340 = vrot.slane %v3338, 1
      %v3341 = vsel %vm1279, %v3336, %v3340
      %v3343 = vshrl.u32 %v3174, 16
      %v3345 = vshll.u32 %v3174, 16
      %v3347 = vrot.slane %v3345, 1
      %v3348 = vor.u32 %v3343, %v3347
      %v3350 = vshll.u32 %v3238, 16
      %v3352 = vrot.slane %v3350, 1
      %v3353 = vsel %vm1279, %v3348, %v3352
      %v3355 = vshrl.u32 %v3175, 16
      %v3357 = vshll.u32 %v3175, 16
      %v3359 = vrot.slane %v3357, 1
      %v3360 = vor.u32 %v3355, %v3359
      %v3362 = vshll.u32 %v3239, 16
      %v3364 = vrot.slane %v3362, 1
      %v3365 = vsel %vm1279, %v3360, %v3364
      %v3367 = vshrl.u32 %v3176, 16
      %v3369 = vshll.u32 %v3176, 16
      %v3371 = vrot.slane %v3369, 1
      %v3372 = vor.u32 %v3367, %v3371
      %v3374 = vshll.u32 %v3240, 16
      %v3376 = vrot.slane %v3374, 1
      %v3377 = vsel %vm1279, %v3372, %v3376
      %v3379 = vshrl.u32 %v3177, 16
      %v3381 = vshll.u32 %v3177, 16
      %v3383 = vrot.slane %v3381, 1
      %v3384 = vor.u32 %v3379, %v3383
      %v3386 = vshll.u32 %v3241, 16
      %v3388 = vrot.slane %v3386, 1
      %v3389 = vsel %vm1279, %v3384, %v3388
      %v3391 = vshrl.u32 %v3178, 16
      %v3393 = vshll.u32 %v3178, 16
      %v3395 = vrot.slane %v3393, 1
      %v3396 = vor.u32 %v3391, %v3395
      %v3398 = vshll.u32 %v3242, 16
      %v3400 = vrot.slane %v3398, 1
      %v3401 = vsel %vm1279, %v3396, %v3400
      %v3403 = vshrl.u32 %v3179, 16
      %v3405 = vshll.u32 %v3179, 16
      %v3407 = vrot.slane %v3405, 1
      %v3408 = vor.u32 %v3403, %v3407
      %v3410 = vshll.u32 %v3243, 16
      %v3412 = vrot.slane %v3410, 1
      %v3413 = vsel %vm1279, %v3408, %v3412
      %v3415 = vshrl.u32 %v3180, 16
      %v3417 = vshll.u32 %v3180, 16
      %v3419 = vrot.slane %v3417, 1
      %v3420 = vor.u32 %v3415, %v3419
      %v3422 = vshll.u32 %v3244, 16
      %v3424 = vrot.slane %v3422, 1
      %v3425 = vsel %vm1279, %v3420, %v3424
      %v3427 = vshrl.u32 %v3181, 16
      %v3429 = vshll.u32 %v3181, 16
      %v3431 = vrot.slane %v3429, 1
      %v3432 = vor.u32 %v3427, %v3431
      %v3434 = vshll.u32 %v3245, 16
      %v3436 = vrot.slane %v3434, 1
      %v3437 = vsel %vm1279, %v3432, %v3436
      %v3454 = vrot.slane %v3166, 1
      %v3455 = vrot.slane %v3230, 1
      %v3456 = vsel %vm1488, %v3454, %v3455
      %v3457 = vrot.slane %v3167, 1
      %v3458 = vrot.slane %v3231, 1
      %v3459 = vsel %vm1488, %v3457, %v3458
      %v3460 = vrot.slane %v3168, 1
      %v3461 = vrot.slane %v3232, 1
      %v3462 = vsel %vm1488, %v3460, %v3461
      %v3463 = vrot.slane %v3169, 1
      %v3464 = vrot.slane %v3233, 1
      %v3465 = vsel %vm1488, %v3463, %v3464
      %v3466 = vrot.slane %v3170, 1
      %v3467 = vrot.slane %v3234, 1
      %v3468 = vsel %vm1488, %v3466, %v3467
      %v3469 = vrot.slane %v3171, 1
      %v3470 = vrot.slane %v3235, 1
      %v3471 = vsel %vm1488, %v3469, %v3470
      %v3472 = vrot.slane %v3172, 1
      %v3473 = vrot.slane %v3236, 1
      %v3474 = vsel %vm1488, %v3472, %v3473
      %v3475 = vrot.slane %v3173, 1
      %v3476 = vrot.slane %v3237, 1
      %v3477 = vsel %vm1488, %v3475, %v3476
      %v3478 = vrot.slane %v3174, 1
      %v3479 = vrot.slane %v3238, 1
      %v3480 = vsel %vm1488, %v3478, %v3479
      %v3481 = vrot.slane %v3175, 1
      %v3482 = vrot.slane %v3239, 1
      %v3483 = vsel %vm1488, %v3481, %v3482
      %v3484 = vrot.slane %v3176, 1
      %v3485 = vrot.slane %v3240, 1
      %v3486 = vsel %vm1488, %v3484, %v3485
      %v3487 = vrot.slane %v3177, 1
      %v3488 = vrot.slane %v3241, 1
      %v3489 = vsel %vm1488, %v3487, %v3488
      %v3490 = vrot.slane %v3178, 1
      %v3491 = vrot.slane %v3242, 1
      %v3492 = vsel %vm1488, %v3490, %v3491
      %v3493 = vrot.slane %v3179, 1
      %v3494 = vrot.slane %v3243, 1
      %v3495 = vsel %vm1488, %v3493, %v3494
      %v3496 = vrot.slane %v3180, 1
      %v3497 = vrot.slane %v3244, 1
      %v3498 = vsel %vm1488, %v3496, %v3497
      %v3499 = vrot.slane %v3181, 1
      %v3500 = vrot.slane %v3245, 1
      %v3501 = vsel %vm1488, %v3499, %v3500
      %s3518 = scalar_lea.vmem %s3, 384
      %v3519 = vld [vmem:[%s3518] sm:$0xf]
      %v3520 = vld [vmem:[%s3518 + $0x4] sm:$0xf]
      %v3521 = vld [vmem:[%s3518 + $0x8] sm:$0xf]
      %v3522 = vld [vmem:[%s3518 + $0xc] sm:$0xf]
      %v3523 = vld [vmem:[%s3518 + $0x10] sm:$0xf]
      %v3524 = vld [vmem:[%s3518 + $0x14] sm:$0xf]
      %v3525 = vld [vmem:[%s3518 + $0x18] sm:$0xf]
      %v3526 = vld [vmem:[%s3518 + $0x1c] sm:$0xf]
      %v3527 = vld [vmem:[%s3518 + $0x20] sm:$0xf]
      %v3528 = vld [vmem:[%s3518 + $0x24] sm:$0xf]
      %v3529 = vld [vmem:[%s3518 + $0x28] sm:$0xf]
      %v3530 = vld [vmem:[%s3518 + $0x2c] sm:$0xf]
      %v3531 = vld [vmem:[%s3518 + $0x30] sm:$0xf]
      %v3532 = vld [vmem:[%s3518 + $0x34] sm:$0xf]
      %v3533 = vld [vmem:[%s3518 + $0x38] sm:$0xf]
      %v3534 = vld [vmem:[%s3518 + $0x3c] sm:$0xf]
      %v3535 = vld [vmem:[%s3518 + $0x40] sm:$0xf]
      %v3536 = vld [vmem:[%s3518 + $0x44] sm:$0xf]
      %v3537 = vld [vmem:[%s3518 + $0x48] sm:$0xf]
      %v3538 = vld [vmem:[%s3518 + $0x4c] sm:$0xf]
      %v3539 = vld [vmem:[%s3518 + $0x50] sm:$0xf]
      %v3540 = vld [vmem:[%s3518 + $0x54] sm:$0xf]
      %v3541 = vld [vmem:[%s3518 + $0x58] sm:$0xf]
      %v3542 = vld [vmem:[%s3518 + $0x5c] sm:$0xf]
      %v3543 = vld [vmem:[%s3518 + $0x60] sm:$0xf]
      %v3544 = vld [vmem:[%s3518 + $0x64] sm:$0xf]
      %v3545 = vld [vmem:[%s3518 + $0x68] sm:$0xf]
      %v3546 = vld [vmem:[%s3518 + $0x6c] sm:$0xf]
      %v3547 = vld [vmem:[%s3518 + $0x70] sm:$0xf]
      %v3548 = vld [vmem:[%s3518 + $0x74] sm:$0xf]
      %v3549 = vld [vmem:[%s3518 + $0x78] sm:$0xf]
      %v3550 = vld [vmem:[%s3518 + $0x7c] sm:$0xf]
      %v3551 = vld [vmem:[%s3518 + $0x80] sm:$0xf]
      %v3552 = vld [vmem:[%s3518 + $0x84] sm:$0xf]
      %v3553 = vld [vmem:[%s3518 + $0x88] sm:$0xf]
      %v3554 = vld [vmem:[%s3518 + $0x8c] sm:$0xf]
      %v3555 = vld [vmem:[%s3518 + $0x90] sm:$0xf]
      %v3556 = vld [vmem:[%s3518 + $0x94] sm:$0xf]
      %v3557 = vld [vmem:[%s3518 + $0x98] sm:$0xf]
      %v3558 = vld [vmem:[%s3518 + $0x9c] sm:$0xf]
      %v3559 = vld [vmem:[%s3518 + $0xa0] sm:$0xf]
      %v3560 = vld [vmem:[%s3518 + $0xa4] sm:$0xf]
      %v3561 = vld [vmem:[%s3518 + $0xa8] sm:$0xf]
      %v3562 = vld [vmem:[%s3518 + $0xac] sm:$0xf]
      %v3563 = vld [vmem:[%s3518 + $0xb0] sm:$0xf]
      %v3564 = vld [vmem:[%s3518 + $0xb4] sm:$0xf]
      %v3565 = vld [vmem:[%s3518 + $0xb8] sm:$0xf]
      %v3566 = vld [vmem:[%s3518 + $0xbc] sm:$0xf]
      %v3615 = vunpack.c.l.b16 %v3519
      %v3616 = vunpack.c.l.b16 %v3520
      %v3617 = vunpack.c.l.b16 %v3521
      %v3618 = vunpack.c.l.b16 %v3522
      %v3619 = vunpack.c.l.b16 %v3523
      %v3620 = vunpack.c.l.b16 %v3524
      %v3621 = vunpack.c.l.b16 %v3525
      %v3622 = vunpack.c.l.b16 %v3526
      %v3623 = vunpack.c.l.b16 %v3527
      %v3624 = vunpack.c.l.b16 %v3528
      %v3625 = vunpack.c.l.b16 %v3529
      %v3626 = vunpack.c.l.b16 %v3530
      %v3627 = vunpack.c.l.b16 %v3531
      %v3628 = vunpack.c.l.b16 %v3532
      %v3629 = vunpack.c.l.b16 %v3533
      %v3630 = vunpack.c.l.b16 %v3534
      %v3631 = vunpack.c.l.b16 %v3535
      %v3632 = vunpack.c.l.b16 %v3536
      %v3633 = vunpack.c.l.b16 %v3537
      %v3634 = vunpack.c.l.b16 %v3538
      %v3635 = vunpack.c.l.b16 %v3539
      %v3636 = vunpack.c.l.b16 %v3540
      %v3637 = vunpack.c.l.b16 %v3541
      %v3638 = vunpack.c.l.b16 %v3542
      %v3639 = vunpack.c.l.b16 %v3543
      %v3640 = vunpack.c.l.b16 %v3544
      %v3641 = vunpack.c.l.b16 %v3545
      %v3642 = vunpack.c.l.b16 %v3546
      %v3643 = vunpack.c.l.b16 %v3547
      %v3644 = vunpack.c.l.b16 %v3548
      %v3645 = vunpack.c.l.b16 %v3549
      %v3646 = vunpack.c.l.b16 %v3550
      %v3647 = vunpack.c.l.b16 %v3551
      %v3648 = vunpack.c.l.b16 %v3552
      %v3649 = vunpack.c.l.b16 %v3553
      %v3650 = vunpack.c.l.b16 %v3554
      %v3651 = vunpack.c.l.b16 %v3555
      %v3652 = vunpack.c.l.b16 %v3556
      %v3653 = vunpack.c.l.b16 %v3557
      %v3654 = vunpack.c.l.b16 %v3558
      %v3655 = vunpack.c.l.b16 %v3559
      %v3656 = vunpack.c.l.b16 %v3560
      %v3657 = vunpack.c.l.b16 %v3561
      %v3658 = vunpack.c.l.b16 %v3562
      %v3659 = vunpack.c.l.b16 %v3563
      %v3660 = vunpack.c.l.b16 %v3564
      %v3661 = vunpack.c.l.b16 %v3565
      %v3662 = vunpack.c.l.b16 %v3566
      %v3663 = vpack.c.b16 %v3616, %v3615
      %v3664 = vpack.c.b16 %v3618, %v3617
      %v3665 = vpack.c.b16 %v3620, %v3619
      %v3666 = vpack.c.b16 %v3622, %v3621
      %v3667 = vpack.c.b16 %v3624, %v3623
      %v3668 = vpack.c.b16 %v3626, %v3625
      %v3669 = vpack.c.b16 %v3628, %v3627
      %v3670 = vpack.c.b16 %v3630, %v3629
      %v3671 = vpack.c.b16 %v3632, %v3631
      %v3672 = vpack.c.b16 %v3634, %v3633
      %v3673 = vpack.c.b16 %v3636, %v3635
      %v3674 = vpack.c.b16 %v3638, %v3637
      %v3675 = vpack.c.b16 %v3640, %v3639
      %v3676 = vpack.c.b16 %v3642, %v3641
      %v3677 = vpack.c.b16 %v3644, %v3643
      %v3678 = vpack.c.b16 %v3646, %v3645
      %v3679 = vpack.c.b16 %v3648, %v3647
      %v3680 = vpack.c.b16 %v3650, %v3649
      %v3681 = vpack.c.b16 %v3652, %v3651
      %v3682 = vpack.c.b16 %v3654, %v3653
      %v3683 = vpack.c.b16 %v3656, %v3655
      %v3684 = vpack.c.b16 %v3658, %v3657
      %v3685 = vpack.c.b16 %v3660, %v3659
      %v3686 = vpack.c.b16 %v3662, %v3661
      %3711 = vmatprep.subr.bf16.mxu0 0
      %3712 = vmatpush1.bf16.msra.mxu0 %v3670
      %3713 = vmatprep.subr.bf16.mxu0 0
      %3714 = vmatpush1.bf16.msra.mxu0 %v3669
      %3715 = vmatprep.subr.bf16.mxu0 0
      %3716 = vmatpush1.bf16.msra.mxu0 %v3668
      %3717 = vmatprep.subr.bf16.mxu0 0
      %3718 = vmatpush1.bf16.msra.mxu0 %v3667
      %3719 = vmatprep.subr.bf16.mxu0 0
      %3720 = vmatpush1.bf16.msra.mxu0 %v3666
      %3721 = vmatprep.subr.bf16.mxu0 0
      %3722 = vmatpush1.bf16.msra.mxu0 %v3665
      %3723 = vmatprep.subr.bf16.mxu0 0
      %3724 = vmatpush1.bf16.msra.mxu0 %v3664
      %3725 = vmatprep.subr.bf16.mxu0 0
      %3726 = vmatpush1.bf16.msra.mxu0 %v3663
      %3727 = vmatprep.subr.bf16.mxu0 0
      %3728 = vmatpush2.bf16.msra.mxu0 %v3678
      %3729 = vmatprep.subr.bf16.mxu0 0
      %3730 = vmatpush2.bf16.msra.mxu0 %v3677
      %3731 = vmatprep.subr.bf16.mxu0 0
      %3732 = vmatpush2.bf16.msra.mxu0 %v3676
      %3733 = vmatprep.subr.bf16.mxu0 0
      %3734 = vmatpush2.bf16.msra.mxu0 %v3675
      %3735 = vmatprep.subr.bf16.mxu0 0
      %3736 = vmatpush2.bf16.msra.mxu0 %v3674
      %3737 = vmatprep.subr.bf16.mxu0 0
      %3738 = vmatpush2.bf16.msra.mxu0 %v3673
      %3739 = vmatprep.subr.bf16.mxu0 0
      %3740 = vmatpush2.bf16.msra.mxu0 %v3672
      %3741 = vmatprep.subr.bf16.mxu0 0
      %3742 = vmatpush2.bf16.msra.mxu0 %v3671
      %3743 = vmatprep.mubr.bf16.mxu0 %v3257
      %3744 = vmatmul.mubr.bf16.gmra.mxu0 %v3166
      %v3745 = vpop.f32.mrf.mxu0
      %v3746 = vadd.f32 0.0, %v3745
      %v3747 = vpop.f32.mrf.mxu0
      %v3748 = vpop.f32.mrf.mxu0
      %v3749 = vadd.f32 0.0, %v3748
      %v3750 = vpop.f32.mrf.mxu0
      %3751 = vmatprep.mubr.bf16.mxu0 %v3269
      %3752 = vmatmul.mubr.bf16.gmra.mxu0 %v3167
      %v3753 = vpop.f32.mrf.mxu0
      %v3754 = vadd.f32 0.0, %v3753
      %v3755 = vpop.f32.mrf.mxu0
      %v3756 = vpop.f32.mrf.mxu0
      %v3757 = vadd.f32 0.0, %v3756
      %v3758 = vpop.f32.mrf.mxu0
      %3759 = vmatprep.mubr.bf16.mxu0 %v3281
      %3760 = vmatmul.mubr.bf16.gmra.mxu0 %v3168
      %v3761 = vpop.f32.mrf.mxu0
      %v3762 = vadd.f32 0.0, %v3761
      %v3763 = vpop.f32.mrf.mxu0
      %v3764 = vpop.f32.mrf.mxu0
      %v3765 = vadd.f32 0.0, %v3764
      %v3766 = vpop.f32.mrf.mxu0
      %3767 = vmatprep.mubr.bf16.mxu0 %v3293
      %3768 = vmatmul.mubr.bf16.gmra.mxu0 %v3169
      %v3769 = vpop.f32.mrf.mxu0
      %v3770 = vadd.f32 0.0, %v3769
      %v3771 = vpop.f32.mrf.mxu0
      %v3772 = vpop.f32.mrf.mxu0
      %v3773 = vadd.f32 0.0, %v3772
      %v3774 = vpop.f32.mrf.mxu0
      %3775 = vmatprep.mubr.bf16.mxu0 %v3305
      %3776 = vmatmul.mubr.bf16.gmra.mxu0 %v3170
      %v3777 = vpop.f32.mrf.mxu0
      %v3778 = vadd.f32 0.0, %v3777
      %v3779 = vpop.f32.mrf.mxu0
      %v3780 = vpop.f32.mrf.mxu0
      %v3781 = vadd.f32 0.0, %v3780
      %v3782 = vpop.f32.mrf.mxu0
      %3783 = vmatprep.mubr.bf16.mxu0 %v3317
      %3784 = vmatmul.mubr.bf16.gmra.mxu0 %v3171
      %v3785 = vpop.f32.mrf.mxu0
      %v3786 = vadd.f32 0.0, %v3785
      %v3787 = vpop.f32.mrf.mxu0
      %v3788 = vpop.f32.mrf.mxu0
      %v3789 = vadd.f32 0.0, %v3788
      %v3790 = vpop.f32.mrf.mxu0
      %3791 = vmatprep.mubr.bf16.mxu0 %v3329
      %3792 = vmatmul.mubr.bf16.gmra.mxu0 %v3172
      %v3793 = vpop.f32.mrf.mxu0
      %v3794 = vadd.f32 0.0, %v3793
      %v3795 = vpop.f32.mrf.mxu0
      %v3796 = vpop.f32.mrf.mxu0
      %v3797 = vadd.f32 0.0, %v3796
      %v3798 = vpop.f32.mrf.mxu0
      %3799 = vmatprep.mubr.bf16.mxu0 %v3341
      %3800 = vmatmul.mubr.bf16.gmra.mxu0 %v3173
      %v3801 = vpop.f32.mrf.mxu0
      %v3802 = vadd.f32 0.0, %v3801
      %v3803 = vpop.f32.mrf.mxu0
      %v3804 = vpop.f32.mrf.mxu0
      %v3805 = vadd.f32 0.0, %v3804
      %v3806 = vpop.f32.mrf.mxu0
      %3807 = vmatprep.mubr.bf16.mxu0 %v3353
      %3808 = vmatmul.mubr.bf16.gmra.mxu0 %v3174
      %v3809 = vpop.f32.mrf.mxu0
      %v3810 = vadd.f32 0.0, %v3809
      %v3811 = vpop.f32.mrf.mxu0
      %v3812 = vpop.f32.mrf.mxu0
      %v3813 = vadd.f32 0.0, %v3812
      %v3814 = vpop.f32.mrf.mxu0
      %3815 = vmatprep.mubr.bf16.mxu0 %v3365
      %3816 = vmatmul.mubr.bf16.gmra.mxu0 %v3175
      %v3817 = vpop.f32.mrf.mxu0
      %v3818 = vadd.f32 0.0, %v3817
      %v3819 = vpop.f32.mrf.mxu0
      %v3820 = vpop.f32.mrf.mxu0
      %v3821 = vadd.f32 0.0, %v3820
      %v3822 = vpop.f32.mrf.mxu0
      %3823 = vmatprep.mubr.bf16.mxu0 %v3377
      %3824 = vmatmul.mubr.bf16.gmra.mxu0 %v3176
      %v3825 = vpop.f32.mrf.mxu0
      %v3826 = vadd.f32 0.0, %v3825
      %v3827 = vpop.f32.mrf.mxu0
      %v3828 = vpop.f32.mrf.mxu0
      %v3829 = vadd.f32 0.0, %v3828
      %v3830 = vpop.f32.mrf.mxu0
      %3831 = vmatprep.mubr.bf16.mxu0 %v3389
      %3832 = vmatmul.mubr.bf16.gmra.mxu0 %v3177
      %v3833 = vpop.f32.mrf.mxu0
      %v3834 = vadd.f32 0.0, %v3833
      %v3835 = vpop.f32.mrf.mxu0
      %v3836 = vpop.f32.mrf.mxu0
      %v3837 = vadd.f32 0.0, %v3836
      %v3838 = vpop.f32.mrf.mxu0
      %3839 = vmatprep.mubr.bf16.mxu0 %v3401
      %3840 = vmatmul.mubr.bf16.gmra.mxu0 %v3178
      %v3841 = vpop.f32.mrf.mxu0
      %v3842 = vadd.f32 0.0, %v3841
      %v3843 = vpop.f32.mrf.mxu0
      %v3844 = vpop.f32.mrf.mxu0
      %v3845 = vadd.f32 0.0, %v3844
      %v3846 = vpop.f32.mrf.mxu0
      %3847 = vmatprep.mubr.bf16.mxu0 %v3413
      %3848 = vmatmul.mubr.bf16.gmra.mxu0 %v3179
      %v3849 = vpop.f32.mrf.mxu0
      %v3850 = vadd.f32 0.0, %v3849
      %v3851 = vpop.f32.mrf.mxu0
      %v3852 = vpop.f32.mrf.mxu0
      %v3853 = vadd.f32 0.0, %v3852
      %v3854 = vpop.f32.mrf.mxu0
      %3855 = vmatprep.mubr.bf16.mxu0 %v3425
      %3856 = vmatmul.mubr.bf16.gmra.mxu0 %v3180
      %v3857 = vpop.f32.mrf.mxu0
      %v3858 = vadd.f32 0.0, %v3857
      %v3859 = vpop.f32.mrf.mxu0
      %v3860 = vpop.f32.mrf.mxu0
      %v3861 = vadd.f32 0.0, %v3860
      %v3862 = vpop.f32.mrf.mxu0
      %3863 = vmatprep.mubr.bf16.mxu0 %v3437
      %3864 = vmatmul.mubr.bf16.gmra.mxu0 %v3181
      %v3865 = vpop.f32.mrf.mxu0
      %v3866 = vadd.f32 0.0, %v3865
      %v3867 = vpop.f32.mrf.mxu0
      %v3868 = vpop.f32.mrf.mxu0
      %v3869 = vadd.f32 0.0, %v3868
      %v3870 = vpop.f32.mrf.mxu0
      %3871 = vdwg.mxu0
      %3872 = vmatprep.subr.bf16.mxu0 0
      %3873 = vmatpush1.bf16.msra.mxu0 %v3686
      %3874 = vmatprep.subr.bf16.mxu0 0
      %3875 = vmatpush1.bf16.msra.mxu0 %v3685
      %3876 = vmatprep.subr.bf16.mxu0 0
      %3877 = vmatpush1.bf16.msra.mxu0 %v3684
      %3878 = vmatprep.subr.bf16.mxu0 0
      %3879 = vmatpush1.bf16.msra.mxu0 %v3683
      %3880 = vmatprep.subr.bf16.mxu0 0
      %3881 = vmatpush1.bf16.msra.mxu0 %v3682
      %3882 = vmatprep.subr.bf16.mxu0 0
      %3883 = vmatpush1.bf16.msra.mxu0 %v3681
      %3884 = vmatprep.subr.bf16.mxu0 0
      %3885 = vmatpush1.bf16.msra.mxu0 %v3680
      %3886 = vmatprep.subr.bf16.mxu0 0
      %3887 = vmatpush1.bf16.msra.mxu0 %v3679
      %3888 = vmatprep.subr.bf16.mxu0 0
      %3889 = vmatpush2.bf16.msra.mxu0 0
      %3890 = vmatprep.subr.bf16.mxu0 0
      %3891 = vmatpush2.bf16.msra.mxu0 0
      %3892 = vmatprep.subr.bf16.mxu0 0
      %3893 = vmatpush2.bf16.msra.mxu0 0
      %3894 = vmatprep.subr.bf16.mxu0 0
      %3895 = vmatpush2.bf16.msra.mxu0 0
      %3896 = vmatprep.subr.bf16.mxu0 0
      %3897 = vmatpush2.bf16.msra.mxu0 0
      %3898 = vmatprep.subr.bf16.mxu0 0
      %3899 = vmatpush2.bf16.msra.mxu0 0
      %3900 = vmatprep.subr.bf16.mxu0 0
      %3901 = vmatpush2.bf16.msra.mxu0 0
      %3902 = vmatprep.subr.bf16.mxu0 0
      %3903 = vmatpush2.bf16.msra.mxu0 0
      %3904 = vmatprep.mubr.bf16.mxu0 0
      %3905 = vmatmul.mubr.bf16.gmra.mxu0 %v3456
      %v3906 = vpop.f32.mrf.mxu0
      %v3907 = vadd.f32 %v3746, %v3906
      %v3908 = vpop.f32.mrf.mxu0
      %v3909 = vpop.f32.mrf.mxu0
      %v3910 = vadd.f32 %v3749, %v3909
      %v3911 = vpop.f32.mrf.mxu0
      %3912 = vmatprep.mubr.bf16.mxu0 0
      %3913 = vmatmul.mubr.bf16.gmra.mxu0 %v3459
      %v3914 = vpop.f32.mrf.mxu0
      %v3915 = vadd.f32 %v3754, %v3914
      %v3916 = vpop.f32.mrf.mxu0
      %v3917 = vpop.f32.mrf.mxu0
      %v3918 = vadd.f32 %v3757, %v3917
      %v3919 = vpop.f32.mrf.mxu0
      %3920 = vmatprep.mubr.bf16.mxu0 0
      %3921 = vmatmul.mubr.bf16.gmra.mxu0 %v3462
      %v3922 = vpop.f32.mrf.mxu0
      %v3923 = vadd.f32 %v3762, %v3922
      %v3924 = vpop.f32.mrf.mxu0
      %v3925 = vpop.f32.mrf.mxu0
      %v3926 = vadd.f32 %v3765, %v3925
      %v3927 = vpop.f32.mrf.mxu0
      %3928 = vmatprep.mubr.bf16.mxu0 0
      %3929 = vmatmul.mubr.bf16.gmra.mxu0 %v3465
      %v3930 = vpop.f32.mrf.mxu0
      %v3931 = vadd.f32 %v3770, %v3930
      %v3932 = vpop.f32.mrf.mxu0
      %v3933 = vpop.f32.mrf.mxu0
      %v3934 = vadd.f32 %v3773, %v3933
      %v3935 = vpop.f32.mrf.mxu0
      %3936 = vmatprep.mubr.bf16.mxu0 0
      %3937 = vmatmul.mubr.bf16.gmra.mxu0 %v3468
      %v3938 = vpop.f32.mrf.mxu0
      %v3939 = vadd.f32 %v3778, %v3938
      %v3940 = vpop.f32.mrf.mxu0
      %v3941 = vpop.f32.mrf.mxu0
      %v3942 = vadd.f32 %v3781, %v3941
      %v3943 = vpop.f32.mrf.mxu0
      %3944 = vmatprep.mubr.bf16.mxu0 0
      %3945 = vmatmul.mubr.bf16.gmra.mxu0 %v3471
      %v3946 = vpop.f32.mrf.mxu0
      %v3947 = vadd.f32 %v3786, %v3946
      %v3948 = vpop.f32.mrf.mxu0
      %v3949 = vpop.f32.mrf.mxu0
      %v3950 = vadd.f32 %v3789, %v3949
      %v3951 = vpop.f32.mrf.mxu0
      %3952 = vmatprep.mubr.bf16.mxu0 0
      %3953 = vmatmul.mubr.bf16.gmra.mxu0 %v3474
      %v3954 = vpop.f32.mrf.mxu0
      %v3955 = vadd.f32 %v3794, %v3954
      %v3956 = vpop.f32.mrf.mxu0
      %v3957 = vpop.f32.mrf.mxu0
      %v3958 = vadd.f32 %v3797, %v3957
      %v3959 = vpop.f32.mrf.mxu0
      %3960 = vmatprep.mubr.bf16.mxu0 0
      %3961 = vmatmul.mubr.bf16.gmra.mxu0 %v3477
      %v3962 = vpop.f32.mrf.mxu0
      %v3963 = vadd.f32 %v3802, %v3962
      %v3964 = vpop.f32.mrf.mxu0
      %v3965 = vpop.f32.mrf.mxu0
      %v3966 = vadd.f32 %v3805, %v3965
      %v3967 = vpop.f32.mrf.mxu0
      %3968 = vmatprep.mubr.bf16.mxu0 0
      %3969 = vmatmul.mubr.bf16.gmra.mxu0 %v3480
      %v3970 = vpop.f32.mrf.mxu0
      %v3971 = vadd.f32 %v3810, %v3970
      %v3972 = vpop.f32.mrf.mxu0
      %v3973 = vpop.f32.mrf.mxu0
      %v3974 = vadd.f32 %v3813, %v3973
      %v3975 = vpop.f32.mrf.mxu0
      %3976 = vmatprep.mubr.bf16.mxu0 0
      %3977 = vmatmul.mubr.bf16.gmra.mxu0 %v3483
      %v3978 = vpop.f32.mrf.mxu0
      %v3979 = vadd.f32 %v3818, %v3978
      %v3980 = vpop.f32.mrf.mxu0
      %v3981 = vpop.f32.mrf.mxu0
      %v3982 = vadd.f32 %v3821, %v3981
      %v3983 = vpop.f32.mrf.mxu0
      %3984 = vmatprep.mubr.bf16.mxu0 0
      %3985 = vmatmul.mubr.bf16.gmra.mxu0 %v3486
      %v3986 = vpop.f32.mrf.mxu0
      %v3987 = vadd.f32 %v3826, %v3986
      %v3988 = vpop.f32.mrf.mxu0
      %v3989 = vpop.f32.mrf.mxu0
      %v3990 = vadd.f32 %v3829, %v3989
      %v3991 = vpop.f32.mrf.mxu0
      %3992 = vmatprep.mubr.bf16.mxu0 0
      %3993 = vmatmul.mubr.bf16.gmra.mxu0 %v3489
      %v3994 = vpop.f32.mrf.mxu0
      %v3995 = vadd.f32 %v3834, %v3994
      %v3996 = vpop.f32.mrf.mxu0
      %v3997 = vpop.f32.mrf.mxu0
      %v3998 = vadd.f32 %v3837, %v3997
      %v3999 = vpop.f32.mrf.mxu0
      %4000 = vmatprep.mubr.bf16.mxu0 0
      %4001 = vmatmul.mubr.bf16.gmra.mxu0 %v3492
      %v4002 = vpop.f32.mrf.mxu0
      %v4003 = vadd.f32 %v3842, %v4002
      %v4004 = vpop.f32.mrf.mxu0
      %v4005 = vpop.f32.mrf.mxu0
      %v4006 = vadd.f32 %v3845, %v4005
      %v4007 = vpop.f32.mrf.mxu0
      %4008 = vmatprep.mubr.bf16.mxu0 0
      %4009 = vmatmul.mubr.bf16.gmra.mxu0 %v3495
      %v4010 = vpop.f32.mrf.mxu0
      %v4011 = vadd.f32 %v3850, %v4010
      %v4012 = vpop.f32.mrf.mxu0
      %v4013 = vpop.f32.mrf.mxu0
      %v4014 = vadd.f32 %v3853, %v4013
      %v4015 = vpop.f32.mrf.mxu0
      %4016 = vmatprep.mubr.bf16.mxu0 0
      %4017 = vmatmul.mubr.bf16.gmra.mxu0 %v3498
      %v4018 = vpop.f32.mrf.mxu0
      %v4019 = vadd.f32 %v3858, %v4018
      %v4020 = vpop.f32.mrf.mxu0
      %v4021 = vpop.f32.mrf.mxu0
      %v4022 = vadd.f32 %v3861, %v4021
      %v4023 = vpop.f32.mrf.mxu0
      %4024 = vmatprep.mubr.bf16.mxu0 0
      %4025 = vmatmul.mubr.bf16.gmra.mxu0 %v3501
      %v4026 = vpop.f32.mrf.mxu0
      %v4027 = vadd.f32 %v3866, %v4026
      %v4028 = vpop.f32.mrf.mxu0
      %v4029 = vpop.f32.mrf.mxu0
      %v4030 = vadd.f32 %v3869, %v4029
      %v4031 = vpop.f32.mrf.mxu0
      %4032 = vdwg.mxu0
      %v4033 = vadd.f32 %v2924, %v3907
      %v4034 = vadd.f32 %v2927, %v3910
      %v4035 = vadd.f32 %v2932, %v3915
      %v4036 = vadd.f32 %v2935, %v3918
      %v4037 = vadd.f32 %v2940, %v3923
      %v4038 = vadd.f32 %v2943, %v3926
      %v4039 = vadd.f32 %v2948, %v3931
      %v4040 = vadd.f32 %v2951, %v3934
      %v4041 = vadd.f32 %v2956, %v3939
      %v4042 = vadd.f32 %v2959, %v3942
      %v4043 = vadd.f32 %v2964, %v3947
      %v4044 = vadd.f32 %v2967, %v3950
      %v4045 = vadd.f32 %v2972, %v3955
      %v4046 = vadd.f32 %v2975, %v3958
      %v4047 = vadd.f32 %v2980, %v3963
      %v4048 = vadd.f32 %v2983, %v3966
      %v4049 = vadd.f32 %v2988, %v3971
      %v4050 = vadd.f32 %v2991, %v3974
      %v4051 = vadd.f32 %v2996, %v3979
      %v4052 = vadd.f32 %v2999, %v3982
      %v4053 = vadd.f32 %v3004, %v3987
      %v4054 = vadd.f32 %v3007, %v3990
      %v4055 = vadd.f32 %v3012, %v3995
      %v4056 = vadd.f32 %v3015, %v3998
      %v4057 = vadd.f32 %v3020, %v4003
      %v4058 = vadd.f32 %v3023, %v4006
      %v4059 = vadd.f32 %v3028, %v4011
      %v4060 = vadd.f32 %v3031, %v4014
      %v4061 = vadd.f32 %v3036, %v4019
      %v4062 = vadd.f32 %v3039, %v4022
      %v4063 = vadd.f32 %v3044, %v4027
      %v4064 = vadd.f32 %v3047, %v4030
      %v4065 = vpack.c.bf16 %v4034, %v4033
      %v4066 = vpack.c.bf16 %v4036, %v4035
      %v4067 = vpack.c.bf16 %v4038, %v4037
      %v4068 = vpack.c.bf16 %v4040, %v4039
      %v4069 = vpack.c.bf16 %v4042, %v4041
      %v4070 = vpack.c.bf16 %v4044, %v4043
      %v4071 = vpack.c.bf16 %v4046, %v4045
      %v4072 = vpack.c.bf16 %v4048, %v4047
      %v4073 = vpack.c.bf16 %v4050, %v4049
      %v4074 = vpack.c.bf16 %v4052, %v4051
      %v4075 = vpack.c.bf16 %v4054, %v4053
      %v4076 = vpack.c.bf16 %v4056, %v4055
      %v4077 = vpack.c.bf16 %v4058, %v4057
      %v4078 = vpack.c.bf16 %v4060, %v4059
      %v4079 = vpack.c.bf16 %v4062, %v4061
      %v4080 = vpack.c.bf16 %v4064, %v4063
      %v4097 = vunpack.c.l.b16 %v4065
      %v4098 = vunpack.c.h.b16 %v4065
      %v4099 = vunpack.c.l.b16 %v4066
      %v4100 = vunpack.c.h.b16 %v4066
      %v4101 = vunpack.c.l.b16 %v4067
      %v4102 = vunpack.c.h.b16 %v4067
      %v4103 = vunpack.c.l.b16 %v4068
      %v4104 = vunpack.c.h.b16 %v4068
      %v4105 = vunpack.c.l.b16 %v4069
      %v4106 = vunpack.c.h.b16 %v4069
      %v4107 = vunpack.c.l.b16 %v4070
      %v4108 = vunpack.c.h.b16 %v4070
      %v4109 = vunpack.c.l.b16 %v4071
      %v4110 = vunpack.c.h.b16 %v4071
      %v4111 = vunpack.c.l.b16 %v4072
      %v4112 = vunpack.c.h.b16 %v4072
      %v4113 = vunpack.c.l.b16 %v4073
      %v4114 = vunpack.c.h.b16 %v4073
      %v4115 = vunpack.c.l.b16 %v4074
      %v4116 = vunpack.c.h.b16 %v4074
      %v4117 = vunpack.c.l.b16 %v4075
      %v4118 = vunpack.c.h.b16 %v4075
      %v4119 = vunpack.c.l.b16 %v4076
      %v4120 = vunpack.c.h.b16 %v4076
      %v4121 = vunpack.c.l.b16 %v4077
      %v4122 = vunpack.c.h.b16 %v4077
      %v4123 = vunpack.c.l.b16 %v4078
      %v4124 = vunpack.c.h.b16 %v4078
      %v4125 = vunpack.c.l.b16 %v4079
      %v4126 = vunpack.c.h.b16 %v4079
      %v4127 = vunpack.c.l.b16 %v4080
      %v4128 = vunpack.c.h.b16 %v4080
      %v4129 = vpack.c.b16 %v4097, %v4097
      %v4130 = vpack.c.b16 %v4098, %v4098
      %v4131 = vpack.c.b16 %v4099, %v4099
      %v4132 = vpack.c.b16 %v4100, %v4100
      %v4133 = vpack.c.b16 %v4101, %v4101
      %v4134 = vpack.c.b16 %v4102, %v4102
      %v4135 = vpack.c.b16 %v4103, %v4103
      %v4136 = vpack.c.b16 %v4104, %v4104
      %v4137 = vpack.c.b16 %v4105, %v4105
      %v4138 = vpack.c.b16 %v4106, %v4106
      %v4139 = vpack.c.b16 %v4107, %v4107
      %v4140 = vpack.c.b16 %v4108, %v4108
      %v4141 = vpack.c.b16 %v4109, %v4109
      %v4142 = vpack.c.b16 %v4110, %v4110
      %v4143 = vpack.c.b16 %v4111, %v4111
      %v4144 = vpack.c.b16 %v4112, %v4112
      %v4145 = vpack.c.b16 %v4113, %v4113
      %v4146 = vpack.c.b16 %v4114, %v4114
      %v4147 = vpack.c.b16 %v4115, %v4115
      %v4148 = vpack.c.b16 %v4116, %v4116
      %v4149 = vpack.c.b16 %v4117, %v4117
      %v4150 = vpack.c.b16 %v4118, %v4118
      %v4151 = vpack.c.b16 %v4119, %v4119
      %v4152 = vpack.c.b16 %v4120, %v4120
      %v4153 = vpack.c.b16 %v4121, %v4121
      %v4154 = vpack.c.b16 %v4122, %v4122
      %v4155 = vpack.c.b16 %v4123, %v4123
      %v4156 = vpack.c.b16 %v4124, %v4124
      %v4157 = vpack.c.b16 %v4125, %v4125
      %v4158 = vpack.c.b16 %v4126, %v4126
      %v4159 = vpack.c.b16 %v4127, %v4127
      %v4160 = vpack.c.b16 %v4128, %v4128
      %4193 = vst [vmem:[%s250] sm:$0xf] %v4129
      %4194 = vst [vmem:[%s250 + $0x4] sm:$0xf] %v4130
      %4195 = vst [vmem:[%s250 + $0x8] sm:$0xf] %v4131
      %4196 = vst [vmem:[%s250 + $0xc] sm:$0xf] %v4132
      %4197 = vst [vmem:[%s250 + $0x10] sm:$0xf] %v4133
      %4198 = vst [vmem:[%s250 + $0x14] sm:$0xf] %v4134
      %4199 = vst [vmem:[%s250 + $0x18] sm:$0xf] %v4135
      %4200 = vst [vmem:[%s250 + $0x1c] sm:$0xf] %v4136
      %4201 = vst [vmem:[%s250 + $0x20] sm:$0xf] %v4137
      %4202 = vst [vmem:[%s250 + $0x24] sm:$0xf] %v4138
      %4203 = vst [vmem:[%s250 + $0x28] sm:$0xf] %v4139
      %4204 = vst [vmem:[%s250 + $0x2c] sm:$0xf] %v4140
      %4205 = vst [vmem:[%s250 + $0x30] sm:$0xf] %v4141
      %4206 = vst [vmem:[%s250 + $0x34] sm:$0xf] %v4142
      %4207 = vst [vmem:[%s250 + $0x38] sm:$0xf] %v4143
      %4208 = vst [vmem:[%s250 + $0x3c] sm:$0xf] %v4144
      %4209 = vst [vmem:[%s250 + $0x40] sm:$0xf] %v4145
      %4210 = vst [vmem:[%s250 + $0x44] sm:$0xf] %v4146
      %4211 = vst [vmem:[%s250 + $0x48] sm:$0xf] %v4147
      %4212 = vst [vmem:[%s250 + $0x4c] sm:$0xf] %v4148
      %4213 = vst [vmem:[%s250 + $0x50] sm:$0xf] %v4149
      %4214 = vst [vmem:[%s250 + $0x54] sm:$0xf] %v4150
      %4215 = vst [vmem:[%s250 + $0x58] sm:$0xf] %v4151
      %4216 = vst [vmem:[%s250 + $0x5c] sm:$0xf] %v4152
      %4217 = vst [vmem:[%s250 + $0x60] sm:$0xf] %v4153
      %4218 = vst [vmem:[%s250 + $0x64] sm:$0xf] %v4154
      %4219 = vst [vmem:[%s250 + $0x68] sm:$0xf] %v4155
      %4220 = vst [vmem:[%s250 + $0x6c] sm:$0xf] %v4156
      %4221 = vst [vmem:[%s250 + $0x70] sm:$0xf] %v4157
      %4222 = vst [vmem:[%s250 + $0x74] sm:$0xf] %v4158
      %4223 = vst [vmem:[%s250 + $0x78] sm:$0xf] %v4159
      %4224 = vst [vmem:[%s250 + $0x7c] sm:$0xf] %v4160
      %v4225 = vadd.f32 %v4033, %v4034
      %v4226 = vadd.f32 %v4225, %v4035
      %v4227 = vadd.f32 %v4226, %v4036
      %v4228 = vadd.f32 %v4227, %v4037
      %v4229 = vadd.f32 %v4228, %v4038
      %v4230 = vadd.f32 %v4229, %v4039
      %v4231 = vadd.f32 %v4230, %v4040
      %v4232 = vadd.f32 %v4231, %v4041
      %v4233 = vadd.f32 %v4232, %v4042
      %v4234 = vadd.f32 %v4233, %v4043
      %v4235 = vadd.f32 %v4234, %v4044
      %v4236 = vadd.f32 %v4235, %v4045
      %v4237 = vadd.f32 %v4236, %v4046
      %v4238 = vadd.f32 %v4237, %v4047
      %v4239 = vadd.f32 %v4238, %v4048
      %v4240 = vadd.f32 %v4239, %v4049
      %v4241 = vadd.f32 %v4240, %v4050
      %v4242 = vadd.f32 %v4241, %v4051
      %v4243 = vadd.f32 %v4242, %v4052
      %v4244 = vadd.f32 %v4243, %v4053
      %v4245 = vadd.f32 %v4244, %v4054
      %v4246 = vadd.f32 %v4245, %v4055
      %v4247 = vadd.f32 %v4246, %v4056
      %v4248 = vadd.f32 %v4247, %v4057
      %v4249 = vadd.f32 %v4248, %v4058
      %v4250 = vadd.f32 %v4249, %v4059
      %v4251 = vadd.f32 %v4250, %v4060
      %v4252 = vadd.f32 %v4251, %v4061
      %v4253 = vadd.f32 %v4252, %v4062
      %v4254 = vadd.f32 %v4253, %v4063
      %v4255 = vadd.f32 %v4254, %v4064
      %v4256 = vrot.slane %v4255, 4
      %v4257 = vadd.f32 %v4255, %v4256
      %v4258 = vrot.slane %v4257, 2
      %v4259 = vadd.f32 %v4257, %v4258
      %v4260 = vrot.slane %v4259, 1
      %v4261 = vadd.f32 %v4259, %v4260
      %v4262 = vrcp.pop 256.0
      %v4263 = vmul.f32 %v4261, %v4262
      %v4264 = vsub.f32 %v4033, %v4263
      %v4265 = vsub.f32 %v4034, %v4263
      %v4266 = vsub.f32 %v4035, %v4263
      %v4267 = vsub.f32 %v4036, %v4263
      %v4268 = vsub.f32 %v4037, %v4263
      %v4269 = vsub.f32 %v4038, %v4263
      %v4270 = vsub.f32 %v4039, %v4263
      %v4271 = vsub.f32 %v4040, %v4263
      %v4272 = vsub.f32 %v4041, %v4263
      %v4273 = vsub.f32 %v4042, %v4263
      %v4274 = vsub.f32 %v4043, %v4263
      %v4275 = vsub.f32 %v4044, %v4263
      %v4276 = vsub.f32 %v4045, %v4263
      %v4277 = vsub.f32 %v4046, %v4263
      %v4278 = vsub.f32 %v4047, %v4263
      %v4279 = vsub.f32 %v4048, %v4263
      %v4280 = vsub.f32 %v4049, %v4263
      %v4281 = vsub.f32 %v4050, %v4263
      %v4282 = vsub.f32 %v4051, %v4263
      %v4283 = vsub.f32 %v4052, %v4263
      %v4284 = vsub.f32 %v4053, %v4263
      %v4285 = vsub.f32 %v4054, %v4263
      %v4286 = vsub.f32 %v4055, %v4263
      %v4287 = vsub.f32 %v4056, %v4263
      %v4288 = vsub.f32 %v4057, %v4263
      %v4289 = vsub.f32 %v4058, %v4263
      %v4290 = vsub.f32 %v4059, %v4263
      %v4291 = vsub.f32 %v4060, %v4263
      %v4292 = vsub.f32 %v4061, %v4263
      %v4293 = vsub.f32 %v4062, %v4263
      %v4294 = vsub.f32 %v4063, %v4263
      %v4295 = vsub.f32 %v4064, %v4263
      %4296 = vst [vmem:[%s257] sm:$0x1] %v4261
      %v4297 = vmul.f32 %v4264, %v4264
      %v4298 = vmul.f32 %v4265, %v4265
      %v4299 = vmul.f32 %v4266, %v4266
      %v4300 = vmul.f32 %v4267, %v4267
      %v4301 = vmul.f32 %v4268, %v4268
      %v4302 = vmul.f32 %v4269, %v4269
      %v4303 = vmul.f32 %v4270, %v4270
      %v4304 = vmul.f32 %v4271, %v4271
      %v4305 = vmul.f32 %v4272, %v4272
      %v4306 = vmul.f32 %v4273, %v4273
      %v4307 = vmul.f32 %v4274, %v4274
      %v4308 = vmul.f32 %v4275, %v4275
      %v4309 = vmul.f32 %v4276, %v4276
      %v4310 = vmul.f32 %v4277, %v4277
      %v4311 = vmul.f32 %v4278, %v4278
      %v4312 = vmul.f32 %v4279, %v4279
      %v4313 = vmul.f32 %v4280, %v4280
      %v4314 = vmul.f32 %v4281, %v4281
      %v4315 = vmul.f32 %v4282, %v4282
      %v4316 = vmul.f32 %v4283, %v4283
      %v4317 = vmul.f32 %v4284, %v4284
      %v4318 = vmul.f32 %v4285, %v4285
      %v4319 = vmul.f32 %v4286, %v4286
      %v4320 = vmul.f32 %v4287, %v4287
      %v4321 = vmul.f32 %v4288, %v4288
      %v4322 = vmul.f32 %v4289, %v4289
      %v4323 = vmul.f32 %v4290, %v4290
      %v4324 = vmul.f32 %v4291, %v4291
      %v4325 = vmul.f32 %v4292, %v4292
      %v4326 = vmul.f32 %v4293, %v4293
      %v4327 = vmul.f32 %v4294, %v4294
      %v4328 = vmul.f32 %v4295, %v4295
      %v4329 = vadd.f32 %v4297, %v4298
      %v4330 = vadd.f32 %v4329, %v4299
      %v4331 = vadd.f32 %v4330, %v4300
      %v4332 = vadd.f32 %v4331, %v4301
      %v4333 = vadd.f32 %v4332, %v4302
      %v4334 = vadd.f32 %v4333, %v4303
      %v4335 = vadd.f32 %v4334, %v4304
      %v4336 = vadd.f32 %v4335, %v4305
      %v4337 = vadd.f32 %v4336, %v4306
      %v4338 = vadd.f32 %v4337, %v4307
      %v4339 = vadd.f32 %v4338, %v4308
      %v4340 = vadd.f32 %v4339, %v4309
      %v4341 = vadd.f32 %v4340, %v4310
      %v4342 = vadd.f32 %v4341, %v4311
      %v4343 = vadd.f32 %v4342, %v4312
      %v4344 = vadd.f32 %v4343, %v4313
      %v4345 = vadd.f32 %v4344, %v4314
      %v4346 = vadd.f32 %v4345, %v4315
      %v4347 = vadd.f32 %v4346, %v4316
      %v4348 = vadd.f32 %v4347, %v4317
      %v4349 = vadd.f32 %v4348, %v4318
      %v4350 = vadd.f32 %v4349, %v4319
      %v4351 = vadd.f32 %v4350, %v4320
      %v4352 = vadd.f32 %v4351, %v4321
      %v4353 = vadd.f32 %v4352, %v4322
      %v4354 = vadd.f32 %v4353, %v4323
      %v4355 = vadd.f32 %v4354, %v4324
      %v4356 = vadd.f32 %v4355, %v4325
      %v4357 = vadd.f32 %v4356, %v4326
      %v4358 = vadd.f32 %v4357, %v4327
      %v4359 = vadd.f32 %v4358, %v4328
      %v4360 = vrot.slane %v4359, 4
      %v4361 = vadd.f32 %v4359, %v4360
      %v4362 = vrot.slane %v4361, 2
      %v4363 = vadd.f32 %v4361, %v4362
      %v4364 = vrot.slane %v4363, 1
      %v4365 = vadd.f32 %v4363, %v4364
      %4366 = vst [vmem:[%s263] sm:$0x1] %v4365
      %s4367 = smul.u32 16, %s23
      %p4368 = scmp.lt.s32.totalorder %s22, 1
      %s4369 = scalar_select %p4368, %s22, 1
      %p4370 = scmp.lt.s32.totalorder %s4367, 15
      %s4371 = scalar_select %p4370, %s4367, 15
      %s4372 = smul.addr %s4371, 2
      %s4373 = smul.addr %s4369, 32
      %s4374 = sadd.s32 %s4372, %s4373
      %s4375 = smul.addr %s4374, 4
      %s4376 = scalar_lea.vmem %s4, %s4375
      %p4377 = scmp.lt.s32.totalorder %s22, 1
      %s4378 = scalar_select %p4377, %s22, 1
      %p4379 = scmp.lt.s32.totalorder %s23, 0
      %s4380 = scalar_select %p4379, %s23, 0
      %s4381 = sadd.s32 %s4380, %s4378
      %s4382 = scalar_lea.vmem %s5, %s4381
      %p4383 = scmp.lt.s32.totalorder %s22, 1
      %s4384 = scalar_select %p4383, %s22, 1
      %p4385 = scmp.lt.s32.totalorder %s23, 0
      %s4386 = scalar_select %p4385, %s23, 0
      %s4387 = sadd.s32 %s4386, %s4384
      %s4388 = scalar_lea.vmem %s6, %s4387
      // Predicated region
      $region72: #{double_conv.3} parent=31 // pred_check
        %p4389 = pneg %p113
      $region73: #{double_conv.3} parent=31 // pred_check_branch
        %4391 = sbr.rel (%p4389) target = $region75
      $region74: #{double_conv.3} parent=31 // pred_region
        %s4392 = smul.u32 16, %s23
      $region75: #{double_conv.3} parent=31 // pred_fallthru
        _
      // Predicated region
      $region76: #{double_conv.3} parent=31 // pred_check
        %p4393 = pneg %p141
      $region77: #{double_conv.3} parent=31 // pred_check_branch
        %4395 = sbr.rel (%p4393) target = $region79
      $region78: #{double_conv.3} parent=31 // pred_region
        _
      $region79: #{double_conv.3} parent=31 // pred_fallthru
        _
      // Predicated region
      $region80: #{double_conv.3} parent=31 // pred_check
        %p4396 = pneg %p169
      $region81: #{double_conv.3} parent=31 // pred_check_branch
        %4398 = sbr.rel (%p4396) target = $region83
      $region82: #{double_conv.3} parent=31 // pred_region
        _
      $region83: #{double_conv.3} parent=31 // pred_fallthru
        _
    $region32: #{double_conv.3} parent=5 // pred_fallthru
      _
    %p4399 = scmp.le.s32.totalorder 2, %s13
    // Predicated region
    $region84: #{double_conv.3} parent=5 // pred_check
      %p4400 = pneg %p4399
    $region85: #{double_conv.3} parent=5 // pred_check_branch
      %4402 = sbr.rel (%p4400) target = $region87
    $region86: #{double_conv.3} parent=5 // pred_region
      %s4403 = ssub.s32 %s13, 2
      // Predicated region
      $region88: #{double_conv.3} parent=86 // pred_check
        %p4404 = pneg %p119
      $region89: #{double_conv.3} parent=86 // pred_check_branch
        %4406 = sbr.rel (%p4404) target = $region91
      $region90: #{double_conv.3} parent=86 // pred_region
        %s4407 = smul.u32 16, %s25
        %p4408 = scmp.lt.s32.totalorder %s24, 1
        %s4409 = scalar_select %p4408, %s24, 1
        %p4410 = scmp.lt.s32.totalorder %s4407, 15
        %s4411 = scalar_select %p4410, %s4407, 15
        %s4412 = smul.addr %s4411, 2
        %s4413 = smul.addr %s4409, 32
        %s4414 = sadd.s32 %s4412, %s4413
        %s4415 = smul.addr %s4414, 4
        %s4416 = scalar_lea.vmem %s4, %s4415
      $region91: #{double_conv.3} parent=86 // pred_fallthru
        _
      // Predicated region
      $region92: #{double_conv.3} parent=86 // pred_check
        %p4417 = pneg %p147
      $region93: #{double_conv.3} parent=86 // pred_check_branch
        %4419 = sbr.rel (%p4417) target = $region95
      $region94: #{double_conv.3} parent=86 // pred_region
        %p4420 = scmp.lt.s32.totalorder %s24, 1
        %s4421 = scalar_select %p4420, %s24, 1
        %p4422 = scmp.lt.s32.totalorder %s25, 0
        %s4423 = scalar_select %p4422, %s25, 0
        %s4424 = sadd.s32 %s4423, %s4421
        %s4425 = scalar_lea.vmem %s5, %s4424
      $region95: #{double_conv.3} parent=86 // pred_fallthru
        _
      // Predicated region
      $region96: #{double_conv.3} parent=86 // pred_check
        %p4426 = pneg %p175
      $region97: #{double_conv.3} parent=86 // pred_check_branch
        %4428 = sbr.rel (%p4426) target = $region99
      $region98: #{double_conv.3} parent=86 // pred_region
        %p4429 = scmp.lt.s32.totalorder %s24, 1
        %s4430 = scalar_select %p4429, %s24, 1
        %p4431 = scmp.lt.s32.totalorder %s25, 0
        %s4432 = scalar_select %p4431, %s25, 0
        %s4433 = sadd.s32 %s4432, %s4430
        %s4434 = scalar_lea.vmem %s6, %s4433
      $region99: #{double_conv.3} parent=86 // pred_fallthru
        _
    $region87: #{double_conv.3} parent=5 // pred_fallthru
      _
  $region6: #{double_conv.3} parent=0 // loop_footer
    %s17 = sadd.s32 1, %s13
  $region7: #{double_conv.3} parent=0 // loop_footer_branch
    %12 = sbr.rel target = $region3
  $region8: #{double_conv.3} parent=0 // loop_exit
    _

// kernel: double_conv.4
$region0: #{double_conv.4}
  #allocation0 [shape = 'u32[]', space=smem, size = 0x4, offset = 0x4, fixed_abs, tag = 'smem constant byte address 0x4 - core index']
  #allocation1 [shape = 'u32[144,128]{1,0:T(1,128)}', space=vmem, size = 0x12000, scoped, tag = 'internal scratch']
  #allocation2 [shape = 'bf16[16,16,128]{2,1,0:T(8,128)(2,1)}', space=vmem, size = 0x10000, scoped, tag = 'scratch operand']
  #allocation3 [shape = 'bf16[18,18,128]{2,1,0:T(8,128)(2,1)}', space=vmem, size = 0x1b000, scoped, tag = 'scratch operand']
  #allocation5 [shape = 's32[]', space=sflag, size = 0x4, offset = 0, fixed_abs, tag = 'sflag constant byte address 0x0 - dummy sync flag']
  %s0 = inlined_call_operand.vmem [shape: bf16[2,16,16,128], index: 0, kind: input, shape index: {}]
  %s1 = inlined_call_operand.vmem [shape: f32[1,1,128], index: 1, kind: input, shape index: {}]
  %s2 = inlined_call_operand.vmem [shape: f32[1,1,128], index: 2, kind: input, shape index: {}]
  %s3 = inlined_call_operand.vmem [shape: bf16[3,384,128], index: 3, kind: input, shape index: {}]
  %s4 = inlined_call_operand.vmem [shape: bf16[2,16,16,128], index: 4, kind: output, shape index: {0}]
  %s5 = inlined_call_operand.vmem [shape: f32[2,1,1,128], index: 5, kind: output, shape index: {1}]
  %s6 = inlined_call_operand.vmem [shape: f32[2,1,1,128], index: 6, kind: output, shape index: {2}]
  %7 = xla_tuple %s4, %s5, %s6
  %s8 = sld [smem:[#allocation0]]
  $region100: #{double_conv.4} parent=0
    _
  %s10 = ssub.s32 1, %s8
  %s11 = scalar_select 0, %s10, %s8
  loop: start=0, step=1, limit=4
  $region2: #{double_conv.4} parent=0 // loop_pre_header
    _
  $region3: #{double_conv.4} parent=0 // loop_header
    %s13 = sphi 0, %s17
    %p14 = scmp.ge.s32.totalorder %s13, 4
    %s20 = sphi 0, %s32
    %s21 = sphi 0, %s28
    %s22 = sphi 0, %s20
    %s23 = sphi 0, %s21
    %s24 = sphi 0, %s22
    %s25 = sphi 0, %s23
    %s33 = sphi 0, %s33
    %s35 = sphi 0, %s33
    %s36 = sphi 0, %s35
    %s50 = sphi 0, %s36
    %s54 = sphi 0, %s54
    %s56 = sphi 0, %s54
    %s57 = sphi 0, %s56
    %s71 = sphi 0, %s57
    %s75 = sphi 0, %s75
    %s77 = sphi 0, %s75
    %s78 = sphi 0, %s77
    %s92 = sphi 0, %s78
    %s100 = sphi 0, %s102
    %s103 = sphi 0, %s100
    %s104 = sphi 0, %s103
    %s120 = sphi 0, %s104
    %s128 = sphi 0, %s130
    %s131 = sphi 0, %s128
    %s132 = sphi 0, %s131
    %s148 = sphi 0, %s132
    %s156 = sphi 0, %s158
    %s159 = sphi 0, %s156
    %s160 = sphi 0, %s159
    %s176 = sphi 0, %s160
  $region4: #{double_conv.4} parent=0 // loop_header_branch
    %16 = sbr.rel (%p14) target = $region8
  $region5: #{double_conv.4} parent=0 // loop_body
    %s18 = ssub.s32 %s13, 1
    %s19 = ssub.s32 %s13, 2
    %s26 = sadd.s32 1, %s21
    %p27 = scmp.ge.s32.totalorder %s26, 1
    %s28 = scalar_select %p27, 0, %s26
    %s29 = sadd.s32 1, %s20
    %s30 = scalar_select %p27, %s29, %s20
    %p31 = scmp.ge.s32.totalorder %s30, 2
    %s32 = scalar_select %p31, 0, %s30
    %s34 = sadd.s32 %s33, 1
    %p37 = scmp.eq.s32.totalorder %s13, 1
    %p38 = scmp.ne.s32.totalorder %s33, %s35
    %p39 = scmp.eq.s32.totalorder %s13, 0
    %p40 = por %p38, %p39
    %p41 = scmp.ne.s32.totalorder %s33, %s35
    %p42 = scmp.eq.s32.totalorder %s18, 1
    %p43 = por %p41, %p42
    %p44 = scmp.ne.s32.totalorder %s35, %s36
    %p45 = scmp.eq.s32.totalorder %s18, 0
    %p46 = por %p44, %p45
    %p47 = scmp.ne.s32.totalorder %s35, %s36
    %p48 = scmp.eq.s32.totalorder %s19, 1
    %p49 = por %p47, %p48
    %p51 = scmp.ne.s32.totalorder %s36, %s50
    %p52 = scmp.eq.s32.totalorder %s19, 0
    %p53 = por %p51, %p52
    %s55 = sadd.s32 %s54, 1
    %p58 = scmp.eq.s32.totalorder %s13, 1
    %p59 = scmp.ne.s32.totalorder %s54, %s56
    %p60 = scmp.eq.s32.totalorder %s13, 0
    %p61 = por %p59, %p60
    %p62 = scmp.ne.s32.totalorder %s54, %s56
    %p63 = scmp.eq.s32.totalorder %s18, 1
    %p64 = por %p62, %p63
    %p65 = scmp.ne.s32.totalorder %s56, %s57
    %p66 = scmp.eq.s32.totalorder %s18, 0
    %p67 = por %p65, %p66
    %p68 = scmp.ne.s32.totalorder %s56, %s57
    %p69 = scmp.eq.s32.totalorder %s19, 1
    %p70 = por %p68, %p69
    %p72 = scmp.ne.s32.totalorder %s57, %s71
    %p73 = scmp.eq.s32.totalorder %s19, 0
    %p74 = por %p72, %p73
    %s76 = sadd.s32 %s75, 1
    %p79 = scmp.eq.s32.totalorder %s13, 1
    %p80 = scmp.ne.s32.totalorder %s75, %s77
    %p81 = scmp.eq.s32.totalorder %s13, 0
    %p82 = por %p80, %p81
    %p83 = scmp.ne.s32.totalorder %s75, %s77
    %p84 = scmp.eq.s32.totalorder %s18, 1
    %p85 = por %p83, %p84
    %p86 = scmp.ne.s32.totalorder %s77, %s78
    %p87 = scmp.eq.s32.totalorder %s18, 0
    %p88 = por %p86, %p87
    %p89 = scmp.ne.s32.totalorder %s77, %s78
    %p90 = scmp.eq.s32.totalorder %s19, 1
    %p91 = por %p89, %p90
    %p93 = scmp.ne.s32.totalorder %s78, %s92
    %p94 = scmp.eq.s32.totalorder %s19, 0
    %p95 = por %p93, %p94
    %s96 = ssub.s32 %s20, %s32
    %s97 = ssub.s32 %s21, %s28
    %s98 = sor.u32 %s96, %s97
    %p99 = scmp.eq.s32.totalorder %s98, 0
    %s101 = sadd.s32 %s100, 1
    %s102 = scalar_select %p99, %s100, %s101
    %p105 = pneg %p99
    %p106 = scmp.eq.s32.totalorder %s13, 1
    %p107 = por %p105, %p106
    %p108 = scmp.ne.s32.totalorder %s100, %s103
    %p109 = scmp.eq.s32.totalorder %s13, 0
    %p110 = por %p108, %p109
    %p111 = scmp.ne.s32.totalorder %s100, %s103
    %p112 = scmp.eq.s32.totalorder %s18, 1
    %p113 = por %p111, %p112
    %p114 = scmp.ne.s32.totalorder %s103, %s104
    %p115 = scmp.eq.s32.totalorder %s18, 0
    %p116 = por %p114, %p115
    %p117 = scmp.ne.s32.totalorder %s103, %s104
    %p118 = scmp.eq.s32.totalorder %s19, 1
    %p119 = por %p117, %p118
    %p121 = scmp.ne.s32.totalorder %s104, %s120
    %p122 = scmp.eq.s32.totalorder %s19, 0
    %p123 = por %p121, %p122
    %s124 = ssub.s32 %s20, %s32
    %s125 = ssub.s32 %s21, %s28
    %s126 = sor.u32 %s124, %s125
    %p127 = scmp.eq.s32.totalorder %s126, 0
    %s129 = sadd.s32 %s128, 1
    %s130 = scalar_select %p127, %s128, %s129
    %p133 = pneg %p127
    %p134 = scmp.eq.s32.totalorder %s13, 1
    %p135 = por %p133, %p134
    %p136 = scmp.ne.s32.totalorder %s128, %s131
    %p137 = scmp.eq.s32.totalorder %s13, 0
    %p138 = por %p136, %p137
    %p139 = scmp.ne.s32.totalorder %s128, %s131
    %p140 = scmp.eq.s32.totalorder %s18, 1
    %p141 = por %p139, %p140
    %p142 = scmp.ne.s32.totalorder %s131, %s132
    %p143 = scmp.eq.s32.totalorder %s18, 0
    %p144 = por %p142, %p143
    %p145 = scmp.ne.s32.totalorder %s131, %s132
    %p146 = scmp.eq.s32.totalorder %s19, 1
    %p147 = por %p145, %p146
    %p149 = scmp.ne.s32.totalorder %s132, %s148
    %p150 = scmp.eq.s32.totalorder %s19, 0
    %p151 = por %p149, %p150
    %s152 = ssub.s32 %s20, %s32
    %s153 = ssub.s32 %s21, %s28
    %s154 = sor.u32 %s152, %s153
    %p155 = scmp.eq.s32.totalorder %s154, 0
    %s157 = sadd.s32 %s156, 1
    %s158 = scalar_select %p155, %s156, %s157
    %p161 = pneg %p155
    %p162 = scmp.eq.s32.totalorder %s13, 1
    %p163 = por %p161, %p162
    %p164 = scmp.ne.s32.totalorder %s156, %s159
    %p165 = scmp.eq.s32.totalorder %s13, 0
    %p166 = por %p164, %p165
    %p167 = scmp.ne.s32.totalorder %s156, %s159
    %p168 = scmp.eq.s32.totalorder %s18, 1
    %p169 = por %p167, %p168
    %p170 = scmp.ne.s32.totalorder %s159, %s160
    %p171 = scmp.eq.s32.totalorder %s18, 0
    %p172 = por %p170, %p171
    %p173 = scmp.ne.s32.totalorder %s159, %s160
    %p174 = scmp.eq.s32.totalorder %s19, 1
    %p175 = por %p173, %p174
    %p177 = scmp.ne.s32.totalorder %s160, %s176
    %p178 = scmp.eq.s32.totalorder %s19, 0
    %p179 = por %p177, %p178
    %p180 = scmp.le.s32.totalorder 1, %s13
    %p181 = scmp.lt.s32.totalorder %s13, 3
    %p182 = pnand %p180, %p181
    %p183 = pneg %p182
    // Predicated region
    $region9: #{double_conv.4} parent=5 // pred_check
      _
    $region10: #{double_conv.4} parent=5 // pred_check_branch
      %185 = sbr.rel (%p182) target = $region12
    $region11: #{double_conv.4} parent=5 // pred_region
      %s186 = ssub.s32 %s13, 1
      // Predicated region
      $region13: #{double_conv.4} parent=11 // pred_check
        %p187 = pneg %p46
      $region14: #{double_conv.4} parent=11 // pred_check_branch
        %189 = sbr.rel (%p187) target = $region16
      $region15: #{double_conv.4} parent=11 // pred_region
        _
      $region16: #{double_conv.4} parent=11 // pred_fallthru
        _
      // Predicated region
      $region17: #{double_conv.4} parent=11 // pred_check
        %p190 = pneg %p67
      $region18: #{double_conv.4} parent=11 // pred_check_branch
        %192 = sbr.rel (%p190) target = $region20
      $region19: #{double_conv.4} parent=11 // pred_region
        _
      $region20: #{double_conv.4} parent=11 // pred_fallthru
        _
      // Predicated region
      $region21: #{double_conv.4} parent=11 // pred_check
        %p193 = pneg %p88
      $region22: #{double_conv.4} parent=11 // pred_check_branch
        %195 = sbr.rel (%p193) target = $region24
      $region23: #{double_conv.4} parent=11 // pred_region
        _
      $region24: #{double_conv.4} parent=11 // pred_fallthru
        _
    $region12: #{double_conv.4} parent=5 // pred_fallthru
      _
    %p196 = scmp.lt.s32.totalorder %s13, 2
    // Predicated region
    $region25: #{double_conv.4} parent=5 // pred_check
      %p197 = pneg %p196
    $region26: #{double_conv.4} parent=5 // pred_check_branch
      %199 = sbr.rel (%p197) target = $region28
    $region27: #{double_conv.4} parent=5 // pred_region
      _
    $region28: #{double_conv.4} parent=5 // pred_fallthru
      _
    %p200 = scmp.le.s32.totalorder 1, %s13
    %p201 = scmp.lt.s32.totalorder %s13, 3
    %p202 = pnand %p200, %p201
    %p203 = pneg %p202
    // Predicated region
    $region29: #{double_conv.4} parent=5 // pred_check
      _
    $region30: #{double_conv.4} parent=5 // pred_check_branch
      %205 = sbr.rel (%p202) target = $region32
    $region31: #{double_conv.4} parent=5 // pred_region
      %s206 = ssub.s32 %s13, 1
      %p207 = pneg %p46
      %p208 = pneg %p43
      %p209 = pneg %p67
      %p210 = pneg %p64
      %p211 = pneg %p88
      %p212 = pneg %p85
      %p213 = pneg %p116
      %p214 = pneg %p113
      %s215 = smul.u32 16, %s23
      %p216 = scmp.lt.s32.totalorder %s22, 1
      %s217 = scalar_select %p216, %s22, 1
      %p218 = scmp.lt.s32.totalorder %s215, 15
      %s219 = scalar_select %p218, %s215, 15
      %s220 = smul.addr %s219, 2
      %s221 = smul.addr %s217, 32
      %s222 = sadd.s32 %s220, %s221
      %s223 = smul.addr %s222, 4
      %s224 = scalar_lea.vmem %s4, %s223
      %p225 = pneg %p144
      %p226 = pneg %p141
      %p227 = scmp.lt.s32.totalorder %s22, 1
      %s228 = scalar_select %p227, %s22, 1
      %p229 = scmp.lt.s32.totalorder %s23, 0
      %s230 = scalar_select %p229, %s23, 0
      %s231 = sadd.s32 %s230, %s228
      %s232 = scalar_lea.vmem %s5, %s231
      %p233 = pneg %p172
      %p234 = pneg %p169
      %p235 = scmp.lt.s32.totalorder %s22, 1
      %s236 = scalar_select %p235, %s22, 1
      %p237 = scmp.lt.s32.totalorder %s23, 0
      %s238 = scalar_select %p237, %s23, 0
      %s239 = sadd.s32 %s238, %s236
      %s240 = scalar_lea.vmem %s6, %s239
      %s241 = smul.u32 16, %s23
      %p242 = scmp.lt.s32.totalorder %s22, 1
      %s243 = scalar_select %p242, %s22, 1
      %p244 = scmp.lt.s32.totalorder %s241, 15
      %s245 = scalar_select %p244, %s241, 15
      %s246 = smul.addr %s245, 2
      %s247 = smul.addr %s243, 32
      %s248 = sadd.s32 %s246, %s247
      %s249 = smul.addr %s248, 4
      %s250 = scalar_lea.vmem %s4, %s249
      %s251 = smul.u32 16, %s23
      %p252 = scmp.lt.s32.totalorder %s22, 1
      %s253 = scalar_select %p252, %s22, 1
      %p254 = scmp.lt.s32.totalorder %s23, 0
      %s255 = scalar_select %p254, %s23, 0
      %s256 = sadd.s32 %s255, %s253
      %s257 = scalar_lea.vmem %s5, %s256
      %p258 = scmp.lt.s32.totalorder %s22, 1
      %s259 = scalar_select %p258, %s22, 1
      %p260 = scmp.lt.s32.totalorder %s23, 0
      %s261 = scalar_select %p260, %s23, 0
      %s262 = sadd.s32 %s261, %s259
      %s263 = scalar_lea.vmem %s6, %s262
      %p265 = scmp.eq.s32.totalorder %s23, 0
      // Predicated region
      $region33: #{double_conv.4} parent=31 // pred_check
        %p266 = pneg %p265
      $region34: #{double_conv.4} parent=31 // pred_check_branch
        %268 = sbr.rel (%p266) target = $region36
      $region35: #{double_conv.4} parent=31 // pred_region
        $region37: #{double_conv.4} parent=35
          #allocation4 [shape = 's32[1]{0}', space=sflag, size = 0x4, scoped, tag = 'scoped memory for double_conv.4']
          %s269 = smul.u32 %s22, 32
          %s270 = smul.addr %s269, 4
          %s271 = scalar_lea.vmem %s0, %s270
          %p273 = scmp.lt.u32.totalorder 128, 8
          %p274 = pneg %p273
          // Predicated region
          $region38: #{double_conv.4} parent=37 // pred_check
            _
          $region39: #{double_conv.4} parent=37 // pred_check_branch
            %276 = sbr.rel (%p273) target = $region41
          $region40: #{double_conv.4} parent=37 // pred_region
            %s292 = sand.u32 128, 7
            %p293 = scmp.eq.s32.totalorder %s292, 0
            // Predicated region
            $region53: #{double_conv.4} parent=40 // pred_check
              %p294 = pneg %p293
            $region54: #{double_conv.4} parent=40 // pred_check_branch
              %296 = sbr.rel (%p294) target = $region56
            $region55: #{double_conv.4} parent=40 // pred_region
              loop: start=0, step=1, limit=1
              $region57: #{double_conv.4} parent=55 // loop_pre_header
                _
              $region58: #{double_conv.4} parent=55 // loop_header
                %s298 = sphi 0, %s302
                %p299 = scmp.ge.s32.totalorder %s298, 1
                %s303 = sphi %s271, %s271
                %s304 = sphi [#allocation2], [#allocation2]
              $region59: #{double_conv.4} parent=55 // loop_header_branch
                %301 = sbr.rel (%p299) target = $region63
              $region60: #{double_conv.4} parent=55 // loop_body
                %v305 = vld [vmem:[%s303] sm:$0xff]
                %306 = vst [vmem:[%s304] sm:$0xff] %v305
                %v307 = vld [vmem:[%s303 + $0x8] sm:$0xff]
                %308 = vst [vmem:[%s304 + $0x8] sm:$0xff] %v307
                %v309 = vld [vmem:[%s303 + $0x10] sm:$0xff]
                %310 = vst [vmem:[%s304 + $0x10] sm:$0xff] %v309
                %v311 = vld [vmem:[%s303 + $0x18] sm:$0xff]
                %312 = vst [vmem:[%s304 + $0x18] sm:$0xff] %v311
                %v313 = vld [vmem:[%s303 + $0x20] sm:$0xff]
                %314 = vst [vmem:[%s304 + $0x20] sm:$0xff] %v313
                %v315 = vld [vmem:[%s303 + $0x28] sm:$0xff]
                %316 = vst [vmem:[%s304 + $0x28] sm:$0xff] %v315
                %v317 = vld [vmem:[%s303 + $0x30] sm:$0xff]
                %318 = vst [vmem:[%s304 + $0x30] sm:$0xff] %v317
                %v319 = vld [vmem:[%s303 + $0x38] sm:$0xff]
                %320 = vst [vmem:[%s304 + $0x38] sm:$0xff] %v319
                %v321 = vld [vmem:[%s303 + $0x40] sm:$0xff]
                %322 = vst [vmem:[%s304 + $0x40] sm:$0xff] %v321
                %v323 = vld [vmem:[%s303 + $0x48] sm:$0xff]
                %324 = vst [vmem:[%s304 + $0x48] sm:$0xff] %v323
                %v325 = vld [vmem:[%s303 + $0x50] sm:$0xff]
                %326 = vst [vmem:[%s304 + $0x50] sm:$0xff] %v325
                %v327 = vld [vmem:[%s303 + $0x58] sm:$0xff]
                %328 = vst [vmem:[%s304 + $0x58] sm:$0xff] %v327
                %v329 = vld [vmem:[%s303 + $0x60] sm:$0xff]
                %330 = vst [vmem:[%s304 + $0x60] sm:$0xff] %v329
                %v331 = vld [vmem:[%s303 + $0x68] sm:$0xff]
                %332 = vst [vmem:[%s304 + $0x68] sm:$0xff] %v331
                %v333 = vld [vmem:[%s303 + $0x70] sm:$0xff]
                %334 = vst [vmem:[%s304 + $0x70] sm:$0xff] %v333
                %v335 = vld [vmem:[%s303 + $0x78] sm:$0xff]
                %336 = vst [vmem:[%s304 + $0x78] sm:$0xff] %v335
              $region61: #{double_conv.4} parent=55 // loop_footer
                %s302 = sadd.s32 1, %s298
              $region62: #{double_conv.4} parent=55 // loop_footer_branch
                %297 = sbr.rel target = $region58
              $region63: #{double_conv.4} parent=55 // loop_exit
                _
            $region56: #{double_conv.4} parent=40 // pred_fallthru
              _
            %p337 = pneg %p293
            // Predicated region
            $region64: #{double_conv.4} parent=40 // pred_check
              _
            $region65: #{double_conv.4} parent=40 // pred_check_branch
              %339 = sbr.rel (%p293) target = $region67
            $region66: #{double_conv.4} parent=40 // pred_region
              %s340 = sand.u32 128, 7
            $region67: #{double_conv.4} parent=40 // pred_fallthru
              _
          $region41: #{double_conv.4} parent=37 // pred_fallthru
            _
          // Predicated region
          $region42: #{double_conv.4} parent=37 // pred_check
            %p277 = pneg %p273
          $region43: #{double_conv.4} parent=37 // pred_check_branch
            %279 = sbr.rel (%p277) target = $region45
          $region44: #{double_conv.4} parent=37 // pred_region
            %s280 = sshll.u32 1, 128
            %s281 = ssub.s32 %s280, 1
            loop: start=0, step=1, limit=1
            $region46: #{double_conv.4} parent=44 // loop_pre_header
              _
            $region47: #{double_conv.4} parent=44 // loop_header
              %s283 = sphi 0, %s287
              %p284 = scmp.ge.s32.totalorder %s283, 1
              %s288 = sphi %s271, %s271
              %s289 = sphi [#allocation2], [#allocation2]
            $region48: #{double_conv.4} parent=44 // loop_header_branch
              %286 = sbr.rel (%p284) target = $region52
            $region49: #{double_conv.4} parent=44 // loop_body
              %v290 = vld [vmem:[%s288] sm:%s281]
              %291 = vst [vmem:[%s289] sm:%s281] %v290
            $region50: #{double_conv.4} parent=44 // loop_footer
              %s287 = sadd.s32 1, %s283
            $region51: #{double_conv.4} parent=44 // loop_footer_branch
              %282 = sbr.rel target = $region47
            $region52: #{double_conv.4} parent=44 // loop_exit
              _
          $region45: #{double_conv.4} parent=37 // pred_fallthru
            _
          // Predicated region
          $region68: #{double_conv.4} parent=37 // pred_check
            _
          $region69: #{double_conv.4} parent=37 // pred_check_branch
            %343 = sbr.rel (0) target = $region71
          $region70: #{double_conv.4} parent=37 // pred_region
            %344 = vsyncadd [#allocation4], 2048
          $region71: #{double_conv.4} parent=37 // pred_fallthru
            _
          %s345 = smul.u32 4, 16
          %s346 = smul.u32 %s345, 2
          %s347 = smul.u32 %s346, 1
          %s348 = sshll.u32 %s347, 4
          %349 = dma.done [#allocation4], %s348
        %350 = vst [vmem:[#allocation3] sm:$0xf] 0
        %351 = vst [vmem:[#allocation3 + $0x4] sm:$0xf] 0
        %352 = vst [vmem:[#allocation3 + $0x8] sm:$0x1] 0
        %353 = vst [vmem:[#allocation3 + $0xc] sm:$0xf] 0
        %354 = vst [vmem:[#allocation3 + $0x10] sm:$0xf] 0
        %355 = vst [vmem:[#allocation3 + $0x14] sm:$0x1] 0
        %356 = vst [vmem:[#allocation3 + $0x18] sm:$0xf] 0
        %357 = vst [vmem:[#allocation3 + $0x1c] sm:$0xf] 0
        %358 = vst [vmem:[#allocation3 + $0x20] sm:$0x1] 0
        %359 = vst [vmem:[#allocation3 + $0x24] sm:$0xf] 0
        %360 = vst [vmem:[#allocation3 + $0x28] sm:$0xf] 0
        %361 = vst [vmem:[#allocation3 + $0x2c] sm:$0x1] 0
        %362 = vst [vmem:[#allocation3 + $0x30] sm:$0xf] 0
        %363 = vst [vmem:[#allocation3 + $0x34] sm:$0xf] 0
        %364 = vst [vmem:[#allocation3 + $0x38] sm:$0x1] 0
        %365 = vst [vmem:[#allocation3 + $0x3c] sm:$0xf] 0
        %366 = vst [vmem:[#allocation3 + $0x40] sm:$0xf] 0
        %367 = vst [vmem:[#allocation3 + $0x44] sm:$0x1] 0
        %368 = vst [vmem:[#allocation3 + $0x48] sm:$0xf] 0
        %369 = vst [vmem:[#allocation3 + $0x4c] sm:$0xf] 0
        %370 = vst [vmem:[#allocation3 + $0x50] sm:$0x1] 0
        %371 = vst [vmem:[#allocation3 + $0x54] sm:$0xf] 0
        %372 = vst [vmem:[#allocation3 + $0x58] sm:$0xf] 0
        %373 = vst [vmem:[#allocation3 + $0x5c] sm:$0x1] 0
        %374 = vst [vmem:[#allocation3 + $0x60] sm:$0xf] 0
        %375 = vst [vmem:[#allocation3 + $0x64] sm:$0xf] 0
        %376 = vst [vmem:[#allocation3 + $0x68] sm:$0x1] 0
        %377 = vst [vmem:[#allocation3 + $0x6c] sm:$0xf] 0
        %378 = vst [vmem:[#allocation3 + $0x70] sm:$0xf] 0
        %379 = vst [vmem:[#allocation3 + $0x74] sm:$0x1] 0
        %380 = vst [vmem:[#allocation3 + $0x78] sm:$0xf] 0
        %381 = vst [vmem:[#allocation3 + $0x7c] sm:$0xf] 0
        %382 = vst [vmem:[#allocation3 + $0x80] sm:$0x1] 0
        %383 = vst [vmem:[#allocation3 + $0x84] sm:$0xf] 0
        %384 = vst [vmem:[#allocation3 + $0x88] sm:$0xf] 0
        %385 = vst [vmem:[#allocation3 + $0x8c] sm:$0x1] 0
        %386 = vst [vmem:[#allocation3 + $0x90] sm:$0xf] 0
        %387 = vst [vmem:[#allocation3 + $0x94] sm:$0xf] 0
        %388 = vst [vmem:[#allocation3 + $0x98] sm:$0x1] 0
        %389 = vst [vmem:[#allocation3 + $0x9c] sm:$0xf] 0
        %390 = vst [vmem:[#allocation3 + $0xa0] sm:$0xf] 0
        %391 = vst [vmem:[#allocation3 + $0xa4] sm:$0x1] 0
        %392 = vst [vmem:[#allocation3 + $0xa8] sm:$0xf] 0
        %393 = vst [vmem:[#allocation3 + $0xac] sm:$0xf] 0
        %394 = vst [vmem:[#allocation3 + $0xb0] sm:$0x1] 0
        %395 = vst [vmem:[#allocation3 + $0xb4] sm:$0xf] 0
        %396 = vst [vmem:[#allocation3 + $0xb8] sm:$0xf] 0
        %397 = vst [vmem:[#allocation3 + $0xbc] sm:$0x1] 0
        %398 = vst [vmem:[#allocation3 + $0xc0] sm:$0xf] 0
        %399 = vst [vmem:[#allocation3 + $0xc4] sm:$0xf] 0
        %400 = vst [vmem:[#allocation3 + $0xc8] sm:$0x1] 0
        %401 = vst [vmem:[#allocation3 + $0xcc] sm:$0xf] 0
        %402 = vst [vmem:[#allocation3 + $0xd0] sm:$0xf] 0
        %403 = vst [vmem:[#allocation3 + $0xd4] sm:$0x1] 0
        %v404 = vld [vmem:[#allocation2] sm:$0xf]
        %v405 = vld [vmem:[#allocation2 + $0x4] sm:$0xf]
        %v406 = vld [vmem:[#allocation2 + $0x8] sm:$0xf]
        %v407 = vld [vmem:[#allocation2 + $0xc] sm:$0xf]
        %v408 = vld [vmem:[#allocation2 + $0x10] sm:$0xf]
        %v409 = vld [vmem:[#allocation2 + $0x14] sm:$0xf]
        %v410 = vld [vmem:[#allocation2 + $0x18] sm:$0xf]
        %v411 = vld [vmem:[#allocation2 + $0x1c] sm:$0xf]
        %v412 = vld [vmem:[#allocation2 + $0x20] sm:$0xf]
        %v413 = vld [vmem:[#allocation2 + $0x24] sm:$0xf]
        %v414 = vld [vmem:[#allocation2 + $0x28] sm:$0xf]
        %v415 = vld [vmem:[#allocation2 + $0x2c] sm:$0xf]
        %v416 = vld [vmem:[#allocation2 + $0x30] sm:$0xf]
        %v417 = vld [vmem:[#allocation2 + $0x34] sm:$0xf]
        %v418 = vld [vmem:[#allocation2 + $0x38] sm:$0xf]
        %v419 = vld [vmem:[#allocation2 + $0x3c] sm:$0xf]
        %v420 = vld [vmem:[#allocation2 + $0x40] sm:$0xf]
        %v421 = vld [vmem:[#allocation2 + $0x44] sm:$0xf]
        %v422 = vld [vmem:[#allocation2 + $0x48] sm:$0xf]
        %v423 = vld [vmem:[#allocation2 + $0x4c] sm:$0xf]
        %v424 = vld [vmem:[#allocation2 + $0x50] sm:$0xf]
        %v425 = vld [vmem:[#allocation2 + $0x54] sm:$0xf]
        %v426 = vld [vmem:[#allocation2 + $0x58] sm:$0xf]
        %v427 = vld [vmem:[#allocation2 + $0x5c] sm:$0xf]
        %v428 = vld [vmem:[#allocation2 + $0x60] sm:$0xf]
        %v429 = vld [vmem:[#allocation2 + $0x64] sm:$0xf]
        %v430 = vld [vmem:[#allocation2 + $0x68] sm:$0xf]
        %v431 = vld [vmem:[#allocation2 + $0x6c] sm:$0xf]
        %v432 = vld [vmem:[#allocation2 + $0x70] sm:$0xf]
        %v433 = vld [vmem:[#allocation2 + $0x74] sm:$0xf]
        %v434 = vld [vmem:[#allocation2 + $0x78] sm:$0xf]
        %v435 = vld [vmem:[#allocation2 + $0x7c] sm:$0xf]
        %v436 = vunpack.c.l.bf16 %v404
        %v437 = vunpack.c.l.bf16 %v405
        %v438 = vunpack.c.l.bf16 %v406
        %v439 = vunpack.c.l.bf16 %v407
        %v440 = vunpack.c.l.bf16 %v408
        %v441 = vunpack.c.l.bf16 %v409
        %v442 = vunpack.c.l.bf16 %v410
        %v443 = vunpack.c.l.bf16 %v411
        %v444 = vunpack.c.l.bf16 %v412
        %v445 = vunpack.c.l.bf16 %v413
        %v446 = vunpack.c.l.bf16 %v414
        %v447 = vunpack.c.l.bf16 %v415
        %v448 = vunpack.c.l.bf16 %v416
        %v449 = vunpack.c.l.bf16 %v417
        %v450 = vunpack.c.l.bf16 %v418
        %v451 = vunpack.c.l.bf16 %v419
        %v452 = vunpack.c.l.bf16 %v420
        %v453 = vunpack.c.l.bf16 %v421
        %v454 = vunpack.c.l.bf16 %v422
        %v455 = vunpack.c.l.bf16 %v423
        %v456 = vunpack.c.l.bf16 %v424
        %v457 = vunpack.c.l.bf16 %v425
        %v458 = vunpack.c.l.bf16 %v426
        %v459 = vunpack.c.l.bf16 %v427
        %v460 = vunpack.c.l.bf16 %v428
        %v461 = vunpack.c.l.bf16 %v429
        %v462 = vunpack.c.l.bf16 %v430
        %v463 = vunpack.c.l.bf16 %v431
        %v464 = vunpack.c.l.bf16 %v432
        %v465 = vunpack.c.l.bf16 %v433
        %v466 = vunpack.c.l.bf16 %v434
        %v467 = vunpack.c.l.bf16 %v435
        %v468 = vld [vmem:[%s1] sm:$0x1]
        %v470 = vlaneseq
        %v471 = vshrl.u32 %v470, 7
        %v472 = vsub.s32 0, %v471
        %v473 = vrot.slane %v468, %v472
        %v475 = vmul.f32 %v436, %v473
        %v476 = vmul.f32 %v437, %v473
        %v477 = vmul.f32 %v438, %v473
        %v478 = vmul.f32 %v439, %v473
        %v479 = vmul.f32 %v440, %v473
        %v480 = vmul.f32 %v441, %v473
        %v481 = vmul.f32 %v442, %v473
        %v482 = vmul.f32 %v443, %v473
        %v483 = vmul.f32 %v444, %v473
        %v484 = vmul.f32 %v445, %v473
        %v485 = vmul.f32 %v446, %v473
        %v486 = vmul.f32 %v447, %v473
        %v487 = vmul.f32 %v448, %v473
        %v488 = vmul.f32 %v449, %v473
        %v489 = vmul.f32 %v450, %v473
        %v490 = vmul.f32 %v451, %v473
        %v491 = vmul.f32 %v452, %v473
        %v492 = vmul.f32 %v453, %v473
        %v493 = vmul.f32 %v454, %v473
        %v494 = vmul.f32 %v455, %v473
        %v495 = vmul.f32 %v456, %v473
        %v496 = vmul.f32 %v457, %v473
        %v497 = vmul.f32 %v458, %v473
        %v498 = vmul.f32 %v459, %v473
        %v499 = vmul.f32 %v460, %v473
        %v500 = vmul.f32 %v461, %v473
        %v501 = vmul.f32 %v462, %v473
        %v502 = vmul.f32 %v463, %v473
        %v503 = vmul.f32 %v464, %v473
        %v504 = vmul.f32 %v465, %v473
        %v505 = vmul.f32 %v466, %v473
        %v506 = vmul.f32 %v467, %v473
        %v507 = vld [vmem:[%s2] sm:$0x1]
        %v509 = vlaneseq
        %v510 = vshrl.u32 %v509, 7
        %v511 = vsub.s32 0, %v510
        %v512 = vrot.slane %v507, %v511
        %v514 = vadd.f32 %v475, %v512
        %v515 = vadd.f32 %v476, %v512
        %v516 = vadd.f32 %v477, %v512
        %v517 = vadd.f32 %v478, %v512
        %v518 = vadd.f32 %v479, %v512
        %v519 = vadd.f32 %v480, %v512
        %v520 = vadd.f32 %v481, %v512
        %v521 = vadd.f32 %v482, %v512
        %v522 = vadd.f32 %v483, %v512
        %v523 = vadd.f32 %v484, %v512
        %v524 = vadd.f32 %v485, %v512
        %v525 = vadd.f32 %v486, %v512
        %v526 = vadd.f32 %v487, %v512
        %v527 = vadd.f32 %v488, %v512
        %v528 = vadd.f32 %v489, %v512
        %v529 = vadd.f32 %v490, %v512
        %v530 = vadd.f32 %v491, %v512
        %v531 = vadd.f32 %v492, %v512
        %v532 = vadd.f32 %v493, %v512
        %v533 = vadd.f32 %v494, %v512
        %v534 = vadd.f32 %v495, %v512
        %v535 = vadd.f32 %v496, %v512
        %v536 = vadd.f32 %v497, %v512
        %v537 = vadd.f32 %v498, %v512
        %v538 = vadd.f32 %v499, %v512
        %v539 = vadd.f32 %v500, %v512
        %v540 = vadd.f32 %v501, %v512
        %v541 = vadd.f32 %v502, %v512
        %v542 = vadd.f32 %v503, %v512
        %v543 = vadd.f32 %v504, %v512
        %v544 = vadd.f32 %v505, %v512
        %v545 = vadd.f32 %v506, %v512
        %vm546 = vcmp.ge.f32.partialorder %v514, 0.0
        %vm547 = vcmp.ge.f32.partialorder %v515, 0.0
        %vm548 = vcmp.ge.f32.partialorder %v516, 0.0
        %vm549 = vcmp.ge.f32.partialorder %v517, 0.0
        %vm550 = vcmp.ge.f32.partialorder %v518, 0.0
        %vm551 = vcmp.ge.f32.partialorder %v519, 0.0
        %vm552 = vcmp.ge.f32.partialorder %v520, 0.0
        %vm553 = vcmp.ge.f32.partialorder %v521, 0.0
        %vm554 = vcmp.ge.f32.partialorder %v522, 0.0
        %vm555 = vcmp.ge.f32.partialorder %v523, 0.0
        %vm556 = vcmp.ge.f32.partialorder %v524, 0.0
        %vm557 = vcmp.ge.f32.partialorder %v525, 0.0
        %vm558 = vcmp.ge.f32.partialorder %v526, 0.0
        %vm559 = vcmp.ge.f32.partialorder %v527, 0.0
        %vm560 = vcmp.ge.f32.partialorder %v528, 0.0
        %vm561 = vcmp.ge.f32.partialorder %v529, 0.0
        %vm562 = vcmp.ge.f32.partialorder %v530, 0.0
        %vm563 = vcmp.ge.f32.partialorder %v531, 0.0
        %vm564 = vcmp.ge.f32.partialorder %v532, 0.0
        %vm565 = vcmp.ge.f32.partialorder %v533, 0.0
        %vm566 = vcmp.ge.f32.partialorder %v534, 0.0
        %vm567 = vcmp.ge.f32.partialorder %v535, 0.0
        %vm568 = vcmp.ge.f32.partialorder %v536, 0.0
        %vm569 = vcmp.ge.f32.partialorder %v537, 0.0
        %vm570 = vcmp.ge.f32.partialorder %v538, 0.0
        %vm571 = vcmp.ge.f32.partialorder %v539, 0.0
        %vm572 = vcmp.ge.f32.partialorder %v540, 0.0
        %vm573 = vcmp.ge.f32.partialorder %v541, 0.0
        %vm574 = vcmp.ge.f32.partialorder %v542, 0.0
        %vm575 = vcmp.ge.f32.partialorder %v543, 0.0
        %vm576 = vcmp.ge.f32.partialorder %v544, 0.0
        %vm577 = vcmp.ge.f32.partialorder %v545, 0.0
        %v578 = vmul.f32 %v514, 0.01
        %v579 = vmul.f32 %v515, 0.01
        %v580 = vmul.f32 %v516, 0.01
        %v581 = vmul.f32 %v517, 0.01
        %v582 = vmul.f32 %v518, 0.01
        %v583 = vmul.f32 %v519, 0.01
        %v584 = vmul.f32 %v520, 0.01
        %v585 = vmul.f32 %v521, 0.01
        %v586 = vmul.f32 %v522, 0.01
        %v587 = vmul.f32 %v523, 0.01
        %v588 = vmul.f32 %v524, 0.01
        %v589 = vmul.f32 %v525, 0.01
        %v590 = vmul.f32 %v526, 0.01
        %v591 = vmul.f32 %v527, 0.01
        %v592 = vmul.f32 %v528, 0.01
        %v593 = vmul.f32 %v529, 0.01
        %v594 = vmul.f32 %v530, 0.01
        %v595 = vmul.f32 %v531, 0.01
        %v596 = vmul.f32 %v532, 0.01
        %v597 = vmul.f32 %v533, 0.01
        %v598 = vmul.f32 %v534, 0.01
        %v599 = vmul.f32 %v535, 0.01
        %v600 = vmul.f32 %v536, 0.01
        %v601 = vmul.f32 %v537, 0.01
        %v602 = vmul.f32 %v538, 0.01
        %v603 = vmul.f32 %v539, 0.01
        %v604 = vmul.f32 %v540, 0.01
        %v605 = vmul.f32 %v541, 0.01
        %v606 = vmul.f32 %v542, 0.01
        %v607 = vmul.f32 %v543, 0.01
        %v608 = vmul.f32 %v544, 0.01
        %v609 = vmul.f32 %v545, 0.01
        %v610 = vsel %vm546, %v514, %v578
        %v611 = vsel %vm547, %v515, %v579
        %v612 = vsel %vm548, %v516, %v580
        %v613 = vsel %vm549, %v517, %v581
        %v614 = vsel %vm550, %v518, %v582
        %v615 = vsel %vm551, %v519, %v583
        %v616 = vsel %vm552, %v520, %v584
        %v617 = vsel %vm553, %v521, %v585
        %v618 = vsel %vm554, %v522, %v586
        %v619 = vsel %vm555, %v523, %v587
        %v620 = vsel %vm556, %v524, %v588
        %v621 = vsel %vm557, %v525, %v589
        %v622 = vsel %vm558, %v526, %v590
        %v623 = vsel %vm559, %v527, %v591
        %v624 = vsel %vm560, %v528, %v592
        %v625 = vsel %vm561, %v529, %v593
        %v626 = vsel %vm562, %v530, %v594
        %v627 = vsel %vm563, %v531, %v595
        %v628 = vsel %vm564, %v532, %v596
        %v629 = vsel %vm565, %v533, %v597
        %v630 = vsel %vm566, %v534, %v598
        %v631 = vsel %vm567, %v535, %v599
        %v632 = vsel %vm568, %v536, %v600
        %v633 = vsel %vm569, %v537, %v601
        %v634 = vsel %vm570, %v538, %v602
        %v635 = vsel %vm571, %v539, %v603
        %v636 = vsel %vm572, %v540, %v604
        %v637 = vsel %vm573, %v541, %v605
        %v638 = vsel %vm574, %v542, %v606
        %v639 = vsel %vm575, %v543, %v607
        %v640 = vsel %vm576, %v544, %v608
        %v641 = vsel %vm577, %v545, %v609
        %v642 = vpack.c.bf16 %v611, %v610
        %v643 = vpack.c.bf16 %v613, %v612
        %v644 = vpack.c.bf16 %v615, %v614
        %v645 = vpack.c.bf16 %v617, %v616
        %v646 = vpack.c.bf16 %v619, %v618
        %v647 = vpack.c.bf16 %v621, %v620
        %v648 = vpack.c.bf16 %v623, %v622
        %v649 = vpack.c.bf16 %v625, %v624
        %v650 = vpack.c.bf16 %v627, %v626
        %v651 = vpack.c.bf16 %v629, %v628
        %v652 = vpack.c.bf16 %v631, %v630
        %v653 = vpack.c.bf16 %v633, %v632
        %v654 = vpack.c.bf16 %v635, %v634
        %v655 = vpack.c.bf16 %v637, %v636
        %v656 = vpack.c.bf16 %v639, %v638
        %v657 = vpack.c.bf16 %v641, %v640
        %v674 = vunpack.c.l.b16 %v642
        %v675 = vunpack.c.h.b16 %v642
        %v676 = vunpack.c.l.b16 %v643
        %v677 = vunpack.c.h.b16 %v643
        %v678 = vunpack.c.l.b16 %v644
        %v679 = vunpack.c.h.b16 %v644
        %v680 = vunpack.c.l.b16 %v645
        %v681 = vunpack.c.h.b16 %v645
        %v682 = vunpack.c.l.b16 %v646
        %v683 = vunpack.c.h.b16 %v646
        %v684 = vunpack.c.l.b16 %v647
        %v685 = vunpack.c.h.b16 %v647
        %v686 = vunpack.c.l.b16 %v648
        %v687 = vunpack.c.h.b16 %v648
        %v688 = vunpack.c.l.b16 %v649
        %v689 = vunpack.c.h.b16 %v649
        %v690 = vunpack.c.l.b16 %v650
        %v691 = vunpack.c.h.b16 %v650
        %v692 = vunpack.c.l.b16 %v651
        %v693 = vunpack.c.h.b16 %v651
        %v694 = vunpack.c.l.b16 %v652
        %v695 = vunpack.c.h.b16 %v652
        %v696 = vunpack.c.l.b16 %v653
        %v697 = vunpack.c.h.b16 %v653
        %v698 = vunpack.c.l.b16 %v654
        %v699 = vunpack.c.h.b16 %v654
        %v700 = vunpack.c.l.b16 %v655
        %v701 = vunpack.c.h.b16 %v655
        %v702 = vunpack.c.l.b16 %v656
        %v703 = vunpack.c.h.b16 %v656
        %v704 = vunpack.c.l.b16 %v657
        %v705 = vunpack.c.h.b16 %v657
        %v706 = vpack.c.b16 %v674, %v674
        %v707 = vpack.c.b16 %v675, %v675
        %v708 = vpack.c.b16 %v676, %v676
        %v709 = vpack.c.b16 %v677, %v677
        %v710 = vpack.c.b16 %v678, %v678
        %v711 = vpack.c.b16 %v679, %v679
        %v712 = vpack.c.b16 %v680, %v680
        %v713 = vpack.c.b16 %v681, %v681
        %v714 = vpack.c.b16 %v682, %v682
        %v715 = vpack.c.b16 %v683, %v683
        %v716 = vpack.c.b16 %v684, %v684
        %v717 = vpack.c.b16 %v685, %v685
        %v718 = vpack.c.b16 %v686, %v686
        %v719 = vpack.c.b16 %v687, %v687
        %v720 = vpack.c.b16 %v688, %v688
        %v721 = vpack.c.b16 %v689, %v689
        %v722 = vpack.c.b16 %v690, %v690
        %v723 = vpack.c.b16 %v691, %v691
        %v724 = vpack.c.b16 %v692, %v692
        %v725 = vpack.c.b16 %v693, %v693
        %v726 = vpack.c.b16 %v694, %v694
        %v727 = vpack.c.b16 %v695, %v695
        %v728 = vpack.c.b16 %v696, %v696
        %v729 = vpack.c.b16 %v697, %v697
        %v730 = vpack.c.b16 %v698, %v698
        %v731 = vpack.c.b16 %v699, %v699
        %v732 = vpack.c.b16 %v700, %v700
        %v733 = vpack.c.b16 %v701, %v701
        %v734 = vpack.c.b16 %v702, %v702
        %v735 = vpack.c.b16 %v703, %v703
        %v736 = vpack.c.b16 %v704, %v704
        %v737 = vpack.c.b16 %v705, %v705
        %vm738 = vsmask.f32 256
        %vm739 = vsmask.f32 4368
        %vm740 = vmor %vm738, %vm739
        %v742 = vshrl.u32 %v706, 16
        %v744 = vrot.slane %v742, 7
        %v745 = vshll.u32 %v706, 16
        %v747 = vor.u32 %v744, %v745
        %v748 = vrot.slane %v744, 4
        %v750 = vshrl.u32 %v707, 16
        %v752 = vrot.slane %v750, 7
        %v753 = vshll.u32 %v707, 16
        %v755 = vor.u32 %v752, %v753
        %v756 = vsel %vm740, %v748, %v755
        %v757 = vrot.slane %v752, 4
        %v759 = vshrl.u32 %v708, 16
        %v761 = vrot.slane %v759, 7
        %v762 = vshll.u32 %v708, 16
        %v764 = vor.u32 %v761, %v762
        %v765 = vrot.slane %v761, 4
        %v767 = vshrl.u32 %v709, 16
        %v769 = vrot.slane %v767, 7
        %v770 = vshll.u32 %v709, 16
        %v772 = vor.u32 %v769, %v770
        %v773 = vsel %vm740, %v765, %v772
        %v774 = vrot.slane %v769, 4
        %v776 = vshrl.u32 %v710, 16
        %v778 = vrot.slane %v776, 7
        %v779 = vshll.u32 %v710, 16
        %v781 = vor.u32 %v778, %v779
        %v782 = vrot.slane %v778, 4
        %v784 = vshrl.u32 %v711, 16
        %v786 = vrot.slane %v784, 7
        %v787 = vshll.u32 %v711, 16
        %v789 = vor.u32 %v786, %v787
        %v790 = vsel %vm740, %v782, %v789
        %v791 = vrot.slane %v786, 4
        %v793 = vshrl.u32 %v712, 16
        %v795 = vrot.slane %v793, 7
        %v796 = vshll.u32 %v712, 16
        %v798 = vor.u32 %v795, %v796
        %v799 = vrot.slane %v795, 4
        %v801 = vshrl.u32 %v713, 16
        %v803 = vrot.slane %v801, 7
        %v804 = vshll.u32 %v713, 16
        %v806 = vor.u32 %v803, %v804
        %v807 = vsel %vm740, %v799, %v806
        %v808 = vrot.slane %v803, 4
        %v810 = vshrl.u32 %v714, 16
        %v812 = vrot.slane %v810, 7
        %v813 = vshll.u32 %v714, 16
        %v815 = vor.u32 %v812, %v813
        %v816 = vrot.slane %v812, 4
        %v818 = vshrl.u32 %v715, 16
        %v820 = vrot.slane %v818, 7
        %v821 = vshll.u32 %v715, 16
        %v823 = vor.u32 %v820, %v821
        %v824 = vsel %vm740, %v816, %v823
        %v825 = vrot.slane %v820, 4
        %v827 = vshrl.u32 %v716, 16
        %v829 = vrot.slane %v827, 7
        %v830 = vshll.u32 %v716, 16
        %v832 = vor.u32 %v829, %v830
        %v833 = vrot.slane %v829, 4
        %v835 = vshrl.u32 %v717, 16
        %v837 = vrot.slane %v835, 7
        %v838 = vshll.u32 %v717, 16
        %v840 = vor.u32 %v837, %v838
        %v841 = vsel %vm740, %v833, %v840
        %v842 = vrot.slane %v837, 4
        %v844 = vshrl.u32 %v718, 16
        %v846 = vrot.slane %v844, 7
        %v847 = vshll.u32 %v718, 16
        %v849 = vor.u32 %v846, %v847
        %v850 = vrot.slane %v846, 4
        %v852 = vshrl.u32 %v719, 16
        %v854 = vrot.slane %v852, 7
        %v855 = vshll.u32 %v719, 16
        %v857 = vor.u32 %v854, %v855
        %v858 = vsel %vm740, %v850, %v857
        %v859 = vrot.slane %v854, 4
        %v861 = vshrl.u32 %v720, 16
        %v863 = vrot.slane %v861, 7
        %v864 = vshll.u32 %v720, 16
        %v866 = vor.u32 %v863, %v864
        %v867 = vrot.slane %v863, 4
        %v869 = vshrl.u32 %v721, 16
        %v871 = vrot.slane %v869, 7
        %v872 = vshll.u32 %v721, 16
        %v874 = vor.u32 %v871, %v872
        %v875 = vsel %vm740, %v867, %v874
        %v876 = vrot.slane %v871, 4
        %v878 = vshrl.u32 %v722, 16
        %v880 = vrot.slane %v878, 7
        %v881 = vshll.u32 %v722, 16
        %v883 = vor.u32 %v880, %v881
        %v884 = vrot.slane %v880, 4
        %v886 = vshrl.u32 %v723, 16
        %v888 = vrot.slane %v886, 7
        %v889 = vshll.u32 %v723, 16
        %v891 = vor.u32 %v888, %v889
        %v892 = vsel %vm740, %v884, %v891
        %v893 = vrot.slane %v888, 4
        %v895 = vshrl.u32 %v724, 16
        %v897 = vrot.slane %v895, 7
        %v898 = vshll.u32 %v724, 16
        %v900 = vor.u32 %v897, %v898
        %v901 = vrot.slane %v897, 4
        %v903 = vshrl.u32 %v725, 16
        %v905 = vrot.slane %v903, 7
        %v906 = vshll.u32 %v725, 16
        %v908 = vor.u32 %v905, %v906
        %v909 = vsel %vm740, %v901, %v908
        %v910 = vrot.slane %v905, 4
        %v912 = vshrl.u32 %v726, 16
        %v914 = vrot.slane %v912, 7
        %v915 = vshll.u32 %v726, 16
        %v917 = vor.u32 %v914, %v915
        %v918 = vrot.slane %v914, 4
        %v920 = vshrl.u32 %v727, 16
        %v922 = vrot.slane %v920, 7
        %v923 = vshll.u32 %v727, 16
        %v925 = vor.u32 %v922, %v923
        %v926 = vsel %vm740, %v918, %v925
        %v927 = vrot.slane %v922, 4
        %v929 = vshrl.u32 %v728, 16
        %v931 = vrot.slane %v929, 7
        %v932 = vshll.u32 %v728, 16
        %v934 = vor.u32 %v931, %v932
        %v935 = vrot.slane %v931, 4
        %v937 = vshrl.u32 %v729, 16
        %v939 = vrot.slane %v937, 7
        %v940 = vshll.u32 %v729, 16
        %v942 = vor.u32 %v939, %v940
        %v943 = vsel %vm740, %v935, %v942
        %v944 = vrot.slane %v939, 4
        %v946 = vshrl.u32 %v730, 16
        %v948 = vrot.slane %v946, 7
        %v949 = vshll.u32 %v730, 16
        %v951 = vor.u32 %v948, %v949
        %v952 = vrot.slane %v948, 4
        %v954 = vshrl.u32 %v731, 16
        %v956 = vrot.slane %v954, 7
        %v957 = vshll.u32 %v731, 16
        %v959 = vor.u32 %v956, %v957
        %v960 = vsel %vm740, %v952, %v959
        %v961 = vrot.slane %v956, 4
        %v963 = vshrl.u32 %v732, 16
        %v965 = vrot.slane %v963, 7
        %v966 = vshll.u32 %v732, 16
        %v968 = vor.u32 %v965, %v966
        %v969 = vrot.slane %v965, 4
        %v971 = vshrl.u32 %v733, 16
        %v973 = vrot.slane %v971, 7
        %v974 = vshll.u32 %v733, 16
        %v976 = vor.u32 %v973, %v974
        %v977 = vsel %vm740, %v969, %v976
        %v978 = vrot.slane %v973, 4
        %v980 = vshrl.u32 %v734, 16
        %v982 = vrot.slane %v980, 7
        %v983 = vshll.u32 %v734, 16
        %v985 = vor.u32 %v982, %v983
        %v986 = vrot.slane %v982, 4
        %v988 = vshrl.u32 %v735, 16
        %v990 = vrot.slane %v988, 7
        %v991 = vshll.u32 %v735, 16
        %v993 = vor.u32 %v990, %v991
        %v994 = vsel %vm740, %v986, %v993
        %v995 = vrot.slane %v990, 4
        %v997 = vshrl.u32 %v736, 16
        %v999 = vrot.slane %v997, 7
        %v1000 = vshll.u32 %v736, 16
        %v1002 = vor.u32 %v999, %v1000
        %v1003 = vrot.slane %v999, 4
        %v1005 = vshrl.u32 %v737, 16
        %v1007 = vrot.slane %v1005, 7
        %v1008 = vshll.u32 %v737, 16
        %v1010 = vor.u32 %v1007, %v1008
        %v1011 = vsel %vm740, %v1003, %v1010
        %v1012 = vrot.slane %v1007, 4
        %s1061 = scalar_lea.vmem [#allocation3], 12
        %vm1062 = vcmask 1043456
        %vm1063 = vsmask.f32 7938
        %vm1064 = vmand %vm1062, %vm1063
        %v1065 = vld [vmem:[%s1061] sm:$0xf]
        %v1066 = vsel %vm1064, %v747, %v1065
        %1067 = vst [vmem:[%s1061] sm:$0xf] %v1066
        %1068 = vst [vmem:[%s1061 + $0x4] sm:$0xf] %v756
        %vm1069 = vcmask 1040384
        %vm1070 = vmand %vm1069, %vm738
        %v1071 = vld [vmem:[%s1061 + $0x8] sm:$0x1]
        %v1072 = vsel %vm1070, %v757, %v1071
        %1073 = vst [vmem:[%s1061 + $0x8] sm:$0x1] %v1072
        %v1074 = vld [vmem:[%s1061 + $0xc] sm:$0xf]
        %v1075 = vsel %vm1064, %v764, %v1074
        %1076 = vst [vmem:[%s1061 + $0xc] sm:$0xf] %v1075
        %1077 = vst [vmem:[%s1061 + $0x10] sm:$0xf] %v773
        %v1078 = vld [vmem:[%s1061 + $0x14] sm:$0x1]
        %v1079 = vsel %vm1070, %v774, %v1078
        %1080 = vst [vmem:[%s1061 + $0x14] sm:$0x1] %v1079
        %v1081 = vld [vmem:[%s1061 + $0x18] sm:$0xf]
        %v1082 = vsel %vm1064, %v781, %v1081
        %1083 = vst [vmem:[%s1061 + $0x18] sm:$0xf] %v1082
        %1084 = vst [vmem:[%s1061 + $0x1c] sm:$0xf] %v790
        %v1085 = vld [vmem:[%s1061 + $0x20] sm:$0x1]
        %v1086 = vsel %vm1070, %v791, %v1085
        %1087 = vst [vmem:[%s1061 + $0x20] sm:$0x1] %v1086
        %v1088 = vld [vmem:[%s1061 + $0x24] sm:$0xf]
        %v1089 = vsel %vm1064, %v798, %v1088
        %1090 = vst [vmem:[%s1061 + $0x24] sm:$0xf] %v1089
        %1091 = vst [vmem:[%s1061 + $0x28] sm:$0xf] %v807
        %v1092 = vld [vmem:[%s1061 + $0x2c] sm:$0x1]
        %v1093 = vsel %vm1070, %v808, %v1092
        %1094 = vst [vmem:[%s1061 + $0x2c] sm:$0x1] %v1093
        %v1095 = vld [vmem:[%s1061 + $0x30] sm:$0xf]
        %v1096 = vsel %vm1064, %v815, %v1095
        %1097 = vst [vmem:[%s1061 + $0x30] sm:$0xf] %v1096
        %1098 = vst [vmem:[%s1061 + $0x34] sm:$0xf] %v824
        %v1099 = vld [vmem:[%s1061 + $0x38] sm:$0x1]
        %v1100 = vsel %vm1070, %v825, %v1099
        %1101 = vst [vmem:[%s1061 + $0x38] sm:$0x1] %v1100
        %v1102 = vld [vmem:[%s1061 + $0x3c] sm:$0xf]
        %v1103 = vsel %vm1064, %v832, %v1102
        %1104 = vst [vmem:[%s1061 + $0x3c] sm:$0xf] %v1103
        %1105 = vst [vmem:[%s1061 + $0x40] sm:$0xf] %v841
        %v1106 = vld [vmem:[%s1061 + $0x44] sm:$0x1]
        %v1107 = vsel %vm1070, %v842, %v1106
        %1108 = vst [vmem:[%s1061 + $0x44] sm:$0x1] %v1107
        %v1109 = vld [vmem:[%s1061 + $0x48] sm:$0xf]
        %v1110 = vsel %vm1064, %v849, %v1109
        %1111 = vst [vmem:[%s1061 + $0x48] sm:$0xf] %v1110
        %1112 = vst [vmem:[%s1061 + $0x4c] sm:$0xf] %v858
        %v1113 = vld [vmem:[%s1061 + $0x50] sm:$0x1]
        %v1114 = vsel %vm1070, %v859, %v1113
        %1115 = vst [vmem:[%s1061 + $0x50] sm:$0x1] %v1114
        %v1116 = vld [vmem:[%s1061 + $0x54] sm:$0xf]
        %v1117 = vsel %vm1064, %v866, %v1116
        %1118 = vst [vmem:[%s1061 + $0x54] sm:$0xf] %v1117
        %1119 = vst [vmem:[%s1061 + $0x58] sm:$0xf] %v875
        %v1120 = vld [vmem:[%s1061 + $0x5c] sm:$0x1]
        %v1121 = vsel %vm1070, %v876, %v1120
        %1122 = vst [vmem:[%s1061 + $0x5c] sm:$0x1] %v1121
        %v1123 = vld [vmem:[%s1061 + $0x60] sm:$0xf]
        %v1124 = vsel %vm1064, %v883, %v1123
        %1125 = vst [vmem:[%s1061 + $0x60] sm:$0xf] %v1124
        %1126 = vst [vmem:[%s1061 + $0x64] sm:$0xf] %v892
        %v1127 = vld [vmem:[%s1061 + $0x68] sm:$0x1]
        %v1128 = vsel %vm1070, %v893, %v1127
        %1129 = vst [vmem:[%s1061 + $0x68] sm:$0x1] %v1128
        %v1130 = vld [vmem:[%s1061 + $0x6c] sm:$0xf]
        %v1131 = vsel %vm1064, %v900, %v1130
        %1132 = vst [vmem:[%s1061 + $0x6c] sm:$0xf] %v1131
        %1133 = vst [vmem:[%s1061 + $0x70] sm:$0xf] %v909
        %v1134 = vld [vmem:[%s1061 + $0x74] sm:$0x1]
        %v1135 = vsel %vm1070, %v910, %v1134
        %1136 = vst [vmem:[%s1061 + $0x74] sm:$0x1] %v1135
        %v1137 = vld [vmem:[%s1061 + $0x78] sm:$0xf]
        %v1138 = vsel %vm1064, %v917, %v1137
        %1139 = vst [vmem:[%s1061 + $0x78] sm:$0xf] %v1138
        %1140 = vst [vmem:[%s1061 + $0x7c] sm:$0xf] %v926
        %v1141 = vld [vmem:[%s1061 + $0x80] sm:$0x1]
        %v1142 = vsel %vm1070, %v927, %v1141
        %1143 = vst [vmem:[%s1061 + $0x80] sm:$0x1] %v1142
        %v1144 = vld [vmem:[%s1061 + $0x84] sm:$0xf]
        %v1145 = vsel %vm1064, %v934, %v1144
        %1146 = vst [vmem:[%s1061 + $0x84] sm:$0xf] %v1145
        %1147 = vst [vmem:[%s1061 + $0x88] sm:$0xf] %v943
        %v1148 = vld [vmem:[%s1061 + $0x8c] sm:$0x1]
        %v1149 = vsel %vm1070, %v944, %v1148
        %1150 = vst [vmem:[%s1061 + $0x8c] sm:$0x1] %v1149
        %v1151 = vld [vmem:[%s1061 + $0x90] sm:$0xf]
        %v1152 = vsel %vm1064, %v951, %v1151
        %1153 = vst [vmem:[%s1061 + $0x90] sm:$0xf] %v1152
        %1154 = vst [vmem:[%s1061 + $0x94] sm:$0xf] %v960
        %v1155 = vld [vmem:[%s1061 + $0x98] sm:$0x1]
        %v1156 = vsel %vm1070, %v961, %v1155
        %1157 = vst [vmem:[%s1061 + $0x98] sm:$0x1] %v1156
        %v1158 = vld [vmem:[%s1061 + $0x9c] sm:$0xf]
        %v1159 = vsel %vm1064, %v968, %v1158
        %1160 = vst [vmem:[%s1061 + $0x9c] sm:$0xf] %v1159
        %1161 = vst [vmem:[%s1061 + $0xa0] sm:$0xf] %v977
        %v1162 = vld [vmem:[%s1061 + $0xa4] sm:$0x1]
        %v1163 = vsel %vm1070, %v978, %v1162
        %1164 = vst [vmem:[%s1061 + $0xa4] sm:$0x1] %v1163
        %v1165 = vld [vmem:[%s1061 + $0xa8] sm:$0xf]
        %v1166 = vsel %vm1064, %v985, %v1165
        %1167 = vst [vmem:[%s1061 + $0xa8] sm:$0xf] %v1166
        %1168 = vst [vmem:[%s1061 + $0xac] sm:$0xf] %v994
        %v1169 = vld [vmem:[%s1061 + $0xb0] sm:$0x1]
        %v1170 = vsel %vm1070, %v995, %v1169
        %1171 = vst [vmem:[%s1061 + $0xb0] sm:$0x1] %v1170
        %v1172 = vld [vmem:[%s1061 + $0xb4] sm:$0xf]
        %v1173 = vsel %vm1064, %v1002, %v1172
        %1174 = vst [vmem:[%s1061 + $0xb4] sm:$0xf] %v1173
        %1175 = vst [vmem:[%s1061 + $0xb8] sm:$0xf] %v1011
        %v1176 = vld [vmem:[%s1061 + $0xbc] sm:$0x1]
        %v1177 = vsel %vm1070, %v1012, %v1176
        %1178 = vst [vmem:[%s1061 + $0xbc] sm:$0x1] %v1177
      $region36: #{double_conv.4} parent=31 // pred_fallthru
        _
      %s1179 = smul.u32 %s23, 16
      %s1180 = smul.u32 %s1179, 3
      %s1181 = smul.addr %s1180, 4
      %s1182 = scalar_lea.vmem [#allocation3], %s1181
      %v1183 = vld [vmem:[%s1182] sm:$0xf]
      %v1184 = vld [vmem:[%s1182 + $0x4] sm:$0xf]
      %v1185 = vld [vmem:[%s1182 + $0x8] sm:$0x1]
      %v1186 = vld [vmem:[%s1182 + $0xc] sm:$0xf]
      %v1187 = vld [vmem:[%s1182 + $0x10] sm:$0xf]
      %v1188 = vld [vmem:[%s1182 + $0x14] sm:$0x1]
      %v1189 = vld [vmem:[%s1182 + $0x18] sm:$0xf]
      %v1190 = vld [vmem:[%s1182 + $0x1c] sm:$0xf]
      %v1191 = vld [vmem:[%s1182 + $0x20] sm:$0x1]
      %v1192 = vld [vmem:[%s1182 + $0x24] sm:$0xf]
      %v1193 = vld [vmem:[%s1182 + $0x28] sm:$0xf]
      %v1194 = vld [vmem:[%s1182 + $0x2c] sm:$0x1]
      %v1195 = vld [vmem:[%s1182 + $0x30] sm:$0xf]
      %v1196 = vld [vmem:[%s1182 + $0x34] sm:$0xf]
      %v1197 = vld [vmem:[%s1182 + $0x38] sm:$0x1]
      %v1198 = vld [vmem:[%s1182 + $0x3c] sm:$0xf]
      %v1199 = vld [vmem:[%s1182 + $0x40] sm:$0xf]
      %v1200 = vld [vmem:[%s1182 + $0x44] sm:$0x1]
      %v1201 = vld [vmem:[%s1182 + $0x48] sm:$0xf]
      %v1202 = vld [vmem:[%s1182 + $0x4c] sm:$0xf]
      %v1203 = vld [vmem:[%s1182 + $0x50] sm:$0x1]
      %v1204 = vld [vmem:[%s1182 + $0x54] sm:$0xf]
      %v1205 = vld [vmem:[%s1182 + $0x58] sm:$0xf]
      %v1206 = vld [vmem:[%s1182 + $0x5c] sm:$0x1]
      %v1207 = vld [vmem:[%s1182 + $0x60] sm:$0xf]
      %v1208 = vld [vmem:[%s1182 + $0x64] sm:$0xf]
      %v1209 = vld [vmem:[%s1182 + $0x68] sm:$0x1]
      %v1210 = vld [vmem:[%s1182 + $0x6c] sm:$0xf]
      %v1211 = vld [vmem:[%s1182 + $0x70] sm:$0xf]
      %v1212 = vld [vmem:[%s1182 + $0x74] sm:$0x1]
      %v1213 = vld [vmem:[%s1182 + $0x78] sm:$0xf]
      %v1214 = vld [vmem:[%s1182 + $0x7c] sm:$0xf]
      %v1215 = vld [vmem:[%s1182 + $0x80] sm:$0x1]
      %v1216 = vld [vmem:[%s1182 + $0x84] sm:$0xf]
      %v1217 = vld [vmem:[%s1182 + $0x88] sm:$0xf]
      %v1218 = vld [vmem:[%s1182 + $0x8c] sm:$0x1]
      %v1219 = vld [vmem:[%s1182 + $0x90] sm:$0xf]
      %v1220 = vld [vmem:[%s1182 + $0x94] sm:$0xf]
      %v1221 = vld [vmem:[%s1182 + $0x98] sm:$0x1]
      %v1222 = vld [vmem:[%s1182 + $0x9c] sm:$0xf]
      %v1223 = vld [vmem:[%s1182 + $0xa0] sm:$0xf]
      %v1224 = vld [vmem:[%s1182 + $0xa4] sm:$0x1]
      %v1225 = vld [vmem:[%s1182 + $0xa8] sm:$0xf]
      %v1226 = vld [vmem:[%s1182 + $0xac] sm:$0xf]
      %v1227 = vld [vmem:[%s1182 + $0xb0] sm:$0x1]
      %v1228 = vld [vmem:[%s1182 + $0xb4] sm:$0xf]
      %v1229 = vld [vmem:[%s1182 + $0xb8] sm:$0xf]
      %v1230 = vld [vmem:[%s1182 + $0xbc] sm:$0x1]
      %v1263 = vunpack.c.l.b16 %v1183
      %v1264 = vunpack.c.l.b16 %v1184
      %v1265 = vunpack.c.l.b16 %v1186
      %v1266 = vunpack.c.l.b16 %v1187
      %v1267 = vunpack.c.l.b16 %v1189
      %v1268 = vunpack.c.l.b16 %v1190
      %v1269 = vunpack.c.l.b16 %v1192
      %v1270 = vunpack.c.l.b16 %v1193
      %v1271 = vunpack.c.l.b16 %v1195
      %v1272 = vunpack.c.l.b16 %v1196
      %v1273 = vunpack.c.l.b16 %v1198
      %v1274 = vunpack.c.l.b16 %v1199
      %v1275 = vunpack.c.l.b16 %v1201
      %v1276 = vunpack.c.l.b16 %v1202
      %v1277 = vunpack.c.l.b16 %v1204
      %v1278 = vunpack.c.l.b16 %v1205
      %v1279 = vunpack.c.l.b16 %v1207
      %v1280 = vunpack.c.l.b16 %v1208
      %v1281 = vunpack.c.l.b16 %v1210
      %v1282 = vunpack.c.l.b16 %v1211
      %v1283 = vunpack.c.l.b16 %v1213
      %v1284 = vunpack.c.l.b16 %v1214
      %v1285 = vunpack.c.l.b16 %v1216
      %v1286 = vunpack.c.l.b16 %v1217
      %v1287 = vunpack.c.l.b16 %v1219
      %v1288 = vunpack.c.l.b16 %v1220
      %v1289 = vunpack.c.l.b16 %v1222
      %v1290 = vunpack.c.l.b16 %v1223
      %v1291 = vunpack.c.l.b16 %v1225
      %v1292 = vunpack.c.l.b16 %v1226
      %v1293 = vunpack.c.l.b16 %v1228
      %v1294 = vunpack.c.l.b16 %v1229
      %v1295 = vpack.c.b16 %v1264, %v1263
      %v1296 = vpack.c.b16 %v1266, %v1265
      %v1297 = vpack.c.b16 %v1268, %v1267
      %v1298 = vpack.c.b16 %v1270, %v1269
      %v1299 = vpack.c.b16 %v1272, %v1271
      %v1300 = vpack.c.b16 %v1274, %v1273
      %v1301 = vpack.c.b16 %v1276, %v1275
      %v1302 = vpack.c.b16 %v1278, %v1277
      %v1303 = vpack.c.b16 %v1280, %v1279
      %v1304 = vpack.c.b16 %v1282, %v1281
      %v1305 = vpack.c.b16 %v1284, %v1283
      %v1306 = vpack.c.b16 %v1286, %v1285
      %v1307 = vpack.c.b16 %v1288, %v1287
      %v1308 = vpack.c.b16 %v1290, %v1289
      %v1309 = vpack.c.b16 %v1292, %v1291
      %v1310 = vpack.c.b16 %v1294, %v1293
      %v1343 = vunpack.c.l.b16 %v1185
      %v1344 = vunpack.c.l.b16 %v1188
      %v1345 = vunpack.c.l.b16 %v1191
      %v1346 = vunpack.c.l.b16 %v1194
      %v1347 = vunpack.c.l.b16 %v1197
      %v1348 = vunpack.c.l.b16 %v1200
      %v1349 = vunpack.c.l.b16 %v1203
      %v1350 = vunpack.c.l.b16 %v1206
      %v1351 = vunpack.c.l.b16 %v1209
      %v1352 = vunpack.c.l.b16 %v1212
      %v1353 = vunpack.c.l.b16 %v1215
      %v1354 = vunpack.c.l.b16 %v1218
      %v1355 = vunpack.c.l.b16 %v1221
      %v1356 = vunpack.c.l.b16 %v1224
      %v1357 = vunpack.c.l.b16 %v1227
      %v1358 = vunpack.c.l.b16 %v1230
      %v1359 = vpack.c.b16 %v1343, %v1343
      %v1360 = vpack.c.b16 %v1344, %v1344
      %v1361 = vpack.c.b16 %v1345, %v1345
      %v1362 = vpack.c.b16 %v1346, %v1346
      %v1363 = vpack.c.b16 %v1347, %v1347
      %v1364 = vpack.c.b16 %v1348, %v1348
      %v1365 = vpack.c.b16 %v1349, %v1349
      %v1366 = vpack.c.b16 %v1350, %v1350
      %v1367 = vpack.c.b16 %v1351, %v1351
      %v1368 = vpack.c.b16 %v1352, %v1352
      %v1369 = vpack.c.b16 %v1353, %v1353
      %v1370 = vpack.c.b16 %v1354, %v1354
      %v1371 = vpack.c.b16 %v1355, %v1355
      %v1372 = vpack.c.b16 %v1356, %v1356
      %v1373 = vpack.c.b16 %v1357, %v1357
      %v1374 = vpack.c.b16 %v1358, %v1358
      %vm1375 = vsmask.f32 7424
      %v1377 = vshrl.u32 %v1295, 16
      %v1379 = vshll.u32 %v1295, 16
      %v1381 = vrot.slane %v1379, 1
      %v1382 = vor.u32 %v1377, %v1381
      %v1384 = vshll.u32 %v1359, 16
      %v1386 = vrot.slane %v1384, 1
      %v1387 = vsel %vm1375, %v1382, %v1386
      %v1389 = vshrl.u32 %v1296, 16
      %v1391 = vshll.u32 %v1296, 16
      %v1393 = vrot.slane %v1391, 1
      %v1394 = vor.u32 %v1389, %v1393
      %v1396 = vshll.u32 %v1360, 16
      %v1398 = vrot.slane %v1396, 1
      %v1399 = vsel %vm1375, %v1394, %v1398
      %v1401 = vshrl.u32 %v1297, 16
      %v1403 = vshll.u32 %v1297, 16
      %v1405 = vrot.slane %v1403, 1
      %v1406 = vor.u32 %v1401, %v1405
      %v1408 = vshll.u32 %v1361, 16
      %v1410 = vrot.slane %v1408, 1
      %v1411 = vsel %vm1375, %v1406, %v1410
      %v1413 = vshrl.u32 %v1298, 16
      %v1415 = vshll.u32 %v1298, 16
      %v1417 = vrot.slane %v1415, 1
      %v1418 = vor.u32 %v1413, %v1417
      %v1420 = vshll.u32 %v1362, 16
      %v1422 = vrot.slane %v1420, 1
      %v1423 = vsel %vm1375, %v1418, %v1422
      %v1425 = vshrl.u32 %v1299, 16
      %v1427 = vshll.u32 %v1299, 16
      %v1429 = vrot.slane %v1427, 1
      %v1430 = vor.u32 %v1425, %v1429
      %v1432 = vshll.u32 %v1363, 16
      %v1434 = vrot.slane %v1432, 1
      %v1435 = vsel %vm1375, %v1430, %v1434
      %v1437 = vshrl.u32 %v1300, 16
      %v1439 = vshll.u32 %v1300, 16
      %v1441 = vrot.slane %v1439, 1
      %v1442 = vor.u32 %v1437, %v1441
      %v1444 = vshll.u32 %v1364, 16
      %v1446 = vrot.slane %v1444, 1
      %v1447 = vsel %vm1375, %v1442, %v1446
      %v1449 = vshrl.u32 %v1301, 16
      %v1451 = vshll.u32 %v1301, 16
      %v1453 = vrot.slane %v1451, 1
      %v1454 = vor.u32 %v1449, %v1453
      %v1456 = vshll.u32 %v1365, 16
      %v1458 = vrot.slane %v1456, 1
      %v1459 = vsel %vm1375, %v1454, %v1458
      %v1461 = vshrl.u32 %v1302, 16
      %v1463 = vshll.u32 %v1302, 16
      %v1465 = vrot.slane %v1463, 1
      %v1466 = vor.u32 %v1461, %v1465
      %v1468 = vshll.u32 %v1366, 16
      %v1470 = vrot.slane %v1468, 1
      %v1471 = vsel %vm1375, %v1466, %v1470
      %v1473 = vshrl.u32 %v1303, 16
      %v1475 = vshll.u32 %v1303, 16
      %v1477 = vrot.slane %v1475, 1
      %v1478 = vor.u32 %v1473, %v1477
      %v1480 = vshll.u32 %v1367, 16
      %v1482 = vrot.slane %v1480, 1
      %v1483 = vsel %vm1375, %v1478, %v1482
      %v1485 = vshrl.u32 %v1304, 16
      %v1487 = vshll.u32 %v1304, 16
      %v1489 = vrot.slane %v1487, 1
      %v1490 = vor.u32 %v1485, %v1489
      %v1492 = vshll.u32 %v1368, 16
      %v1494 = vrot.slane %v1492, 1
      %v1495 = vsel %vm1375, %v1490, %v1494
      %v1497 = vshrl.u32 %v1305, 16
      %v1499 = vshll.u32 %v1305, 16
      %v1501 = vrot.slane %v1499, 1
      %v1502 = vor.u32 %v1497, %v1501
      %v1504 = vshll.u32 %v1369, 16
      %v1506 = vrot.slane %v1504, 1
      %v1507 = vsel %vm1375, %v1502, %v1506
      %v1509 = vshrl.u32 %v1306, 16
      %v1511 = vshll.u32 %v1306, 16
      %v1513 = vrot.slane %v1511, 1
      %v1514 = vor.u32 %v1509, %v1513
      %v1516 = vshll.u32 %v1370, 16
      %v1518 = vrot.slane %v1516, 1
      %v1519 = vsel %vm1375, %v1514, %v1518
      %v1521 = vshrl.u32 %v1307, 16
      %v1523 = vshll.u32 %v1307, 16
      %v1525 = vrot.slane %v1523, 1
      %v1526 = vor.u32 %v1521, %v1525
      %v1528 = vshll.u32 %v1371, 16
      %v1530 = vrot.slane %v1528, 1
      %v1531 = vsel %vm1375, %v1526, %v1530
      %v1533 = vshrl.u32 %v1308, 16
      %v1535 = vshll.u32 %v1308, 16
      %v1537 = vrot.slane %v1535, 1
      %v1538 = vor.u32 %v1533, %v1537
      %v1540 = vshll.u32 %v1372, 16
      %v1542 = vrot.slane %v1540, 1
      %v1543 = vsel %vm1375, %v1538, %v1542
      %v1545 = vshrl.u32 %v1309, 16
      %v1547 = vshll.u32 %v1309, 16
      %v1549 = vrot.slane %v1547, 1
      %v1550 = vor.u32 %v1545, %v1549
      %v1552 = vshll.u32 %v1373, 16
      %v1554 = vrot.slane %v1552, 1
      %v1555 = vsel %vm1375, %v1550, %v1554
      %v1557 = vshrl.u32 %v1310, 16
      %v1559 = vshll.u32 %v1310, 16
      %v1561 = vrot.slane %v1559, 1
      %v1562 = vor.u32 %v1557, %v1561
      %v1564 = vshll.u32 %v1374, 16
      %v1566 = vrot.slane %v1564, 1
      %v1567 = vsel %vm1375, %v1562, %v1566
      %vm1584 = vcmask 1046528
      %v1585 = vrot.slane %v1295, 1
      %v1586 = vrot.slane %v1359, 1
      %v1587 = vsel %vm1584, %v1585, %v1586
      %v1588 = vrot.slane %v1296, 1
      %v1589 = vrot.slane %v1360, 1
      %v1590 = vsel %vm1584, %v1588, %v1589
      %v1591 = vrot.slane %v1297, 1
      %v1592 = vrot.slane %v1361, 1
      %v1593 = vsel %vm1584, %v1591, %v1592
      %v1594 = vrot.slane %v1298, 1
      %v1595 = vrot.slane %v1362, 1
      %v1596 = vsel %vm1584, %v1594, %v1595
      %v1597 = vrot.slane %v1299, 1
      %v1598 = vrot.slane %v1363, 1
      %v1599 = vsel %vm1584, %v1597, %v1598
      %v1600 = vrot.slane %v1300, 1
      %v1601 = vrot.slane %v1364, 1
      %v1602 = vsel %vm1584, %v1600, %v1601
      %v1603 = vrot.slane %v1301, 1
      %v1604 = vrot.slane %v1365, 1
      %v1605 = vsel %vm1584, %v1603, %v1604
      %v1606 = vrot.slane %v1302, 1
      %v1607 = vrot.slane %v1366, 1
      %v1608 = vsel %vm1584, %v1606, %v1607
      %v1609 = vrot.slane %v1303, 1
      %v1610 = vrot.slane %v1367, 1
      %v1611 = vsel %vm1584, %v1609, %v1610
      %v1612 = vrot.slane %v1304, 1
      %v1613 = vrot.slane %v1368, 1
      %v1614 = vsel %vm1584, %v1612, %v1613
      %v1615 = vrot.slane %v1305, 1
      %v1616 = vrot.slane %v1369, 1
      %v1617 = vsel %vm1584, %v1615, %v1616
      %v1618 = vrot.slane %v1306, 1
      %v1619 = vrot.slane %v1370, 1
      %v1620 = vsel %vm1584, %v1618, %v1619
      %v1621 = vrot.slane %v1307, 1
      %v1622 = vrot.slane %v1371, 1
      %v1623 = vsel %vm1584, %v1621, %v1622
      %v1624 = vrot.slane %v1308, 1
      %v1625 = vrot.slane %v1372, 1
      %v1626 = vsel %vm1584, %v1624, %v1625
      %v1627 = vrot.slane %v1309, 1
      %v1628 = vrot.slane %v1373, 1
      %v1629 = vsel %vm1584, %v1627, %v1628
      %v1630 = vrot.slane %v1310, 1
      %v1631 = vrot.slane %v1374, 1
      %v1632 = vsel %vm1584, %v1630, %v1631
      %v1649 = vld [vmem:[%s3] sm:$0xf]
      %v1650 = vld [vmem:[%s3 + $0x4] sm:$0xf]
      %v1651 = vld [vmem:[%s3 + $0x8] sm:$0xf]
      %v1652 = vld [vmem:[%s3 + $0xc] sm:$0xf]
      %v1653 = vld [vmem:[%s3 + $0x10] sm:$0xf]
      %v1654 = vld [vmem:[%s3 + $0x14] sm:$0xf]
      %v1655 = vld [vmem:[%s3 + $0x18] sm:$0xf]
      %v1656 = vld [vmem:[%s3 + $0x1c] sm:$0xf]
      %v1657 = vld [vmem:[%s3 + $0x20] sm:$0xf]
      %v1658 = vld [vmem:[%s3 + $0x24] sm:$0xf]
      %v1659 = vld [vmem:[%s3 + $0x28] sm:$0xf]
      %v1660 = vld [vmem:[%s3 + $0x2c] sm:$0xf]
      %v1661 = vld [vmem:[%s3 + $0x30] sm:$0xf]
      %v1662 = vld [vmem:[%s3 + $0x34] sm:$0xf]
      %v1663 = vld [vmem:[%s3 + $0x38] sm:$0xf]
      %v1664 = vld [vmem:[%s3 + $0x3c] sm:$0xf]
      %v1665 = vld [vmem:[%s3 + $0x40] sm:$0xf]
      %v1666 = vld [vmem:[%s3 + $0x44] sm:$0xf]
      %v1667 = vld [vmem:[%s3 + $0x48] sm:$0xf]
      %v1668 = vld [vmem:[%s3 + $0x4c] sm:$0xf]
      %v1669 = vld [vmem:[%s3 + $0x50] sm:$0xf]
      %v1670 = vld [vmem:[%s3 + $0x54] sm:$0xf]
      %v1671 = vld [vmem:[%s3 + $0x58] sm:$0xf]
      %v1672 = vld [vmem:[%s3 + $0x5c] sm:$0xf]
      %v1673 = vld [vmem:[%s3 + $0x60] sm:$0xf]
      %v1674 = vld [vmem:[%s3 + $0x64] sm:$0xf]
      %v1675 = vld [vmem:[%s3 + $0x68] sm:$0xf]
      %v1676 = vld [vmem:[%s3 + $0x6c] sm:$0xf]
      %v1677 = vld [vmem:[%s3 + $0x70] sm:$0xf]
      %v1678 = vld [vmem:[%s3 + $0x74] sm:$0xf]
      %v1679 = vld [vmem:[%s3 + $0x78] sm:$0xf]
      %v1680 = vld [vmem:[%s3 + $0x7c] sm:$0xf]
      %v1681 = vld [vmem:[%s3 + $0x80] sm:$0xf]
      %v1682 = vld [vmem:[%s3 + $0x84] sm:$0xf]
      %v1683 = vld [vmem:[%s3 + $0x88] sm:$0xf]
      %v1684 = vld [vmem:[%s3 + $0x8c] sm:$0xf]
      %v1685 = vld [vmem:[%s3 + $0x90] sm:$0xf]
      %v1686 = vld [vmem:[%s3 + $0x94] sm:$0xf]
      %v1687 = vld [vmem:[%s3 + $0x98] sm:$0xf]
      %v1688 = vld [vmem:[%s3 + $0x9c] sm:$0xf]
      %v1689 = vld [vmem:[%s3 + $0xa0] sm:$0xf]
      %v1690 = vld [vmem:[%s3 + $0xa4] sm:$0xf]
      %v1691 = vld [vmem:[%s3 + $0xa8] sm:$0xf]
      %v1692 = vld [vmem:[%s3 + $0xac] sm:$0xf]
      %v1693 = vld [vmem:[%s3 + $0xb0] sm:$0xf]
      %v1694 = vld [vmem:[%s3 + $0xb4] sm:$0xf]
      %v1695 = vld [vmem:[%s3 + $0xb8] sm:$0xf]
      %v1696 = vld [vmem:[%s3 + $0xbc] sm:$0xf]
      %s1697 = sadd.s32 %s1179, 1
      %s1698 = smul.u32 %s1697, 3
      %s1699 = smul.addr %s1698, 4
      %s1700 = scalar_lea.vmem [#allocation3], %s1699
      %v1701 = vld [vmem:[%s1700] sm:$0xf]
      %v1702 = vld [vmem:[%s1700 + $0x4] sm:$0xf]
      %v1703 = vld [vmem:[%s1700 + $0x8] sm:$0x1]
      %v1704 = vld [vmem:[%s1700 + $0xc] sm:$0xf]
      %v1705 = vld [vmem:[%s1700 + $0x10] sm:$0xf]
      %v1706 = vld [vmem:[%s1700 + $0x14] sm:$0x1]
      %v1707 = vld [vmem:[%s1700 + $0x18] sm:$0xf]
      %v1708 = vld [vmem:[%s1700 + $0x1c] sm:$0xf]
      %v1709 = vld [vmem:[%s1700 + $0x20] sm:$0x1]
      %v1710 = vld [vmem:[%s1700 + $0x24] sm:$0xf]
      %v1711 = vld [vmem:[%s1700 + $0x28] sm:$0xf]
      %v1712 = vld [vmem:[%s1700 + $0x2c] sm:$0x1]
      %v1713 = vld [vmem:[%s1700 + $0x30] sm:$0xf]
      %v1714 = vld [vmem:[%s1700 + $0x34] sm:$0xf]
      %v1715 = vld [vmem:[%s1700 + $0x38] sm:$0x1]
      %v1716 = vld [vmem:[%s1700 + $0x3c] sm:$0xf]
      %v1717 = vld [vmem:[%s1700 + $0x40] sm:$0xf]
      %v1718 = vld [vmem:[%s1700 + $0x44] sm:$0x1]
      %v1719 = vld [vmem:[%s1700 + $0x48] sm:$0xf]
      %v1720 = vld [vmem:[%s1700 + $0x4c] sm:$0xf]
      %v1721 = vld [vmem:[%s1700 + $0x50] sm:$0x1]
      %v1722 = vld [vmem:[%s1700 + $0x54] sm:$0xf]
      %v1723 = vld [vmem:[%s1700 + $0x58] sm:$0xf]
      %v1724 = vld [vmem:[%s1700 + $0x5c] sm:$0x1]
      %v1725 = vld [vmem:[%s1700 + $0x60] sm:$0xf]
      %v1726 = vld [vmem:[%s1700 + $0x64] sm:$0xf]
      %v1727 = vld [vmem:[%s1700 + $0x68] sm:$0x1]
      %v1728 = vld [vmem:[%s1700 + $0x6c] sm:$0xf]
      %v1729 = vld [vmem:[%s1700 + $0x70] sm:$0xf]
      %v1730 = vld [vmem:[%s1700 + $0x74] sm:$0x1]
      %v1731 = vld [vmem:[%s1700 + $0x78] sm:$0xf]
      %v1732 = vld [vmem:[%s1700 + $0x7c] sm:$0xf]
      %v1733 = vld [vmem:[%s1700 + $0x80] sm:$0x1]
      %v1734 = vld [vmem:[%s1700 + $0x84] sm:$0xf]
      %v1735 = vld [vmem:[%s1700 + $0x88] sm:$0xf]
      %v1736 = vld [vmem:[%s1700 + $0x8c] sm:$0x1]
      %v1737 = vld [vmem:[%s1700 + $0x90] sm:$0xf]
      %v1738 = vld [vmem:[%s1700 + $0x94] sm:$0xf]
      %v1739 = vld [vmem:[%s1700 + $0x98] sm:$0x1]
      %v1740 = vld [vmem:[%s1700 + $0x9c] sm:$0xf]
      %v1741 = vld [vmem:[%s1700 + $0xa0] sm:$0xf]
      %v1742 = vld [vmem:[%s1700 + $0xa4] sm:$0x1]
      %v1743 = vld [vmem:[%s1700 + $0xa8] sm:$0xf]
      %v1744 = vld [vmem:[%s1700 + $0xac] sm:$0xf]
      %v1745 = vld [vmem:[%s1700 + $0xb0] sm:$0x1]
      %v1746 = vld [vmem:[%s1700 + $0xb4] sm:$0xf]
      %v1747 = vld [vmem:[%s1700 + $0xb8] sm:$0xf]
      %v1748 = vld [vmem:[%s1700 + $0xbc] sm:$0x1]
      %v1781 = vunpack.c.l.b16 %v1701
      %v1782 = vunpack.c.l.b16 %v1702
      %v1783 = vunpack.c.l.b16 %v1704
      %v1784 = vunpack.c.l.b16 %v1705
      %v1785 = vunpack.c.l.b16 %v1707
      %v1786 = vunpack.c.l.b16 %v1708
      %v1787 = vunpack.c.l.b16 %v1710
      %v1788 = vunpack.c.l.b16 %v1711
      %v1789 = vunpack.c.l.b16 %v1713
      %v1790 = vunpack.c.l.b16 %v1714
      %v1791 = vunpack.c.l.b16 %v1716
      %v1792 = vunpack.c.l.b16 %v1717
      %v1793 = vunpack.c.l.b16 %v1719
      %v1794 = vunpack.c.l.b16 %v1720
      %v1795 = vunpack.c.l.b16 %v1722
      %v1796 = vunpack.c.l.b16 %v1723
      %v1797 = vunpack.c.l.b16 %v1725
      %v1798 = vunpack.c.l.b16 %v1726
      %v1799 = vunpack.c.l.b16 %v1728
      %v1800 = vunpack.c.l.b16 %v1729
      %v1801 = vunpack.c.l.b16 %v1731
      %v1802 = vunpack.c.l.b16 %v1732
      %v1803 = vunpack.c.l.b16 %v1734
      %v1804 = vunpack.c.l.b16 %v1735
      %v1805 = vunpack.c.l.b16 %v1737
      %v1806 = vunpack.c.l.b16 %v1738
      %v1807 = vunpack.c.l.b16 %v1740
      %v1808 = vunpack.c.l.b16 %v1741
      %v1809 = vunpack.c.l.b16 %v1743
      %v1810 = vunpack.c.l.b16 %v1744
      %v1811 = vunpack.c.l.b16 %v1746
      %v1812 = vunpack.c.l.b16 %v1747
      %v1813 = vpack.c.b16 %v1782, %v1781
      %v1814 = vpack.c.b16 %v1784, %v1783
      %v1815 = vpack.c.b16 %v1786, %v1785
      %v1816 = vpack.c.b16 %v1788, %v1787
      %v1817 = vpack.c.b16 %v1790, %v1789
      %v1818 = vpack.c.b16 %v1792, %v1791
      %v1819 = vpack.c.b16 %v1794, %v1793
      %v1820 = vpack.c.b16 %v1796, %v1795
      %v1821 = vpack.c.b16 %v1798, %v1797
      %v1822 = vpack.c.b16 %v1800, %v1799
      %v1823 = vpack.c.b16 %v1802, %v1801
      %v1824 = vpack.c.b16 %v1804, %v1803
      %v1825 = vpack.c.b16 %v1806, %v1805
      %v1826 = vpack.c.b16 %v1808, %v1807
      %v1827 = vpack.c.b16 %v1810, %v1809
      %v1828 = vpack.c.b16 %v1812, %v1811
      %v1861 = vunpack.c.l.b16 %v1703
      %v1862 = vunpack.c.l.b16 %v1706
      %v1863 = vunpack.c.l.b16 %v1709
      %v1864 = vunpack.c.l.b16 %v1712
      %v1865 = vunpack.c.l.b16 %v1715
      %v1866 = vunpack.c.l.b16 %v1718
      %v1867 = vunpack.c.l.b16 %v1721
      %v1868 = vunpack.c.l.b16 %v1724
      %v1869 = vunpack.c.l.b16 %v1727
      %v1870 = vunpack.c.l.b16 %v1730
      %v1871 = vunpack.c.l.b16 %v1733
      %v1872 = vunpack.c.l.b16 %v1736
      %v1873 = vunpack.c.l.b16 %v1739
      %v1874 = vunpack.c.l.b16 %v1742
      %v1875 = vunpack.c.l.b16 %v1745
      %v1876 = vunpack.c.l.b16 %v1748
      %v1877 = vpack.c.b16 %v1861, %v1861
      %v1878 = vpack.c.b16 %v1862, %v1862
      %v1879 = vpack.c.b16 %v1863, %v1863
      %v1880 = vpack.c.b16 %v1864, %v1864
      %v1881 = vpack.c.b16 %v1865, %v1865
      %v1882 = vpack.c.b16 %v1866, %v1866
      %v1883 = vpack.c.b16 %v1867, %v1867
      %v1884 = vpack.c.b16 %v1868, %v1868
      %v1885 = vpack.c.b16 %v1869, %v1869
      %v1886 = vpack.c.b16 %v1870, %v1870
      %v1887 = vpack.c.b16 %v1871, %v1871
      %v1888 = vpack.c.b16 %v1872, %v1872
      %v1889 = vpack.c.b16 %v1873, %v1873
      %v1890 = vpack.c.b16 %v1874, %v1874
      %v1891 = vpack.c.b16 %v1875, %v1875
      %v1892 = vpack.c.b16 %v1876, %v1876
      %v1894 = vshrl.u32 %v1813, 16
      %v1896 = vshll.u32 %v1813, 16
      %v1898 = vrot.slane %v1896, 1
      %v1899 = vor.u32 %v1894, %v1898
      %v1901 = vshll.u32 %v1877, 16
      %v1903 = vrot.slane %v1901, 1
      %v1904 = vsel %vm1375, %v1899, %v1903
      %v1906 = vshrl.u32 %v1814, 16
      %v1908 = vshll.u32 %v1814, 16
      %v1910 = vrot.slane %v1908, 1
      %v1911 = vor.u32 %v1906, %v1910
      %v1913 = vshll.u32 %v1878, 16
      %v1915 = vrot.slane %v1913, 1
      %v1916 = vsel %vm1375, %v1911, %v1915
      %v1918 = vshrl.u32 %v1815, 16
      %v1920 = vshll.u32 %v1815, 16
      %v1922 = vrot.slane %v1920, 1
      %v1923 = vor.u32 %v1918, %v1922
      %v1925 = vshll.u32 %v1879, 16
      %v1927 = vrot.slane %v1925, 1
      %v1928 = vsel %vm1375, %v1923, %v1927
      %v1930 = vshrl.u32 %v1816, 16
      %v1932 = vshll.u32 %v1816, 16
      %v1934 = vrot.slane %v1932, 1
      %v1935 = vor.u32 %v1930, %v1934
      %v1937 = vshll.u32 %v1880, 16
      %v1939 = vrot.slane %v1937, 1
      %v1940 = vsel %vm1375, %v1935, %v1939
      %v1942 = vshrl.u32 %v1817, 16
      %v1944 = vshll.u32 %v1817, 16
      %v1946 = vrot.slane %v1944, 1
      %v1947 = vor.u32 %v1942, %v1946
      %v1949 = vshll.u32 %v1881, 16
      %v1951 = vrot.slane %v1949, 1
      %v1952 = vsel %vm1375, %v1947, %v1951
      %v1954 = vshrl.u32 %v1818, 16
      %v1956 = vshll.u32 %v1818, 16
      %v1958 = vrot.slane %v1956, 1
      %v1959 = vor.u32 %v1954, %v1958
      %v1961 = vshll.u32 %v1882, 16
      %v1963 = vrot.slane %v1961, 1
      %v1964 = vsel %vm1375, %v1959, %v1963
      %v1966 = vshrl.u32 %v1819, 16
      %v1968 = vshll.u32 %v1819, 16
      %v1970 = vrot.slane %v1968, 1
      %v1971 = vor.u32 %v1966, %v1970
      %v1973 = vshll.u32 %v1883, 16
      %v1975 = vrot.slane %v1973, 1
      %v1976 = vsel %vm1375, %v1971, %v1975
      %v1978 = vshrl.u32 %v1820, 16
      %v1980 = vshll.u32 %v1820, 16
      %v1982 = vrot.slane %v1980, 1
      %v1983 = vor.u32 %v1978, %v1982
      %v1985 = vshll.u32 %v1884, 16
      %v1987 = vrot.slane %v1985, 1
      %v1988 = vsel %vm1375, %v1983, %v1987
      %v1990 = vshrl.u32 %v1821, 16
      %v1992 = vshll.u32 %v1821, 16
      %v1994 = vrot.slane %v1992, 1
      %v1995 = vor.u32 %v1990, %v1994
      %v1997 = vshll.u32 %v1885, 16
      %v1999 = vrot.slane %v1997, 1
      %v2000 = vsel %vm1375, %v1995, %v1999
      %v2002 = vshrl.u32 %v1822, 16
      %v2004 = vshll.u32 %v1822, 16
      %v2006 = vrot.slane %v2004, 1
      %v2007 = vor.u32 %v2002, %v2006
      %v2009 = vshll.u32 %v1886, 16
      %v2011 = vrot.slane %v2009, 1
      %v2012 = vsel %vm1375, %v2007, %v2011
      %v2014 = vshrl.u32 %v1823, 16
      %v2016 = vshll.u32 %v1823, 16
      %v2018 = vrot.slane %v2016, 1
      %v2019 = vor.u32 %v2014, %v2018
      %v2021 = vshll.u32 %v1887, 16
      %v2023 = vrot.slane %v2021, 1
      %v2024 = vsel %vm1375, %v2019, %v2023
      %v2026 = vshrl.u32 %v1824, 16
      %v2028 = vshll.u32 %v1824, 16
      %v2030 = vrot.slane %v2028, 1
      %v2031 = vor.u32 %v2026, %v2030
      %v2033 = vshll.u32 %v1888, 16
      %v2035 = vrot.slane %v2033, 1
      %v2036 = vsel %vm1375, %v2031, %v2035
      %v2038 = vshrl.u32 %v1825, 16
      %v2040 = vshll.u32 %v1825, 16
      %v2042 = vrot.slane %v2040, 1
      %v2043 = vor.u32 %v2038, %v2042
      %v2045 = vshll.u32 %v1889, 16
      %v2047 = vrot.slane %v2045, 1
      %v2048 = vsel %vm1375, %v2043, %v2047
      %v2050 = vshrl.u32 %v1826, 16
      %v2052 = vshll.u32 %v1826, 16
      %v2054 = vrot.slane %v2052, 1
      %v2055 = vor.u32 %v2050, %v2054
      %v2057 = vshll.u32 %v1890, 16
      %v2059 = vrot.slane %v2057, 1
      %v2060 = vsel %vm1375, %v2055, %v2059
      %v2062 = vshrl.u32 %v1827, 16
      %v2064 = vshll.u32 %v1827, 16
      %v2066 = vrot.slane %v2064, 1
      %v2067 = vor.u32 %v2062, %v2066
      %v2069 = vshll.u32 %v1891, 16
      %v2071 = vrot.slane %v2069, 1
      %v2072 = vsel %vm1375, %v2067, %v2071
      %v2074 = vshrl.u32 %v1828, 16
      %v2076 = vshll.u32 %v1828, 16
      %v2078 = vrot.slane %v2076, 1
      %v2079 = vor.u32 %v2074, %v2078
      %v2081 = vshll.u32 %v1892, 16
      %v2083 = vrot.slane %v2081, 1
      %v2084 = vsel %vm1375, %v2079, %v2083
      %v2101 = vrot.slane %v1813, 1
      %v2102 = vrot.slane %v1877, 1
      %v2103 = vsel %vm1584, %v2101, %v2102
      %v2104 = vrot.slane %v1814, 1
      %v2105 = vrot.slane %v1878, 1
      %v2106 = vsel %vm1584, %v2104, %v2105
      %v2107 = vrot.slane %v1815, 1
      %v2108 = vrot.slane %v1879, 1
      %v2109 = vsel %vm1584, %v2107, %v2108
      %v2110 = vrot.slane %v1816, 1
      %v2111 = vrot.slane %v1880, 1
      %v2112 = vsel %vm1584, %v2110, %v2111
      %v2113 = vrot.slane %v1817, 1
      %v2114 = vrot.slane %v1881, 1
      %v2115 = vsel %vm1584, %v2113, %v2114
      %v2116 = vrot.slane %v1818, 1
      %v2117 = vrot.slane %v1882, 1
      %v2118 = vsel %vm1584, %v2116, %v2117
      %v2119 = vrot.slane %v1819, 1
      %v2120 = vrot.slane %v1883, 1
      %v2121 = vsel %vm1584, %v2119, %v2120
      %v2122 = vrot.slane %v1820, 1
      %v2123 = vrot.slane %v1884, 1
      %v2124 = vsel %vm1584, %v2122, %v2123
      %v2125 = vrot.slane %v1821, 1
      %v2126 = vrot.slane %v1885, 1
      %v2127 = vsel %vm1584, %v2125, %v2126
      %v2128 = vrot.slane %v1822, 1
      %v2129 = vrot.slane %v1886, 1
      %v2130 = vsel %vm1584, %v2128, %v2129
      %v2131 = vrot.slane %v1823, 1
      %v2132 = vrot.slane %v1887, 1
      %v2133 = vsel %vm1584, %v2131, %v2132
      %v2134 = vrot.slane %v1824, 1
      %v2135 = vrot.slane %v1888, 1
      %v2136 = vsel %vm1584, %v2134, %v2135
      %v2137 = vrot.slane %v1825, 1
      %v2138 = vrot.slane %v1889, 1
      %v2139 = vsel %vm1584, %v2137, %v2138
      %v2140 = vrot.slane %v1826, 1
      %v2141 = vrot.slane %v1890, 1
      %v2142 = vsel %vm1584, %v2140, %v2141
      %v2143 = vrot.slane %v1827, 1
      %v2144 = vrot.slane %v1891, 1
      %v2145 = vsel %vm1584, %v2143, %v2144
      %v2146 = vrot.slane %v1828, 1
      %v2147 = vrot.slane %v1892, 1
      %v2148 = vsel %vm1584, %v2146, %v2147
      %s2165 = scalar_lea.vmem %s3, 192
      %v2166 = vld [vmem:[%s2165] sm:$0xf]
      %v2167 = vld [vmem:[%s2165 + $0x4] sm:$0xf]
      %v2168 = vld [vmem:[%s2165 + $0x8] sm:$0xf]
      %v2169 = vld [vmem:[%s2165 + $0xc] sm:$0xf]
      %v2170 = vld [vmem:[%s2165 + $0x10] sm:$0xf]
      %v2171 = vld [vmem:[%s2165 + $0x14] sm:$0xf]
      %v2172 = vld [vmem:[%s2165 + $0x18] sm:$0xf]
      %v2173 = vld [vmem:[%s2165 + $0x1c] sm:$0xf]
      %v2174 = vld [vmem:[%s2165 + $0x20] sm:$0xf]
      %v2175 = vld [vmem:[%s2165 + $0x24] sm:$0xf]
      %v2176 = vld [vmem:[%s2165 + $0x28] sm:$0xf]
      %v2177 = vld [vmem:[%s2165 + $0x2c] sm:$0xf]
      %v2178 = vld [vmem:[%s2165 + $0x30] sm:$0xf]
      %v2179 = vld [vmem:[%s2165 + $0x34] sm:$0xf]
      %v2180 = vld [vmem:[%s2165 + $0x38] sm:$0xf]
      %v2181 = vld [vmem:[%s2165 + $0x3c] sm:$0xf]
      %v2182 = vld [vmem:[%s2165 + $0x40] sm:$0xf]
      %v2183 = vld [vmem:[%s2165 + $0x44] sm:$0xf]
      %v2184 = vld [vmem:[%s2165 + $0x48] sm:$0xf]
      %v2185 = vld [vmem:[%s2165 + $0x4c] sm:$0xf]
      %v2186 = vld [vmem:[%s2165 + $0x50] sm:$0xf]
      %v2187 = vld [vmem:[%s2165 + $0x54] sm:$0xf]
      %v2188 = vld [vmem:[%s2165 + $0x58] sm:$0xf]
      %v2189 = vld [vmem:[%s2165 + $0x5c] sm:$0xf]
      %v2190 = vld [vmem:[%s2165 + $0x60] sm:$0xf]
      %v2191 = vld [vmem:[%s2165 + $0x64] sm:$0xf]
      %v2192 = vld [vmem:[%s2165 + $0x68] sm:$0xf]
      %v2193 = vld [vmem:[%s2165 + $0x6c] sm:$0xf]
      %v2194 = vld [vmem:[%s2165 + $0x70] sm:$0xf]
      %v2195 = vld [vmem:[%s2165 + $0x74] sm:$0xf]
      %v2196 = vld [vmem:[%s2165 + $0x78] sm:$0xf]
      %v2197 = vld [vmem:[%s2165 + $0x7c] sm:$0xf]
      %v2198 = vld [vmem:[%s2165 + $0x80] sm:$0xf]
      %v2199 = vld [vmem:[%s2165 + $0x84] sm:$0xf]
      %v2200 = vld [vmem:[%s2165 + $0x88] sm:$0xf]
      %v2201 = vld [vmem:[%s2165 + $0x8c] sm:$0xf]
      %v2202 = vld [vmem:[%s2165 + $0x90] sm:$0xf]
      %v2203 = vld [vmem:[%s2165 + $0x94] sm:$0xf]
      %v2204 = vld [vmem:[%s2165 + $0x98] sm:$0xf]
      %v2205 = vld [vmem:[%s2165 + $0x9c] sm:$0xf]
      %v2206 = vld [vmem:[%s2165 + $0xa0] sm:$0xf]
      %v2207 = vld [vmem:[%s2165 + $0xa4] sm:$0xf]
      %v2208 = vld [vmem:[%s2165 + $0xa8] sm:$0xf]
      %v2209 = vld [vmem:[%s2165 + $0xac] sm:$0xf]
      %v2210 = vld [vmem:[%s2165 + $0xb0] sm:$0xf]
      %v2211 = vld [vmem:[%s2165 + $0xb4] sm:$0xf]
      %v2212 = vld [vmem:[%s2165 + $0xb8] sm:$0xf]
      %v2213 = vld [vmem:[%s2165 + $0xbc] sm:$0xf]
      %v2262 = vunpack.c.l.b16 %v2166
      %v2263 = vunpack.c.l.b16 %v2167
      %v2264 = vunpack.c.l.b16 %v2168
      %v2265 = vunpack.c.l.b16 %v2169
      %v2266 = vunpack.c.l.b16 %v2170
      %v2267 = vunpack.c.l.b16 %v2171
      %v2268 = vunpack.c.l.b16 %v2172
      %v2269 = vunpack.c.l.b16 %v2173
      %v2270 = vunpack.c.l.b16 %v2174
      %v2271 = vunpack.c.l.b16 %v2175
      %v2272 = vunpack.c.l.b16 %v2176
      %v2273 = vunpack.c.l.b16 %v2177
      %v2274 = vunpack.c.l.b16 %v2178
      %v2275 = vunpack.c.l.b16 %v2179
      %v2276 = vunpack.c.l.b16 %v2180
      %v2277 = vunpack.c.l.b16 %v2181
      %v2278 = vunpack.c.l.b16 %v2182
      %v2279 = vunpack.c.l.b16 %v2183
      %v2280 = vunpack.c.l.b16 %v2184
      %v2281 = vunpack.c.l.b16 %v2185
      %v2282 = vunpack.c.l.b16 %v2186
      %v2283 = vunpack.c.l.b16 %v2187
      %v2284 = vunpack.c.l.b16 %v2188
      %v2285 = vunpack.c.l.b16 %v2189
      %v2286 = vunpack.c.l.b16 %v2190
      %v2287 = vunpack.c.l.b16 %v2191
      %v2288 = vunpack.c.l.b16 %v2192
      %v2289 = vunpack.c.l.b16 %v2193
      %v2290 = vunpack.c.l.b16 %v2194
      %v2291 = vunpack.c.l.b16 %v2195
      %v2292 = vunpack.c.l.b16 %v2196
      %v2293 = vunpack.c.l.b16 %v2197
      %v2294 = vunpack.c.l.b16 %v2198
      %v2295 = vunpack.c.l.b16 %v2199
      %v2296 = vunpack.c.l.b16 %v2200
      %v2297 = vunpack.c.l.b16 %v2201
      %v2298 = vunpack.c.l.b16 %v2202
      %v2299 = vunpack.c.l.b16 %v2203
      %v2300 = vunpack.c.l.b16 %v2204
      %v2301 = vunpack.c.l.b16 %v2205
      %v2302 = vunpack.c.l.b16 %v2206
      %v2303 = vunpack.c.l.b16 %v2207
      %v2304 = vunpack.c.l.b16 %v2208
      %v2305 = vunpack.c.l.b16 %v2209
      %v2306 = vunpack.c.l.b16 %v2210
      %v2307 = vunpack.c.l.b16 %v2211
      %v2308 = vunpack.c.l.b16 %v2212
      %v2309 = vunpack.c.l.b16 %v2213
      %v2310 = vpack.c.b16 %v2263, %v2262
      %v2311 = vpack.c.b16 %v2265, %v2264
      %v2312 = vpack.c.b16 %v2267, %v2266
      %v2313 = vpack.c.b16 %v2269, %v2268
      %v2314 = vpack.c.b16 %v2271, %v2270
      %v2315 = vpack.c.b16 %v2273, %v2272
      %v2316 = vpack.c.b16 %v2275, %v2274
      %v2317 = vpack.c.b16 %v2277, %v2276
      %v2318 = vpack.c.b16 %v2279, %v2278
      %v2319 = vpack.c.b16 %v2281, %v2280
      %v2320 = vpack.c.b16 %v2283, %v2282
      %v2321 = vpack.c.b16 %v2285, %v2284
      %v2322 = vpack.c.b16 %v2287, %v2286
      %v2323 = vpack.c.b16 %v2289, %v2288
      %v2324 = vpack.c.b16 %v2291, %v2290
      %v2325 = vpack.c.b16 %v2293, %v2292
      %v2326 = vpack.c.b16 %v2295, %v2294
      %v2327 = vpack.c.b16 %v2297, %v2296
      %v2328 = vpack.c.b16 %v2299, %v2298
      %v2329 = vpack.c.b16 %v2301, %v2300
      %v2330 = vpack.c.b16 %v2303, %v2302
      %v2331 = vpack.c.b16 %v2305, %v2304
      %v2332 = vpack.c.b16 %v2307, %v2306
      %v2333 = vpack.c.b16 %v2309, %v2308
      %2358 = vmatprep.subr.bf16.mxu0 0
      %2359 = vmatpush1.bf16.msra.mxu0 %v2317
      %2360 = vmatprep.subr.bf16.mxu0 0
      %2361 = vmatpush1.bf16.msra.mxu0 %v2316
      %2362 = vmatprep.subr.bf16.mxu0 0
      %2363 = vmatpush1.bf16.msra.mxu0 %v2315
      %2364 = vmatprep.subr.bf16.mxu0 0
      %2365 = vmatpush1.bf16.msra.mxu0 %v2314
      %2366 = vmatprep.subr.bf16.mxu0 0
      %2367 = vmatpush1.bf16.msra.mxu0 %v2313
      %2368 = vmatprep.subr.bf16.mxu0 0
      %2369 = vmatpush1.bf16.msra.mxu0 %v2312
      %2370 = vmatprep.subr.bf16.mxu0 0
      %2371 = vmatpush1.bf16.msra.mxu0 %v2311
      %2372 = vmatprep.subr.bf16.mxu0 0
      %2373 = vmatpush1.bf16.msra.mxu0 %v2310
      %2374 = vmatprep.subr.bf16.mxu0 0
      %2375 = vmatpush2.bf16.msra.mxu0 %v2325
      %2376 = vmatprep.subr.bf16.mxu0 0
      %2377 = vmatpush2.bf16.msra.mxu0 %v2324
      %2378 = vmatprep.subr.bf16.mxu0 0
      %2379 = vmatpush2.bf16.msra.mxu0 %v2323
      %2380 = vmatprep.subr.bf16.mxu0 0
      %2381 = vmatpush2.bf16.msra.mxu0 %v2322
      %2382 = vmatprep.subr.bf16.mxu0 0
      %2383 = vmatpush2.bf16.msra.mxu0 %v2321
      %2384 = vmatprep.subr.bf16.mxu0 0
      %2385 = vmatpush2.bf16.msra.mxu0 %v2320
      %2386 = vmatprep.subr.bf16.mxu0 0
      %2387 = vmatpush2.bf16.msra.mxu0 %v2319
      %2388 = vmatprep.subr.bf16.mxu0 0
      %2389 = vmatpush2.bf16.msra.mxu0 %v2318
      %2390 = vmatprep.mubr.bf16.mxu0 %v1904
      %2391 = vmatmul.mubr.bf16.gmra.mxu0 %v1813
      %v2392 = vpop.f32.mrf.mxu0
      %v2393 = vadd.f32 0.0, %v2392
      %v2394 = vpop.f32.mrf.mxu0
      %v2395 = vpop.f32.mrf.mxu0
      %v2396 = vadd.f32 0.0, %v2395
      %v2397 = vpop.f32.mrf.mxu0
      %2398 = vmatprep.mubr.bf16.mxu0 %v1916
      %2399 = vmatmul.mubr.bf16.gmra.mxu0 %v1814
      %v2400 = vpop.f32.mrf.mxu0
      %v2401 = vadd.f32 0.0, %v2400
      %v2402 = vpop.f32.mrf.mxu0
      %v2403 = vpop.f32.mrf.mxu0
      %v2404 = vadd.f32 0.0, %v2403
      %v2405 = vpop.f32.mrf.mxu0
      %2406 = vmatprep.mubr.bf16.mxu0 %v1928
      %2407 = vmatmul.mubr.bf16.gmra.mxu0 %v1815
      %v2408 = vpop.f32.mrf.mxu0
      %v2409 = vadd.f32 0.0, %v2408
      %v2410 = vpop.f32.mrf.mxu0
      %v2411 = vpop.f32.mrf.mxu0
      %v2412 = vadd.f32 0.0, %v2411
      %v2413 = vpop.f32.mrf.mxu0
      %2414 = vmatprep.mubr.bf16.mxu0 %v1940
      %2415 = vmatmul.mubr.bf16.gmra.mxu0 %v1816
      %v2416 = vpop.f32.mrf.mxu0
      %v2417 = vadd.f32 0.0, %v2416
      %v2418 = vpop.f32.mrf.mxu0
      %v2419 = vpop.f32.mrf.mxu0
      %v2420 = vadd.f32 0.0, %v2419
      %v2421 = vpop.f32.mrf.mxu0
      %2422 = vmatprep.mubr.bf16.mxu0 %v1952
      %2423 = vmatmul.mubr.bf16.gmra.mxu0 %v1817
      %v2424 = vpop.f32.mrf.mxu0
      %v2425 = vadd.f32 0.0, %v2424
      %v2426 = vpop.f32.mrf.mxu0
      %v2427 = vpop.f32.mrf.mxu0
      %v2428 = vadd.f32 0.0, %v2427
      %v2429 = vpop.f32.mrf.mxu0
      %2430 = vmatprep.mubr.bf16.mxu0 %v1964
      %2431 = vmatmul.mubr.bf16.gmra.mxu0 %v1818
      %v2432 = vpop.f32.mrf.mxu0
      %v2433 = vadd.f32 0.0, %v2432
      %v2434 = vpop.f32.mrf.mxu0
      %v2435 = vpop.f32.mrf.mxu0
      %v2436 = vadd.f32 0.0, %v2435
      %v2437 = vpop.f32.mrf.mxu0
      %2438 = vmatprep.mubr.bf16.mxu0 %v1976
      %2439 = vmatmul.mubr.bf16.gmra.mxu0 %v1819
      %v2440 = vpop.f32.mrf.mxu0
      %v2441 = vadd.f32 0.0, %v2440
      %v2442 = vpop.f32.mrf.mxu0
      %v2443 = vpop.f32.mrf.mxu0
      %v2444 = vadd.f32 0.0, %v2443
      %v2445 = vpop.f32.mrf.mxu0
      %2446 = vmatprep.mubr.bf16.mxu0 %v1988
      %2447 = vmatmul.mubr.bf16.gmra.mxu0 %v1820
      %v2448 = vpop.f32.mrf.mxu0
      %v2449 = vadd.f32 0.0, %v2448
      %v2450 = vpop.f32.mrf.mxu0
      %v2451 = vpop.f32.mrf.mxu0
      %v2452 = vadd.f32 0.0, %v2451
      %v2453 = vpop.f32.mrf.mxu0
      %2454 = vmatprep.mubr.bf16.mxu0 %v2000
      %2455 = vmatmul.mubr.bf16.gmra.mxu0 %v1821
      %v2456 = vpop.f32.mrf.mxu0
      %v2457 = vadd.f32 0.0, %v2456
      %v2458 = vpop.f32.mrf.mxu0
      %v2459 = vpop.f32.mrf.mxu0
      %v2460 = vadd.f32 0.0, %v2459
      %v2461 = vpop.f32.mrf.mxu0
      %2462 = vmatprep.mubr.bf16.mxu0 %v2012
      %2463 = vmatmul.mubr.bf16.gmra.mxu0 %v1822
      %v2464 = vpop.f32.mrf.mxu0
      %v2465 = vadd.f32 0.0, %v2464
      %v2466 = vpop.f32.mrf.mxu0
      %v2467 = vpop.f32.mrf.mxu0
      %v2468 = vadd.f32 0.0, %v2467
      %v2469 = vpop.f32.mrf.mxu0
      %2470 = vmatprep.mubr.bf16.mxu0 %v2024
      %2471 = vmatmul.mubr.bf16.gmra.mxu0 %v1823
      %v2472 = vpop.f32.mrf.mxu0
      %v2473 = vadd.f32 0.0, %v2472
      %v2474 = vpop.f32.mrf.mxu0
      %v2475 = vpop.f32.mrf.mxu0
      %v2476 = vadd.f32 0.0, %v2475
      %v2477 = vpop.f32.mrf.mxu0
      %2478 = vmatprep.mubr.bf16.mxu0 %v2036
      %2479 = vmatmul.mubr.bf16.gmra.mxu0 %v1824
      %v2480 = vpop.f32.mrf.mxu0
      %v2481 = vadd.f32 0.0, %v2480
      %v2482 = vpop.f32.mrf.mxu0
      %v2483 = vpop.f32.mrf.mxu0
      %v2484 = vadd.f32 0.0, %v2483
      %v2485 = vpop.f32.mrf.mxu0
      %2486 = vmatprep.mubr.bf16.mxu0 %v2048
      %2487 = vmatmul.mubr.bf16.gmra.mxu0 %v1825
      %v2488 = vpop.f32.mrf.mxu0
      %v2489 = vadd.f32 0.0, %v2488
      %v2490 = vpop.f32.mrf.mxu0
      %v2491 = vpop.f32.mrf.mxu0
      %v2492 = vadd.f32 0.0, %v2491
      %v2493 = vpop.f32.mrf.mxu0
      %2494 = vmatprep.mubr.bf16.mxu0 %v2060
      %2495 = vmatmul.mubr.bf16.gmra.mxu0 %v1826
      %v2496 = vpop.f32.mrf.mxu0
      %v2497 = vadd.f32 0.0, %v2496
      %v2498 = vpop.f32.mrf.mxu0
      %v2499 = vpop.f32.mrf.mxu0
      %v2500 = vadd.f32 0.0, %v2499
      %v2501 = vpop.f32.mrf.mxu0
      %2502 = vmatprep.mubr.bf16.mxu0 %v2072
      %2503 = vmatmul.mubr.bf16.gmra.mxu0 %v1827
      %v2504 = vpop.f32.mrf.mxu0
      %v2505 = vadd.f32 0.0, %v2504
      %v2506 = vpop.f32.mrf.mxu0
      %v2507 = vpop.f32.mrf.mxu0
      %v2508 = vadd.f32 0.0, %v2507
      %v2509 = vpop.f32.mrf.mxu0
      %2510 = vmatprep.mubr.bf16.mxu0 %v2084
      %2511 = vmatmul.mubr.bf16.gmra.mxu0 %v1828
      %v2512 = vpop.f32.mrf.mxu0
      %v2513 = vadd.f32 0.0, %v2512
      %v2514 = vpop.f32.mrf.mxu0
      %v2515 = vpop.f32.mrf.mxu0
      %v2516 = vadd.f32 0.0, %v2515
      %v2517 = vpop.f32.mrf.mxu0
      %2518 = vdwg.mxu0
      %2519 = vmatprep.subr.bf16.mxu0 0
      %2520 = vmatpush1.bf16.msra.mxu0 %v2333
      %2521 = vmatprep.subr.bf16.mxu0 0
      %2522 = vmatpush1.bf16.msra.mxu0 %v2332
      %2523 = vmatprep.subr.bf16.mxu0 0
      %2524 = vmatpush1.bf16.msra.mxu0 %v2331
      %2525 = vmatprep.subr.bf16.mxu0 0
      %2526 = vmatpush1.bf16.msra.mxu0 %v2330
      %2527 = vmatprep.subr.bf16.mxu0 0
      %2528 = vmatpush1.bf16.msra.mxu0 %v2329
      %2529 = vmatprep.subr.bf16.mxu0 0
      %2530 = vmatpush1.bf16.msra.mxu0 %v2328
      %2531 = vmatprep.subr.bf16.mxu0 0
      %2532 = vmatpush1.bf16.msra.mxu0 %v2327
      %2533 = vmatprep.subr.bf16.mxu0 0
      %2534 = vmatpush1.bf16.msra.mxu0 %v2326
      %2535 = vmatprep.subr.bf16.mxu0 0
      %2536 = vmatpush2.bf16.msra.mxu0 0
      %2537 = vmatprep.subr.bf16.mxu0 0
      %2538 = vmatpush2.bf16.msra.mxu0 0
      %2539 = vmatprep.subr.bf16.mxu0 0
      %2540 = vmatpush2.bf16.msra.mxu0 0
      %2541 = vmatprep.subr.bf16.mxu0 0
      %2542 = vmatpush2.bf16.msra.mxu0 0
      %2543 = vmatprep.subr.bf16.mxu0 0
      %2544 = vmatpush2.bf16.msra.mxu0 0
      %2545 = vmatprep.subr.bf16.mxu0 0
      %2546 = vmatpush2.bf16.msra.mxu0 0
      %2547 = vmatprep.subr.bf16.mxu0 0
      %2548 = vmatpush2.bf16.msra.mxu0 0
      %2549 = vmatprep.subr.bf16.mxu0 0
      %2550 = vmatpush2.bf16.msra.mxu0 0
      %2551 = vmatprep.mubr.bf16.mxu0 0
      %2552 = vmatmul.mubr.bf16.gmra.mxu0 %v2103
      %v2553 = vpop.f32.mrf.mxu0
      %v2554 = vadd.f32 %v2393, %v2553
      %v2555 = vpop.f32.mrf.mxu0
      %v2556 = vpop.f32.mrf.mxu0
      %v2557 = vadd.f32 %v2396, %v2556
      %v2558 = vpop.f32.mrf.mxu0
      %2559 = vmatprep.mubr.bf16.mxu0 0
      %2560 = vmatmul.mubr.bf16.gmra.mxu0 %v2106
      %v2561 = vpop.f32.mrf.mxu0
      %v2562 = vadd.f32 %v2401, %v2561
      %v2563 = vpop.f32.mrf.mxu0
      %v2564 = vpop.f32.mrf.mxu0
      %v2565 = vadd.f32 %v2404, %v2564
      %v2566 = vpop.f32.mrf.mxu0
      %2567 = vmatprep.mubr.bf16.mxu0 0
      %2568 = vmatmul.mubr.bf16.gmra.mxu0 %v2109
      %v2569 = vpop.f32.mrf.mxu0
      %v2570 = vadd.f32 %v2409, %v2569
      %v2571 = vpop.f32.mrf.mxu0
      %v2572 = vpop.f32.mrf.mxu0
      %v2573 = vadd.f32 %v2412, %v2572
      %v2574 = vpop.f32.mrf.mxu0
      %2575 = vmatprep.mubr.bf16.mxu0 0
      %2576 = vmatmul.mubr.bf16.gmra.mxu0 %v2112
      %v2577 = vpop.f32.mrf.mxu0
      %v2578 = vadd.f32 %v2417, %v2577
      %v2579 = vpop.f32.mrf.mxu0
      %v2580 = vpop.f32.mrf.mxu0
      %v2581 = vadd.f32 %v2420, %v2580
      %v2582 = vpop.f32.mrf.mxu0
      %2583 = vmatprep.mubr.bf16.mxu0 0
      %2584 = vmatmul.mubr.bf16.gmra.mxu0 %v2115
      %v2585 = vpop.f32.mrf.mxu0
      %v2586 = vadd.f32 %v2425, %v2585
      %v2587 = vpop.f32.mrf.mxu0
      %v2588 = vpop.f32.mrf.mxu0
      %v2589 = vadd.f32 %v2428, %v2588
      %v2590 = vpop.f32.mrf.mxu0
      %2591 = vmatprep.mubr.bf16.mxu0 0
      %2592 = vmatmul.mubr.bf16.gmra.mxu0 %v2118
      %v2593 = vpop.f32.mrf.mxu0
      %v2594 = vadd.f32 %v2433, %v2593
      %v2595 = vpop.f32.mrf.mxu0
      %v2596 = vpop.f32.mrf.mxu0
      %v2597 = vadd.f32 %v2436, %v2596
      %v2598 = vpop.f32.mrf.mxu0
      %2599 = vmatprep.mubr.bf16.mxu0 0
      %2600 = vmatmul.mubr.bf16.gmra.mxu0 %v2121
      %v2601 = vpop.f32.mrf.mxu0
      %v2602 = vadd.f32 %v2441, %v2601
      %v2603 = vpop.f32.mrf.mxu0
      %v2604 = vpop.f32.mrf.mxu0
      %v2605 = vadd.f32 %v2444, %v2604
      %v2606 = vpop.f32.mrf.mxu0
      %2607 = vmatprep.mubr.bf16.mxu0 0
      %2608 = vmatmul.mubr.bf16.gmra.mxu0 %v2124
      %v2609 = vpop.f32.mrf.mxu0
      %v2610 = vadd.f32 %v2449, %v2609
      %v2611 = vpop.f32.mrf.mxu0
      %v2612 = vpop.f32.mrf.mxu0
      %v2613 = vadd.f32 %v2452, %v2612
      %v2614 = vpop.f32.mrf.mxu0
      %2615 = vmatprep.mubr.bf16.mxu0 0
      %2616 = vmatmul.mubr.bf16.gmra.mxu0 %v2127
      %v2617 = vpop.f32.mrf.mxu0
      %v2618 = vadd.f32 %v2457, %v2617
      %v2619 = vpop.f32.mrf.mxu0
      %v2620 = vpop.f32.mrf.mxu0
      %v2621 = vadd.f32 %v2460, %v2620
      %v2622 = vpop.f32.mrf.mxu0
      %2623 = vmatprep.mubr.bf16.mxu0 0
      %2624 = vmatmul.mubr.bf16.gmra.mxu0 %v2130
      %v2625 = vpop.f32.mrf.mxu0
      %v2626 = vadd.f32 %v2465, %v2625
      %v2627 = vpop.f32.mrf.mxu0
      %v2628 = vpop.f32.mrf.mxu0
      %v2629 = vadd.f32 %v2468, %v2628
      %v2630 = vpop.f32.mrf.mxu0
      %2631 = vmatprep.mubr.bf16.mxu0 0
      %2632 = vmatmul.mubr.bf16.gmra.mxu0 %v2133
      %v2633 = vpop.f32.mrf.mxu0
      %v2634 = vadd.f32 %v2473, %v2633
      %v2635 = vpop.f32.mrf.mxu0
      %v2636 = vpop.f32.mrf.mxu0
      %v2637 = vadd.f32 %v2476, %v2636
      %v2638 = vpop.f32.mrf.mxu0
      %2639 = vmatprep.mubr.bf16.mxu0 0
      %2640 = vmatmul.mubr.bf16.gmra.mxu0 %v2136
      %v2641 = vpop.f32.mrf.mxu0
      %v2642 = vadd.f32 %v2481, %v2641
      %v2643 = vpop.f32.mrf.mxu0
      %v2644 = vpop.f32.mrf.mxu0
      %v2645 = vadd.f32 %v2484, %v2644
      %v2646 = vpop.f32.mrf.mxu0
      %2647 = vmatprep.mubr.bf16.mxu0 0
      %2648 = vmatmul.mubr.bf16.gmra.mxu0 %v2139
      %v2649 = vpop.f32.mrf.mxu0
      %v2650 = vadd.f32 %v2489, %v2649
      %v2651 = vpop.f32.mrf.mxu0
      %v2652 = vpop.f32.mrf.mxu0
      %v2653 = vadd.f32 %v2492, %v2652
      %v2654 = vpop.f32.mrf.mxu0
      %2655 = vmatprep.mubr.bf16.mxu0 0
      %2656 = vmatmul.mubr.bf16.gmra.mxu0 %v2142
      %v2657 = vpop.f32.mrf.mxu0
      %v2658 = vadd.f32 %v2497, %v2657
      %v2659 = vpop.f32.mrf.mxu0
      %v2660 = vpop.f32.mrf.mxu0
      %v2661 = vadd.f32 %v2500, %v2660
      %v2662 = vpop.f32.mrf.mxu0
      %2663 = vmatprep.mubr.bf16.mxu0 0
      %2664 = vmatmul.mubr.bf16.gmra.mxu0 %v2145
      %v2665 = vpop.f32.mrf.mxu0
      %v2666 = vadd.f32 %v2505, %v2665
      %v2667 = vpop.f32.mrf.mxu0
      %v2668 = vpop.f32.mrf.mxu0
      %v2669 = vadd.f32 %v2508, %v2668
      %v2670 = vpop.f32.mrf.mxu0
      %2671 = vmatprep.mubr.bf16.mxu0 0
      %2672 = vmatmul.mubr.bf16.gmra.mxu0 %v2148
      %v2673 = vpop.f32.mrf.mxu0
      %v2674 = vadd.f32 %v2513, %v2673
      %v2675 = vpop.f32.mrf.mxu0
      %v2676 = vpop.f32.mrf.mxu0
      %v2677 = vadd.f32 %v2516, %v2676
      %v2678 = vpop.f32.mrf.mxu0
      %2679 = vdwg.mxu0
      %v2728 = vunpack.c.l.b16 %v1649
      %v2729 = vunpack.c.l.b16 %v1650
      %v2730 = vunpack.c.l.b16 %v1651
      %v2731 = vunpack.c.l.b16 %v1652
      %v2732 = vunpack.c.l.b16 %v1653
      %v2733 = vunpack.c.l.b16 %v1654
      %v2734 = vunpack.c.l.b16 %v1655
      %v2735 = vunpack.c.l.b16 %v1656
      %v2736 = vunpack.c.l.b16 %v1657
      %v2737 = vunpack.c.l.b16 %v1658
      %v2738 = vunpack.c.l.b16 %v1659
      %v2739 = vunpack.c.l.b16 %v1660
      %v2740 = vunpack.c.l.b16 %v1661
      %v2741 = vunpack.c.l.b16 %v1662
      %v2742 = vunpack.c.l.b16 %v1663
      %v2743 = vunpack.c.l.b16 %v1664
      %v2744 = vunpack.c.l.b16 %v1665
      %v2745 = vunpack.c.l.b16 %v1666
      %v2746 = vunpack.c.l.b16 %v1667
      %v2747 = vunpack.c.l.b16 %v1668
      %v2748 = vunpack.c.l.b16 %v1669
      %v2749 = vunpack.c.l.b16 %v1670
      %v2750 = vunpack.c.l.b16 %v1671
      %v2751 = vunpack.c.l.b16 %v1672
      %v2752 = vunpack.c.l.b16 %v1673
      %v2753 = vunpack.c.l.b16 %v1674
      %v2754 = vunpack.c.l.b16 %v1675
      %v2755 = vunpack.c.l.b16 %v1676
      %v2756 = vunpack.c.l.b16 %v1677
      %v2757 = vunpack.c.l.b16 %v1678
      %v2758 = vunpack.c.l.b16 %v1679
      %v2759 = vunpack.c.l.b16 %v1680
      %v2760 = vunpack.c.l.b16 %v1681
      %v2761 = vunpack.c.l.b16 %v1682
      %v2762 = vunpack.c.l.b16 %v1683
      %v2763 = vunpack.c.l.b16 %v1684
      %v2764 = vunpack.c.l.b16 %v1685
      %v2765 = vunpack.c.l.b16 %v1686
      %v2766 = vunpack.c.l.b16 %v1687
      %v2767 = vunpack.c.l.b16 %v1688
      %v2768 = vunpack.c.l.b16 %v1689
      %v2769 = vunpack.c.l.b16 %v1690
      %v2770 = vunpack.c.l.b16 %v1691
      %v2771 = vunpack.c.l.b16 %v1692
      %v2772 = vunpack.c.l.b16 %v1693
      %v2773 = vunpack.c.l.b16 %v1694
      %v2774 = vunpack.c.l.b16 %v1695
      %v2775 = vunpack.c.l.b16 %v1696
      %v2776 = vpack.c.b16 %v2729, %v2728
      %v2777 = vpack.c.b16 %v2731, %v2730
      %v2778 = vpack.c.b16 %v2733, %v2732
      %v2779 = vpack.c.b16 %v2735, %v2734
      %v2780 = vpack.c.b16 %v2737, %v2736
      %v2781 = vpack.c.b16 %v2739, %v2738
      %v2782 = vpack.c.b16 %v2741, %v2740
      %v2783 = vpack.c.b16 %v2743, %v2742
      %v2784 = vpack.c.b16 %v2745, %v2744
      %v2785 = vpack.c.b16 %v2747, %v2746
      %v2786 = vpack.c.b16 %v2749, %v2748
      %v2787 = vpack.c.b16 %v2751, %v2750
      %v2788 = vpack.c.b16 %v2753, %v2752
      %v2789 = vpack.c.b16 %v2755, %v2754
      %v2790 = vpack.c.b16 %v2757, %v2756
      %v2791 = vpack.c.b16 %v2759, %v2758
      %v2792 = vpack.c.b16 %v2761, %v2760
      %v2793 = vpack.c.b16 %v2763, %v2762
      %v2794 = vpack.c.b16 %v2765, %v2764
      %v2795 = vpack.c.b16 %v2767, %v2766
      %v2796 = vpack.c.b16 %v2769, %v2768
      %v2797 = vpack.c.b16 %v2771, %v2770
      %v2798 = vpack.c.b16 %v2773, %v2772
      %v2799 = vpack.c.b16 %v2775, %v2774
      %2824 = vmatprep.subr.bf16.mxu0 0
      %2825 = vmatpush1.bf16.msra.mxu0 %v2783
      %2826 = vmatprep.subr.bf16.mxu0 0
      %2827 = vmatpush1.bf16.msra.mxu0 %v2782
      %2828 = vmatprep.subr.bf16.mxu0 0
      %2829 = vmatpush1.bf16.msra.mxu0 %v2781
      %2830 = vmatprep.subr.bf16.mxu0 0
      %2831 = vmatpush1.bf16.msra.mxu0 %v2780
      %2832 = vmatprep.subr.bf16.mxu0 0
      %2833 = vmatpush1.bf16.msra.mxu0 %v2779
      %2834 = vmatprep.subr.bf16.mxu0 0
      %2835 = vmatpush1.bf16.msra.mxu0 %v2778
      %2836 = vmatprep.subr.bf16.mxu0 0
      %2837 = vmatpush1.bf16.msra.mxu0 %v2777
      %2838 = vmatprep.subr.bf16.mxu0 0
      %2839 = vmatpush1.bf16.msra.mxu0 %v2776
      %2840 = vmatprep.subr.bf16.mxu0 0
      %2841 = vmatpush2.bf16.msra.mxu0 %v2791
      %2842 = vmatprep.subr.bf16.mxu0 0
      %2843 = vmatpush2.bf16.msra.mxu0 %v2790
      %2844 = vmatprep.subr.bf16.mxu0 0
      %2845 = vmatpush2.bf16.msra.mxu0 %v2789
      %2846 = vmatprep.subr.bf16.mxu0 0
      %2847 = vmatpush2.bf16.msra.mxu0 %v2788
      %2848 = vmatprep.subr.bf16.mxu0 0
      %2849 = vmatpush2.bf16.msra.mxu0 %v2787
      %2850 = vmatprep.subr.bf16.mxu0 0
      %2851 = vmatpush2.bf16.msra.mxu0 %v2786
      %2852 = vmatprep.subr.bf16.mxu0 0
      %2853 = vmatpush2.bf16.msra.mxu0 %v2785
      %2854 = vmatprep.subr.bf16.mxu0 0
      %2855 = vmatpush2.bf16.msra.mxu0 %v2784
      %2856 = vmatprep.mubr.bf16.mxu0 %v1387
      %2857 = vmatmul.mubr.bf16.gmra.mxu0 %v1295
      %v2858 = vpop.f32.mrf.mxu0
      %v2859 = vadd.f32 %v2554, %v2858
      %v2860 = vpop.f32.mrf.mxu0
      %v2861 = vpop.f32.mrf.mxu0
      %v2862 = vadd.f32 %v2557, %v2861
      %v2863 = vpop.f32.mrf.mxu0
      %2864 = vmatprep.mubr.bf16.mxu0 %v1399
      %2865 = vmatmul.mubr.bf16.gmra.mxu0 %v1296
      %v2866 = vpop.f32.mrf.mxu0
      %v2867 = vadd.f32 %v2562, %v2866
      %v2868 = vpop.f32.mrf.mxu0
      %v2869 = vpop.f32.mrf.mxu0
      %v2870 = vadd.f32 %v2565, %v2869
      %v2871 = vpop.f32.mrf.mxu0
      %2872 = vmatprep.mubr.bf16.mxu0 %v1411
      %2873 = vmatmul.mubr.bf16.gmra.mxu0 %v1297
      %v2874 = vpop.f32.mrf.mxu0
      %v2875 = vadd.f32 %v2570, %v2874
      %v2876 = vpop.f32.mrf.mxu0
      %v2877 = vpop.f32.mrf.mxu0
      %v2878 = vadd.f32 %v2573, %v2877
      %v2879 = vpop.f32.mrf.mxu0
      %2880 = vmatprep.mubr.bf16.mxu0 %v1423
      %2881 = vmatmul.mubr.bf16.gmra.mxu0 %v1298
      %v2882 = vpop.f32.mrf.mxu0
      %v2883 = vadd.f32 %v2578, %v2882
      %v2884 = vpop.f32.mrf.mxu0
      %v2885 = vpop.f32.mrf.mxu0
      %v2886 = vadd.f32 %v2581, %v2885
      %v2887 = vpop.f32.mrf.mxu0
      %2888 = vmatprep.mubr.bf16.mxu0 %v1435
      %2889 = vmatmul.mubr.bf16.gmra.mxu0 %v1299
      %v2890 = vpop.f32.mrf.mxu0
      %v2891 = vadd.f32 %v2586, %v2890
      %v2892 = vpop.f32.mrf.mxu0
      %v2893 = vpop.f32.mrf.mxu0
      %v2894 = vadd.f32 %v2589, %v2893
      %v2895 = vpop.f32.mrf.mxu0
      %2896 = vmatprep.mubr.bf16.mxu0 %v1447
      %2897 = vmatmul.mubr.bf16.gmra.mxu0 %v1300
      %v2898 = vpop.f32.mrf.mxu0
      %v2899 = vadd.f32 %v2594, %v2898
      %v2900 = vpop.f32.mrf.mxu0
      %v2901 = vpop.f32.mrf.mxu0
      %v2902 = vadd.f32 %v2597, %v2901
      %v2903 = vpop.f32.mrf.mxu0
      %2904 = vmatprep.mubr.bf16.mxu0 %v1459
      %2905 = vmatmul.mubr.bf16.gmra.mxu0 %v1301
      %v2906 = vpop.f32.mrf.mxu0
      %v2907 = vadd.f32 %v2602, %v2906
      %v2908 = vpop.f32.mrf.mxu0
      %v2909 = vpop.f32.mrf.mxu0
      %v2910 = vadd.f32 %v2605, %v2909
      %v2911 = vpop.f32.mrf.mxu0
      %2912 = vmatprep.mubr.bf16.mxu0 %v1471
      %2913 = vmatmul.mubr.bf16.gmra.mxu0 %v1302
      %v2914 = vpop.f32.mrf.mxu0
      %v2915 = vadd.f32 %v2610, %v2914
      %v2916 = vpop.f32.mrf.mxu0
      %v2917 = vpop.f32.mrf.mxu0
      %v2918 = vadd.f32 %v2613, %v2917
      %v2919 = vpop.f32.mrf.mxu0
      %2920 = vmatprep.mubr.bf16.mxu0 %v1483
      %2921 = vmatmul.mubr.bf16.gmra.mxu0 %v1303
      %v2922 = vpop.f32.mrf.mxu0
      %v2923 = vadd.f32 %v2618, %v2922
      %v2924 = vpop.f32.mrf.mxu0
      %v2925 = vpop.f32.mrf.mxu0
      %v2926 = vadd.f32 %v2621, %v2925
      %v2927 = vpop.f32.mrf.mxu0
      %2928 = vmatprep.mubr.bf16.mxu0 %v1495
      %2929 = vmatmul.mubr.bf16.gmra.mxu0 %v1304
      %v2930 = vpop.f32.mrf.mxu0
      %v2931 = vadd.f32 %v2626, %v2930
      %v2932 = vpop.f32.mrf.mxu0
      %v2933 = vpop.f32.mrf.mxu0
      %v2934 = vadd.f32 %v2629, %v2933
      %v2935 = vpop.f32.mrf.mxu0
      %2936 = vmatprep.mubr.bf16.mxu0 %v1507
      %2937 = vmatmul.mubr.bf16.gmra.mxu0 %v1305
      %v2938 = vpop.f32.mrf.mxu0
      %v2939 = vadd.f32 %v2634, %v2938
      %v2940 = vpop.f32.mrf.mxu0
      %v2941 = vpop.f32.mrf.mxu0
      %v2942 = vadd.f32 %v2637, %v2941
      %v2943 = vpop.f32.mrf.mxu0
      %2944 = vmatprep.mubr.bf16.mxu0 %v1519
      %2945 = vmatmul.mubr.bf16.gmra.mxu0 %v1306
      %v2946 = vpop.f32.mrf.mxu0
      %v2947 = vadd.f32 %v2642, %v2946
      %v2948 = vpop.f32.mrf.mxu0
      %v2949 = vpop.f32.mrf.mxu0
      %v2950 = vadd.f32 %v2645, %v2949
      %v2951 = vpop.f32.mrf.mxu0
      %2952 = vmatprep.mubr.bf16.mxu0 %v1531
      %2953 = vmatmul.mubr.bf16.gmra.mxu0 %v1307
      %v2954 = vpop.f32.mrf.mxu0
      %v2955 = vadd.f32 %v2650, %v2954
      %v2956 = vpop.f32.mrf.mxu0
      %v2957 = vpop.f32.mrf.mxu0
      %v2958 = vadd.f32 %v2653, %v2957
      %v2959 = vpop.f32.mrf.mxu0
      %2960 = vmatprep.mubr.bf16.mxu0 %v1543
      %2961 = vmatmul.mubr.bf16.gmra.mxu0 %v1308
      %v2962 = vpop.f32.mrf.mxu0
      %v2963 = vadd.f32 %v2658, %v2962
      %v2964 = vpop.f32.mrf.mxu0
      %v2965 = vpop.f32.mrf.mxu0
      %v2966 = vadd.f32 %v2661, %v2965
      %v2967 = vpop.f32.mrf.mxu0
      %2968 = vmatprep.mubr.bf16.mxu0 %v1555
      %2969 = vmatmul.mubr.bf16.gmra.mxu0 %v1309
      %v2970 = vpop.f32.mrf.mxu0
      %v2971 = vadd.f32 %v2666, %v2970
      %v2972 = vpop.f32.mrf.mxu0
      %v2973 = vpop.f32.mrf.mxu0
      %v2974 = vadd.f32 %v2669, %v2973
      %v2975 = vpop.f32.mrf.mxu0
      %2976 = vmatprep.mubr.bf16.mxu0 %v1567
      %2977 = vmatmul.mubr.bf16.gmra.mxu0 %v1310
      %v2978 = vpop.f32.mrf.mxu0
      %v2979 = vadd.f32 %v2674, %v2978
      %v2980 = vpop.f32.mrf.mxu0
      %v2981 = vpop.f32.mrf.mxu0
      %v2982 = vadd.f32 %v2677, %v2981
      %v2983 = vpop.f32.mrf.mxu0
      %2984 = vdwg.mxu0
      %2985 = vmatprep.subr.bf16.mxu0 0
      %2986 = vmatpush1.bf16.msra.mxu0 %v2799
      %2987 = vmatprep.subr.bf16.mxu0 0
      %2988 = vmatpush1.bf16.msra.mxu0 %v2798
      %2989 = vmatprep.subr.bf16.mxu0 0
      %2990 = vmatpush1.bf16.msra.mxu0 %v2797
      %2991 = vmatprep.subr.bf16.mxu0 0
      %2992 = vmatpush1.bf16.msra.mxu0 %v2796
      %2993 = vmatprep.subr.bf16.mxu0 0
      %2994 = vmatpush1.bf16.msra.mxu0 %v2795
      %2995 = vmatprep.subr.bf16.mxu0 0
      %2996 = vmatpush1.bf16.msra.mxu0 %v2794
      %2997 = vmatprep.subr.bf16.mxu0 0
      %2998 = vmatpush1.bf16.msra.mxu0 %v2793
      %2999 = vmatprep.subr.bf16.mxu0 0
      %3000 = vmatpush1.bf16.msra.mxu0 %v2792
      %3001 = vmatprep.subr.bf16.mxu0 0
      %3002 = vmatpush2.bf16.msra.mxu0 0
      %3003 = vmatprep.subr.bf16.mxu0 0
      %3004 = vmatpush2.bf16.msra.mxu0 0
      %3005 = vmatprep.subr.bf16.mxu0 0
      %3006 = vmatpush2.bf16.msra.mxu0 0
      %3007 = vmatprep.subr.bf16.mxu0 0
      %3008 = vmatpush2.bf16.msra.mxu0 0
      %3009 = vmatprep.subr.bf16.mxu0 0
      %3010 = vmatpush2.bf16.msra.mxu0 0
      %3011 = vmatprep.subr.bf16.mxu0 0
      %3012 = vmatpush2.bf16.msra.mxu0 0
      %3013 = vmatprep.subr.bf16.mxu0 0
      %3014 = vmatpush2.bf16.msra.mxu0 0
      %3015 = vmatprep.subr.bf16.mxu0 0
      %3016 = vmatpush2.bf16.msra.mxu0 0
      %3017 = vmatprep.mubr.bf16.mxu0 0
      %3018 = vmatmul.mubr.bf16.gmra.mxu0 %v1587
      %v3019 = vpop.f32.mrf.mxu0
      %v3020 = vadd.f32 %v2859, %v3019
      %v3021 = vpop.f32.mrf.mxu0
      %v3022 = vpop.f32.mrf.mxu0
      %v3023 = vadd.f32 %v2862, %v3022
      %v3024 = vpop.f32.mrf.mxu0
      %3025 = vmatprep.mubr.bf16.mxu0 0
      %3026 = vmatmul.mubr.bf16.gmra.mxu0 %v1590
      %v3027 = vpop.f32.mrf.mxu0
      %v3028 = vadd.f32 %v2867, %v3027
      %v3029 = vpop.f32.mrf.mxu0
      %v3030 = vpop.f32.mrf.mxu0
      %v3031 = vadd.f32 %v2870, %v3030
      %v3032 = vpop.f32.mrf.mxu0
      %3033 = vmatprep.mubr.bf16.mxu0 0
      %3034 = vmatmul.mubr.bf16.gmra.mxu0 %v1593
      %v3035 = vpop.f32.mrf.mxu0
      %v3036 = vadd.f32 %v2875, %v3035
      %v3037 = vpop.f32.mrf.mxu0
      %v3038 = vpop.f32.mrf.mxu0
      %v3039 = vadd.f32 %v2878, %v3038
      %v3040 = vpop.f32.mrf.mxu0
      %3041 = vmatprep.mubr.bf16.mxu0 0
      %3042 = vmatmul.mubr.bf16.gmra.mxu0 %v1596
      %v3043 = vpop.f32.mrf.mxu0
      %v3044 = vadd.f32 %v2883, %v3043
      %v3045 = vpop.f32.mrf.mxu0
      %v3046 = vpop.f32.mrf.mxu0
      %v3047 = vadd.f32 %v2886, %v3046
      %v3048 = vpop.f32.mrf.mxu0
      %3049 = vmatprep.mubr.bf16.mxu0 0
      %3050 = vmatmul.mubr.bf16.gmra.mxu0 %v1599
      %v3051 = vpop.f32.mrf.mxu0
      %v3052 = vadd.f32 %v2891, %v3051
      %v3053 = vpop.f32.mrf.mxu0
      %v3054 = vpop.f32.mrf.mxu0
      %v3055 = vadd.f32 %v2894, %v3054
      %v3056 = vpop.f32.mrf.mxu0
      %3057 = vmatprep.mubr.bf16.mxu0 0
      %3058 = vmatmul.mubr.bf16.gmra.mxu0 %v1602
      %v3059 = vpop.f32.mrf.mxu0
      %v3060 = vadd.f32 %v2899, %v3059
      %v3061 = vpop.f32.mrf.mxu0
      %v3062 = vpop.f32.mrf.mxu0
      %v3063 = vadd.f32 %v2902, %v3062
      %v3064 = vpop.f32.mrf.mxu0
      %3065 = vmatprep.mubr.bf16.mxu0 0
      %3066 = vmatmul.mubr.bf16.gmra.mxu0 %v1605
      %v3067 = vpop.f32.mrf.mxu0
      %v3068 = vadd.f32 %v2907, %v3067
      %v3069 = vpop.f32.mrf.mxu0
      %v3070 = vpop.f32.mrf.mxu0
      %v3071 = vadd.f32 %v2910, %v3070
      %v3072 = vpop.f32.mrf.mxu0
      %3073 = vmatprep.mubr.bf16.mxu0 0
      %3074 = vmatmul.mubr.bf16.gmra.mxu0 %v1608
      %v3075 = vpop.f32.mrf.mxu0
      %v3076 = vadd.f32 %v2915, %v3075
      %v3077 = vpop.f32.mrf.mxu0
      %v3078 = vpop.f32.mrf.mxu0
      %v3079 = vadd.f32 %v2918, %v3078
      %v3080 = vpop.f32.mrf.mxu0
      %3081 = vmatprep.mubr.bf16.mxu0 0
      %3082 = vmatmul.mubr.bf16.gmra.mxu0 %v1611
      %v3083 = vpop.f32.mrf.mxu0
      %v3084 = vadd.f32 %v2923, %v3083
      %v3085 = vpop.f32.mrf.mxu0
      %v3086 = vpop.f32.mrf.mxu0
      %v3087 = vadd.f32 %v2926, %v3086
      %v3088 = vpop.f32.mrf.mxu0
      %3089 = vmatprep.mubr.bf16.mxu0 0
      %3090 = vmatmul.mubr.bf16.gmra.mxu0 %v1614
      %v3091 = vpop.f32.mrf.mxu0
      %v3092 = vadd.f32 %v2931, %v3091
      %v3093 = vpop.f32.mrf.mxu0
      %v3094 = vpop.f32.mrf.mxu0
      %v3095 = vadd.f32 %v2934, %v3094
      %v3096 = vpop.f32.mrf.mxu0
      %3097 = vmatprep.mubr.bf16.mxu0 0
      %3098 = vmatmul.mubr.bf16.gmra.mxu0 %v1617
      %v3099 = vpop.f32.mrf.mxu0
      %v3100 = vadd.f32 %v2939, %v3099
      %v3101 = vpop.f32.mrf.mxu0
      %v3102 = vpop.f32.mrf.mxu0
      %v3103 = vadd.f32 %v2942, %v3102
      %v3104 = vpop.f32.mrf.mxu0
      %3105 = vmatprep.mubr.bf16.mxu0 0
      %3106 = vmatmul.mubr.bf16.gmra.mxu0 %v1620
      %v3107 = vpop.f32.mrf.mxu0
      %v3108 = vadd.f32 %v2947, %v3107
      %v3109 = vpop.f32.mrf.mxu0
      %v3110 = vpop.f32.mrf.mxu0
      %v3111 = vadd.f32 %v2950, %v3110
      %v3112 = vpop.f32.mrf.mxu0
      %3113 = vmatprep.mubr.bf16.mxu0 0
      %3114 = vmatmul.mubr.bf16.gmra.mxu0 %v1623
      %v3115 = vpop.f32.mrf.mxu0
      %v3116 = vadd.f32 %v2955, %v3115
      %v3117 = vpop.f32.mrf.mxu0
      %v3118 = vpop.f32.mrf.mxu0
      %v3119 = vadd.f32 %v2958, %v3118
      %v3120 = vpop.f32.mrf.mxu0
      %3121 = vmatprep.mubr.bf16.mxu0 0
      %3122 = vmatmul.mubr.bf16.gmra.mxu0 %v1626
      %v3123 = vpop.f32.mrf.mxu0
      %v3124 = vadd.f32 %v2963, %v3123
      %v3125 = vpop.f32.mrf.mxu0
      %v3126 = vpop.f32.mrf.mxu0
      %v3127 = vadd.f32 %v2966, %v3126
      %v3128 = vpop.f32.mrf.mxu0
      %3129 = vmatprep.mubr.bf16.mxu0 0
      %3130 = vmatmul.mubr.bf16.gmra.mxu0 %v1629
      %v3131 = vpop.f32.mrf.mxu0
      %v3132 = vadd.f32 %v2971, %v3131
      %v3133 = vpop.f32.mrf.mxu0
      %v3134 = vpop.f32.mrf.mxu0
      %v3135 = vadd.f32 %v2974, %v3134
      %v3136 = vpop.f32.mrf.mxu0
      %3137 = vmatprep.mubr.bf16.mxu0 0
      %3138 = vmatmul.mubr.bf16.gmra.mxu0 %v1632
      %v3139 = vpop.f32.mrf.mxu0
      %v3140 = vadd.f32 %v2979, %v3139
      %v3141 = vpop.f32.mrf.mxu0
      %v3142 = vpop.f32.mrf.mxu0
      %v3143 = vadd.f32 %v2982, %v3142
      %v3144 = vpop.f32.mrf.mxu0
      %3145 = vdwg.mxu0
      %s3146 = sadd.s32 %s1179, 2
      %s3147 = smul.u32 %s3146, 3
      %s3148 = smul.addr %s3147, 4
      %s3149 = scalar_lea.vmem [#allocation3], %s3148
      %v3150 = vld [vmem:[%s3149] sm:$0xf]
      %v3151 = vld [vmem:[%s3149 + $0x4] sm:$0xf]
      %v3152 = vld [vmem:[%s3149 + $0x8] sm:$0x1]
      %v3153 = vld [vmem:[%s3149 + $0xc] sm:$0xf]
      %v3154 = vld [vmem:[%s3149 + $0x10] sm:$0xf]
      %v3155 = vld [vmem:[%s3149 + $0x14] sm:$0x1]
      %v3156 = vld [vmem:[%s3149 + $0x18] sm:$0xf]
      %v3157 = vld [vmem:[%s3149 + $0x1c] sm:$0xf]
      %v3158 = vld [vmem:[%s3149 + $0x20] sm:$0x1]
      %v3159 = vld [vmem:[%s3149 + $0x24] sm:$0xf]
      %v3160 = vld [vmem:[%s3149 + $0x28] sm:$0xf]
      %v3161 = vld [vmem:[%s3149 + $0x2c] sm:$0x1]
      %v3162 = vld [vmem:[%s3149 + $0x30] sm:$0xf]
      %v3163 = vld [vmem:[%s3149 + $0x34] sm:$0xf]
      %v3164 = vld [vmem:[%s3149 + $0x38] sm:$0x1]
      %v3165 = vld [vmem:[%s3149 + $0x3c] sm:$0xf]
      %v3166 = vld [vmem:[%s3149 + $0x40] sm:$0xf]
      %v3167 = vld [vmem:[%s3149 + $0x44] sm:$0x1]
      %v3168 = vld [vmem:[%s3149 + $0x48] sm:$0xf]
      %v3169 = vld [vmem:[%s3149 + $0x4c] sm:$0xf]
      %v3170 = vld [vmem:[%s3149 + $0x50] sm:$0x1]
      %v3171 = vld [vmem:[%s3149 + $0x54] sm:$0xf]
      %v3172 = vld [vmem:[%s3149 + $0x58] sm:$0xf]
      %v3173 = vld [vmem:[%s3149 + $0x5c] sm:$0x1]
      %v3174 = vld [vmem:[%s3149 + $0x60] sm:$0xf]
      %v3175 = vld [vmem:[%s3149 + $0x64] sm:$0xf]
      %v3176 = vld [vmem:[%s3149 + $0x68] sm:$0x1]
      %v3177 = vld [vmem:[%s3149 + $0x6c] sm:$0xf]
      %v3178 = vld [vmem:[%s3149 + $0x70] sm:$0xf]
      %v3179 = vld [vmem:[%s3149 + $0x74] sm:$0x1]
      %v3180 = vld [vmem:[%s3149 + $0x78] sm:$0xf]
      %v3181 = vld [vmem:[%s3149 + $0x7c] sm:$0xf]
      %v3182 = vld [vmem:[%s3149 + $0x80] sm:$0x1]
      %v3183 = vld [vmem:[%s3149 + $0x84] sm:$0xf]
      %v3184 = vld [vmem:[%s3149 + $0x88] sm:$0xf]
      %v3185 = vld [vmem:[%s3149 + $0x8c] sm:$0x1]
      %v3186 = vld [vmem:[%s3149 + $0x90] sm:$0xf]
      %v3187 = vld [vmem:[%s3149 + $0x94] sm:$0xf]
      %v3188 = vld [vmem:[%s3149 + $0x98] sm:$0x1]
      %v3189 = vld [vmem:[%s3149 + $0x9c] sm:$0xf]
      %v3190 = vld [vmem:[%s3149 + $0xa0] sm:$0xf]
      %v3191 = vld [vmem:[%s3149 + $0xa4] sm:$0x1]
      %v3192 = vld [vmem:[%s3149 + $0xa8] sm:$0xf]
      %v3193 = vld [vmem:[%s3149 + $0xac] sm:$0xf]
      %v3194 = vld [vmem:[%s3149 + $0xb0] sm:$0x1]
      %v3195 = vld [vmem:[%s3149 + $0xb4] sm:$0xf]
      %v3196 = vld [vmem:[%s3149 + $0xb8] sm:$0xf]
      %v3197 = vld [vmem:[%s3149 + $0xbc] sm:$0x1]
      %v3230 = vunpack.c.l.b16 %v3150
      %v3231 = vunpack.c.l.b16 %v3151
      %v3232 = vunpack.c.l.b16 %v3153
      %v3233 = vunpack.c.l.b16 %v3154
      %v3234 = vunpack.c.l.b16 %v3156
      %v3235 = vunpack.c.l.b16 %v3157
      %v3236 = vunpack.c.l.b16 %v3159
      %v3237 = vunpack.c.l.b16 %v3160
      %v3238 = vunpack.c.l.b16 %v3162
      %v3239 = vunpack.c.l.b16 %v3163
      %v3240 = vunpack.c.l.b16 %v3165
      %v3241 = vunpack.c.l.b16 %v3166
      %v3242 = vunpack.c.l.b16 %v3168
      %v3243 = vunpack.c.l.b16 %v3169
      %v3244 = vunpack.c.l.b16 %v3171
      %v3245 = vunpack.c.l.b16 %v3172
      %v3246 = vunpack.c.l.b16 %v3174
      %v3247 = vunpack.c.l.b16 %v3175
      %v3248 = vunpack.c.l.b16 %v3177
      %v3249 = vunpack.c.l.b16 %v3178
      %v3250 = vunpack.c.l.b16 %v3180
      %v3251 = vunpack.c.l.b16 %v3181
      %v3252 = vunpack.c.l.b16 %v3183
      %v3253 = vunpack.c.l.b16 %v3184
      %v3254 = vunpack.c.l.b16 %v3186
      %v3255 = vunpack.c.l.b16 %v3187
      %v3256 = vunpack.c.l.b16 %v3189
      %v3257 = vunpack.c.l.b16 %v3190
      %v3258 = vunpack.c.l.b16 %v3192
      %v3259 = vunpack.c.l.b16 %v3193
      %v3260 = vunpack.c.l.b16 %v3195
      %v3261 = vunpack.c.l.b16 %v3196
      %v3262 = vpack.c.b16 %v3231, %v3230
      %v3263 = vpack.c.b16 %v3233, %v3232
      %v3264 = vpack.c.b16 %v3235, %v3234
      %v3265 = vpack.c.b16 %v3237, %v3236
      %v3266 = vpack.c.b16 %v3239, %v3238
      %v3267 = vpack.c.b16 %v3241, %v3240
      %v3268 = vpack.c.b16 %v3243, %v3242
      %v3269 = vpack.c.b16 %v3245, %v3244
      %v3270 = vpack.c.b16 %v3247, %v3246
      %v3271 = vpack.c.b16 %v3249, %v3248
      %v3272 = vpack.c.b16 %v3251, %v3250
      %v3273 = vpack.c.b16 %v3253, %v3252
      %v3274 = vpack.c.b16 %v3255, %v3254
      %v3275 = vpack.c.b16 %v3257, %v3256
      %v3276 = vpack.c.b16 %v3259, %v3258
      %v3277 = vpack.c.b16 %v3261, %v3260
      %v3310 = vunpack.c.l.b16 %v3152
      %v3311 = vunpack.c.l.b16 %v3155
      %v3312 = vunpack.c.l.b16 %v3158
      %v3313 = vunpack.c.l.b16 %v3161
      %v3314 = vunpack.c.l.b16 %v3164
      %v3315 = vunpack.c.l.b16 %v3167
      %v3316 = vunpack.c.l.b16 %v3170
      %v3317 = vunpack.c.l.b16 %v3173
      %v3318 = vunpack.c.l.b16 %v3176
      %v3319 = vunpack.c.l.b16 %v3179
      %v3320 = vunpack.c.l.b16 %v3182
      %v3321 = vunpack.c.l.b16 %v3185
      %v3322 = vunpack.c.l.b16 %v3188
      %v3323 = vunpack.c.l.b16 %v3191
      %v3324 = vunpack.c.l.b16 %v3194
      %v3325 = vunpack.c.l.b16 %v3197
      %v3326 = vpack.c.b16 %v3310, %v3310
      %v3327 = vpack.c.b16 %v3311, %v3311
      %v3328 = vpack.c.b16 %v3312, %v3312
      %v3329 = vpack.c.b16 %v3313, %v3313
      %v3330 = vpack.c.b16 %v3314, %v3314
      %v3331 = vpack.c.b16 %v3315, %v3315
      %v3332 = vpack.c.b16 %v3316, %v3316
      %v3333 = vpack.c.b16 %v3317, %v3317
      %v3334 = vpack.c.b16 %v3318, %v3318
      %v3335 = vpack.c.b16 %v3319, %v3319
      %v3336 = vpack.c.b16 %v3320, %v3320
      %v3337 = vpack.c.b16 %v3321, %v3321
      %v3338 = vpack.c.b16 %v3322, %v3322
      %v3339 = vpack.c.b16 %v3323, %v3323
      %v3340 = vpack.c.b16 %v3324, %v3324
      %v3341 = vpack.c.b16 %v3325, %v3325
      %v3343 = vshrl.u32 %v3262, 16
      %v3345 = vshll.u32 %v3262, 16
      %v3347 = vrot.slane %v3345, 1
      %v3348 = vor.u32 %v3343, %v3347
      %v3350 = vshll.u32 %v3326, 16
      %v3352 = vrot.slane %v3350, 1
      %v3353 = vsel %vm1375, %v3348, %v3352
      %v3355 = vshrl.u32 %v3263, 16
      %v3357 = vshll.u32 %v3263, 16
      %v3359 = vrot.slane %v3357, 1
      %v3360 = vor.u32 %v3355, %v3359
      %v3362 = vshll.u32 %v3327, 16
      %v3364 = vrot.slane %v3362, 1
      %v3365 = vsel %vm1375, %v3360, %v3364
      %v3367 = vshrl.u32 %v3264, 16
      %v3369 = vshll.u32 %v3264, 16
      %v3371 = vrot.slane %v3369, 1
      %v3372 = vor.u32 %v3367, %v3371
      %v3374 = vshll.u32 %v3328, 16
      %v3376 = vrot.slane %v3374, 1
      %v3377 = vsel %vm1375, %v3372, %v3376
      %v3379 = vshrl.u32 %v3265, 16
      %v3381 = vshll.u32 %v3265, 16
      %v3383 = vrot.slane %v3381, 1
      %v3384 = vor.u32 %v3379, %v3383
      %v3386 = vshll.u32 %v3329, 16
      %v3388 = vrot.slane %v3386, 1
      %v3389 = vsel %vm1375, %v3384, %v3388
      %v3391 = vshrl.u32 %v3266, 16
      %v3393 = vshll.u32 %v3266, 16
      %v3395 = vrot.slane %v3393, 1
      %v3396 = vor.u32 %v3391, %v3395
      %v3398 = vshll.u32 %v3330, 16
      %v3400 = vrot.slane %v3398, 1
      %v3401 = vsel %vm1375, %v3396, %v3400
      %v3403 = vshrl.u32 %v3267, 16
      %v3405 = vshll.u32 %v3267, 16
      %v3407 = vrot.slane %v3405, 1
      %v3408 = vor.u32 %v3403, %v3407
      %v3410 = vshll.u32 %v3331, 16
      %v3412 = vrot.slane %v3410, 1
      %v3413 = vsel %vm1375, %v3408, %v3412
      %v3415 = vshrl.u32 %v3268, 16
      %v3417 = vshll.u32 %v3268, 16
      %v3419 = vrot.slane %v3417, 1
      %v3420 = vor.u32 %v3415, %v3419
      %v3422 = vshll.u32 %v3332, 16
      %v3424 = vrot.slane %v3422, 1
      %v3425 = vsel %vm1375, %v3420, %v3424
      %v3427 = vshrl.u32 %v3269, 16
      %v3429 = vshll.u32 %v3269, 16
      %v3431 = vrot.slane %v3429, 1
      %v3432 = vor.u32 %v3427, %v3431
      %v3434 = vshll.u32 %v3333, 16
      %v3436 = vrot.slane %v3434, 1
      %v3437 = vsel %vm1375, %v3432, %v3436
      %v3439 = vshrl.u32 %v3270, 16
      %v3441 = vshll.u32 %v3270, 16
      %v3443 = vrot.slane %v3441, 1
      %v3444 = vor.u32 %v3439, %v3443
      %v3446 = vshll.u32 %v3334, 16
      %v3448 = vrot.slane %v3446, 1
      %v3449 = vsel %vm1375, %v3444, %v3448
      %v3451 = vshrl.u32 %v3271, 16
      %v3453 = vshll.u32 %v3271, 16
      %v3455 = vrot.slane %v3453, 1
      %v3456 = vor.u32 %v3451, %v3455
      %v3458 = vshll.u32 %v3335, 16
      %v3460 = vrot.slane %v3458, 1
      %v3461 = vsel %vm1375, %v3456, %v3460
      %v3463 = vshrl.u32 %v3272, 16
      %v3465 = vshll.u32 %v3272, 16
      %v3467 = vrot.slane %v3465, 1
      %v3468 = vor.u32 %v3463, %v3467
      %v3470 = vshll.u32 %v3336, 16
      %v3472 = vrot.slane %v3470, 1
      %v3473 = vsel %vm1375, %v3468, %v3472
      %v3475 = vshrl.u32 %v3273, 16
      %v3477 = vshll.u32 %v3273, 16
      %v3479 = vrot.slane %v3477, 1
      %v3480 = vor.u32 %v3475, %v3479
      %v3482 = vshll.u32 %v3337, 16
      %v3484 = vrot.slane %v3482, 1
      %v3485 = vsel %vm1375, %v3480, %v3484
      %v3487 = vshrl.u32 %v3274, 16
      %v3489 = vshll.u32 %v3274, 16
      %v3491 = vrot.slane %v3489, 1
      %v3492 = vor.u32 %v3487, %v3491
      %v3494 = vshll.u32 %v3338, 16
      %v3496 = vrot.slane %v3494, 1
      %v3497 = vsel %vm1375, %v3492, %v3496
      %v3499 = vshrl.u32 %v3275, 16
      %v3501 = vshll.u32 %v3275, 16
      %v3503 = vrot.slane %v3501, 1
      %v3504 = vor.u32 %v3499, %v3503
      %v3506 = vshll.u32 %v3339, 16
      %v3508 = vrot.slane %v3506, 1
      %v3509 = vsel %vm1375, %v3504, %v3508
      %v3511 = vshrl.u32 %v3276, 16
      %v3513 = vshll.u32 %v3276, 16
      %v3515 = vrot.slane %v3513, 1
      %v3516 = vor.u32 %v3511, %v3515
      %v3518 = vshll.u32 %v3340, 16
      %v3520 = vrot.slane %v3518, 1
      %v3521 = vsel %vm1375, %v3516, %v3520
      %v3523 = vshrl.u32 %v3277, 16
      %v3525 = vshll.u32 %v3277, 16
      %v3527 = vrot.slane %v3525, 1
      %v3528 = vor.u32 %v3523, %v3527
      %v3530 = vshll.u32 %v3341, 16
      %v3532 = vrot.slane %v3530, 1
      %v3533 = vsel %vm1375, %v3528, %v3532
      %v3550 = vrot.slane %v3262, 1
      %v3551 = vrot.slane %v3326, 1
      %v3552 = vsel %vm1584, %v3550, %v3551
      %v3553 = vrot.slane %v3263, 1
      %v3554 = vrot.slane %v3327, 1
      %v3555 = vsel %vm1584, %v3553, %v3554
      %v3556 = vrot.slane %v3264, 1
      %v3557 = vrot.slane %v3328, 1
      %v3558 = vsel %vm1584, %v3556, %v3557
      %v3559 = vrot.slane %v3265, 1
      %v3560 = vrot.slane %v3329, 1
      %v3561 = vsel %vm1584, %v3559, %v3560
      %v3562 = vrot.slane %v3266, 1
      %v3563 = vrot.slane %v3330, 1
      %v3564 = vsel %vm1584, %v3562, %v3563
      %v3565 = vrot.slane %v3267, 1
      %v3566 = vrot.slane %v3331, 1
      %v3567 = vsel %vm1584, %v3565, %v3566
      %v3568 = vrot.slane %v3268, 1
      %v3569 = vrot.slane %v3332, 1
      %v3570 = vsel %vm1584, %v3568, %v3569
      %v3571 = vrot.slane %v3269, 1
      %v3572 = vrot.slane %v3333, 1
      %v3573 = vsel %vm1584, %v3571, %v3572
      %v3574 = vrot.slane %v3270, 1
      %v3575 = vrot.slane %v3334, 1
      %v3576 = vsel %vm1584, %v3574, %v3575
      %v3577 = vrot.slane %v3271, 1
      %v3578 = vrot.slane %v3335, 1
      %v3579 = vsel %vm1584, %v3577, %v3578
      %v3580 = vrot.slane %v3272, 1
      %v3581 = vrot.slane %v3336, 1
      %v3582 = vsel %vm1584, %v3580, %v3581
      %v3583 = vrot.slane %v3273, 1
      %v3584 = vrot.slane %v3337, 1
      %v3585 = vsel %vm1584, %v3583, %v3584
      %v3586 = vrot.slane %v3274, 1
      %v3587 = vrot.slane %v3338, 1
      %v3588 = vsel %vm1584, %v3586, %v3587
      %v3589 = vrot.slane %v3275, 1
      %v3590 = vrot.slane %v3339, 1
      %v3591 = vsel %vm1584, %v3589, %v3590
      %v3592 = vrot.slane %v3276, 1
      %v3593 = vrot.slane %v3340, 1
      %v3594 = vsel %vm1584, %v3592, %v3593
      %v3595 = vrot.slane %v3277, 1
      %v3596 = vrot.slane %v3341, 1
      %v3597 = vsel %vm1584, %v3595, %v3596
      %s3614 = scalar_lea.vmem %s3, 384
      %v3615 = vld [vmem:[%s3614] sm:$0xf]
      %v3616 = vld [vmem:[%s3614 + $0x4] sm:$0xf]
      %v3617 = vld [vmem:[%s3614 + $0x8] sm:$0xf]
      %v3618 = vld [vmem:[%s3614 + $0xc] sm:$0xf]
      %v3619 = vld [vmem:[%s3614 + $0x10] sm:$0xf]
      %v3620 = vld [vmem:[%s3614 + $0x14] sm:$0xf]
      %v3621 = vld [vmem:[%s3614 + $0x18] sm:$0xf]
      %v3622 = vld [vmem:[%s3614 + $0x1c] sm:$0xf]
      %v3623 = vld [vmem:[%s3614 + $0x20] sm:$0xf]
      %v3624 = vld [vmem:[%s3614 + $0x24] sm:$0xf]
      %v3625 = vld [vmem:[%s3614 + $0x28] sm:$0xf]
      %v3626 = vld [vmem:[%s3614 + $0x2c] sm:$0xf]
      %v3627 = vld [vmem:[%s3614 + $0x30] sm:$0xf]
      %v3628 = vld [vmem:[%s3614 + $0x34] sm:$0xf]
      %v3629 = vld [vmem:[%s3614 + $0x38] sm:$0xf]
      %v3630 = vld [vmem:[%s3614 + $0x3c] sm:$0xf]
      %v3631 = vld [vmem:[%s3614 + $0x40] sm:$0xf]
      %v3632 = vld [vmem:[%s3614 + $0x44] sm:$0xf]
      %v3633 = vld [vmem:[%s3614 + $0x48] sm:$0xf]
      %v3634 = vld [vmem:[%s3614 + $0x4c] sm:$0xf]
      %v3635 = vld [vmem:[%s3614 + $0x50] sm:$0xf]
      %v3636 = vld [vmem:[%s3614 + $0x54] sm:$0xf]
      %v3637 = vld [vmem:[%s3614 + $0x58] sm:$0xf]
      %v3638 = vld [vmem:[%s3614 + $0x5c] sm:$0xf]
      %v3639 = vld [vmem:[%s3614 + $0x60] sm:$0xf]
      %v3640 = vld [vmem:[%s3614 + $0x64] sm:$0xf]
      %v3641 = vld [vmem:[%s3614 + $0x68] sm:$0xf]
      %v3642 = vld [vmem:[%s3614 + $0x6c] sm:$0xf]
      %v3643 = vld [vmem:[%s3614 + $0x70] sm:$0xf]
      %v3644 = vld [vmem:[%s3614 + $0x74] sm:$0xf]
      %v3645 = vld [vmem:[%s3614 + $0x78] sm:$0xf]
      %v3646 = vld [vmem:[%s3614 + $0x7c] sm:$0xf]
      %v3647 = vld [vmem:[%s3614 + $0x80] sm:$0xf]
      %v3648 = vld [vmem:[%s3614 + $0x84] sm:$0xf]
      %v3649 = vld [vmem:[%s3614 + $0x88] sm:$0xf]
      %v3650 = vld [vmem:[%s3614 + $0x8c] sm:$0xf]
      %v3651 = vld [vmem:[%s3614 + $0x90] sm:$0xf]
      %v3652 = vld [vmem:[%s3614 + $0x94] sm:$0xf]
      %v3653 = vld [vmem:[%s3614 + $0x98] sm:$0xf]
      %v3654 = vld [vmem:[%s3614 + $0x9c] sm:$0xf]
      %v3655 = vld [vmem:[%s3614 + $0xa0] sm:$0xf]
      %v3656 = vld [vmem:[%s3614 + $0xa4] sm:$0xf]
      %v3657 = vld [vmem:[%s3614 + $0xa8] sm:$0xf]
      %v3658 = vld [vmem:[%s3614 + $0xac] sm:$0xf]
      %v3659 = vld [vmem:[%s3614 + $0xb0] sm:$0xf]
      %v3660 = vld [vmem:[%s3614 + $0xb4] sm:$0xf]
      %v3661 = vld [vmem:[%s3614 + $0xb8] sm:$0xf]
      %v3662 = vld [vmem:[%s3614 + $0xbc] sm:$0xf]
      %v3711 = vunpack.c.l.b16 %v3615
      %v3712 = vunpack.c.l.b16 %v3616
      %v3713 = vunpack.c.l.b16 %v3617
      %v3714 = vunpack.c.l.b16 %v3618
      %v3715 = vunpack.c.l.b16 %v3619
      %v3716 = vunpack.c.l.b16 %v3620
      %v3717 = vunpack.c.l.b16 %v3621
      %v3718 = vunpack.c.l.b16 %v3622
      %v3719 = vunpack.c.l.b16 %v3623
      %v3720 = vunpack.c.l.b16 %v3624
      %v3721 = vunpack.c.l.b16 %v3625
      %v3722 = vunpack.c.l.b16 %v3626
      %v3723 = vunpack.c.l.b16 %v3627
      %v3724 = vunpack.c.l.b16 %v3628
      %v3725 = vunpack.c.l.b16 %v3629
      %v3726 = vunpack.c.l.b16 %v3630
      %v3727 = vunpack.c.l.b16 %v3631
      %v3728 = vunpack.c.l.b16 %v3632
      %v3729 = vunpack.c.l.b16 %v3633
      %v3730 = vunpack.c.l.b16 %v3634
      %v3731 = vunpack.c.l.b16 %v3635
      %v3732 = vunpack.c.l.b16 %v3636
      %v3733 = vunpack.c.l.b16 %v3637
      %v3734 = vunpack.c.l.b16 %v3638
      %v3735 = vunpack.c.l.b16 %v3639
      %v3736 = vunpack.c.l.b16 %v3640
      %v3737 = vunpack.c.l.b16 %v3641
      %v3738 = vunpack.c.l.b16 %v3642
      %v3739 = vunpack.c.l.b16 %v3643
      %v3740 = vunpack.c.l.b16 %v3644
      %v3741 = vunpack.c.l.b16 %v3645
      %v3742 = vunpack.c.l.b16 %v3646
      %v3743 = vunpack.c.l.b16 %v3647
      %v3744 = vunpack.c.l.b16 %v3648
      %v3745 = vunpack.c.l.b16 %v3649
      %v3746 = vunpack.c.l.b16 %v3650
      %v3747 = vunpack.c.l.b16 %v3651
      %v3748 = vunpack.c.l.b16 %v3652
      %v3749 = vunpack.c.l.b16 %v3653
      %v3750 = vunpack.c.l.b16 %v3654
      %v3751 = vunpack.c.l.b16 %v3655
      %v3752 = vunpack.c.l.b16 %v3656
      %v3753 = vunpack.c.l.b16 %v3657
      %v3754 = vunpack.c.l.b16 %v3658
      %v3755 = vunpack.c.l.b16 %v3659
      %v3756 = vunpack.c.l.b16 %v3660
      %v3757 = vunpack.c.l.b16 %v3661
      %v3758 = vunpack.c.l.b16 %v3662
      %v3759 = vpack.c.b16 %v3712, %v3711
      %v3760 = vpack.c.b16 %v3714, %v3713
      %v3761 = vpack.c.b16 %v3716, %v3715
      %v3762 = vpack.c.b16 %v3718, %v3717
      %v3763 = vpack.c.b16 %v3720, %v3719
      %v3764 = vpack.c.b16 %v3722, %v3721
      %v3765 = vpack.c.b16 %v3724, %v3723
      %v3766 = vpack.c.b16 %v3726, %v3725
      %v3767 = vpack.c.b16 %v3728, %v3727
      %v3768 = vpack.c.b16 %v3730, %v3729
      %v3769 = vpack.c.b16 %v3732, %v3731
      %v3770 = vpack.c.b16 %v3734, %v3733
      %v3771 = vpack.c.b16 %v3736, %v3735
      %v3772 = vpack.c.b16 %v3738, %v3737
      %v3773 = vpack.c.b16 %v3740, %v3739
      %v3774 = vpack.c.b16 %v3742, %v3741
      %v3775 = vpack.c.b16 %v3744, %v3743
      %v3776 = vpack.c.b16 %v3746, %v3745
      %v3777 = vpack.c.b16 %v3748, %v3747
      %v3778 = vpack.c.b16 %v3750, %v3749
      %v3779 = vpack.c.b16 %v3752, %v3751
      %v3780 = vpack.c.b16 %v3754, %v3753
      %v3781 = vpack.c.b16 %v3756, %v3755
      %v3782 = vpack.c.b16 %v3758, %v3757
      %3807 = vmatprep.subr.bf16.mxu0 0
      %3808 = vmatpush1.bf16.msra.mxu0 %v3766
      %3809 = vmatprep.subr.bf16.mxu0 0
      %3810 = vmatpush1.bf16.msra.mxu0 %v3765
      %3811 = vmatprep.subr.bf16.mxu0 0
      %3812 = vmatpush1.bf16.msra.mxu0 %v3764
      %3813 = vmatprep.subr.bf16.mxu0 0
      %3814 = vmatpush1.bf16.msra.mxu0 %v3763
      %3815 = vmatprep.subr.bf16.mxu0 0
      %3816 = vmatpush1.bf16.msra.mxu0 %v3762
      %3817 = vmatprep.subr.bf16.mxu0 0
      %3818 = vmatpush1.bf16.msra.mxu0 %v3761
      %3819 = vmatprep.subr.bf16.mxu0 0
      %3820 = vmatpush1.bf16.msra.mxu0 %v3760
      %3821 = vmatprep.subr.bf16.mxu0 0
      %3822 = vmatpush1.bf16.msra.mxu0 %v3759
      %3823 = vmatprep.subr.bf16.mxu0 0
      %3824 = vmatpush2.bf16.msra.mxu0 %v3774
      %3825 = vmatprep.subr.bf16.mxu0 0
      %3826 = vmatpush2.bf16.msra.mxu0 %v3773
      %3827 = vmatprep.subr.bf16.mxu0 0
      %3828 = vmatpush2.bf16.msra.mxu0 %v3772
      %3829 = vmatprep.subr.bf16.mxu0 0
      %3830 = vmatpush2.bf16.msra.mxu0 %v3771
      %3831 = vmatprep.subr.bf16.mxu0 0
      %3832 = vmatpush2.bf16.msra.mxu0 %v3770
      %3833 = vmatprep.subr.bf16.mxu0 0
      %3834 = vmatpush2.bf16.msra.mxu0 %v3769
      %3835 = vmatprep.subr.bf16.mxu0 0
      %3836 = vmatpush2.bf16.msra.mxu0 %v3768
      %3837 = vmatprep.subr.bf16.mxu0 0
      %3838 = vmatpush2.bf16.msra.mxu0 %v3767
      %3839 = vmatprep.mubr.bf16.mxu0 %v3353
      %3840 = vmatmul.mubr.bf16.gmra.mxu0 %v3262
      %v3841 = vpop.f32.mrf.mxu0
      %v3842 = vadd.f32 0.0, %v3841
      %v3843 = vpop.f32.mrf.mxu0
      %v3844 = vpop.f32.mrf.mxu0
      %v3845 = vadd.f32 0.0, %v3844
      %v3846 = vpop.f32.mrf.mxu0
      %3847 = vmatprep.mubr.bf16.mxu0 %v3365
      %3848 = vmatmul.mubr.bf16.gmra.mxu0 %v3263
      %v3849 = vpop.f32.mrf.mxu0
      %v3850 = vadd.f32 0.0, %v3849
      %v3851 = vpop.f32.mrf.mxu0
      %v3852 = vpop.f32.mrf.mxu0
      %v3853 = vadd.f32 0.0, %v3852
      %v3854 = vpop.f32.mrf.mxu0
      %3855 = vmatprep.mubr.bf16.mxu0 %v3377
      %3856 = vmatmul.mubr.bf16.gmra.mxu0 %v3264
      %v3857 = vpop.f32.mrf.mxu0
      %v3858 = vadd.f32 0.0, %v3857
      %v3859 = vpop.f32.mrf.mxu0
      %v3860 = vpop.f32.mrf.mxu0
      %v3861 = vadd.f32 0.0, %v3860
      %v3862 = vpop.f32.mrf.mxu0
      %3863 = vmatprep.mubr.bf16.mxu0 %v3389
      %3864 = vmatmul.mubr.bf16.gmra.mxu0 %v3265
      %v3865 = vpop.f32.mrf.mxu0
      %v3866 = vadd.f32 0.0, %v3865
      %v3867 = vpop.f32.mrf.mxu0
      %v3868 = vpop.f32.mrf.mxu0
      %v3869 = vadd.f32 0.0, %v3868
      %v3870 = vpop.f32.mrf.mxu0
      %3871 = vmatprep.mubr.bf16.mxu0 %v3401
      %3872 = vmatmul.mubr.bf16.gmra.mxu0 %v3266
      %v3873 = vpop.f32.mrf.mxu0
      %v3874 = vadd.f32 0.0, %v3873
      %v3875 = vpop.f32.mrf.mxu0
      %v3876 = vpop.f32.mrf.mxu0
      %v3877 = vadd.f32 0.0, %v3876
      %v3878 = vpop.f32.mrf.mxu0
      %3879 = vmatprep.mubr.bf16.mxu0 %v3413
      %3880 = vmatmul.mubr.bf16.gmra.mxu0 %v3267
      %v3881 = vpop.f32.mrf.mxu0
      %v3882 = vadd.f32 0.0, %v3881
      %v3883 = vpop.f32.mrf.mxu0
      %v3884 = vpop.f32.mrf.mxu0
      %v3885 = vadd.f32 0.0, %v3884
      %v3886 = vpop.f32.mrf.mxu0
      %3887 = vmatprep.mubr.bf16.mxu0 %v3425
      %3888 = vmatmul.mubr.bf16.gmra.mxu0 %v3268
      %v3889 = vpop.f32.mrf.mxu0
      %v3890 = vadd.f32 0.0, %v3889
      %v3891 = vpop.f32.mrf.mxu0
      %v3892 = vpop.f32.mrf.mxu0
      %v3893 = vadd.f32 0.0, %v3892
      %v3894 = vpop.f32.mrf.mxu0
      %3895 = vmatprep.mubr.bf16.mxu0 %v3437
      %3896 = vmatmul.mubr.bf16.gmra.mxu0 %v3269
      %v3897 = vpop.f32.mrf.mxu0
      %v3898 = vadd.f32 0.0, %v3897
      %v3899 = vpop.f32.mrf.mxu0
      %v3900 = vpop.f32.mrf.mxu0
      %v3901 = vadd.f32 0.0, %v3900
      %v3902 = vpop.f32.mrf.mxu0
      %3903 = vmatprep.mubr.bf16.mxu0 %v3449
      %3904 = vmatmul.mubr.bf16.gmra.mxu0 %v3270
      %v3905 = vpop.f32.mrf.mxu0
      %v3906 = vadd.f32 0.0, %v3905
      %v3907 = vpop.f32.mrf.mxu0
      %v3908 = vpop.f32.mrf.mxu0
      %v3909 = vadd.f32 0.0, %v3908
      %v3910 = vpop.f32.mrf.mxu0
      %3911 = vmatprep.mubr.bf16.mxu0 %v3461
      %3912 = vmatmul.mubr.bf16.gmra.mxu0 %v3271
      %v3913 = vpop.f32.mrf.mxu0
      %v3914 = vadd.f32 0.0, %v3913
      %v3915 = vpop.f32.mrf.mxu0
      %v3916 = vpop.f32.mrf.mxu0
      %v3917 = vadd.f32 0.0, %v3916
      %v3918 = vpop.f32.mrf.mxu0
      %3919 = vmatprep.mubr.bf16.mxu0 %v3473
      %3920 = vmatmul.mubr.bf16.gmra.mxu0 %v3272
      %v3921 = vpop.f32.mrf.mxu0
      %v3922 = vadd.f32 0.0, %v3921
      %v3923 = vpop.f32.mrf.mxu0
      %v3924 = vpop.f32.mrf.mxu0
      %v3925 = vadd.f32 0.0, %v3924
      %v3926 = vpop.f32.mrf.mxu0
      %3927 = vmatprep.mubr.bf16.mxu0 %v3485
      %3928 = vmatmul.mubr.bf16.gmra.mxu0 %v3273
      %v3929 = vpop.f32.mrf.mxu0
      %v3930 = vadd.f32 0.0, %v3929
      %v3931 = vpop.f32.mrf.mxu0
      %v3932 = vpop.f32.mrf.mxu0
      %v3933 = vadd.f32 0.0, %v3932
      %v3934 = vpop.f32.mrf.mxu0
      %3935 = vmatprep.mubr.bf16.mxu0 %v3497
      %3936 = vmatmul.mubr.bf16.gmra.mxu0 %v3274
      %v3937 = vpop.f32.mrf.mxu0
      %v3938 = vadd.f32 0.0, %v3937
      %v3939 = vpop.f32.mrf.mxu0
      %v3940 = vpop.f32.mrf.mxu0
      %v3941 = vadd.f32 0.0, %v3940
      %v3942 = vpop.f32.mrf.mxu0
      %3943 = vmatprep.mubr.bf16.mxu0 %v3509
      %3944 = vmatmul.mubr.bf16.gmra.mxu0 %v3275
      %v3945 = vpop.f32.mrf.mxu0
      %v3946 = vadd.f32 0.0, %v3945
      %v3947 = vpop.f32.mrf.mxu0
      %v3948 = vpop.f32.mrf.mxu0
      %v3949 = vadd.f32 0.0, %v3948
      %v3950 = vpop.f32.mrf.mxu0
      %3951 = vmatprep.mubr.bf16.mxu0 %v3521
      %3952 = vmatmul.mubr.bf16.gmra.mxu0 %v3276
      %v3953 = vpop.f32.mrf.mxu0
      %v3954 = vadd.f32 0.0, %v3953
      %v3955 = vpop.f32.mrf.mxu0
      %v3956 = vpop.f32.mrf.mxu0
      %v3957 = vadd.f32 0.0, %v3956
      %v3958 = vpop.f32.mrf.mxu0
      %3959 = vmatprep.mubr.bf16.mxu0 %v3533
      %3960 = vmatmul.mubr.bf16.gmra.mxu0 %v3277
      %v3961 = vpop.f32.mrf.mxu0
      %v3962 = vadd.f32 0.0, %v3961
      %v3963 = vpop.f32.mrf.mxu0
      %v3964 = vpop.f32.mrf.mxu0
      %v3965 = vadd.f32 0.0, %v3964
      %v3966 = vpop.f32.mrf.mxu0
      %3967 = vdwg.mxu0
      %3968 = vmatprep.subr.bf16.mxu0 0
      %3969 = vmatpush1.bf16.msra.mxu0 %v3782
      %3970 = vmatprep.subr.bf16.mxu0 0
      %3971 = vmatpush1.bf16.msra.mxu0 %v3781
      %3972 = vmatprep.subr.bf16.mxu0 0
      %3973 = vmatpush1.bf16.msra.mxu0 %v3780
      %3974 = vmatprep.subr.bf16.mxu0 0
      %3975 = vmatpush1.bf16.msra.mxu0 %v3779
      %3976 = vmatprep.subr.bf16.mxu0 0
      %3977 = vmatpush1.bf16.msra.mxu0 %v3778
      %3978 = vmatprep.subr.bf16.mxu0 0
      %3979 = vmatpush1.bf16.msra.mxu0 %v3777
      %3980 = vmatprep.subr.bf16.mxu0 0
      %3981 = vmatpush1.bf16.msra.mxu0 %v3776
      %3982 = vmatprep.subr.bf16.mxu0 0
      %3983 = vmatpush1.bf16.msra.mxu0 %v3775
      %3984 = vmatprep.subr.bf16.mxu0 0
      %3985 = vmatpush2.bf16.msra.mxu0 0
      %3986 = vmatprep.subr.bf16.mxu0 0
      %3987 = vmatpush2.bf16.msra.mxu0 0
      %3988 = vmatprep.subr.bf16.mxu0 0
      %3989 = vmatpush2.bf16.msra.mxu0 0
      %3990 = vmatprep.subr.bf16.mxu0 0
      %3991 = vmatpush2.bf16.msra.mxu0 0
      %3992 = vmatprep.subr.bf16.mxu0 0
      %3993 = vmatpush2.bf16.msra.mxu0 0
      %3994 = vmatprep.subr.bf16.mxu0 0
      %3995 = vmatpush2.bf16.msra.mxu0 0
      %3996 = vmatprep.subr.bf16.mxu0 0
      %3997 = vmatpush2.bf16.msra.mxu0 0
      %3998 = vmatprep.subr.bf16.mxu0 0
      %3999 = vmatpush2.bf16.msra.mxu0 0
      %4000 = vmatprep.mubr.bf16.mxu0 0
      %4001 = vmatmul.mubr.bf16.gmra.mxu0 %v3552
      %v4002 = vpop.f32.mrf.mxu0
      %v4003 = vadd.f32 %v3842, %v4002
      %v4004 = vpop.f32.mrf.mxu0
      %v4005 = vpop.f32.mrf.mxu0
      %v4006 = vadd.f32 %v3845, %v4005
      %v4007 = vpop.f32.mrf.mxu0
      %4008 = vmatprep.mubr.bf16.mxu0 0
      %4009 = vmatmul.mubr.bf16.gmra.mxu0 %v3555
      %v4010 = vpop.f32.mrf.mxu0
      %v4011 = vadd.f32 %v3850, %v4010
      %v4012 = vpop.f32.mrf.mxu0
      %v4013 = vpop.f32.mrf.mxu0
      %v4014 = vadd.f32 %v3853, %v4013
      %v4015 = vpop.f32.mrf.mxu0
      %4016 = vmatprep.mubr.bf16.mxu0 0
      %4017 = vmatmul.mubr.bf16.gmra.mxu0 %v3558
      %v4018 = vpop.f32.mrf.mxu0
      %v4019 = vadd.f32 %v3858, %v4018
      %v4020 = vpop.f32.mrf.mxu0
      %v4021 = vpop.f32.mrf.mxu0
      %v4022 = vadd.f32 %v3861, %v4021
      %v4023 = vpop.f32.mrf.mxu0
      %4024 = vmatprep.mubr.bf16.mxu0 0
      %4025 = vmatmul.mubr.bf16.gmra.mxu0 %v3561
      %v4026 = vpop.f32.mrf.mxu0
      %v4027 = vadd.f32 %v3866, %v4026
      %v4028 = vpop.f32.mrf.mxu0
      %v4029 = vpop.f32.mrf.mxu0
      %v4030 = vadd.f32 %v3869, %v4029
      %v4031 = vpop.f32.mrf.mxu0
      %4032 = vmatprep.mubr.bf16.mxu0 0
      %4033 = vmatmul.mubr.bf16.gmra.mxu0 %v3564
      %v4034 = vpop.f32.mrf.mxu0
      %v4035 = vadd.f32 %v3874, %v4034
      %v4036 = vpop.f32.mrf.mxu0
      %v4037 = vpop.f32.mrf.mxu0
      %v4038 = vadd.f32 %v3877, %v4037
      %v4039 = vpop.f32.mrf.mxu0
      %4040 = vmatprep.mubr.bf16.mxu0 0
      %4041 = vmatmul.mubr.bf16.gmra.mxu0 %v3567
      %v4042 = vpop.f32.mrf.mxu0
      %v4043 = vadd.f32 %v3882, %v4042
      %v4044 = vpop.f32.mrf.mxu0
      %v4045 = vpop.f32.mrf.mxu0
      %v4046 = vadd.f32 %v3885, %v4045
      %v4047 = vpop.f32.mrf.mxu0
      %4048 = vmatprep.mubr.bf16.mxu0 0
      %4049 = vmatmul.mubr.bf16.gmra.mxu0 %v3570
      %v4050 = vpop.f32.mrf.mxu0
      %v4051 = vadd.f32 %v3890, %v4050
      %v4052 = vpop.f32.mrf.mxu0
      %v4053 = vpop.f32.mrf.mxu0
      %v4054 = vadd.f32 %v3893, %v4053
      %v4055 = vpop.f32.mrf.mxu0
      %4056 = vmatprep.mubr.bf16.mxu0 0
      %4057 = vmatmul.mubr.bf16.gmra.mxu0 %v3573
      %v4058 = vpop.f32.mrf.mxu0
      %v4059 = vadd.f32 %v3898, %v4058
      %v4060 = vpop.f32.mrf.mxu0
      %v4061 = vpop.f32.mrf.mxu0
      %v4062 = vadd.f32 %v3901, %v4061
      %v4063 = vpop.f32.mrf.mxu0
      %4064 = vmatprep.mubr.bf16.mxu0 0
      %4065 = vmatmul.mubr.bf16.gmra.mxu0 %v3576
      %v4066 = vpop.f32.mrf.mxu0
      %v4067 = vadd.f32 %v3906, %v4066
      %v4068 = vpop.f32.mrf.mxu0
      %v4069 = vpop.f32.mrf.mxu0
      %v4070 = vadd.f32 %v3909, %v4069
      %v4071 = vpop.f32.mrf.mxu0
      %4072 = vmatprep.mubr.bf16.mxu0 0
      %4073 = vmatmul.mubr.bf16.gmra.mxu0 %v3579
      %v4074 = vpop.f32.mrf.mxu0
      %v4075 = vadd.f32 %v3914, %v4074
      %v4076 = vpop.f32.mrf.mxu0
      %v4077 = vpop.f32.mrf.mxu0
      %v4078 = vadd.f32 %v3917, %v4077
      %v4079 = vpop.f32.mrf.mxu0
      %4080 = vmatprep.mubr.bf16.mxu0 0
      %4081 = vmatmul.mubr.bf16.gmra.mxu0 %v3582
      %v4082 = vpop.f32.mrf.mxu0
      %v4083 = vadd.f32 %v3922, %v4082
      %v4084 = vpop.f32.mrf.mxu0
      %v4085 = vpop.f32.mrf.mxu0
      %v4086 = vadd.f32 %v3925, %v4085
      %v4087 = vpop.f32.mrf.mxu0
      %4088 = vmatprep.mubr.bf16.mxu0 0
      %4089 = vmatmul.mubr.bf16.gmra.mxu0 %v3585
      %v4090 = vpop.f32.mrf.mxu0
      %v4091 = vadd.f32 %v3930, %v4090
      %v4092 = vpop.f32.mrf.mxu0
      %v4093 = vpop.f32.mrf.mxu0
      %v4094 = vadd.f32 %v3933, %v4093
      %v4095 = vpop.f32.mrf.mxu0
      %4096 = vmatprep.mubr.bf16.mxu0 0
      %4097 = vmatmul.mubr.bf16.gmra.mxu0 %v3588
      %v4098 = vpop.f32.mrf.mxu0
      %v4099 = vadd.f32 %v3938, %v4098
      %v4100 = vpop.f32.mrf.mxu0
      %v4101 = vpop.f32.mrf.mxu0
      %v4102 = vadd.f32 %v3941, %v4101
      %v4103 = vpop.f32.mrf.mxu0
      %4104 = vmatprep.mubr.bf16.mxu0 0
      %4105 = vmatmul.mubr.bf16.gmra.mxu0 %v3591
      %v4106 = vpop.f32.mrf.mxu0
      %v4107 = vadd.f32 %v3946, %v4106
      %v4108 = vpop.f32.mrf.mxu0
      %v4109 = vpop.f32.mrf.mxu0
      %v4110 = vadd.f32 %v3949, %v4109
      %v4111 = vpop.f32.mrf.mxu0
      %4112 = vmatprep.mubr.bf16.mxu0 0
      %4113 = vmatmul.mubr.bf16.gmra.mxu0 %v3594
      %v4114 = vpop.f32.mrf.mxu0
      %v4115 = vadd.f32 %v3954, %v4114
      %v4116 = vpop.f32.mrf.mxu0
      %v4117 = vpop.f32.mrf.mxu0
      %v4118 = vadd.f32 %v3957, %v4117
      %v4119 = vpop.f32.mrf.mxu0
      %4120 = vmatprep.mubr.bf16.mxu0 0
      %4121 = vmatmul.mubr.bf16.gmra.mxu0 %v3597
      %v4122 = vpop.f32.mrf.mxu0
      %v4123 = vadd.f32 %v3962, %v4122
      %v4124 = vpop.f32.mrf.mxu0
      %v4125 = vpop.f32.mrf.mxu0
      %v4126 = vadd.f32 %v3965, %v4125
      %v4127 = vpop.f32.mrf.mxu0
      %4128 = vdwg.mxu0
      %v4129 = vadd.f32 %v3020, %v4003
      %v4130 = vadd.f32 %v3023, %v4006
      %v4131 = vadd.f32 %v3028, %v4011
      %v4132 = vadd.f32 %v3031, %v4014
      %v4133 = vadd.f32 %v3036, %v4019
      %v4134 = vadd.f32 %v3039, %v4022
      %v4135 = vadd.f32 %v3044, %v4027
      %v4136 = vadd.f32 %v3047, %v4030
      %v4137 = vadd.f32 %v3052, %v4035
      %v4138 = vadd.f32 %v3055, %v4038
      %v4139 = vadd.f32 %v3060, %v4043
      %v4140 = vadd.f32 %v3063, %v4046
      %v4141 = vadd.f32 %v3068, %v4051
      %v4142 = vadd.f32 %v3071, %v4054
      %v4143 = vadd.f32 %v3076, %v4059
      %v4144 = vadd.f32 %v3079, %v4062
      %v4145 = vadd.f32 %v3084, %v4067
      %v4146 = vadd.f32 %v3087, %v4070
      %v4147 = vadd.f32 %v3092, %v4075
      %v4148 = vadd.f32 %v3095, %v4078
      %v4149 = vadd.f32 %v3100, %v4083
      %v4150 = vadd.f32 %v3103, %v4086
      %v4151 = vadd.f32 %v3108, %v4091
      %v4152 = vadd.f32 %v3111, %v4094
      %v4153 = vadd.f32 %v3116, %v4099
      %v4154 = vadd.f32 %v3119, %v4102
      %v4155 = vadd.f32 %v3124, %v4107
      %v4156 = vadd.f32 %v3127, %v4110
      %v4157 = vadd.f32 %v3132, %v4115
      %v4158 = vadd.f32 %v3135, %v4118
      %v4159 = vadd.f32 %v3140, %v4123
      %v4160 = vadd.f32 %v3143, %v4126
      %v4161 = vpack.c.bf16 %v4130, %v4129
      %v4162 = vpack.c.bf16 %v4132, %v4131
      %v4163 = vpack.c.bf16 %v4134, %v4133
      %v4164 = vpack.c.bf16 %v4136, %v4135
      %v4165 = vpack.c.bf16 %v4138, %v4137
      %v4166 = vpack.c.bf16 %v4140, %v4139
      %v4167 = vpack.c.bf16 %v4142, %v4141
      %v4168 = vpack.c.bf16 %v4144, %v4143
      %v4169 = vpack.c.bf16 %v4146, %v4145
      %v4170 = vpack.c.bf16 %v4148, %v4147
      %v4171 = vpack.c.bf16 %v4150, %v4149
      %v4172 = vpack.c.bf16 %v4152, %v4151
      %v4173 = vpack.c.bf16 %v4154, %v4153
      %v4174 = vpack.c.bf16 %v4156, %v4155
      %v4175 = vpack.c.bf16 %v4158, %v4157
      %v4176 = vpack.c.bf16 %v4160, %v4159
      %v4193 = vunpack.c.l.b16 %v4161
      %v4194 = vunpack.c.h.b16 %v4161
      %v4195 = vunpack.c.l.b16 %v4162
      %v4196 = vunpack.c.h.b16 %v4162
      %v4197 = vunpack.c.l.b16 %v4163
      %v4198 = vunpack.c.h.b16 %v4163
      %v4199 = vunpack.c.l.b16 %v4164
      %v4200 = vunpack.c.h.b16 %v4164
      %v4201 = vunpack.c.l.b16 %v4165
      %v4202 = vunpack.c.h.b16 %v4165
      %v4203 = vunpack.c.l.b16 %v4166
      %v4204 = vunpack.c.h.b16 %v4166
      %v4205 = vunpack.c.l.b16 %v4167
      %v4206 = vunpack.c.h.b16 %v4167
      %v4207 = vunpack.c.l.b16 %v4168
      %v4208 = vunpack.c.h.b16 %v4168
      %v4209 = vunpack.c.l.b16 %v4169
      %v4210 = vunpack.c.h.b16 %v4169
      %v4211 = vunpack.c.l.b16 %v4170
      %v4212 = vunpack.c.h.b16 %v4170
      %v4213 = vunpack.c.l.b16 %v4171
      %v4214 = vunpack.c.h.b16 %v4171
      %v4215 = vunpack.c.l.b16 %v4172
      %v4216 = vunpack.c.h.b16 %v4172
      %v4217 = vunpack.c.l.b16 %v4173
      %v4218 = vunpack.c.h.b16 %v4173
      %v4219 = vunpack.c.l.b16 %v4174
      %v4220 = vunpack.c.h.b16 %v4174
      %v4221 = vunpack.c.l.b16 %v4175
      %v4222 = vunpack.c.h.b16 %v4175
      %v4223 = vunpack.c.l.b16 %v4176
      %v4224 = vunpack.c.h.b16 %v4176
      %v4225 = vpack.c.b16 %v4193, %v4193
      %v4226 = vpack.c.b16 %v4194, %v4194
      %v4227 = vpack.c.b16 %v4195, %v4195
      %v4228 = vpack.c.b16 %v4196, %v4196
      %v4229 = vpack.c.b16 %v4197, %v4197
      %v4230 = vpack.c.b16 %v4198, %v4198
      %v4231 = vpack.c.b16 %v4199, %v4199
      %v4232 = vpack.c.b16 %v4200, %v4200
      %v4233 = vpack.c.b16 %v4201, %v4201
      %v4234 = vpack.c.b16 %v4202, %v4202
      %v4235 = vpack.c.b16 %v4203, %v4203
      %v4236 = vpack.c.b16 %v4204, %v4204
      %v4237 = vpack.c.b16 %v4205, %v4205
      %v4238 = vpack.c.b16 %v4206, %v4206
      %v4239 = vpack.c.b16 %v4207, %v4207
      %v4240 = vpack.c.b16 %v4208, %v4208
      %v4241 = vpack.c.b16 %v4209, %v4209
      %v4242 = vpack.c.b16 %v4210, %v4210
      %v4243 = vpack.c.b16 %v4211, %v4211
      %v4244 = vpack.c.b16 %v4212, %v4212
      %v4245 = vpack.c.b16 %v4213, %v4213
      %v4246 = vpack.c.b16 %v4214, %v4214
      %v4247 = vpack.c.b16 %v4215, %v4215
      %v4248 = vpack.c.b16 %v4216, %v4216
      %v4249 = vpack.c.b16 %v4217, %v4217
      %v4250 = vpack.c.b16 %v4218, %v4218
      %v4251 = vpack.c.b16 %v4219, %v4219
      %v4252 = vpack.c.b16 %v4220, %v4220
      %v4253 = vpack.c.b16 %v4221, %v4221
      %v4254 = vpack.c.b16 %v4222, %v4222
      %v4255 = vpack.c.b16 %v4223, %v4223
      %v4256 = vpack.c.b16 %v4224, %v4224
      %4289 = vst [vmem:[%s250] sm:$0xf] %v4225
      %4290 = vst [vmem:[%s250 + $0x4] sm:$0xf] %v4226
      %4291 = vst [vmem:[%s250 + $0x8] sm:$0xf] %v4227
      %4292 = vst [vmem:[%s250 + $0xc] sm:$0xf] %v4228
      %4293 = vst [vmem:[%s250 + $0x10] sm:$0xf] %v4229
      %4294 = vst [vmem:[%s250 + $0x14] sm:$0xf] %v4230
      %4295 = vst [vmem:[%s250 + $0x18] sm:$0xf] %v4231
      %4296 = vst [vmem:[%s250 + $0x1c] sm:$0xf] %v4232
      %4297 = vst [vmem:[%s250 + $0x20] sm:$0xf] %v4233
      %4298 = vst [vmem:[%s250 + $0x24] sm:$0xf] %v4234
      %4299 = vst [vmem:[%s250 + $0x28] sm:$0xf] %v4235
      %4300 = vst [vmem:[%s250 + $0x2c] sm:$0xf] %v4236
      %4301 = vst [vmem:[%s250 + $0x30] sm:$0xf] %v4237
      %4302 = vst [vmem:[%s250 + $0x34] sm:$0xf] %v4238
      %4303 = vst [vmem:[%s250 + $0x38] sm:$0xf] %v4239
      %4304 = vst [vmem:[%s250 + $0x3c] sm:$0xf] %v4240
      %4305 = vst [vmem:[%s250 + $0x40] sm:$0xf] %v4241
      %4306 = vst [vmem:[%s250 + $0x44] sm:$0xf] %v4242
      %4307 = vst [vmem:[%s250 + $0x48] sm:$0xf] %v4243
      %4308 = vst [vmem:[%s250 + $0x4c] sm:$0xf] %v4244
      %4309 = vst [vmem:[%s250 + $0x50] sm:$0xf] %v4245
      %4310 = vst [vmem:[%s250 + $0x54] sm:$0xf] %v4246
      %4311 = vst [vmem:[%s250 + $0x58] sm:$0xf] %v4247
      %4312 = vst [vmem:[%s250 + $0x5c] sm:$0xf] %v4248
      %4313 = vst [vmem:[%s250 + $0x60] sm:$0xf] %v4249
      %4314 = vst [vmem:[%s250 + $0x64] sm:$0xf] %v4250
      %4315 = vst [vmem:[%s250 + $0x68] sm:$0xf] %v4251
      %4316 = vst [vmem:[%s250 + $0x6c] sm:$0xf] %v4252
      %4317 = vst [vmem:[%s250 + $0x70] sm:$0xf] %v4253
      %4318 = vst [vmem:[%s250 + $0x74] sm:$0xf] %v4254
      %4319 = vst [vmem:[%s250 + $0x78] sm:$0xf] %v4255
      %4320 = vst [vmem:[%s250 + $0x7c] sm:$0xf] %v4256
      %v4321 = vadd.f32 %v4129, %v4130
      %v4322 = vadd.f32 %v4321, %v4131
      %v4323 = vadd.f32 %v4322, %v4132
      %v4324 = vadd.f32 %v4323, %v4133
      %v4325 = vadd.f32 %v4324, %v4134
      %v4326 = vadd.f32 %v4325, %v4135
      %v4327 = vadd.f32 %v4326, %v4136
      %v4328 = vadd.f32 %v4327, %v4137
      %v4329 = vadd.f32 %v4328, %v4138
      %v4330 = vadd.f32 %v4329, %v4139
      %v4331 = vadd.f32 %v4330, %v4140
      %v4332 = vadd.f32 %v4331, %v4141
      %v4333 = vadd.f32 %v4332, %v4142
      %v4334 = vadd.f32 %v4333, %v4143
      %v4335 = vadd.f32 %v4334, %v4144
      %v4336 = vadd.f32 %v4335, %v4145
      %v4337 = vadd.f32 %v4336, %v4146
      %v4338 = vadd.f32 %v4337, %v4147
      %v4339 = vadd.f32 %v4338, %v4148
      %v4340 = vadd.f32 %v4339, %v4149
      %v4341 = vadd.f32 %v4340, %v4150
      %v4342 = vadd.f32 %v4341, %v4151
      %v4343 = vadd.f32 %v4342, %v4152
      %v4344 = vadd.f32 %v4343, %v4153
      %v4345 = vadd.f32 %v4344, %v4154
      %v4346 = vadd.f32 %v4345, %v4155
      %v4347 = vadd.f32 %v4346, %v4156
      %v4348 = vadd.f32 %v4347, %v4157
      %v4349 = vadd.f32 %v4348, %v4158
      %v4350 = vadd.f32 %v4349, %v4159
      %v4351 = vadd.f32 %v4350, %v4160
      %v4352 = vrot.slane %v4351, 4
      %v4353 = vadd.f32 %v4351, %v4352
      %v4354 = vrot.slane %v4353, 2
      %v4355 = vadd.f32 %v4353, %v4354
      %v4356 = vrot.slane %v4355, 1
      %v4357 = vadd.f32 %v4355, %v4356
      %v4358 = vrcp.pop 256.0
      %v4359 = vmul.f32 %v4357, %v4358
      %v4360 = vsub.f32 %v4129, %v4359
      %v4361 = vsub.f32 %v4130, %v4359
      %v4362 = vsub.f32 %v4131, %v4359
      %v4363 = vsub.f32 %v4132, %v4359
      %v4364 = vsub.f32 %v4133, %v4359
      %v4365 = vsub.f32 %v4134, %v4359
      %v4366 = vsub.f32 %v4135, %v4359
      %v4367 = vsub.f32 %v4136, %v4359
      %v4368 = vsub.f32 %v4137, %v4359
      %v4369 = vsub.f32 %v4138, %v4359
      %v4370 = vsub.f32 %v4139, %v4359
      %v4371 = vsub.f32 %v4140, %v4359
      %v4372 = vsub.f32 %v4141, %v4359
      %v4373 = vsub.f32 %v4142, %v4359
      %v4374 = vsub.f32 %v4143, %v4359
      %v4375 = vsub.f32 %v4144, %v4359
      %v4376 = vsub.f32 %v4145, %v4359
      %v4377 = vsub.f32 %v4146, %v4359
      %v4378 = vsub.f32 %v4147, %v4359
      %v4379 = vsub.f32 %v4148, %v4359
      %v4380 = vsub.f32 %v4149, %v4359
      %v4381 = vsub.f32 %v4150, %v4359
      %v4382 = vsub.f32 %v4151, %v4359
      %v4383 = vsub.f32 %v4152, %v4359
      %v4384 = vsub.f32 %v4153, %v4359
      %v4385 = vsub.f32 %v4154, %v4359
      %v4386 = vsub.f32 %v4155, %v4359
      %v4387 = vsub.f32 %v4156, %v4359
      %v4388 = vsub.f32 %v4157, %v4359
      %v4389 = vsub.f32 %v4158, %v4359
      %v4390 = vsub.f32 %v4159, %v4359
      %v4391 = vsub.f32 %v4160, %v4359
      %4392 = vst [vmem:[%s257] sm:$0x1] %v4357
      %v4393 = vmul.f32 %v4360, %v4360
      %v4394 = vmul.f32 %v4361, %v4361
      %v4395 = vmul.f32 %v4362, %v4362
      %v4396 = vmul.f32 %v4363, %v4363
      %v4397 = vmul.f32 %v4364, %v4364
      %v4398 = vmul.f32 %v4365, %v4365
      %v4399 = vmul.f32 %v4366, %v4366
      %v4400 = vmul.f32 %v4367, %v4367
      %v4401 = vmul.f32 %v4368, %v4368
      %v4402 = vmul.f32 %v4369, %v4369
      %v4403 = vmul.f32 %v4370, %v4370
      %v4404 = vmul.f32 %v4371, %v4371
      %v4405 = vmul.f32 %v4372, %v4372
      %v4406 = vmul.f32 %v4373, %v4373
      %v4407 = vmul.f32 %v4374, %v4374
      %v4408 = vmul.f32 %v4375, %v4375
      %v4409 = vmul.f32 %v4376, %v4376
      %v4410 = vmul.f32 %v4377, %v4377
      %v4411 = vmul.f32 %v4378, %v4378
      %v4412 = vmul.f32 %v4379, %v4379
      %v4413 = vmul.f32 %v4380, %v4380
      %v4414 = vmul.f32 %v4381, %v4381
      %v4415 = vmul.f32 %v4382, %v4382
      %v4416 = vmul.f32 %v4383, %v4383
      %v4417 = vmul.f32 %v4384, %v4384
      %v4418 = vmul.f32 %v4385, %v4385
      %v4419 = vmul.f32 %v4386, %v4386
      %v4420 = vmul.f32 %v4387, %v4387
      %v4421 = vmul.f32 %v4388, %v4388
      %v4422 = vmul.f32 %v4389, %v4389
      %v4423 = vmul.f32 %v4390, %v4390
      %v4424 = vmul.f32 %v4391, %v4391
      %v4425 = vadd.f32 %v4393, %v4394
      %v4426 = vadd.f32 %v4425, %v4395
      %v4427 = vadd.f32 %v4426, %v4396
      %v4428 = vadd.f32 %v4427, %v4397
      %v4429 = vadd.f32 %v4428, %v4398
      %v4430 = vadd.f32 %v4429, %v4399
      %v4431 = vadd.f32 %v4430, %v4400
      %v4432 = vadd.f32 %v4431, %v4401
      %v4433 = vadd.f32 %v4432, %v4402
      %v4434 = vadd.f32 %v4433, %v4403
      %v4435 = vadd.f32 %v4434, %v4404
      %v4436 = vadd.f32 %v4435, %v4405
      %v4437 = vadd.f32 %v4436, %v4406
      %v4438 = vadd.f32 %v4437, %v4407
      %v4439 = vadd.f32 %v4438, %v4408
      %v4440 = vadd.f32 %v4439, %v4409
      %v4441 = vadd.f32 %v4440, %v4410
      %v4442 = vadd.f32 %v4441, %v4411
      %v4443 = vadd.f32 %v4442, %v4412
      %v4444 = vadd.f32 %v4443, %v4413
      %v4445 = vadd.f32 %v4444, %v4414
      %v4446 = vadd.f32 %v4445, %v4415
      %v4447 = vadd.f32 %v4446, %v4416
      %v4448 = vadd.f32 %v4447, %v4417
      %v4449 = vadd.f32 %v4448, %v4418
      %v4450 = vadd.f32 %v4449, %v4419
      %v4451 = vadd.f32 %v4450, %v4420
      %v4452 = vadd.f32 %v4451, %v4421
      %v4453 = vadd.f32 %v4452, %v4422
      %v4454 = vadd.f32 %v4453, %v4423
      %v4455 = vadd.f32 %v4454, %v4424
      %v4456 = vrot.slane %v4455, 4
      %v4457 = vadd.f32 %v4455, %v4456
      %v4458 = vrot.slane %v4457, 2
      %v4459 = vadd.f32 %v4457, %v4458
      %v4460 = vrot.slane %v4459, 1
      %v4461 = vadd.f32 %v4459, %v4460
      %4462 = vst [vmem:[%s263] sm:$0x1] %v4461
      %s4463 = smul.u32 16, %s23
      %p4464 = scmp.lt.s32.totalorder %s22, 1
      %s4465 = scalar_select %p4464, %s22, 1
      %p4466 = scmp.lt.s32.totalorder %s4463, 15
      %s4467 = scalar_select %p4466, %s4463, 15
      %s4468 = smul.addr %s4467, 2
      %s4469 = smul.addr %s4465, 32
      %s4470 = sadd.s32 %s4468, %s4469
      %s4471 = smul.addr %s4470, 4
      %s4472 = scalar_lea.vmem %s4, %s4471
      %p4473 = scmp.lt.s32.totalorder %s22, 1
      %s4474 = scalar_select %p4473, %s22, 1
      %p4475 = scmp.lt.s32.totalorder %s23, 0
      %s4476 = scalar_select %p4475, %s23, 0
      %s4477 = sadd.s32 %s4476, %s4474
      %s4478 = scalar_lea.vmem %s5, %s4477
      %p4479 = scmp.lt.s32.totalorder %s22, 1
      %s4480 = scalar_select %p4479, %s22, 1
      %p4481 = scmp.lt.s32.totalorder %s23, 0
      %s4482 = scalar_select %p4481, %s23, 0
      %s4483 = sadd.s32 %s4482, %s4480
      %s4484 = scalar_lea.vmem %s6, %s4483
      // Predicated region
      $region72: #{double_conv.4} parent=31 // pred_check
        %p4485 = pneg %p113
      $region73: #{double_conv.4} parent=31 // pred_check_branch
        %4487 = sbr.rel (%p4485) target = $region75
      $region74: #{double_conv.4} parent=31 // pred_region
        %s4488 = smul.u32 16, %s23
      $region75: #{double_conv.4} parent=31 // pred_fallthru
        _
      // Predicated region
      $region76: #{double_conv.4} parent=31 // pred_check
        %p4489 = pneg %p141
      $region77: #{double_conv.4} parent=31 // pred_check_branch
        %4491 = sbr.rel (%p4489) target = $region79
      $region78: #{double_conv.4} parent=31 // pred_region
        _
      $region79: #{double_conv.4} parent=31 // pred_fallthru
        _
      // Predicated region
      $region80: #{double_conv.4} parent=31 // pred_check
        %p4492 = pneg %p169
      $region81: #{double_conv.4} parent=31 // pred_check_branch
        %4494 = sbr.rel (%p4492) target = $region83
      $region82: #{double_conv.4} parent=31 // pred_region
        _
      $region83: #{double_conv.4} parent=31 // pred_fallthru
        _
    $region32: #{double_conv.4} parent=5 // pred_fallthru
      _
    %p4495 = scmp.le.s32.totalorder 2, %s13
    // Predicated region
    $region84: #{double_conv.4} parent=5 // pred_check
      %p4496 = pneg %p4495
    $region85: #{double_conv.4} parent=5 // pred_check_branch
      %4498 = sbr.rel (%p4496) target = $region87
    $region86: #{double_conv.4} parent=5 // pred_region
      %s4499 = ssub.s32 %s13, 2
      // Predicated region
      $region88: #{double_conv.4} parent=86 // pred_check
        %p4500 = pneg %p119
      $region89: #{double_conv.4} parent=86 // pred_check_branch
        %4502 = sbr.rel (%p4500) target = $region91
      $region90: #{double_conv.4} parent=86 // pred_region
        %s4503 = smul.u32 16, %s25
        %p4504 = scmp.lt.s32.totalorder %s24, 1
        %s4505 = scalar_select %p4504, %s24, 1
        %p4506 = scmp.lt.s32.totalorder %s4503, 15
        %s4507 = scalar_select %p4506, %s4503, 15
        %s4508 = smul.addr %s4507, 2
        %s4509 = smul.addr %s4505, 32
        %s4510 = sadd.s32 %s4508, %s4509
        %s4511 = smul.addr %s4510, 4
        %s4512 = scalar_lea.vmem %s4, %s4511
      $region91: #{double_conv.4} parent=86 // pred_fallthru
        _
      // Predicated region
      $region92: #{double_conv.4} parent=86 // pred_check
        %p4513 = pneg %p147
      $region93: #{double_conv.4} parent=86 // pred_check_branch
        %4515 = sbr.rel (%p4513) target = $region95
      $region94: #{double_conv.4} parent=86 // pred_region
        %p4516 = scmp.lt.s32.totalorder %s24, 1
        %s4517 = scalar_select %p4516, %s24, 1
        %p4518 = scmp.lt.s32.totalorder %s25, 0
        %s4519 = scalar_select %p4518, %s25, 0
        %s4520 = sadd.s32 %s4519, %s4517
        %s4521 = scalar_lea.vmem %s5, %s4520
      $region95: #{double_conv.4} parent=86 // pred_fallthru
        _
      // Predicated region
      $region96: #{double_conv.4} parent=86 // pred_check
        %p4522 = pneg %p175
      $region97: #{double_conv.4} parent=86 // pred_check_branch
        %4524 = sbr.rel (%p4522) target = $region99
      $region98: #{double_conv.4} parent=86 // pred_region
        %p4525 = scmp.lt.s32.totalorder %s24, 1
        %s4526 = scalar_select %p4525, %s24, 1
        %p4527 = scmp.lt.s32.totalorder %s25, 0
        %s4528 = scalar_select %p4527, %s25, 0
        %s4529 = sadd.s32 %s4528, %s4526
        %s4530 = scalar_lea.vmem %s6, %s4529
      $region99: #{double_conv.4} parent=86 // pred_fallthru
        _
    $region87: #{double_conv.4} parent=5 // pred_fallthru
      _
  $region6: #{double_conv.4} parent=0 // loop_footer
    %s17 = sadd.s32 1, %s13
  $region7: #{double_conv.4} parent=0 // loop_footer_branch
    %12 = sbr.rel target = $region3
  $region8: #{double_conv.4} parent=0 // loop_exit
    _

</llo_original>
